<compile_context>
chip_gen: v5e
topology: v5e:2x2
jax: 0.10.0
libtpu: 0.0.40
codegen_flags: <defaults>
</compile_context>

<pallas_src>
import numpy as np
import jax
import jax.numpy as jnp
from jax import lax
from jax.experimental import pallas as pl
from jax.experimental.pallas import tpu as pltpu


# ----------------------------------------------------------------------------
# Glue: deterministic operator matrices (pool / bilinear upsample)
# ----------------------------------------------------------------------------
def _bilinear_matrix(out_size: int, in_size: int) -> np.ndarray:
    """1-D bilinear interpolation matrix, PyTorch align_corners=False."""
    scale = in_size / out_size
    m = np.zeros((out_size, in_size), dtype=np.float32)
    for o in range(out_size):
        src = (o + 0.5) * scale - 0.5
        i0 = int(np.floor(src))
        frac = src - i0
        i0c = min(max(i0, 0), in_size - 1)
        i1c = min(max(i0 + 1, 0), in_size - 1)
        m[o, i0c] += 1.0 - frac
        m[o, i1c] += frac
    return m


def _avgpool2_matrix(out_size: int) -> np.ndarray:
    """1-D 2x average-pool matrix (out_size, 2*out_size)."""
    m = np.zeros((out_size, 2 * out_size), dtype=np.float32)
    for o in range(out_size):
        m[o, 2 * o] = 0.5
        m[o, 2 * o + 1] = 0.5
    return m


def _default_n_cores() -> int:
    """2 TensorCores only on v7x; on v5e/v6e a 2-way split is pure overhead."""
    try:
        kind = jax.devices()[0].device_kind.lower()
    except Exception:
        return 1
    return 2 if "v7" in kind else 1


# ----------------------------------------------------------------------------
# Wrapper reproducing Net_scoreCAM_Feature.forward semantics
# ----------------------------------------------------------------------------
def net_scorecam_feature_forward(x, w1, w2, *, n_cores=None):
    """x: (1, C, H, W) float32 NCHW.  Returns (x, x, x) like the PyTorch module
    (or None if the accumulated saliency map is flat)."""
    if n_cores is None:
        n_cores = _default_n_cores()
    b, c, h, w = x.shape
    assert b == 1, "Score-CAM code path assumes batch size 1"
    k_feat = int(w1.shape[0])
    ncls = int(w2.shape[0])
    assert h % 2 == 0 and w % 2 == 0
    u, v = h // 2, w // 2
    hw, uv = h * w, u * v
    assert k_feat % n_cores == 0
    tile_k = k_feat // n_cores            # collapsed grid: one tile per core
    assert tile_k % 16 == 0, "bf16 sublane packing needs 16-aligned channel tiles"

    # operator matrices (glue, deterministic)
    pool_np = np.kron(_avgpool2_matrix(u), _avgpool2_matrix(v)).astype(np.float32)        # (UV, HW)
    up_np = np.kron(_bilinear_matrix(h, u), _bilinear_matrix(w, v)).T.astype(np.float32)  # (UV, HW)
    # TODO(synk): dense Kronecker pool/upsample operators are fine at 16x16 but must
    # become separable 1-D row/col matmuls (or HW-tiled) at real resolutions (v7x VMEM).

    # ------------------------------------------------------------------------
    # One fused kernel: initial forward + argmax prologue, then the fully
    # batched Score-CAM computation for this core's channel tile.
    # ------------------------------------------------------------------------
    def kernel(x_ref, pool_ref, up_ref, w1_ref, w2_ref, sal_ref):
        # --- initial classifier forward (once per grid step == once per core) ---
        x_b = x_ref[...]                                                     # (C, HW) bf16
        y = jnp.dot(w1_ref[...], x_b, preferred_element_type=jnp.float32)    # (K, HW) f32
        y_b = y.astype(jnp.bfloat16)
        # features activations: relu(pool(w1 @ x)) == relu(w1 @ pool(x))
        acts = jnp.maximum(
            lax.dot_general(y_b, pool_ref[...], (((1,), (1,)), ((), ())),
                            preferred_element_type=jnp.float32), 0.0)        # (K, UV)
        g0 = jnp.mean(acts, axis=1, keepdims=True)                           # (K, 1) GAP
        logits0 = lax.dot_general(w2_ref[...], g0.astype(jnp.bfloat16),
                                  (((1,), (0,)), ((), ())),
                                  preferred_element_type=jnp.float32)        # (NCLS, 1)
        mx0 = jnp.max(logits0, axis=0, keepdims=True)                        # (1, 1)
        ids_col = lax.broadcasted_iota(jnp.int32, logits0.shape, 0)
        pc = jnp.min(jnp.where(logits0 >= mx0, ids_col, ncls),
                     axis=0, keepdims=True)                                  # (1, 1) i32
        ids_row = lax.broadcasted_iota(jnp.int32, (1, ncls), 1)
        onehot = (ids_row == pc).astype(jnp.float32)                         # (1, NCLS)
        # TODO(synk): score.backward(retain_graph=True) + gradient hooks only fill
        # unused dicts in the PyTorch module; no autograd state is materialised here.

        # --- Score-CAM for this core's tile of TILE_K feature channels ----------
        if n_cores == 1:
            a = acts.astype(jnp.bfloat16)                                    # (TK, UV)
        else:
            i = pl.program_id(0)
            ch0 = pl.multiple_of(i * tile_k, tile_k)
            w1_t = w1_ref[pl.ds(ch0, tile_k), :]                             # (TK, C) bf16
            y_t = jnp.dot(w1_t, x_b, preferred_element_type=jnp.float32)     # (TK, HW)
            a = jnp.maximum(
                lax.dot_general(y_t.astype(jnp.bfloat16), pool_ref[...],
                                (((1,), (1,)), ((), ())),
                                preferred_element_type=jnp.float32), 0.0
            ).astype(jnp.bfloat16)                                           # (TK, UV)

        # bilinear upsample of every channel map of the tile (one MXU matmul)
        sal = jnp.dot(a, up_ref[...], preferred_element_type=jnp.float32)    # (TK, HW)

        smax = jnp.max(sal, axis=1, keepdims=True)                           # (TK, 1)
        smin = jnp.min(sal, axis=1, keepdims=True)
        denom = smax - smin
        valid = denom != 0.0                                                 # per-channel "continue" guard
        inv = pl.reciprocal(jnp.where(valid, denom, 1.0), approx=False)
        norm = (sal - smin) * inv                                            # (TK, HW) f32

        # masked re-forward, batched over the TK channels of this tile:
        #   pool(w1 @ (x * m_c))[k, u] = sum_p pool[u, p] * m_c[p] * y[k, p]
        norm_b = norm.astype(jnp.bfloat16)
        qn = norm_b[:, None, :] * pool_ref[...][None, :, :]                  # (TK, UV, HW) bf16
        pre = lax.dot_general(qn.reshape(tile_k * uv, hw), y_b,
                              (((1,), (1,)), ((), ())),
                              preferred_element_type=jnp.float32)            # (TK*UV, K)
        am = jnp.maximum(pre, 0.0)
        g = jnp.mean(am.reshape(tile_k, uv, k_feat), axis=1)                 # (TK, K)  GAP
        logits = lax.dot_general(g.astype(jnp.bfloat16), w2_ref[...],
                                 (((1,), (1,)), ((), ())),
                                 preferred_element_type=jnp.float32)         # (TK, NCLS)
        mlog = jnp.max(logits, axis=1, keepdims=True)
        e = jnp.exp(logits - mlog)
        # score = softmax(logits)[predicted_class]
        score = (jnp.sum(e * onehot, axis=1, keepdims=True) *
                 pl.reciprocal(jnp.sum(e, axis=1, keepdims=True), approx=False))  # (TK, 1)

        # PyTorch accumulates score * (un-normalised) upsampled activation map;
        # the per-channel rows are summed on device in the wrapper.
        sal_ref[...] = jnp.where(valid, score, 0.0) * sal

    grid_spec = pltpu.PrefetchScalarGridSpec(
        num_scalar_prefetch=0,
        grid=(n_cores,),
        in_specs=[
            pl.BlockSpec((c, hw), lambda i: (0, 0)),            # x (bf16, lane-dense)
            pl.BlockSpec((uv, hw), lambda i: (0, 0)),           # pool operator (bf16)
            pl.BlockSpec((uv, hw), lambda i: (0, 0)),           # upsample^T operator (bf16)
            pl.BlockSpec((k_feat, c), lambda i: (0, 0)),        # w1 (bf16)
            pl.BlockSpec((ncls, k_feat), lambda i: (0, 0)),     # w2 (bf16)
        ],
        out_specs=pl.BlockSpec((tile_k, hw), lambda i: (i, 0)),
    )
    # TODO(synk): constant-index operands could be single-buffered to reclaim VMEM
    # at higher resolutions; negligible at this problem size.

    @jax.jit
    def run(x_in, w1_in, w2_in):
        x2 = x_in.reshape(c, hw).astype(jnp.bfloat16)            # (C, HW) lane-dense
        pool_b = jnp.asarray(pool_np, dtype=jnp.bfloat16)        # (UV, HW)
        up_b = jnp.asarray(up_np, dtype=jnp.bfloat16)            # (UV, HW)
        w1_b = w1_in.astype(jnp.bfloat16)
        w2_b = w2_in.astype(jnp.bfloat16)
        partials = pl.pallas_call(
            kernel,
            out_shape=jax.ShapeDtypeStruct((k_feat, hw), jnp.float32),
            grid_spec=grid_spec,
            compiler_params=pltpu.CompilerParams(
                dimension_semantics=("parallel",)),
        )(x2, pool_b, up_b, w1_b, w2_b)
        # sum per-channel contributions, final ReLU + flat-map flag on device
        sal = jnp.sum(partials, axis=0)                          # (HW,)
        sal_map = jnp.maximum(sal, 0.0)
        return jnp.min(sal_map) == jnp.max(sal_map)              # flat flag

    flat = run(x, w1, w2)
    # single tiny scalar host read, required only to reproduce `return None`
    if bool(flat):
        return None
    # TODO(synk): the PyTorch module also min/max-normalises the saliency map here
    # and then discards it (dead code before `return (x, x, x)`); skipped.
    return (x, x, x)


if __name__ == "__main__":
    C, H, W = 4, 16, 16       # input channels / spatial size
    K_FEAT = 64               # "features" channels of the synthetic model_arch
    NCLS = 20                 # synthetic classifier classes

    key = jax.random.PRNGKey(0)
    kx, k1, k2 = jax.random.split(key, 3)
    x = jax.random.normal(kx, (1, C, H, W), dtype=jnp.float32)
    w1 = jax.random.normal(k1, (K_FEAT, C), dtype=jnp.float32) * 0.5
    w2 = jax.random.normal(k2, (NCLS, K_FEAT), dtype=jnp.float32) * 0.5

    out = net_scorecam_feature_forward(x, w1, w2)
    if out is not None:
        jax.block_until_ready(out)
    print("KERNEL_OK")
</pallas_src>

<mosaic_0001>
module attributes {stable_mosaic.version = 11 : i64} {
  func.func @kernel(%arg0: i32, %arg1: memref<4x256xbf16, #tpu.memory_space<vmem>>, %arg2: memref<64x256xbf16, #tpu.memory_space<vmem>>, %arg3: memref<64x256xbf16, #tpu.memory_space<vmem>>, %arg4: memref<64x4xbf16, #tpu.memory_space<vmem>>, %arg5: memref<20x64xbf16, #tpu.memory_space<vmem>>, %arg6: memref<64x256xf32, #tpu.memory_space<vmem>>) attributes {dimension_semantics = [#tpu.dimension_semantics<parallel>], iteration_bounds = array<i64: 1>, scalar_prefetch = 0 : i64, scratch_operands = 0 : i64, tpu.core_type = #tpu.core_type<tc>, window_params = [{pipeline_mode = #tpu.pipeline_mode<synchronous>, transform_indices = @transform_0, window_bounds = array<i64: 4, 256>}, {pipeline_mode = #tpu.pipeline_mode<synchronous>, transform_indices = @transform_1, window_bounds = array<i64: 64, 256>}, {pipeline_mode = #tpu.pipeline_mode<synchronous>, transform_indices = @transform_2, window_bounds = array<i64: 64, 256>}, {pipeline_mode = #tpu.pipeline_mode<synchronous>, transform_indices = @transform_3, window_bounds = array<i64: 64, 4>}, {pipeline_mode = #tpu.pipeline_mode<synchronous>, transform_indices = @transform_4, window_bounds = array<i64: 20, 64>}, {transform_indices = @transform_5, window_bounds = array<i64: 64, 256>}]} {
    %c0 = arith.constant 0 : index
    %c0_0 = arith.constant 0 : index
    %0 = vector.load %arg1[%c0, %c0_0] : memref<4x256xbf16, #tpu.memory_space<vmem>>, vector<4x256xbf16>
    %c0_1 = arith.constant 0 : index
    %c0_2 = arith.constant 0 : index
    %1 = vector.load %arg4[%c0_1, %c0_2] : memref<64x4xbf16, #tpu.memory_space<vmem>>, vector<64x4xbf16>
    %cst = arith.constant dense<0.000000e+00> : vector<64x256xf32>
    %2 = tpu.matmul %1, %0, %cst {dimension_numbers = #tpu.dot_dimension_numbers<[1], [0], [0], [1], [0, 0, 1, 1], [], []>} : vector<64x4xbf16>, vector<4x256xbf16>, vector<64x256xf32> -> vector<64x256xf32>
    %3 = arith.truncf %2 : vector<64x256xf32> to vector<64x256xbf16>
    %c0_3 = arith.constant 0 : index
    %c0_4 = arith.constant 0 : index
    %4 = vector.load %arg2[%c0_3, %c0_4] : memref<64x256xbf16, #tpu.memory_space<vmem>>, vector<64x256xbf16>
    %cst_5 = arith.constant dense<0.000000e+00> : vector<64x64xf32>
    %5 = tpu.matmul %3, %4, %cst_5 {dimension_numbers = #tpu.dot_dimension_numbers<[1], [1], [0], [0], [0, 0, 1, 0], [], []>} : vector<64x256xbf16>, vector<64x256xbf16>, vector<64x64xf32> -> vector<64x64xf32>
    %cst_6 = arith.constant 0.000000e+00 : f32
    %6 = vector.broadcast %cst_6 : f32 to vector<64x64xf32>
    %7 = arith.maximumf %5, %6 : vector<64x64xf32>
    %cst_7 = arith.constant dense<0.000000e+00> : vector<64xf32>
    %8 = vector.multi_reduction <add>, %7, %cst_7 [1] : vector<64x64xf32> to vector<64xf32>
    %9 = vector.shape_cast %8 : vector<64xf32> to vector<64x1xf32>
    %cst_8 = arith.constant 6.400000e+01 : f32
    %10 = vector.broadcast %cst_8 : f32 to vector<64x1xf32>
    %11 = arith.divf %9, %10 : vector<64x1xf32>
    %c0_9 = arith.constant 0 : index
    %c0_10 = arith.constant 0 : index
    %12 = vector.load %arg5[%c0_9, %c0_10] : memref<20x64xbf16, #tpu.memory_space<vmem>>, vector<20x64xbf16>
    %13 = arith.truncf %11 : vector<64x1xf32> to vector<64x1xbf16>
    %cst_11 = arith.constant dense<0.000000e+00> : vector<20x1xf32>
    %14 = tpu.matmul %12, %13, %cst_11 {dimension_numbers = #tpu.dot_dimension_numbers<[1], [0], [0], [1], [0, 0, 1, 1], [], []>} : vector<20x64xbf16>, vector<64x1xbf16>, vector<20x1xf32> -> vector<20x1xf32>
    %cst_12 = arith.constant dense<0xFF800000> : vector<1xf32>
    %15 = vector.multi_reduction <maximumf>, %14, %cst_12 [0] : vector<20x1xf32> to vector<1xf32>
    %16 = vector.shape_cast %15 : vector<1xf32> to vector<1x1xf32>
    %17 = tpu.iota {dimensions = array<i32: 0>} : vector<20x1xi32>
    %18 = vector.broadcast %16 : vector<1x1xf32> to vector<20x1xf32>
    %19 = arith.cmpf oge, %14, %18 : vector<20x1xf32>
    %c20_i32 = arith.constant 20 : i32
    %20 = vector.broadcast %c20_i32 : i32 to vector<20x1xi32>
    %21 = arith.select %19, %17, %20 : vector<20x1xi1>, vector<20x1xi32>
    %cst_13 = arith.constant dense<2147483647> : vector<1xi32>
    %22 = vector.multi_reduction <minsi>, %21, %cst_13 [0] : vector<20x1xi32> to vector<1xi32>
    %23 = vector.shape_cast %22 : vector<1xi32> to vector<1x1xi32>
    %24 = tpu.iota {dimensions = array<i32: 1>} : vector<1x20xi32>
    %25 = vector.broadcast %23 : vector<1x1xi32> to vector<1x20xi32>
    %26 = arith.cmpi eq, %24, %25 : vector<1x20xi32>
    %27 = arith.extui %26 : vector<1x20xi1> to vector<1x20xi32>
    %28 = arith.sitofp %27 : vector<1x20xi32> to vector<1x20xf32>
    %29 = arith.truncf %7 : vector<64x64xf32> to vector<64x64xbf16>
    %c0_14 = arith.constant 0 : index
    %c0_15 = arith.constant 0 : index
    %30 = vector.load %arg3[%c0_14, %c0_15] : memref<64x256xbf16, #tpu.memory_space<vmem>>, vector<64x256xbf16>
    %cst_16 = arith.constant dense<0.000000e+00> : vector<64x256xf32>
    %31 = tpu.matmul %29, %30, %cst_16 {dimension_numbers = #tpu.dot_dimension_numbers<[1], [0], [0], [1], [0, 0, 1, 1], [], []>} : vector<64x64xbf16>, vector<64x256xbf16>, vector<64x256xf32> -> vector<64x256xf32>
    %cst_17 = arith.constant dense<0xFF800000> : vector<64xf32>
    %32 = vector.multi_reduction <maximumf>, %31, %cst_17 [1] : vector<64x256xf32> to vector<64xf32>
    %33 = vector.shape_cast %32 : vector<64xf32> to vector<64x1xf32>
    %cst_18 = arith.constant dense<0x7F800000> : vector<64xf32>
    %34 = vector.multi_reduction <minimumf>, %31, %cst_18 [1] : vector<64x256xf32> to vector<64xf32>
    %35 = vector.shape_cast %34 : vector<64xf32> to vector<64x1xf32>
    %36 = arith.subf %33, %35 : vector<64x1xf32>
    %cst_19 = arith.constant 0.000000e+00 : f32
    %37 = vector.broadcast %cst_19 : f32 to vector<64x1xf32>
    %38 = arith.cmpf one, %36, %37 : vector<64x1xf32>
    %cst_20 = arith.constant 1.000000e+00 : f32
    %39 = vector.broadcast %cst_20 : f32 to vector<64x1xf32>
    %40 = arith.select %38, %36, %39 : vector<64x1xi1>, vector<64x1xf32>
    %41 = tpu.reciprocal %40 : vector<64x1xf32> -> vector<64x1xf32>
    %42 = vector.broadcast %35 : vector<64x1xf32> to vector<64x256xf32>
    %43 = arith.subf %31, %42 : vector<64x256xf32>
    %44 = vector.broadcast %41 : vector<64x1xf32> to vector<64x256xf32>
    %45 = arith.mulf %43, %44 : vector<64x256xf32>
    %46 = arith.truncf %45 : vector<64x256xf32> to vector<64x256xbf16>
    %47 = vector.shape_cast %46 : vector<64x256xbf16> to vector<64x1x256xbf16>
    %c0_21 = arith.constant 0 : index
    %c0_22 = arith.constant 0 : index
    %48 = vector.load %arg2[%c0_21, %c0_22] : memref<64x256xbf16, #tpu.memory_space<vmem>>, vector<64x256xbf16>
    %49 = vector.shape_cast %48 : vector<64x256xbf16> to vector<1x64x256xbf16>
    %50 = vector.broadcast %47 : vector<64x1x256xbf16> to vector<64x64x256xbf16>
    %51 = vector.broadcast %49 : vector<1x64x256xbf16> to vector<64x64x256xbf16>
    %52 = arith.mulf %50, %51 : vector<64x64x256xbf16>
    %53 = vector.shape_cast %52 : vector<64x64x256xbf16> to vector<4096x256xbf16>
    %cst_23 = arith.constant dense<0.000000e+00> : vector<4096x64xf32>
    %54 = tpu.matmul %53, %3, %cst_23 {dimension_numbers = #tpu.dot_dimension_numbers<[1], [1], [0], [0], [0, 0, 1, 0], [], []>} : vector<4096x256xbf16>, vector<64x256xbf16>, vector<4096x64xf32> -> vector<4096x64xf32>
    %cst_24 = arith.constant 0.000000e+00 : f32
    %55 = vector.broadcast %cst_24 : f32 to vector<4096x64xf32>
    %56 = arith.maximumf %54, %55 : vector<4096x64xf32>
    %57 = vector.shape_cast %56 : vector<4096x64xf32> to vector<64x64x64xf32>
    %cst_25 = arith.constant dense<0.000000e+00> : vector<64x64xf32>
    %58 = vector.multi_reduction <add>, %57, %cst_25 [1] : vector<64x64x64xf32> to vector<64x64xf32>
    %cst_26 = arith.constant 6.400000e+01 : f32
    %59 = vector.broadcast %cst_26 : f32 to vector<64x64xf32>
    %60 = arith.divf %58, %59 : vector<64x64xf32>
    %61 = arith.truncf %60 : vector<64x64xf32> to vector<64x64xbf16>
    %c0_27 = arith.constant 0 : index
    %c0_28 = arith.constant 0 : index
    %62 = vector.load %arg5[%c0_27, %c0_28] : memref<20x64xbf16, #tpu.memory_space<vmem>>, vector<20x64xbf16>
    %cst_29 = arith.constant dense<0.000000e+00> : vector<64x20xf32>
    %63 = tpu.matmul %61, %62, %cst_29 {dimension_numbers = #tpu.dot_dimension_numbers<[1], [1], [0], [0], [0, 0, 1, 0], [], []>} : vector<64x64xbf16>, vector<20x64xbf16>, vector<64x20xf32> -> vector<64x20xf32>
    %cst_30 = arith.constant dense<0xFF800000> : vector<64xf32>
    %64 = vector.multi_reduction <maximumf>, %63, %cst_30 [1] : vector<64x20xf32> to vector<64xf32>
    %65 = vector.shape_cast %64 : vector<64xf32> to vector<64x1xf32>
    %66 = vector.broadcast %65 : vector<64x1xf32> to vector<64x20xf32>
    %67 = arith.subf %63, %66 : vector<64x20xf32>
    %68 = math.exp %67 : vector<64x20xf32>
    %69 = vector.broadcast %28 : vector<1x20xf32> to vector<64x20xf32>
    %70 = arith.mulf %68, %69 : vector<64x20xf32>
    %cst_31 = arith.constant dense<0.000000e+00> : vector<64xf32>
    %71 = vector.multi_reduction <add>, %70, %cst_31 [1] : vector<64x20xf32> to vector<64xf32>
    %72 = vector.shape_cast %71 : vector<64xf32> to vector<64x1xf32>
    %cst_32 = arith.constant dense<0.000000e+00> : vector<64xf32>
    %73 = vector.multi_reduction <add>, %68, %cst_32 [1] : vector<64x20xf32> to vector<64xf32>
    %74 = vector.shape_cast %73 : vector<64xf32> to vector<64x1xf32>
    %75 = tpu.reciprocal %74 : vector<64x1xf32> -> vector<64x1xf32>
    %76 = arith.mulf %72, %75 : vector<64x1xf32>
    %cst_33 = arith.constant 0.000000e+00 : f32
    %77 = vector.broadcast %cst_33 : f32 to vector<64x1xf32>
    %78 = arith.select %38, %76, %77 : vector<64x1xi1>, vector<64x1xf32>
    %79 = vector.broadcast %78 : vector<64x1xf32> to vector<64x256xf32>
    %80 = arith.mulf %79, %31 : vector<64x256xf32>
    %c0_34 = arith.constant 0 : index
    %c0_35 = arith.constant 0 : index
    %81 = vector.load %arg6[%c0_34, %c0_35] : memref<64x256xf32, #tpu.memory_space<vmem>>, vector<64x256xf32>
    tpu.vector_store %arg6[%c0_34, %c0_35], %80 {strides = array<i32>} : memref<64x256xf32, #tpu.memory_space<vmem>>, vector<64x256xf32>,
    return
  }
  func.func @transform_0(%arg0: i32) -> (i32, i32) {
    %c0_i32 = arith.constant 0 : i32
    %c0_i32_0 = arith.constant 0 : i32
    %c0_i32_1 = arith.constant 0 : i32
    return %c0_i32, %c0_i32_0 : i32, i32
  }
  func.func @transform_1(%arg0: i32) -> (i32, i32) {
    %c0_i32 = arith.constant 0 : i32
    %c0_i32_0 = arith.constant 0 : i32
    %c0_i32_1 = arith.constant 0 : i32
    return %c0_i32, %c0_i32_0 : i32, i32
  }
  func.func @transform_2(%arg0: i32) -> (i32, i32) {
    %c0_i32 = arith.constant 0 : i32
    %c0_i32_0 = arith.constant 0 : i32
    %c0_i32_1 = arith.constant 0 : i32
    return %c0_i32, %c0_i32_0 : i32, i32
  }
  func.func @transform_3(%arg0: i32) -> (i32, i32) {
    %c0_i32 = arith.constant 0 : i32
    %c0_i32_0 = arith.constant 0 : i32
    %c0_i32_1 = arith.constant 0 : i32
    return %c0_i32, %c0_i32_0 : i32, i32
  }
  func.func @transform_4(%arg0: i32) -> (i32, i32) {
    %c0_i32 = arith.constant 0 : i32
    %c0_i32_0 = arith.constant 0 : i32
    %c0_i32_1 = arith.constant 0 : i32
    return %c0_i32, %c0_i32_0 : i32, i32
  }
  func.func @transform_5(%arg0: i32) -> (i32, i32) {
    %c0_i32 = arith.constant 0 : i32
    %c0_i32_0 = arith.constant 0 : i32
    return %arg0, %c0_i32 : i32, i32
  }
}

</mosaic_0001>

<llo_original>
// kernel: run.1
$region0: #{run.1}
  #allocation0 [shape = 'u32[]', space=smem, size = 0x4, offset = 0x4, fixed_abs, tag = 'smem constant byte address 0x4 - core index']
  #allocation1 [shape = 'u32[72,128]{1,0:T(1,128)}', space=vmem, size = 0x9000, scoped, tag = 'internal scratch']
  %s0 = inlined_call_operand.vmem [shape: bf16[4,256], index: 0, kind: input, shape index: {}]
  %s1 = inlined_call_operand.vmem [shape: bf16[64,256], index: 1, kind: input, shape index: {}]
  %s2 = inlined_call_operand.vmem [shape: bf16[64,256], index: 2, kind: input, shape index: {}]
  %s3 = inlined_call_operand.vmem [shape: bf16[64,4], index: 3, kind: input, shape index: {}]
  %s4 = inlined_call_operand.vmem [shape: bf16[20,64], index: 4, kind: input, shape index: {}]
  %s5 = inlined_call_operand.vmem [shape: f32[64,256], index: 5, kind: output, shape index: {}]
  %s6 = sld [smem:[#allocation0]]
  $region30: #{run.1} parent=0
    _
  %s8 = ssub.s32 1, %s6
  %s9 = scalar_select 0, %s8, %s6
  // Predicated region
  $region2: #{run.1} parent=0 // pred_check
    _
  $region3: #{run.1} parent=0 // pred_check_branch
    %11 = sbr.rel (0) target = $region5
  $region4: #{run.1} parent=0 // pred_region
    _
  $region5: #{run.1} parent=0 // pred_fallthru
    _
  // Predicated region
  $region6: #{run.1} parent=0 // pred_check
    _
  $region7: #{run.1} parent=0 // pred_check_branch
    %13 = sbr.rel (0) target = $region9
  $region8: #{run.1} parent=0 // pred_region
    _
  $region9: #{run.1} parent=0 // pred_fallthru
    _
  // Predicated region
  $region10: #{run.1} parent=0 // pred_check
    _
  $region11: #{run.1} parent=0 // pred_check_branch
    %15 = sbr.rel (0) target = $region13
  $region12: #{run.1} parent=0 // pred_region
    _
  $region13: #{run.1} parent=0 // pred_fallthru
    _
  // Predicated region
  $region14: #{run.1} parent=0 // pred_check
    _
  $region15: #{run.1} parent=0 // pred_check_branch
    %17 = sbr.rel (0) target = $region17
  $region16: #{run.1} parent=0 // pred_region
    _
  $region17: #{run.1} parent=0 // pred_fallthru
    _
  // Predicated region
  $region18: #{run.1} parent=0 // pred_check
    _
  $region19: #{run.1} parent=0 // pred_check_branch
    %19 = sbr.rel (0) target = $region21
  $region20: #{run.1} parent=0 // pred_region
    _
  $region21: #{run.1} parent=0 // pred_fallthru
    _
  %v21 = vld [vmem:[%s0] sm:$0xf]
  %v22 = vld [vmem:[%s3] sm:$0xf]
  %v23 = vld [vmem:[%s3 + $0x4] sm:$0xf]
  %v24 = vld [vmem:[%s3 + $0x8] sm:$0xf]
  %v25 = vld [vmem:[%s3 + $0xc] sm:$0xf]
  %v26 = vld [vmem:[%s3 + $0x10] sm:$0xf]
  %v27 = vld [vmem:[%s3 + $0x14] sm:$0xf]
  %v28 = vld [vmem:[%s3 + $0x18] sm:$0xf]
  %v29 = vld [vmem:[%s3 + $0x1c] sm:$0xf]
  %v38 = vunpack.c.l.b16 %v22
  %v39 = vunpack.c.l.b16 %v23
  %v40 = vunpack.c.l.b16 %v24
  %v41 = vunpack.c.l.b16 %v25
  %v42 = vunpack.c.l.b16 %v26
  %v43 = vunpack.c.l.b16 %v27
  %v44 = vunpack.c.l.b16 %v28
  %v45 = vunpack.c.l.b16 %v29
  %v46 = vpack.c.b16 %v39, %v38
  %v47 = vpack.c.b16 %v41, %v40
  %v48 = vpack.c.b16 %v43, %v42
  %v49 = vpack.c.b16 %v45, %v44
  %51 = vst [vmem:[#allocation1] ss:$4 sm:$0xff] %v21
  %v52 = vld.sshfl [vmem:[#allocation1] sm:$0xff pattern:$0x73625140]
  %v53 = vld.sshfl [vmem:[#allocation1 + $0x8] sm:$0xff pattern:$0x73625140]
  %vm54 = vcmask 31744
  %v56 = vsel %vm54, %v46, 0
  %v59 = vsel %vm54, %v47, 0
  %v62 = vsel %vm54, %v48, 0
  %v65 = vsel %vm54, %v49, 0
  %vm67 = vcmask 1041408
  %v68 = vsel %vm67, %v52, 0
  %v70 = vsel %vm67, %v53, 0
  %72 = vmatpush.bf16.msra.mxu0 0
  %73 = vmatpush.bf16.msra.mxu0 0
  %74 = vmatpush.bf16.msra.mxu0 0
  %75 = vmatpush.bf16.msra.mxu0 0
  %76 = vmatpush.bf16.msra.mxu0 0
  %77 = vmatpush.bf16.msra.mxu0 0
  %78 = vmatpush.bf16.msra.mxu0 0
  %79 = vmatpush.bf16.msra.mxu0 %v68
  %80 = vmatmul.bf16.gmra.mxu0 %v56
  %v81 = vpop.f32.mrf.mxu0
  %v82 = vadd.f32 0.0, %v81
  %v83 = vpop.f32.mrf.mxu0
  %v84 = vadd.f32 0.0, %v83
  %85 = vmatmul.bf16.gmra.mxu0 %v59
  %v86 = vpop.f32.mrf.mxu0
  %v87 = vadd.f32 0.0, %v86
  %v88 = vpop.f32.mrf.mxu0
  %v89 = vadd.f32 0.0, %v88
  %90 = vmatmul.bf16.gmra.mxu0 %v62
  %v91 = vpop.f32.mrf.mxu0
  %v92 = vadd.f32 0.0, %v91
  %v93 = vpop.f32.mrf.mxu0
  %v94 = vadd.f32 0.0, %v93
  %95 = vmatmul.bf16.gmra.mxu0 %v65
  %v96 = vpop.f32.mrf.mxu0
  %v97 = vadd.f32 0.0, %v96
  %v98 = vpop.f32.mrf.mxu0
  %v99 = vadd.f32 0.0, %v98
  %100 = vdwg.mxu0
  %101 = vmatpush.bf16.msra.mxu0 0
  %102 = vmatpush.bf16.msra.mxu0 0
  %103 = vmatpush.bf16.msra.mxu0 0
  %104 = vmatpush.bf16.msra.mxu0 0
  %105 = vmatpush.bf16.msra.mxu0 0
  %106 = vmatpush.bf16.msra.mxu0 0
  %107 = vmatpush.bf16.msra.mxu0 0
  %108 = vmatpush.bf16.msra.mxu0 %v70
  %109 = vmatmul.bf16.gmra.mxu0 %v56
  %v110 = vpop.f32.mrf.mxu0
  %v111 = vadd.f32 0.0, %v110
  %v112 = vpop.f32.mrf.mxu0
  %v113 = vadd.f32 0.0, %v112
  %114 = vmatmul.bf16.gmra.mxu0 %v59
  %v115 = vpop.f32.mrf.mxu0
  %v116 = vadd.f32 0.0, %v115
  %v117 = vpop.f32.mrf.mxu0
  %v118 = vadd.f32 0.0, %v117
  %119 = vmatmul.bf16.gmra.mxu0 %v62
  %v120 = vpop.f32.mrf.mxu0
  %v121 = vadd.f32 0.0, %v120
  %v122 = vpop.f32.mrf.mxu0
  %v123 = vadd.f32 0.0, %v122
  %124 = vmatmul.bf16.gmra.mxu0 %v65
  %v125 = vpop.f32.mrf.mxu0
  %v126 = vadd.f32 0.0, %v125
  %v127 = vpop.f32.mrf.mxu0
  %v128 = vadd.f32 0.0, %v127
  %129 = vdwg.mxu0
  %v130 = vpack.c.bf16 %v84, %v82
  %v131 = vpack.c.bf16 %v113, %v111
  %v132 = vpack.c.bf16 %v89, %v87
  %v133 = vpack.c.bf16 %v118, %v116
  %v134 = vpack.c.bf16 %v94, %v92
  %v135 = vpack.c.bf16 %v123, %v121
  %v136 = vpack.c.bf16 %v99, %v97
  %v137 = vpack.c.bf16 %v128, %v126
  %v138 = vld [vmem:[%s1] sm:$0xff]
  %v139 = vld [vmem:[%s1 + $0x8] sm:$0xff]
  %v140 = vld [vmem:[%s1 + $0x10] sm:$0xff]
  %v141 = vld [vmem:[%s1 + $0x18] sm:$0xff]
  %v142 = vld [vmem:[%s1 + $0x20] sm:$0xff]
  %v143 = vld [vmem:[%s1 + $0x28] sm:$0xff]
  %v144 = vld [vmem:[%s1 + $0x30] sm:$0xff]
  %v145 = vld [vmem:[%s1 + $0x38] sm:$0xff]
  %v154 = vunpack.c.l.b16 %v138
  %v155 = vunpack.c.h.b16 %v138
  %v156 = vunpack.c.l.b16 %v139
  %v157 = vunpack.c.h.b16 %v139
  %v158 = vunpack.c.l.b16 %v140
  %v159 = vunpack.c.h.b16 %v140
  %v160 = vunpack.c.l.b16 %v141
  %v161 = vunpack.c.h.b16 %v141
  %v162 = vunpack.c.l.b16 %v142
  %v163 = vunpack.c.h.b16 %v142
  %v164 = vunpack.c.l.b16 %v143
  %v165 = vunpack.c.h.b16 %v143
  %v166 = vunpack.c.l.b16 %v144
  %v167 = vunpack.c.h.b16 %v144
  %v168 = vunpack.c.l.b16 %v145
  %v169 = vunpack.c.h.b16 %v145
  %v170 = vpack.c.b16 %v156, %v154
  %v171 = vpack.c.b16 %v157, %v155
  %v172 = vpack.c.b16 %v160, %v158
  %v173 = vpack.c.b16 %v161, %v159
  %v174 = vpack.c.b16 %v164, %v162
  %v175 = vpack.c.b16 %v165, %v163
  %v176 = vpack.c.b16 %v168, %v166
  %v177 = vpack.c.b16 %v169, %v167
  %186 = vmatpush.bf16.xpose.msra.mxu0 0
  %187 = vmatpush.bf16.xpose.msra.mxu0 0
  %188 = vmatpush.bf16.xpose.msra.mxu0 0
  %189 = vmatpush.bf16.xpose.msra.mxu0 0
  %190 = vmatpush.bf16.xpose.msra.mxu0 %v176
  %191 = vmatpush.bf16.xpose.msra.mxu0 %v174
  %192 = vmatpush.bf16.xpose.msra.mxu0 %v172
  %193 = vmatpush.bf16.xpose.msra.mxu0 %v170
  %194 = vmatmul.bf16.gmra.mxu0 %v130
  %v195 = vpop.f32.mrf.mxu0
  %v196 = vadd.f32 0.0, %v195
  %v197 = vpop.f32.mrf.mxu0
  %v198 = vadd.f32 0.0, %v197
  %199 = vmatmul.bf16.gmra.mxu0 %v132
  %v200 = vpop.f32.mrf.mxu0
  %v201 = vadd.f32 0.0, %v200
  %v202 = vpop.f32.mrf.mxu0
  %v203 = vadd.f32 0.0, %v202
  %204 = vmatmul.bf16.gmra.mxu0 %v134
  %v205 = vpop.f32.mrf.mxu0
  %v206 = vadd.f32 0.0, %v205
  %v207 = vpop.f32.mrf.mxu0
  %v208 = vadd.f32 0.0, %v207
  %209 = vmatmul.bf16.gmra.mxu0 %v136
  %v210 = vpop.f32.mrf.mxu0
  %v211 = vadd.f32 0.0, %v210
  %v212 = vpop.f32.mrf.mxu0
  %v213 = vadd.f32 0.0, %v212
  %214 = vdwg.mxu0
  %215 = vmatpush.bf16.xpose.msra.mxu0 0
  %216 = vmatpush.bf16.xpose.msra.mxu0 0
  %217 = vmatpush.bf16.xpose.msra.mxu0 0
  %218 = vmatpush.bf16.xpose.msra.mxu0 0
  %219 = vmatpush.bf16.xpose.msra.mxu0 %v177
  %220 = vmatpush.bf16.xpose.msra.mxu0 %v175
  %221 = vmatpush.bf16.xpose.msra.mxu0 %v173
  %222 = vmatpush.bf16.xpose.msra.mxu0 %v171
  %223 = vmatmul.bf16.gmra.mxu0 %v131
  %v224 = vpop.f32.mrf.mxu0
  %v225 = vadd.f32 %v196, %v224
  %v226 = vpop.f32.mrf.mxu0
  %v227 = vadd.f32 %v198, %v226
  %228 = vmatmul.bf16.gmra.mxu0 %v133
  %v229 = vpop.f32.mrf.mxu0
  %v230 = vadd.f32 %v201, %v229
  %v231 = vpop.f32.mrf.mxu0
  %v232 = vadd.f32 %v203, %v231
  %233 = vmatmul.bf16.gmra.mxu0 %v135
  %v234 = vpop.f32.mrf.mxu0
  %v235 = vadd.f32 %v206, %v234
  %v236 = vpop.f32.mrf.mxu0
  %v237 = vadd.f32 %v208, %v236
  %238 = vmatmul.bf16.gmra.mxu0 %v137
  %v239 = vpop.f32.mrf.mxu0
  %v240 = vadd.f32 %v211, %v239
  %v241 = vpop.f32.mrf.mxu0
  %v242 = vadd.f32 %v213, %v241
  %243 = vdwg.mxu0
  %v244 = vmax.f32 %v225, 0.0
  %v245 = vmax.f32 %v227, 0.0
  %v246 = vmax.f32 %v230, 0.0
  %v247 = vmax.f32 %v232, 0.0
  %v248 = vmax.f32 %v235, 0.0
  %v249 = vmax.f32 %v237, 0.0
  %v250 = vmax.f32 %v240, 0.0
  %v251 = vmax.f32 %v242, 0.0
  %vm252 = vcmask 523264
  %v253 = vsel %vm252, %v244, 0.0
  %254 = vadd.xlane.f32.xlu0 %v253
  %v255 = vpop.xlane.xlu0 %254
  %v256 = vsel %vm252, %v245, 0.0
  %257 = vadd.xlane.f32.xlu0 %v256
  %v258 = vpop.xlane.xlu0 %257
  %v259 = vsel %vm252, %v246, 0.0
  %260 = vadd.xlane.f32.xlu0 %v259
  %v261 = vpop.xlane.xlu0 %260
  %v262 = vsel %vm252, %v247, 0.0
  %263 = vadd.xlane.f32.xlu0 %v262
  %v264 = vpop.xlane.xlu0 %263
  %v265 = vsel %vm252, %v248, 0.0
  %266 = vadd.xlane.f32.xlu0 %v265
  %v267 = vpop.xlane.xlu0 %266
  %v268 = vsel %vm252, %v249, 0.0
  %269 = vadd.xlane.f32.xlu0 %v268
  %v270 = vpop.xlane.xlu0 %269
  %v271 = vsel %vm252, %v250, 0.0
  %272 = vadd.xlane.f32.xlu0 %v271
  %v273 = vpop.xlane.xlu0 %272
  %v274 = vsel %vm252, %v251, 0.0
  %275 = vadd.xlane.f32.xlu0 %v274
  %v276 = vpop.xlane.xlu0 %275
  %v277 = vrcp.pop 64.0
  %v278 = vmul.f32 64.0, %v277
  %v279 = vsub.f32 1.0, %v278
  %v280 = vmul.f32 %v277, %v279
  %v281 = vadd.f32 %v277, %v280
  %vm282 = vweird.f32 %v277
  %v283 = vsel %vm282, %v277, %v281
  %v284 = vmul.f32 %v255, %v283
  %v285 = vmul.f32 %v258, %v283
  %v286 = vmul.f32 %v261, %v283
  %v287 = vmul.f32 %v264, %v283
  %v288 = vmul.f32 %v267, %v283
  %v289 = vmul.f32 %v270, %v283
  %v290 = vmul.f32 %v273, %v283
  %v291 = vmul.f32 %v276, %v283
  %v292 = vld [vmem:[%s4] sm:$0xf]
  %v293 = vld [vmem:[%s4 + $0x4] sm:$0xf]
  %v294 = vld [vmem:[%s4 + $0x8] sm:$0x3]
  %v295 = vpack.c.bf16 %v285, %v284
  %v296 = vpack.c.bf16 %v287, %v286
  %v297 = vpack.c.bf16 %v289, %v288
  %v298 = vpack.c.bf16 %v291, %v290
  %v302 = vunpack.c.l.b16 %v292
  %v303 = vunpack.c.l.b16 %v293
  %v304 = vunpack.c.l.b16 %v294
  %v305 = vpack.c.b16 %v303, %v302
  %v306 = vpack.c.b16 %v304, %v304
  %v308 = vsel %vm252, %v305, 0
  %v311 = vsel %vm252, %v306, 0
  %313 = vmatpush.bf16.msra.mxu0 0
  %314 = vmatpush.bf16.msra.mxu0 0
  %315 = vmatpush.bf16.msra.mxu0 0
  %316 = vmatpush.bf16.msra.mxu0 0
  %317 = vmatpush.bf16.msra.mxu0 %v298
  %318 = vmatpush.bf16.msra.mxu0 %v297
  %319 = vmatpush.bf16.msra.mxu0 %v296
  %320 = vmatpush.bf16.msra.mxu0 %v295
  %321 = vmatmul.bf16.gmra.mxu0 %v308
  %v322 = vpop.f32.mrf.mxu0
  %v323 = vadd.f32 0.0, %v322
  %v324 = vpop.f32.mrf.mxu0
  %v325 = vadd.f32 0.0, %v324
  %326 = vmatmul.bf16.gmra.mxu0 %v311
  %v327 = vpop.f32.mrf.mxu0
  %v328 = vadd.f32 0.0, %v327
  %v329 = vpop.f32.mrf.mxu0
  %330 = vdwg.mxu0
  %vm331 = vcmask 7168
  %v332 = vsel %vm331, %v323, -inf
  %v333 = vsel %vm331, %v325, -inf
  %vm334 = vcmask 3072
  %v335 = vsel %vm334, %v328, -inf
  %v336 = vmax.f32 %v332, %v333
  %v337 = vmax.f32 %v336, %v335
  %v338 = vrot.slane %v337, 4
  %v339 = vmax.f32 %v337, %v338
  %v340 = vrot.slane %v339, 2
  %v341 = vmax.f32 %v339, %v340
  %v342 = vrot.slane %v341, 1
  %v343 = vmax.f32 %v341, %v342
  %v344 = vlaneseq
  %v345 = vshrl.u32 %v344, 7
  %v346 = vadd.s32 %v345, 8
  %v347 = vadd.s32 %v345, 16
  %vm348 = vcmp.ge.f32.partialorder %v323, %v343
  %vm349 = vcmp.ge.f32.partialorder %v325, %v343
  %vm350 = vcmp.ge.f32.partialorder %v328, %v343
  %v351 = vsel %vm348, %v345, 20
  %v352 = vsel %vm349, %v346, 20
  %v353 = vsel %vm350, %v347, 20
  %v354 = vsel %vm331, %v351, 2147483647
  %v355 = vsel %vm331, %v352, 2147483647
  %v356 = vsel %vm334, %v353, 2147483647
  %vm357 = vcmp.lt.s32.totalorder %v354, %v355
  %v358 = vsel %vm357, %v354, %v355
  %vm359 = vcmp.lt.s32.totalorder %v358, %v356
  %v360 = vsel %vm359, %v358, %v356
  %v361 = vrot.slane %v360, 4
  %vm362 = vcmp.lt.s32.totalorder %v360, %v361
  %v363 = vsel %vm362, %v360, %v361
  %v364 = vrot.slane %v363, 2
  %vm365 = vcmp.lt.s32.totalorder %v363, %v364
  %v366 = vsel %vm365, %v363, %v364
  %v367 = vrot.slane %v366, 1
  %vm368 = vcmp.lt.s32.totalorder %v366, %v367
  %v369 = vsel %vm368, %v366, %v367
  %v370 = vlaneseq
  %v371 = vand.u32 %v370, 127
  %372 = vset.pattern.permute.xlu0 0
  %373 = vperm.xlu0 %372, %v369
  %v374 = vpop.permute.xlu0 %373
  %vm375 = vcmp.eq.s32.totalorder %v371, %v374
  %v376 = vsel %vm375, 1, 0
  %v377 = vcvt.s32.f32 %v376
  %v378 = vpack.c.bf16 %v245, %v244
  %v379 = vpack.c.bf16 %v247, %v246
  %v380 = vpack.c.bf16 %v249, %v248
  %v381 = vpack.c.bf16 %v251, %v250
  %v382 = vld [vmem:[%s2] sm:$0xff]
  %v383 = vld [vmem:[%s2 + $0x8] sm:$0xff]
  %v384 = vld [vmem:[%s2 + $0x10] sm:$0xff]
  %v385 = vld [vmem:[%s2 + $0x18] sm:$0xff]
  %v386 = vld [vmem:[%s2 + $0x20] sm:$0xff]
  %v387 = vld [vmem:[%s2 + $0x28] sm:$0xff]
  %v388 = vld [vmem:[%s2 + $0x30] sm:$0xff]
  %v389 = vld [vmem:[%s2 + $0x38] sm:$0xff]
  %v398 = vunpack.c.l.b16 %v382
  %v399 = vunpack.c.h.b16 %v382
  %v400 = vunpack.c.l.b16 %v383
  %v401 = vunpack.c.h.b16 %v383
  %v402 = vunpack.c.l.b16 %v384
  %v403 = vunpack.c.h.b16 %v384
  %v404 = vunpack.c.l.b16 %v385
  %v405 = vunpack.c.h.b16 %v385
  %v406 = vunpack.c.l.b16 %v386
  %v407 = vunpack.c.h.b16 %v386
  %v408 = vunpack.c.l.b16 %v387
  %v409 = vunpack.c.h.b16 %v387
  %v410 = vunpack.c.l.b16 %v388
  %v411 = vunpack.c.h.b16 %v388
  %v412 = vunpack.c.l.b16 %v389
  %v413 = vunpack.c.h.b16 %v389
  %v414 = vpack.c.b16 %v400, %v398
  %v415 = vpack.c.b16 %v401, %v399
  %v416 = vpack.c.b16 %v404, %v402
  %v417 = vpack.c.b16 %v405, %v403
  %v418 = vpack.c.b16 %v408, %v406
  %v419 = vpack.c.b16 %v409, %v407
  %v420 = vpack.c.b16 %v412, %v410
  %v421 = vpack.c.b16 %v413, %v411
  %v431 = vsel %vm252, %v378, 0
  %v434 = vsel %vm252, %v379, 0
  %v437 = vsel %vm252, %v380, 0
  %v440 = vsel %vm252, %v381, 0
  %442 = vmatpush.bf16.msra.mxu0 0
  %443 = vmatpush.bf16.msra.mxu0 0
  %444 = vmatpush.bf16.msra.mxu0 0
  %445 = vmatpush.bf16.msra.mxu0 0
  %446 = vmatpush.bf16.msra.mxu0 %v420
  %447 = vmatpush.bf16.msra.mxu0 %v418
  %448 = vmatpush.bf16.msra.mxu0 %v416
  %449 = vmatpush.bf16.msra.mxu0 %v414
  %450 = vmatmul.bf16.gmra.mxu0 %v431
  %v451 = vpop.f32.mrf.mxu0
  %v452 = vadd.f32 0.0, %v451
  %v453 = vpop.f32.mrf.mxu0
  %v454 = vadd.f32 0.0, %v453
  %455 = vmatmul.bf16.gmra.mxu0 %v434
  %v456 = vpop.f32.mrf.mxu0
  %v457 = vadd.f32 0.0, %v456
  %v458 = vpop.f32.mrf.mxu0
  %v459 = vadd.f32 0.0, %v458
  %460 = vmatmul.bf16.gmra.mxu0 %v437
  %v461 = vpop.f32.mrf.mxu0
  %v462 = vadd.f32 0.0, %v461
  %v463 = vpop.f32.mrf.mxu0
  %v464 = vadd.f32 0.0, %v463
  %465 = vmatmul.bf16.gmra.mxu0 %v440
  %v466 = vpop.f32.mrf.mxu0
  %v467 = vadd.f32 0.0, %v466
  %v468 = vpop.f32.mrf.mxu0
  %v469 = vadd.f32 0.0, %v468
  %470 = vdwg.mxu0
  %471 = vmatpush.bf16.msra.mxu0 0
  %472 = vmatpush.bf16.msra.mxu0 0
  %473 = vmatpush.bf16.msra.mxu0 0
  %474 = vmatpush.bf16.msra.mxu0 0
  %475 = vmatpush.bf16.msra.mxu0 %v421
  %476 = vmatpush.bf16.msra.mxu0 %v419
  %477 = vmatpush.bf16.msra.mxu0 %v417
  %478 = vmatpush.bf16.msra.mxu0 %v415
  %479 = vmatmul.bf16.gmra.mxu0 %v431
  %v480 = vpop.f32.mrf.mxu0
  %v481 = vadd.f32 0.0, %v480
  %v482 = vpop.f32.mrf.mxu0
  %v483 = vadd.f32 0.0, %v482
  %484 = vmatmul.bf16.gmra.mxu0 %v434
  %v485 = vpop.f32.mrf.mxu0
  %v486 = vadd.f32 0.0, %v485
  %v487 = vpop.f32.mrf.mxu0
  %v488 = vadd.f32 0.0, %v487
  %489 = vmatmul.bf16.gmra.mxu0 %v437
  %v490 = vpop.f32.mrf.mxu0
  %v491 = vadd.f32 0.0, %v490
  %v492 = vpop.f32.mrf.mxu0
  %v493 = vadd.f32 0.0, %v492
  %494 = vmatmul.bf16.gmra.mxu0 %v440
  %v495 = vpop.f32.mrf.mxu0
  %v496 = vadd.f32 0.0, %v495
  %v497 = vpop.f32.mrf.mxu0
  %v498 = vadd.f32 0.0, %v497
  %499 = vdwg.mxu0
  %v500 = vmax.f32 %v452, %v481
  %501 = vmax.xlane.f32.xlu0 %v500
  %v502 = vpop.xlane.xlu0 %501
  %v503 = vmax.f32 %v454, %v483
  %504 = vmax.xlane.f32.xlu0 %v503
  %v505 = vpop.xlane.xlu0 %504
  %v506 = vmax.f32 %v457, %v486
  %507 = vmax.xlane.f32.xlu0 %v506
  %v508 = vpop.xlane.xlu0 %507
  %v509 = vmax.f32 %v459, %v488
  %510 = vmax.xlane.f32.xlu0 %v509
  %v511 = vpop.xlane.xlu0 %510
  %v512 = vmax.f32 %v462, %v491
  %513 = vmax.xlane.f32.xlu0 %v512
  %v514 = vpop.xlane.xlu0 %513
  %v515 = vmax.f32 %v464, %v493
  %516 = vmax.xlane.f32.xlu0 %v515
  %v517 = vpop.xlane.xlu0 %516
  %v518 = vmax.f32 %v467, %v496
  %519 = vmax.xlane.f32.xlu0 %v518
  %v520 = vpop.xlane.xlu0 %519
  %v521 = vmax.f32 %v469, %v498
  %522 = vmax.xlane.f32.xlu0 %v521
  %v523 = vpop.xlane.xlu0 %522
  %v524 = vmin.f32 %v452, %v481
  %525 = vmin.xlane.f32.xlu0 %v524
  %v526 = vpop.xlane.xlu0 %525
  %v527 = vmin.f32 %v454, %v483
  %528 = vmin.xlane.f32.xlu0 %v527
  %v529 = vpop.xlane.xlu0 %528
  %v530 = vmin.f32 %v457, %v486
  %531 = vmin.xlane.f32.xlu0 %v530
  %v532 = vpop.xlane.xlu0 %531
  %v533 = vmin.f32 %v459, %v488
  %534 = vmin.xlane.f32.xlu0 %v533
  %v535 = vpop.xlane.xlu0 %534
  %v536 = vmin.f32 %v462, %v491
  %537 = vmin.xlane.f32.xlu0 %v536
  %v538 = vpop.xlane.xlu0 %537
  %v539 = vmin.f32 %v464, %v493
  %540 = vmin.xlane.f32.xlu0 %v539
  %v541 = vpop.xlane.xlu0 %540
  %v542 = vmin.f32 %v467, %v496
  %543 = vmin.xlane.f32.xlu0 %v542
  %v544 = vpop.xlane.xlu0 %543
  %v545 = vmin.f32 %v469, %v498
  %546 = vmin.xlane.f32.xlu0 %v545
  %v547 = vpop.xlane.xlu0 %546
  %v548 = vsub.f32 %v502, %v526
  %v549 = vsub.f32 %v505, %v529
  %v550 = vsub.f32 %v508, %v532
  %v551 = vsub.f32 %v511, %v535
  %v552 = vsub.f32 %v514, %v538
  %v553 = vsub.f32 %v517, %v541
  %v554 = vsub.f32 %v520, %v544
  %v555 = vsub.f32 %v523, %v547
  %vm556 = vcmp.ne.f32.partialorder %v548, 0.0
  %vm557 = vcmp.ne.f32.partialorder %v549, 0.0
  %vm558 = vcmp.ne.f32.partialorder %v550, 0.0
  %vm559 = vcmp.ne.f32.partialorder %v551, 0.0
  %vm560 = vcmp.ne.f32.partialorder %v552, 0.0
  %vm561 = vcmp.ne.f32.partialorder %v553, 0.0
  %vm562 = vcmp.ne.f32.partialorder %v554, 0.0
  %vm563 = vcmp.ne.f32.partialorder %v555, 0.0
  %v564 = vsel %vm556, %v548, 1.0
  %v565 = vsel %vm557, %v549, 1.0
  %v566 = vsel %vm558, %v550, 1.0
  %v567 = vsel %vm559, %v551, 1.0
  %v568 = vsel %vm560, %v552, 1.0
  %v569 = vsel %vm561, %v553, 1.0
  %v570 = vsel %vm562, %v554, 1.0
  %v571 = vsel %vm563, %v555, 1.0
  %v572 = vrcp.pop %v564
  %v573 = vmul.f32 %v564, %v572
  %v574 = vsub.f32 1.0, %v573
  %v575 = vmul.f32 %v572, %v574
  %v576 = vadd.f32 %v572, %v575
  %vm577 = vweird.f32 %v564
  %vm578 = vweird.f32 %v572
  %vm579 = vmor %vm577, %vm578
  %v580 = vsel %vm579, %v572, %v576
  %v581 = vand.u32 2147483647, %v564
  %vm582 = vcmp.eq.f32.partialorder %v581, 8.507059e+37
  %v583 = vand.u32 %v564, 2147483648
  %v584 = vor.u32 1.1754944e-38, %v583
  %v585 = vsel %vm582, %v584, %v580
  %v586 = vrcp.pop %v565
  %v587 = vmul.f32 %v565, %v586
  %v588 = vsub.f32 1.0, %v587
  %v589 = vmul.f32 %v586, %v588
  %v590 = vadd.f32 %v586, %v589
  %vm591 = vweird.f32 %v565
  %vm592 = vweird.f32 %v586
  %vm593 = vmor %vm591, %vm592
  %v594 = vsel %vm593, %v586, %v590
  %v595 = vand.u32 2147483647, %v565
  %vm596 = vcmp.eq.f32.partialorder %v595, 8.507059e+37
  %v597 = vand.u32 %v565, 2147483648
  %v598 = vor.u32 1.1754944e-38, %v597
  %v599 = vsel %vm596, %v598, %v594
  %v600 = vrcp.pop %v566
  %v601 = vmul.f32 %v566, %v600
  %v602 = vsub.f32 1.0, %v601
  %v603 = vmul.f32 %v600, %v602
  %v604 = vadd.f32 %v600, %v603
  %vm605 = vweird.f32 %v566
  %vm606 = vweird.f32 %v600
  %vm607 = vmor %vm605, %vm606
  %v608 = vsel %vm607, %v600, %v604
  %v609 = vand.u32 2147483647, %v566
  %vm610 = vcmp.eq.f32.partialorder %v609, 8.507059e+37
  %v611 = vand.u32 %v566, 2147483648
  %v612 = vor.u32 1.1754944e-38, %v611
  %v613 = vsel %vm610, %v612, %v608
  %v614 = vrcp.pop %v567
  %v615 = vmul.f32 %v567, %v614
  %v616 = vsub.f32 1.0, %v615
  %v617 = vmul.f32 %v614, %v616
  %v618 = vadd.f32 %v614, %v617
  %vm619 = vweird.f32 %v567
  %vm620 = vweird.f32 %v614
  %vm621 = vmor %vm619, %vm620
  %v622 = vsel %vm621, %v614, %v618
  %v623 = vand.u32 2147483647, %v567
  %vm624 = vcmp.eq.f32.partialorder %v623, 8.507059e+37
  %v625 = vand.u32 %v567, 2147483648
  %v626 = vor.u32 1.1754944e-38, %v625
  %v627 = vsel %vm624, %v626, %v622
  %v628 = vrcp.pop %v568
  %v629 = vmul.f32 %v568, %v628
  %v630 = vsub.f32 1.0, %v629
  %v631 = vmul.f32 %v628, %v630
  %v632 = vadd.f32 %v628, %v631
  %vm633 = vweird.f32 %v568
  %vm634 = vweird.f32 %v628
  %vm635 = vmor %vm633, %vm634
  %v636 = vsel %vm635, %v628, %v632
  %v637 = vand.u32 2147483647, %v568
  %vm638 = vcmp.eq.f32.partialorder %v637, 8.507059e+37
  %v639 = vand.u32 %v568, 2147483648
  %v640 = vor.u32 1.1754944e-38, %v639
  %v641 = vsel %vm638, %v640, %v636
  %v642 = vrcp.pop %v569
  %v643 = vmul.f32 %v569, %v642
  %v644 = vsub.f32 1.0, %v643
  %v645 = vmul.f32 %v642, %v644
  %v646 = vadd.f32 %v642, %v645
  %vm647 = vweird.f32 %v569
  %vm648 = vweird.f32 %v642
  %vm649 = vmor %vm647, %vm648
  %v650 = vsel %vm649, %v642, %v646
  %v651 = vand.u32 2147483647, %v569
  %vm652 = vcmp.eq.f32.partialorder %v651, 8.507059e+37
  %v653 = vand.u32 %v569, 2147483648
  %v654 = vor.u32 1.1754944e-38, %v653
  %v655 = vsel %vm652, %v654, %v650
  %v656 = vrcp.pop %v570
  %v657 = vmul.f32 %v570, %v656
  %v658 = vsub.f32 1.0, %v657
  %v659 = vmul.f32 %v656, %v658
  %v660 = vadd.f32 %v656, %v659
  %vm661 = vweird.f32 %v570
  %vm662 = vweird.f32 %v656
  %vm663 = vmor %vm661, %vm662
  %v664 = vsel %vm663, %v656, %v660
  %v665 = vand.u32 2147483647, %v570
  %vm666 = vcmp.eq.f32.partialorder %v665, 8.507059e+37
  %v667 = vand.u32 %v570, 2147483648
  %v668 = vor.u32 1.1754944e-38, %v667
  %v669 = vsel %vm666, %v668, %v664
  %v670 = vrcp.pop %v571
  %v671 = vmul.f32 %v571, %v670
  %v672 = vsub.f32 1.0, %v671
  %v673 = vmul.f32 %v670, %v672
  %v674 = vadd.f32 %v670, %v673
  %vm675 = vweird.f32 %v571
  %vm676 = vweird.f32 %v670
  %vm677 = vmor %vm675, %vm676
  %v678 = vsel %vm677, %v670, %v674
  %v679 = vand.u32 2147483647, %v571
  %vm680 = vcmp.eq.f32.partialorder %v679, 8.507059e+37
  %v681 = vand.u32 %v571, 2147483648
  %v682 = vor.u32 1.1754944e-38, %v681
  %v683 = vsel %vm680, %v682, %v678
  %v684 = vsub.f32 %v452, %v526
  %v685 = vsub.f32 %v481, %v526
  %v686 = vsub.f32 %v454, %v529
  %v687 = vsub.f32 %v483, %v529
  %v688 = vsub.f32 %v457, %v532
  %v689 = vsub.f32 %v486, %v532
  %v690 = vsub.f32 %v459, %v535
  %v691 = vsub.f32 %v488, %v535
  %v692 = vsub.f32 %v462, %v538
  %v693 = vsub.f32 %v491, %v538
  %v694 = vsub.f32 %v464, %v541
  %v695 = vsub.f32 %v493, %v541
  %v696 = vsub.f32 %v467, %v544
  %v697 = vsub.f32 %v496, %v544
  %v698 = vsub.f32 %v469, %v547
  %v699 = vsub.f32 %v498, %v547
  %v700 = vmul.f32 %v684, %v585
  %v701 = vmul.f32 %v685, %v585
  %v702 = vmul.f32 %v686, %v599
  %v703 = vmul.f32 %v687, %v599
  %v704 = vmul.f32 %v688, %v613
  %v705 = vmul.f32 %v689, %v613
  %v706 = vmul.f32 %v690, %v627
  %v707 = vmul.f32 %v691, %v627
  %v708 = vmul.f32 %v692, %v641
  %v709 = vmul.f32 %v693, %v641
  %v710 = vmul.f32 %v694, %v655
  %v711 = vmul.f32 %v695, %v655
  %v712 = vmul.f32 %v696, %v669
  %v713 = vmul.f32 %v697, %v669
  %v714 = vmul.f32 %v698, %v683
  %v715 = vmul.f32 %v699, %v683
  %v716 = vpack.c.bf16 %v701, %v700
  %v717 = vpack.c.bf16 %v703, %v702
  %v718 = vpack.c.bf16 %v705, %v704
  %v719 = vpack.c.bf16 %v707, %v706
  %v720 = vpack.c.bf16 %v709, %v708
  %v721 = vpack.c.bf16 %v711, %v710
  %v722 = vpack.c.bf16 %v713, %v712
  %v723 = vpack.c.bf16 %v715, %v714
  %v732 = vrot.slane %v716, 3
  %v733 = vrot.slane %v717, 3
  %v734 = vrot.slane %v718, 3
  %v735 = vrot.slane %v719, 3
  %v736 = vrot.slane %v720, 3
  %v737 = vrot.slane %v721, 3
  %v738 = vrot.slane %v722, 3
  %v739 = vrot.slane %v723, 3
  %vm740 = vcmask 1040384
  %v743 = vsel %vm740, %v716, %v732
  %vm745 = vcmask 1041409
  %v746 = vsel %vm745, %v716, %v732
  %v748 = vrot.slane %v746, 1
  %vm749 = vcmask 1042434
  %v750 = vsel %vm749, %v716, %v732
  %v752 = vrot.slane %v750, 2
  %vm753 = vcmask 1043459
  %v754 = vsel %vm753, %v716, %v732
  %v756 = vrot.slane %v754, 3
  %v759 = vsel %vm740, %v717, %v733
  %v761 = vsel %vm745, %v717, %v733
  %v763 = vrot.slane %v761, 1
  %v764 = vsel %vm749, %v717, %v733
  %v766 = vrot.slane %v764, 2
  %v767 = vsel %vm753, %v717, %v733
  %v769 = vrot.slane %v767, 3
  %v772 = vsel %vm740, %v718, %v734
  %v774 = vsel %vm745, %v718, %v734
  %v776 = vrot.slane %v774, 1
  %v777 = vsel %vm749, %v718, %v734
  %v779 = vrot.slane %v777, 2
  %v780 = vsel %vm753, %v718, %v734
  %v782 = vrot.slane %v780, 3
  %v785 = vsel %vm740, %v719, %v735
  %v787 = vsel %vm745, %v719, %v735
  %v789 = vrot.slane %v787, 1
  %v790 = vsel %vm749, %v719, %v735
  %v792 = vrot.slane %v790, 2
  %v793 = vsel %vm753, %v719, %v735
  %v795 = vrot.slane %v793, 3
  %v798 = vsel %vm740, %v720, %v736
  %v800 = vsel %vm745, %v720, %v736
  %v802 = vrot.slane %v800, 1
  %v803 = vsel %vm749, %v720, %v736
  %v805 = vrot.slane %v803, 2
  %v806 = vsel %vm753, %v720, %v736
  %v808 = vrot.slane %v806, 3
  %v811 = vsel %vm740, %v721, %v737
  %v813 = vsel %vm745, %v721, %v737
  %v815 = vrot.slane %v813, 1
  %v816 = vsel %vm749, %v721, %v737
  %v818 = vrot.slane %v816, 2
  %v819 = vsel %vm753, %v721, %v737
  %v821 = vrot.slane %v819, 3
  %v824 = vsel %vm740, %v722, %v738
  %v826 = vsel %vm745, %v722, %v738
  %v828 = vrot.slane %v826, 1
  %v829 = vsel %vm749, %v722, %v738
  %v831 = vrot.slane %v829, 2
  %v832 = vsel %vm753, %v722, %v738
  %v834 = vrot.slane %v832, 3
  %v837 = vsel %vm740, %v723, %v739
  %v839 = vsel %vm745, %v723, %v739
  %v841 = vrot.slane %v839, 1
  %v842 = vsel %vm749, %v723, %v739
  %v844 = vrot.slane %v842, 2
  %v845 = vsel %vm753, %v723, %v739
  %v847 = vrot.slane %v845, 3
  %v848 = vunpack.i.l.s16 %v743
  %v849 = vunpack.i.h.s16 %v743
  %v850 = vunpack.i.l.s16 %v748
  %v851 = vunpack.i.h.s16 %v748
  %v852 = vunpack.i.l.s16 %v752
  %v853 = vunpack.i.h.s16 %v752
  %v854 = vunpack.i.l.s16 %v756
  %v855 = vunpack.i.h.s16 %v756
  %v856 = vunpack.i.l.s16 %v759
  %v857 = vunpack.i.h.s16 %v759
  %v858 = vunpack.i.l.s16 %v763
  %v859 = vunpack.i.h.s16 %v763
  %v860 = vunpack.i.l.s16 %v766
  %v861 = vunpack.i.h.s16 %v766
  %v862 = vunpack.i.l.s16 %v769
  %v863 = vunpack.i.h.s16 %v769
  %v864 = vunpack.i.l.s16 %v772
  %v865 = vunpack.i.h.s16 %v772
  %v866 = vunpack.i.l.s16 %v776
  %v867 = vunpack.i.h.s16 %v776
  %v868 = vunpack.i.l.s16 %v779
  %v869 = vunpack.i.h.s16 %v779
  %v870 = vunpack.i.l.s16 %v782
  %v871 = vunpack.i.h.s16 %v782
  %v872 = vunpack.i.l.s16 %v785
  %v873 = vunpack.i.h.s16 %v785
  %v874 = vunpack.i.l.s16 %v789
  %v875 = vunpack.i.h.s16 %v789
  %v876 = vunpack.i.l.s16 %v792
  %v877 = vunpack.i.h.s16 %v792
  %v878 = vunpack.i.l.s16 %v795
  %v879 = vunpack.i.h.s16 %v795
  %v880 = vunpack.i.l.s16 %v798
  %v881 = vunpack.i.h.s16 %v798
  %v882 = vunpack.i.l.s16 %v802
  %v883 = vunpack.i.h.s16 %v802
  %v884 = vunpack.i.l.s16 %v805
  %v885 = vunpack.i.h.s16 %v805
  %v886 = vunpack.i.l.s16 %v808
  %v887 = vunpack.i.h.s16 %v808
  %v888 = vunpack.i.l.s16 %v811
  %v889 = vunpack.i.h.s16 %v811
  %v890 = vunpack.i.l.s16 %v815
  %v891 = vunpack.i.h.s16 %v815
  %v892 = vunpack.i.l.s16 %v818
  %v893 = vunpack.i.h.s16 %v818
  %v894 = vunpack.i.l.s16 %v821
  %v895 = vunpack.i.h.s16 %v821
  %v896 = vunpack.i.l.s16 %v824
  %v897 = vunpack.i.h.s16 %v824
  %v898 = vunpack.i.l.s16 %v828
  %v899 = vunpack.i.h.s16 %v828
  %v900 = vunpack.i.l.s16 %v831
  %v901 = vunpack.i.h.s16 %v831
  %v902 = vunpack.i.l.s16 %v834
  %v903 = vunpack.i.h.s16 %v834
  %v904 = vunpack.i.l.s16 %v837
  %v905 = vunpack.i.h.s16 %v837
  %v906 = vunpack.i.l.s16 %v841
  %v907 = vunpack.i.h.s16 %v841
  %v908 = vunpack.i.l.s16 %v844
  %v909 = vunpack.i.h.s16 %v844
  %v910 = vunpack.i.l.s16 %v847
  %v911 = vunpack.i.h.s16 %v847
  %v912 = vpack.i.b16 %v848, %v848
  %v913 = vpack.i.b16 %v849, %v849
  %v914 = vpack.i.b16 %v850, %v850
  %v915 = vpack.i.b16 %v851, %v851
  %v916 = vpack.i.b16 %v852, %v852
  %v917 = vpack.i.b16 %v853, %v853
  %v918 = vpack.i.b16 %v854, %v854
  %v919 = vpack.i.b16 %v855, %v855
  %v920 = vpack.i.b16 %v856, %v856
  %v921 = vpack.i.b16 %v857, %v857
  %v922 = vpack.i.b16 %v858, %v858
  %v923 = vpack.i.b16 %v859, %v859
  %v924 = vpack.i.b16 %v860, %v860
  %v925 = vpack.i.b16 %v861, %v861
  %v926 = vpack.i.b16 %v862, %v862
  %v927 = vpack.i.b16 %v863, %v863
  %v928 = vpack.i.b16 %v864, %v864
  %v929 = vpack.i.b16 %v865, %v865
  %v930 = vpack.i.b16 %v866, %v866
  %v931 = vpack.i.b16 %v867, %v867
  %v932 = vpack.i.b16 %v868, %v868
  %v933 = vpack.i.b16 %v869, %v869
  %v934 = vpack.i.b16 %v870, %v870
  %v935 = vpack.i.b16 %v871, %v871
  %v936 = vpack.i.b16 %v872, %v872
  %v937 = vpack.i.b16 %v873, %v873
  %v938 = vpack.i.b16 %v874, %v874
  %v939 = vpack.i.b16 %v875, %v875
  %v940 = vpack.i.b16 %v876, %v876
  %v941 = vpack.i.b16 %v877, %v877
  %v942 = vpack.i.b16 %v878, %v878
  %v943 = vpack.i.b16 %v879, %v879
  %v944 = vpack.i.b16 %v880, %v880
  %v945 = vpack.i.b16 %v881, %v881
  %v946 = vpack.i.b16 %v882, %v882
  %v947 = vpack.i.b16 %v883, %v883
  %v948 = vpack.i.b16 %v884, %v884
  %v949 = vpack.i.b16 %v885, %v885
  %v950 = vpack.i.b16 %v886, %v886
  %v951 = vpack.i.b16 %v887, %v887
  %v952 = vpack.i.b16 %v888, %v888
  %v953 = vpack.i.b16 %v889, %v889
  %v954 = vpack.i.b16 %v890, %v890
  %v955 = vpack.i.b16 %v891, %v891
  %v956 = vpack.i.b16 %v892, %v892
  %v957 = vpack.i.b16 %v893, %v893
  %v958 = vpack.i.b16 %v894, %v894
  %v959 = vpack.i.b16 %v895, %v895
  %v960 = vpack.i.b16 %v896, %v896
  %v961 = vpack.i.b16 %v897, %v897
  %v962 = vpack.i.b16 %v898, %v898
  %v963 = vpack.i.b16 %v899, %v899
  %v964 = vpack.i.b16 %v900, %v900
  %v965 = vpack.i.b16 %v901, %v901
  %v966 = vpack.i.b16 %v902, %v902
  %v967 = vpack.i.b16 %v903, %v903
  %v968 = vpack.i.b16 %v904, %v904
  %v969 = vpack.i.b16 %v905, %v905
  %v970 = vpack.i.b16 %v906, %v906
  %v971 = vpack.i.b16 %v907, %v907
  %v972 = vpack.i.b16 %v908, %v908
  %v973 = vpack.i.b16 %v909, %v909
  %v974 = vpack.i.b16 %v910, %v910
  %v975 = vpack.i.b16 %v911, %v911
  %v976 = vperm.slane %v912, 0
  %v977 = vperm.slane %v912, 1
  %v978 = vperm.slane %v913, 0
  %v979 = vperm.slane %v913, 1
  %v980 = vperm.slane %v914, 0
  %v981 = vperm.slane %v914, 1
  %v982 = vperm.slane %v915, 0
  %v983 = vperm.slane %v915, 1
  %v984 = vperm.slane %v916, 0
  %v985 = vperm.slane %v916, 1
  %v986 = vperm.slane %v917, 0
  %v987 = vperm.slane %v917, 1
  %v988 = vperm.slane %v918, 0
  %v989 = vperm.slane %v918, 1
  %v990 = vperm.slane %v919, 0
  %v991 = vperm.slane %v919, 1
  %v992 = vperm.slane %v920, 0
  %v993 = vperm.slane %v920, 1
  %v994 = vperm.slane %v921, 0
  %v995 = vperm.slane %v921, 1
  %v996 = vperm.slane %v922, 0
  %v997 = vperm.slane %v922, 1
  %v998 = vperm.slane %v923, 0
  %v999 = vperm.slane %v923, 1
  %v1000 = vperm.slane %v924, 0
  %v1001 = vperm.slane %v924, 1
  %v1002 = vperm.slane %v925, 0
  %v1003 = vperm.slane %v925, 1
  %v1004 = vperm.slane %v926, 0
  %v1005 = vperm.slane %v926, 1
  %v1006 = vperm.slane %v927, 0
  %v1007 = vperm.slane %v927, 1
  %v1008 = vperm.slane %v928, 0
  %v1009 = vperm.slane %v928, 1
  %v1010 = vperm.slane %v929, 0
  %v1011 = vperm.slane %v929, 1
  %v1012 = vperm.slane %v930, 0
  %v1013 = vperm.slane %v930, 1
  %v1014 = vperm.slane %v931, 0
  %v1015 = vperm.slane %v931, 1
  %v1016 = vperm.slane %v932, 0
  %v1017 = vperm.slane %v932, 1
  %v1018 = vperm.slane %v933, 0
  %v1019 = vperm.slane %v933, 1
  %v1020 = vperm.slane %v934, 0
  %v1021 = vperm.slane %v934, 1
  %v1022 = vperm.slane %v935, 0
  %v1023 = vperm.slane %v935, 1
  %v1024 = vperm.slane %v936, 0
  %v1025 = vperm.slane %v936, 1
  %v1026 = vperm.slane %v937, 0
  %v1027 = vperm.slane %v937, 1
  %v1028 = vperm.slane %v938, 0
  %v1029 = vperm.slane %v938, 1
  %v1030 = vperm.slane %v939, 0
  %v1031 = vperm.slane %v939, 1
  %v1032 = vperm.slane %v940, 0
  %v1033 = vperm.slane %v940, 1
  %v1034 = vperm.slane %v941, 0
  %v1035 = vperm.slane %v941, 1
  %v1036 = vperm.slane %v942, 0
  %v1037 = vperm.slane %v942, 1
  %v1038 = vperm.slane %v943, 0
  %v1039 = vperm.slane %v943, 1
  %v1040 = vperm.slane %v944, 0
  %v1041 = vperm.slane %v944, 1
  %v1042 = vperm.slane %v945, 0
  %v1043 = vperm.slane %v945, 1
  %v1044 = vperm.slane %v946, 0
  %v1045 = vperm.slane %v946, 1
  %v1046 = vperm.slane %v947, 0
  %v1047 = vperm.slane %v947, 1
  %v1048 = vperm.slane %v948, 0
  %v1049 = vperm.slane %v948, 1
  %v1050 = vperm.slane %v949, 0
  %v1051 = vperm.slane %v949, 1
  %v1052 = vperm.slane %v950, 0
  %v1053 = vperm.slane %v950, 1
  %v1054 = vperm.slane %v951, 0
  %v1055 = vperm.slane %v951, 1
  %v1056 = vperm.slane %v952, 0
  %v1057 = vperm.slane %v952, 1
  %v1058 = vperm.slane %v953, 0
  %v1059 = vperm.slane %v953, 1
  %v1060 = vperm.slane %v954, 0
  %v1061 = vperm.slane %v954, 1
  %v1062 = vperm.slane %v955, 0
  %v1063 = vperm.slane %v955, 1
  %v1064 = vperm.slane %v956, 0
  %v1065 = vperm.slane %v956, 1
  %v1066 = vperm.slane %v957, 0
  %v1067 = vperm.slane %v957, 1
  %v1068 = vperm.slane %v958, 0
  %v1069 = vperm.slane %v958, 1
  %v1070 = vperm.slane %v959, 0
  %v1071 = vperm.slane %v959, 1
  %v1072 = vperm.slane %v960, 0
  %v1073 = vperm.slane %v960, 1
  %v1074 = vperm.slane %v961, 0
  %v1075 = vperm.slane %v961, 1
  %v1076 = vperm.slane %v962, 0
  %v1077 = vperm.slane %v962, 1
  %v1078 = vperm.slane %v963, 0
  %v1079 = vperm.slane %v963, 1
  %v1080 = vperm.slane %v964, 0
  %v1081 = vperm.slane %v964, 1
  %v1082 = vperm.slane %v965, 0
  %v1083 = vperm.slane %v965, 1
  %v1084 = vperm.slane %v966, 0
  %v1085 = vperm.slane %v966, 1
  %v1086 = vperm.slane %v967, 0
  %v1087 = vperm.slane %v967, 1
  %v1088 = vperm.slane %v968, 0
  %v1089 = vperm.slane %v968, 1
  %v1090 = vperm.slane %v969, 0
  %v1091 = vperm.slane %v969, 1
  %v1092 = vperm.slane %v970, 0
  %v1093 = vperm.slane %v970, 1
  %v1094 = vperm.slane %v971, 0
  %v1095 = vperm.slane %v971, 1
  %v1096 = vperm.slane %v972, 0
  %v1097 = vperm.slane %v972, 1
  %v1098 = vperm.slane %v973, 0
  %v1099 = vperm.slane %v973, 1
  %v1100 = vperm.slane %v974, 0
  %v1101 = vperm.slane %v974, 1
  %v1102 = vperm.slane %v975, 0
  %v1103 = vperm.slane %v975, 1
  %v1105 = vpack.i.b16 %v976, %v976
  %v1107 = vperm.slane %v1105, 0
  %v1109 = vpack.i.b16 %v977, %v977
  %v1111 = vperm.slane %v1109, 0
  %v1113 = vpack.i.b16 %v978, %v978
  %v1115 = vperm.slane %v1113, 0
  %v1117 = vpack.i.b16 %v979, %v979
  %v1119 = vperm.slane %v1117, 0
  %v1121 = vpack.i.b16 %v980, %v980
  %v1123 = vperm.slane %v1121, 0
  %v1125 = vpack.i.b16 %v981, %v981
  %v1127 = vperm.slane %v1125, 0
  %v1129 = vpack.i.b16 %v982, %v982
  %v1131 = vperm.slane %v1129, 0
  %v1133 = vpack.i.b16 %v983, %v983
  %v1135 = vperm.slane %v1133, 0
  %v1137 = vpack.i.b16 %v984, %v984
  %v1139 = vperm.slane %v1137, 0
  %v1141 = vpack.i.b16 %v985, %v985
  %v1143 = vperm.slane %v1141, 0
  %v1145 = vpack.i.b16 %v986, %v986
  %v1147 = vperm.slane %v1145, 0
  %v1149 = vpack.i.b16 %v987, %v987
  %v1151 = vperm.slane %v1149, 0
  %v1153 = vpack.i.b16 %v988, %v988
  %v1155 = vperm.slane %v1153, 0
  %v1157 = vpack.i.b16 %v989, %v989
  %v1159 = vperm.slane %v1157, 0
  %v1161 = vpack.i.b16 %v990, %v990
  %v1163 = vperm.slane %v1161, 0
  %v1165 = vpack.i.b16 %v991, %v991
  %v1167 = vperm.slane %v1165, 0
  %v1169 = vpack.i.b16 %v992, %v992
  %v1171 = vperm.slane %v1169, 0
  %v1173 = vpack.i.b16 %v993, %v993
  %v1175 = vperm.slane %v1173, 0
  %v1177 = vpack.i.b16 %v994, %v994
  %v1179 = vperm.slane %v1177, 0
  %v1181 = vpack.i.b16 %v995, %v995
  %v1183 = vperm.slane %v1181, 0
  %v1185 = vpack.i.b16 %v996, %v996
  %v1187 = vperm.slane %v1185, 0
  %v1189 = vpack.i.b16 %v997, %v997
  %v1191 = vperm.slane %v1189, 0
  %v1193 = vpack.i.b16 %v998, %v998
  %v1195 = vperm.slane %v1193, 0
  %v1197 = vpack.i.b16 %v999, %v999
  %v1199 = vperm.slane %v1197, 0
  %v1201 = vpack.i.b16 %v1000, %v1000
  %v1203 = vperm.slane %v1201, 0
  %v1205 = vpack.i.b16 %v1001, %v1001
  %v1207 = vperm.slane %v1205, 0
  %v1209 = vpack.i.b16 %v1002, %v1002
  %v1211 = vperm.slane %v1209, 0
  %v1213 = vpack.i.b16 %v1003, %v1003
  %v1215 = vperm.slane %v1213, 0
  %v1217 = vpack.i.b16 %v1004, %v1004
  %v1219 = vperm.slane %v1217, 0
  %v1221 = vpack.i.b16 %v1005, %v1005
  %v1223 = vperm.slane %v1221, 0
  %v1225 = vpack.i.b16 %v1006, %v1006
  %v1227 = vperm.slane %v1225, 0
  %v1229 = vpack.i.b16 %v1007, %v1007
  %v1231 = vperm.slane %v1229, 0
  %v1233 = vpack.i.b16 %v1008, %v1008
  %v1235 = vperm.slane %v1233, 0
  %v1237 = vpack.i.b16 %v1009, %v1009
  %v1239 = vperm.slane %v1237, 0
  %v1241 = vpack.i.b16 %v1010, %v1010
  %v1243 = vperm.slane %v1241, 0
  %v1245 = vpack.i.b16 %v1011, %v1011
  %v1247 = vperm.slane %v1245, 0
  %v1249 = vpack.i.b16 %v1012, %v1012
  %v1251 = vperm.slane %v1249, 0
  %v1253 = vpack.i.b16 %v1013, %v1013
  %v1255 = vperm.slane %v1253, 0
  %v1257 = vpack.i.b16 %v1014, %v1014
  %v1259 = vperm.slane %v1257, 0
  %v1261 = vpack.i.b16 %v1015, %v1015
  %v1263 = vperm.slane %v1261, 0
  %v1265 = vpack.i.b16 %v1016, %v1016
  %v1267 = vperm.slane %v1265, 0
  %v1269 = vpack.i.b16 %v1017, %v1017
  %v1271 = vperm.slane %v1269, 0
  %v1273 = vpack.i.b16 %v1018, %v1018
  %v1275 = vperm.slane %v1273, 0
  %v1277 = vpack.i.b16 %v1019, %v1019
  %v1279 = vperm.slane %v1277, 0
  %v1281 = vpack.i.b16 %v1020, %v1020
  %v1283 = vperm.slane %v1281, 0
  %v1285 = vpack.i.b16 %v1021, %v1021
  %v1287 = vperm.slane %v1285, 0
  %v1289 = vpack.i.b16 %v1022, %v1022
  %v1291 = vperm.slane %v1289, 0
  %v1293 = vpack.i.b16 %v1023, %v1023
  %v1295 = vperm.slane %v1293, 0
  %v1297 = vpack.i.b16 %v1024, %v1024
  %v1299 = vperm.slane %v1297, 0
  %v1301 = vpack.i.b16 %v1025, %v1025
  %v1303 = vperm.slane %v1301, 0
  %v1305 = vpack.i.b16 %v1026, %v1026
  %v1307 = vperm.slane %v1305, 0
  %v1309 = vpack.i.b16 %v1027, %v1027
  %v1311 = vperm.slane %v1309, 0
  %v1313 = vpack.i.b16 %v1028, %v1028
  %v1315 = vperm.slane %v1313, 0
  %v1317 = vpack.i.b16 %v1029, %v1029
  %v1319 = vperm.slane %v1317, 0
  %v1321 = vpack.i.b16 %v1030, %v1030
  %v1323 = vperm.slane %v1321, 0
  %v1325 = vpack.i.b16 %v1031, %v1031
  %v1327 = vperm.slane %v1325, 0
  %v1329 = vpack.i.b16 %v1032, %v1032
  %v1331 = vperm.slane %v1329, 0
  %v1333 = vpack.i.b16 %v1033, %v1033
  %v1335 = vperm.slane %v1333, 0
  %v1337 = vpack.i.b16 %v1034, %v1034
  %v1339 = vperm.slane %v1337, 0
  %v1341 = vpack.i.b16 %v1035, %v1035
  %v1343 = vperm.slane %v1341, 0
  %v1345 = vpack.i.b16 %v1036, %v1036
  %v1347 = vperm.slane %v1345, 0
  %v1349 = vpack.i.b16 %v1037, %v1037
  %v1351 = vperm.slane %v1349, 0
  %v1353 = vpack.i.b16 %v1038, %v1038
  %v1355 = vperm.slane %v1353, 0
  %v1357 = vpack.i.b16 %v1039, %v1039
  %v1359 = vperm.slane %v1357, 0
  %v1361 = vpack.i.b16 %v1040, %v1040
  %v1363 = vperm.slane %v1361, 0
  %v1365 = vpack.i.b16 %v1041, %v1041
  %v1367 = vperm.slane %v1365, 0
  %v1369 = vpack.i.b16 %v1042, %v1042
  %v1371 = vperm.slane %v1369, 0
  %v1373 = vpack.i.b16 %v1043, %v1043
  %v1375 = vperm.slane %v1373, 0
  %v1377 = vpack.i.b16 %v1044, %v1044
  %v1379 = vperm.slane %v1377, 0
  %v1381 = vpack.i.b16 %v1045, %v1045
  %v1383 = vperm.slane %v1381, 0
  %v1385 = vpack.i.b16 %v1046, %v1046
  %v1387 = vperm.slane %v1385, 0
  %v1389 = vpack.i.b16 %v1047, %v1047
  %v1391 = vperm.slane %v1389, 0
  %v1393 = vpack.i.b16 %v1048, %v1048
  %v1395 = vperm.slane %v1393, 0
  %v1397 = vpack.i.b16 %v1049, %v1049
  %v1399 = vperm.slane %v1397, 0
  %v1401 = vpack.i.b16 %v1050, %v1050
  %v1403 = vperm.slane %v1401, 0
  %v1405 = vpack.i.b16 %v1051, %v1051
  %v1407 = vperm.slane %v1405, 0
  %v1409 = vpack.i.b16 %v1052, %v1052
  %v1411 = vperm.slane %v1409, 0
  %v1413 = vpack.i.b16 %v1053, %v1053
  %v1415 = vperm.slane %v1413, 0
  %v1417 = vpack.i.b16 %v1054, %v1054
  %v1419 = vperm.slane %v1417, 0
  %v1421 = vpack.i.b16 %v1055, %v1055
  %v1423 = vperm.slane %v1421, 0
  %v1425 = vpack.i.b16 %v1056, %v1056
  %v1427 = vperm.slane %v1425, 0
  %v1429 = vpack.i.b16 %v1057, %v1057
  %v1431 = vperm.slane %v1429, 0
  %v1433 = vpack.i.b16 %v1058, %v1058
  %v1435 = vperm.slane %v1433, 0
  %v1437 = vpack.i.b16 %v1059, %v1059
  %v1439 = vperm.slane %v1437, 0
  %v1441 = vpack.i.b16 %v1060, %v1060
  %v1443 = vperm.slane %v1441, 0
  %v1445 = vpack.i.b16 %v1061, %v1061
  %v1447 = vperm.slane %v1445, 0
  %v1449 = vpack.i.b16 %v1062, %v1062
  %v1451 = vperm.slane %v1449, 0
  %v1453 = vpack.i.b16 %v1063, %v1063
  %v1455 = vperm.slane %v1453, 0
  %v1457 = vpack.i.b16 %v1064, %v1064
  %v1459 = vperm.slane %v1457, 0
  %v1461 = vpack.i.b16 %v1065, %v1065
  %v1463 = vperm.slane %v1461, 0
  %v1465 = vpack.i.b16 %v1066, %v1066
  %v1467 = vperm.slane %v1465, 0
  %v1469 = vpack.i.b16 %v1067, %v1067
  %v1471 = vperm.slane %v1469, 0
  %v1473 = vpack.i.b16 %v1068, %v1068
  %v1475 = vperm.slane %v1473, 0
  %v1477 = vpack.i.b16 %v1069, %v1069
  %v1479 = vperm.slane %v1477, 0
  %v1481 = vpack.i.b16 %v1070, %v1070
  %v1483 = vperm.slane %v1481, 0
  %v1485 = vpack.i.b16 %v1071, %v1071
  %v1487 = vperm.slane %v1485, 0
  %v1489 = vpack.i.b16 %v1072, %v1072
  %v1491 = vperm.slane %v1489, 0
  %v1493 = vpack.i.b16 %v1073, %v1073
  %v1495 = vperm.slane %v1493, 0
  %v1497 = vpack.i.b16 %v1074, %v1074
  %v1499 = vperm.slane %v1497, 0
  %v1501 = vpack.i.b16 %v1075, %v1075
  %v1503 = vperm.slane %v1501, 0
  %v1505 = vpack.i.b16 %v1076, %v1076
  %v1507 = vperm.slane %v1505, 0
  %v1509 = vpack.i.b16 %v1077, %v1077
  %v1511 = vperm.slane %v1509, 0
  %v1513 = vpack.i.b16 %v1078, %v1078
  %v1515 = vperm.slane %v1513, 0
  %v1517 = vpack.i.b16 %v1079, %v1079
  %v1519 = vperm.slane %v1517, 0
  %v1521 = vpack.i.b16 %v1080, %v1080
  %v1523 = vperm.slane %v1521, 0
  %v1525 = vpack.i.b16 %v1081, %v1081
  %v1527 = vperm.slane %v1525, 0
  %v1529 = vpack.i.b16 %v1082, %v1082
  %v1531 = vperm.slane %v1529, 0
  %v1533 = vpack.i.b16 %v1083, %v1083
  %v1535 = vperm.slane %v1533, 0
  %v1537 = vpack.i.b16 %v1084, %v1084
  %v1539 = vperm.slane %v1537, 0
  %v1541 = vpack.i.b16 %v1085, %v1085
  %v1543 = vperm.slane %v1541, 0
  %v1545 = vpack.i.b16 %v1086, %v1086
  %v1547 = vperm.slane %v1545, 0
  %v1549 = vpack.i.b16 %v1087, %v1087
  %v1551 = vperm.slane %v1549, 0
  %v1553 = vpack.i.b16 %v1088, %v1088
  %v1555 = vperm.slane %v1553, 0
  %v1557 = vpack.i.b16 %v1089, %v1089
  %v1559 = vperm.slane %v1557, 0
  %v1561 = vpack.i.b16 %v1090, %v1090
  %v1563 = vperm.slane %v1561, 0
  %v1565 = vpack.i.b16 %v1091, %v1091
  %v1567 = vperm.slane %v1565, 0
  %v1569 = vpack.i.b16 %v1092, %v1092
  %v1571 = vperm.slane %v1569, 0
  %v1573 = vpack.i.b16 %v1093, %v1093
  %v1575 = vperm.slane %v1573, 0
  %v1577 = vpack.i.b16 %v1094, %v1094
  %v1579 = vperm.slane %v1577, 0
  %v1581 = vpack.i.b16 %v1095, %v1095
  %v1583 = vperm.slane %v1581, 0
  %v1585 = vpack.i.b16 %v1096, %v1096
  %v1587 = vperm.slane %v1585, 0
  %v1589 = vpack.i.b16 %v1097, %v1097
  %v1591 = vperm.slane %v1589, 0
  %v1593 = vpack.i.b16 %v1098, %v1098
  %v1595 = vperm.slane %v1593, 0
  %v1597 = vpack.i.b16 %v1099, %v1099
  %v1599 = vperm.slane %v1597, 0
  %v1601 = vpack.i.b16 %v1100, %v1100
  %v1603 = vperm.slane %v1601, 0
  %v1605 = vpack.i.b16 %v1101, %v1101
  %v1607 = vperm.slane %v1605, 0
  %v1609 = vpack.i.b16 %v1102, %v1102
  %v1611 = vperm.slane %v1609, 0
  %v1613 = vpack.i.b16 %v1103, %v1103
  %v1615 = vperm.slane %v1613, 0
  %v1616 = vunpack.c.l.bf16 %v1107
  %v1617 = vunpack.c.l.bf16 %v1111
  %v1618 = vunpack.c.l.bf16 %v1115
  %v1619 = vunpack.c.l.bf16 %v1119
  %v1620 = vunpack.c.l.bf16 %v1123
  %v1621 = vunpack.c.l.bf16 %v1127
  %v1622 = vunpack.c.l.bf16 %v1131
  %v1623 = vunpack.c.l.bf16 %v1135
  %v1624 = vunpack.c.l.bf16 %v1139
  %v1625 = vunpack.c.l.bf16 %v1143
  %v1626 = vunpack.c.l.bf16 %v1147
  %v1627 = vunpack.c.l.bf16 %v1151
  %v1628 = vunpack.c.l.bf16 %v1155
  %v1629 = vunpack.c.l.bf16 %v1159
  %v1630 = vunpack.c.l.bf16 %v1163
  %v1631 = vunpack.c.l.bf16 %v1167
  %v1632 = vunpack.c.l.bf16 %v1171
  %v1633 = vunpack.c.l.bf16 %v1175
  %v1634 = vunpack.c.l.bf16 %v1179
  %v1635 = vunpack.c.l.bf16 %v1183
  %v1636 = vunpack.c.l.bf16 %v1187
  %v1637 = vunpack.c.l.bf16 %v1191
  %v1638 = vunpack.c.l.bf16 %v1195
  %v1639 = vunpack.c.l.bf16 %v1199
  %v1640 = vunpack.c.l.bf16 %v1203
  %v1641 = vunpack.c.l.bf16 %v1207
  %v1642 = vunpack.c.l.bf16 %v1211
  %v1643 = vunpack.c.l.bf16 %v1215
  %v1644 = vunpack.c.l.bf16 %v1219
  %v1645 = vunpack.c.l.bf16 %v1223
  %v1646 = vunpack.c.l.bf16 %v1227
  %v1647 = vunpack.c.l.bf16 %v1231
  %v1648 = vunpack.c.l.bf16 %v1235
  %v1649 = vunpack.c.l.bf16 %v1239
  %v1650 = vunpack.c.l.bf16 %v1243
  %v1651 = vunpack.c.l.bf16 %v1247
  %v1652 = vunpack.c.l.bf16 %v1251
  %v1653 = vunpack.c.l.bf16 %v1255
  %v1654 = vunpack.c.l.bf16 %v1259
  %v1655 = vunpack.c.l.bf16 %v1263
  %v1656 = vunpack.c.l.bf16 %v1267
  %v1657 = vunpack.c.l.bf16 %v1271
  %v1658 = vunpack.c.l.bf16 %v1275
  %v1659 = vunpack.c.l.bf16 %v1279
  %v1660 = vunpack.c.l.bf16 %v1283
  %v1661 = vunpack.c.l.bf16 %v1287
  %v1662 = vunpack.c.l.bf16 %v1291
  %v1663 = vunpack.c.l.bf16 %v1295
  %v1664 = vunpack.c.l.bf16 %v1299
  %v1665 = vunpack.c.l.bf16 %v1303
  %v1666 = vunpack.c.l.bf16 %v1307
  %v1667 = vunpack.c.l.bf16 %v1311
  %v1668 = vunpack.c.l.bf16 %v1315
  %v1669 = vunpack.c.l.bf16 %v1319
  %v1670 = vunpack.c.l.bf16 %v1323
  %v1671 = vunpack.c.l.bf16 %v1327
  %v1672 = vunpack.c.l.bf16 %v1331
  %v1673 = vunpack.c.l.bf16 %v1335
  %v1674 = vunpack.c.l.bf16 %v1339
  %v1675 = vunpack.c.l.bf16 %v1343
  %v1676 = vunpack.c.l.bf16 %v1347
  %v1677 = vunpack.c.l.bf16 %v1351
  %v1678 = vunpack.c.l.bf16 %v1355
  %v1679 = vunpack.c.l.bf16 %v1359
  %v1680 = vunpack.c.l.bf16 %v1363
  %v1681 = vunpack.c.l.bf16 %v1367
  %v1682 = vunpack.c.l.bf16 %v1371
  %v1683 = vunpack.c.l.bf16 %v1375
  %v1684 = vunpack.c.l.bf16 %v1379
  %v1685 = vunpack.c.l.bf16 %v1383
  %v1686 = vunpack.c.l.bf16 %v1387
  %v1687 = vunpack.c.l.bf16 %v1391
  %v1688 = vunpack.c.l.bf16 %v1395
  %v1689 = vunpack.c.l.bf16 %v1399
  %v1690 = vunpack.c.l.bf16 %v1403
  %v1691 = vunpack.c.l.bf16 %v1407
  %v1692 = vunpack.c.l.bf16 %v1411
  %v1693 = vunpack.c.l.bf16 %v1415
  %v1694 = vunpack.c.l.bf16 %v1419
  %v1695 = vunpack.c.l.bf16 %v1423
  %v1696 = vunpack.c.l.bf16 %v1427
  %v1697 = vunpack.c.l.bf16 %v1431
  %v1698 = vunpack.c.l.bf16 %v1435
  %v1699 = vunpack.c.l.bf16 %v1439
  %v1700 = vunpack.c.l.bf16 %v1443
  %v1701 = vunpack.c.l.bf16 %v1447
  %v1702 = vunpack.c.l.bf16 %v1451
  %v1703 = vunpack.c.l.bf16 %v1455
  %v1704 = vunpack.c.l.bf16 %v1459
  %v1705 = vunpack.c.l.bf16 %v1463
  %v1706 = vunpack.c.l.bf16 %v1467
  %v1707 = vunpack.c.l.bf16 %v1471
  %v1708 = vunpack.c.l.bf16 %v1475
  %v1709 = vunpack.c.l.bf16 %v1479
  %v1710 = vunpack.c.l.bf16 %v1483
  %v1711 = vunpack.c.l.bf16 %v1487
  %v1712 = vunpack.c.l.bf16 %v1491
  %v1713 = vunpack.c.l.bf16 %v1495
  %v1714 = vunpack.c.l.bf16 %v1499
  %v1715 = vunpack.c.l.bf16 %v1503
  %v1716 = vunpack.c.l.bf16 %v1507
  %v1717 = vunpack.c.l.bf16 %v1511
  %v1718 = vunpack.c.l.bf16 %v1515
  %v1719 = vunpack.c.l.bf16 %v1519
  %v1720 = vunpack.c.l.bf16 %v1523
  %v1721 = vunpack.c.l.bf16 %v1527
  %v1722 = vunpack.c.l.bf16 %v1531
  %v1723 = vunpack.c.l.bf16 %v1535
  %v1724 = vunpack.c.l.bf16 %v1539
  %v1725 = vunpack.c.l.bf16 %v1543
  %v1726 = vunpack.c.l.bf16 %v1547
  %v1727 = vunpack.c.l.bf16 %v1551
  %v1728 = vunpack.c.l.bf16 %v1555
  %v1729 = vunpack.c.l.bf16 %v1559
  %v1730 = vunpack.c.l.bf16 %v1563
  %v1731 = vunpack.c.l.bf16 %v1567
  %v1732 = vunpack.c.l.bf16 %v1571
  %v1733 = vunpack.c.l.bf16 %v1575
  %v1734 = vunpack.c.l.bf16 %v1579
  %v1735 = vunpack.c.l.bf16 %v1583
  %v1736 = vunpack.c.l.bf16 %v1587
  %v1737 = vunpack.c.l.bf16 %v1591
  %v1738 = vunpack.c.l.bf16 %v1595
  %v1739 = vunpack.c.l.bf16 %v1599
  %v1740 = vunpack.c.l.bf16 %v1603
  %v1741 = vunpack.c.l.bf16 %v1607
  %v1742 = vunpack.c.l.bf16 %v1611
  %v1743 = vunpack.c.l.bf16 %v1615
  %v1744 = vunpack.c.l.bf16 %v138
  %v1745 = vunpack.c.h.bf16 %v138
  %v1746 = vunpack.c.l.bf16 %v139
  %v1747 = vunpack.c.h.bf16 %v139
  %v1748 = vunpack.c.l.bf16 %v140
  %v1749 = vunpack.c.h.bf16 %v140
  %v1750 = vunpack.c.l.bf16 %v141
  %v1751 = vunpack.c.h.bf16 %v141
  %v1752 = vunpack.c.l.bf16 %v142
  %v1753 = vunpack.c.h.bf16 %v142
  %v1754 = vunpack.c.l.bf16 %v143
  %v1755 = vunpack.c.h.bf16 %v143
  %v1756 = vunpack.c.l.bf16 %v144
  %v1757 = vunpack.c.h.bf16 %v144
  %v1758 = vunpack.c.l.bf16 %v145
  %v1759 = vunpack.c.h.bf16 %v145
  %v1760 = vmul.f32 %v1616, %v1744
  %v1761 = vmul.f32 %v1617, %v1745
  %v1762 = vmul.f32 %v1616, %v1746
  %v1763 = vmul.f32 %v1617, %v1747
  %v1764 = vmul.f32 %v1616, %v1748
  %v1765 = vmul.f32 %v1617, %v1749
  %v1766 = vmul.f32 %v1616, %v1750
  %v1767 = vmul.f32 %v1617, %v1751
  %v1768 = vmul.f32 %v1616, %v1752
  %v1769 = vmul.f32 %v1617, %v1753
  %v1770 = vmul.f32 %v1616, %v1754
  %v1771 = vmul.f32 %v1617, %v1755
  %v1772 = vmul.f32 %v1616, %v1756
  %v1773 = vmul.f32 %v1617, %v1757
  %v1774 = vmul.f32 %v1616, %v1758
  %v1775 = vmul.f32 %v1617, %v1759
  %v1776 = vmul.f32 %v1618, %v1744
  %v1777 = vmul.f32 %v1619, %v1745
  %v1778 = vmul.f32 %v1618, %v1746
  %v1779 = vmul.f32 %v1619, %v1747
  %v1780 = vmul.f32 %v1618, %v1748
  %v1781 = vmul.f32 %v1619, %v1749
  %v1782 = vmul.f32 %v1618, %v1750
  %v1783 = vmul.f32 %v1619, %v1751
  %v1784 = vmul.f32 %v1618, %v1752
  %v1785 = vmul.f32 %v1619, %v1753
  %v1786 = vmul.f32 %v1618, %v1754
  %v1787 = vmul.f32 %v1619, %v1755
  %v1788 = vmul.f32 %v1618, %v1756
  %v1789 = vmul.f32 %v1619, %v1757
  %v1790 = vmul.f32 %v1618, %v1758
  %v1791 = vmul.f32 %v1619, %v1759
  %v1792 = vmul.f32 %v1620, %v1744
  %v1793 = vmul.f32 %v1621, %v1745
  %v1794 = vmul.f32 %v1620, %v1746
  %v1795 = vmul.f32 %v1621, %v1747
  %v1796 = vmul.f32 %v1620, %v1748
  %v1797 = vmul.f32 %v1621, %v1749
  %v1798 = vmul.f32 %v1620, %v1750
  %v1799 = vmul.f32 %v1621, %v1751
  %v1800 = vmul.f32 %v1620, %v1752
  %v1801 = vmul.f32 %v1621, %v1753
  %v1802 = vmul.f32 %v1620, %v1754
  %v1803 = vmul.f32 %v1621, %v1755
  %v1804 = vmul.f32 %v1620, %v1756
  %v1805 = vmul.f32 %v1621, %v1757
  %v1806 = vmul.f32 %v1620, %v1758
  %v1807 = vmul.f32 %v1621, %v1759
  %v1808 = vmul.f32 %v1622, %v1744
  %v1809 = vmul.f32 %v1623, %v1745
  %v1810 = vmul.f32 %v1622, %v1746
  %v1811 = vmul.f32 %v1623, %v1747
  %v1812 = vmul.f32 %v1622, %v1748
  %v1813 = vmul.f32 %v1623, %v1749
  %v1814 = vmul.f32 %v1622, %v1750
  %v1815 = vmul.f32 %v1623, %v1751
  %v1816 = vmul.f32 %v1622, %v1752
  %v1817 = vmul.f32 %v1623, %v1753
  %v1818 = vmul.f32 %v1622, %v1754
  %v1819 = vmul.f32 %v1623, %v1755
  %v1820 = vmul.f32 %v1622, %v1756
  %v1821 = vmul.f32 %v1623, %v1757
  %v1822 = vmul.f32 %v1622, %v1758
  %v1823 = vmul.f32 %v1623, %v1759
  %v1824 = vmul.f32 %v1624, %v1744
  %v1825 = vmul.f32 %v1625, %v1745
  %v1826 = vmul.f32 %v1624, %v1746
  %v1827 = vmul.f32 %v1625, %v1747
  %v1828 = vmul.f32 %v1624, %v1748
  %v1829 = vmul.f32 %v1625, %v1749
  %v1830 = vmul.f32 %v1624, %v1750
  %v1831 = vmul.f32 %v1625, %v1751
  %v1832 = vmul.f32 %v1624, %v1752
  %v1833 = vmul.f32 %v1625, %v1753
  %v1834 = vmul.f32 %v1624, %v1754
  %v1835 = vmul.f32 %v1625, %v1755
  %v1836 = vmul.f32 %v1624, %v1756
  %v1837 = vmul.f32 %v1625, %v1757
  %v1838 = vmul.f32 %v1624, %v1758
  %v1839 = vmul.f32 %v1625, %v1759
  %v1840 = vmul.f32 %v1626, %v1744
  %v1841 = vmul.f32 %v1627, %v1745
  %v1842 = vmul.f32 %v1626, %v1746
  %v1843 = vmul.f32 %v1627, %v1747
  %v1844 = vmul.f32 %v1626, %v1748
  %v1845 = vmul.f32 %v1627, %v1749
  %v1846 = vmul.f32 %v1626, %v1750
  %v1847 = vmul.f32 %v1627, %v1751
  %v1848 = vmul.f32 %v1626, %v1752
  %v1849 = vmul.f32 %v1627, %v1753
  %v1850 = vmul.f32 %v1626, %v1754
  %v1851 = vmul.f32 %v1627, %v1755
  %v1852 = vmul.f32 %v1626, %v1756
  %v1853 = vmul.f32 %v1627, %v1757
  %v1854 = vmul.f32 %v1626, %v1758
  %v1855 = vmul.f32 %v1627, %v1759
  %v1856 = vmul.f32 %v1628, %v1744
  %v1857 = vmul.f32 %v1629, %v1745
  %v1858 = vmul.f32 %v1628, %v1746
  %v1859 = vmul.f32 %v1629, %v1747
  %v1860 = vmul.f32 %v1628, %v1748
  %v1861 = vmul.f32 %v1629, %v1749
  %v1862 = vmul.f32 %v1628, %v1750
  %v1863 = vmul.f32 %v1629, %v1751
  %v1864 = vmul.f32 %v1628, %v1752
  %v1865 = vmul.f32 %v1629, %v1753
  %v1866 = vmul.f32 %v1628, %v1754
  %v1867 = vmul.f32 %v1629, %v1755
  %v1868 = vmul.f32 %v1628, %v1756
  %v1869 = vmul.f32 %v1629, %v1757
  %v1870 = vmul.f32 %v1628, %v1758
  %v1871 = vmul.f32 %v1629, %v1759
  %v1872 = vmul.f32 %v1630, %v1744
  %v1873 = vmul.f32 %v1631, %v1745
  %v1874 = vmul.f32 %v1630, %v1746
  %v1875 = vmul.f32 %v1631, %v1747
  %v1876 = vmul.f32 %v1630, %v1748
  %v1877 = vmul.f32 %v1631, %v1749
  %v1878 = vmul.f32 %v1630, %v1750
  %v1879 = vmul.f32 %v1631, %v1751
  %v1880 = vmul.f32 %v1630, %v1752
  %v1881 = vmul.f32 %v1631, %v1753
  %v1882 = vmul.f32 %v1630, %v1754
  %v1883 = vmul.f32 %v1631, %v1755
  %v1884 = vmul.f32 %v1630, %v1756
  %v1885 = vmul.f32 %v1631, %v1757
  %v1886 = vmul.f32 %v1630, %v1758
  %v1887 = vmul.f32 %v1631, %v1759
  %v1888 = vmul.f32 %v1632, %v1744
  %v1889 = vmul.f32 %v1633, %v1745
  %v1890 = vmul.f32 %v1632, %v1746
  %v1891 = vmul.f32 %v1633, %v1747
  %v1892 = vmul.f32 %v1632, %v1748
  %v1893 = vmul.f32 %v1633, %v1749
  %v1894 = vmul.f32 %v1632, %v1750
  %v1895 = vmul.f32 %v1633, %v1751
  %v1896 = vmul.f32 %v1632, %v1752
  %v1897 = vmul.f32 %v1633, %v1753
  %v1898 = vmul.f32 %v1632, %v1754
  %v1899 = vmul.f32 %v1633, %v1755
  %v1900 = vmul.f32 %v1632, %v1756
  %v1901 = vmul.f32 %v1633, %v1757
  %v1902 = vmul.f32 %v1632, %v1758
  %v1903 = vmul.f32 %v1633, %v1759
  %v1904 = vmul.f32 %v1634, %v1744
  %v1905 = vmul.f32 %v1635, %v1745
  %v1906 = vmul.f32 %v1634, %v1746
  %v1907 = vmul.f32 %v1635, %v1747
  %v1908 = vmul.f32 %v1634, %v1748
  %v1909 = vmul.f32 %v1635, %v1749
  %v1910 = vmul.f32 %v1634, %v1750
  %v1911 = vmul.f32 %v1635, %v1751
  %v1912 = vmul.f32 %v1634, %v1752
  %v1913 = vmul.f32 %v1635, %v1753
  %v1914 = vmul.f32 %v1634, %v1754
  %v1915 = vmul.f32 %v1635, %v1755
  %v1916 = vmul.f32 %v1634, %v1756
  %v1917 = vmul.f32 %v1635, %v1757
  %v1918 = vmul.f32 %v1634, %v1758
  %v1919 = vmul.f32 %v1635, %v1759
  %v1920 = vmul.f32 %v1636, %v1744
  %v1921 = vmul.f32 %v1637, %v1745
  %v1922 = vmul.f32 %v1636, %v1746
  %v1923 = vmul.f32 %v1637, %v1747
  %v1924 = vmul.f32 %v1636, %v1748
  %v1925 = vmul.f32 %v1637, %v1749
  %v1926 = vmul.f32 %v1636, %v1750
  %v1927 = vmul.f32 %v1637, %v1751
  %v1928 = vmul.f32 %v1636, %v1752
  %v1929 = vmul.f32 %v1637, %v1753
  %v1930 = vmul.f32 %v1636, %v1754
  %v1931 = vmul.f32 %v1637, %v1755
  %v1932 = vmul.f32 %v1636, %v1756
  %v1933 = vmul.f32 %v1637, %v1757
  %v1934 = vmul.f32 %v1636, %v1758
  %v1935 = vmul.f32 %v1637, %v1759
  %v1936 = vmul.f32 %v1638, %v1744
  %v1937 = vmul.f32 %v1639, %v1745
  %v1938 = vmul.f32 %v1638, %v1746
  %v1939 = vmul.f32 %v1639, %v1747
  %v1940 = vmul.f32 %v1638, %v1748
  %v1941 = vmul.f32 %v1639, %v1749
  %v1942 = vmul.f32 %v1638, %v1750
  %v1943 = vmul.f32 %v1639, %v1751
  %v1944 = vmul.f32 %v1638, %v1752
  %v1945 = vmul.f32 %v1639, %v1753
  %v1946 = vmul.f32 %v1638, %v1754
  %v1947 = vmul.f32 %v1639, %v1755
  %v1948 = vmul.f32 %v1638, %v1756
  %v1949 = vmul.f32 %v1639, %v1757
  %v1950 = vmul.f32 %v1638, %v1758
  %v1951 = vmul.f32 %v1639, %v1759
  %v1952 = vmul.f32 %v1640, %v1744
  %v1953 = vmul.f32 %v1641, %v1745
  %v1954 = vmul.f32 %v1640, %v1746
  %v1955 = vmul.f32 %v1641, %v1747
  %v1956 = vmul.f32 %v1640, %v1748
  %v1957 = vmul.f32 %v1641, %v1749
  %v1958 = vmul.f32 %v1640, %v1750
  %v1959 = vmul.f32 %v1641, %v1751
  %v1960 = vmul.f32 %v1640, %v1752
  %v1961 = vmul.f32 %v1641, %v1753
  %v1962 = vmul.f32 %v1640, %v1754
  %v1963 = vmul.f32 %v1641, %v1755
  %v1964 = vmul.f32 %v1640, %v1756
  %v1965 = vmul.f32 %v1641, %v1757
  %v1966 = vmul.f32 %v1640, %v1758
  %v1967 = vmul.f32 %v1641, %v1759
  %v1968 = vmul.f32 %v1642, %v1744
  %v1969 = vmul.f32 %v1643, %v1745
  %v1970 = vmul.f32 %v1642, %v1746
  %v1971 = vmul.f32 %v1643, %v1747
  %v1972 = vmul.f32 %v1642, %v1748
  %v1973 = vmul.f32 %v1643, %v1749
  %v1974 = vmul.f32 %v1642, %v1750
  %v1975 = vmul.f32 %v1643, %v1751
  %v1976 = vmul.f32 %v1642, %v1752
  %v1977 = vmul.f32 %v1643, %v1753
  %v1978 = vmul.f32 %v1642, %v1754
  %v1979 = vmul.f32 %v1643, %v1755
  %v1980 = vmul.f32 %v1642, %v1756
  %v1981 = vmul.f32 %v1643, %v1757
  %v1982 = vmul.f32 %v1642, %v1758
  %v1983 = vmul.f32 %v1643, %v1759
  %v1984 = vmul.f32 %v1644, %v1744
  %v1985 = vmul.f32 %v1645, %v1745
  %v1986 = vmul.f32 %v1644, %v1746
  %v1987 = vmul.f32 %v1645, %v1747
  %v1988 = vmul.f32 %v1644, %v1748
  %v1989 = vmul.f32 %v1645, %v1749
  %v1990 = vmul.f32 %v1644, %v1750
  %v1991 = vmul.f32 %v1645, %v1751
  %v1992 = vmul.f32 %v1644, %v1752
  %v1993 = vmul.f32 %v1645, %v1753
  %v1994 = vmul.f32 %v1644, %v1754
  %v1995 = vmul.f32 %v1645, %v1755
  %v1996 = vmul.f32 %v1644, %v1756
  %v1997 = vmul.f32 %v1645, %v1757
  %v1998 = vmul.f32 %v1644, %v1758
  %v1999 = vmul.f32 %v1645, %v1759
  %v2000 = vmul.f32 %v1646, %v1744
  %v2001 = vmul.f32 %v1647, %v1745
  %v2002 = vmul.f32 %v1646, %v1746
  %v2003 = vmul.f32 %v1647, %v1747
  %v2004 = vmul.f32 %v1646, %v1748
  %v2005 = vmul.f32 %v1647, %v1749
  %v2006 = vmul.f32 %v1646, %v1750
  %v2007 = vmul.f32 %v1647, %v1751
  %v2008 = vmul.f32 %v1646, %v1752
  %v2009 = vmul.f32 %v1647, %v1753
  %v2010 = vmul.f32 %v1646, %v1754
  %v2011 = vmul.f32 %v1647, %v1755
  %v2012 = vmul.f32 %v1646, %v1756
  %v2013 = vmul.f32 %v1647, %v1757
  %v2014 = vmul.f32 %v1646, %v1758
  %v2015 = vmul.f32 %v1647, %v1759
  %v2016 = vmul.f32 %v1648, %v1744
  %v2017 = vmul.f32 %v1649, %v1745
  %v2018 = vmul.f32 %v1648, %v1746
  %v2019 = vmul.f32 %v1649, %v1747
  %v2020 = vmul.f32 %v1648, %v1748
  %v2021 = vmul.f32 %v1649, %v1749
  %v2022 = vmul.f32 %v1648, %v1750
  %v2023 = vmul.f32 %v1649, %v1751
  %v2024 = vmul.f32 %v1648, %v1752
  %v2025 = vmul.f32 %v1649, %v1753
  %v2026 = vmul.f32 %v1648, %v1754
  %v2027 = vmul.f32 %v1649, %v1755
  %v2028 = vmul.f32 %v1648, %v1756
  %v2029 = vmul.f32 %v1649, %v1757
  %v2030 = vmul.f32 %v1648, %v1758
  %v2031 = vmul.f32 %v1649, %v1759
  %v2032 = vmul.f32 %v1650, %v1744
  %v2033 = vmul.f32 %v1651, %v1745
  %v2034 = vmul.f32 %v1650, %v1746
  %v2035 = vmul.f32 %v1651, %v1747
  %v2036 = vmul.f32 %v1650, %v1748
  %v2037 = vmul.f32 %v1651, %v1749
  %v2038 = vmul.f32 %v1650, %v1750
  %v2039 = vmul.f32 %v1651, %v1751
  %v2040 = vmul.f32 %v1650, %v1752
  %v2041 = vmul.f32 %v1651, %v1753
  %v2042 = vmul.f32 %v1650, %v1754
  %v2043 = vmul.f32 %v1651, %v1755
  %v2044 = vmul.f32 %v1650, %v1756
  %v2045 = vmul.f32 %v1651, %v1757
  %v2046 = vmul.f32 %v1650, %v1758
  %v2047 = vmul.f32 %v1651, %v1759
  %v2048 = vmul.f32 %v1652, %v1744
  %v2049 = vmul.f32 %v1653, %v1745
  %v2050 = vmul.f32 %v1652, %v1746
  %v2051 = vmul.f32 %v1653, %v1747
  %v2052 = vmul.f32 %v1652, %v1748
  %v2053 = vmul.f32 %v1653, %v1749
  %v2054 = vmul.f32 %v1652, %v1750
  %v2055 = vmul.f32 %v1653, %v1751
  %v2056 = vmul.f32 %v1652, %v1752
  %v2057 = vmul.f32 %v1653, %v1753
  %v2058 = vmul.f32 %v1652, %v1754
  %v2059 = vmul.f32 %v1653, %v1755
  %v2060 = vmul.f32 %v1652, %v1756
  %v2061 = vmul.f32 %v1653, %v1757
  %v2062 = vmul.f32 %v1652, %v1758
  %v2063 = vmul.f32 %v1653, %v1759
  %v2064 = vmul.f32 %v1654, %v1744
  %v2065 = vmul.f32 %v1655, %v1745
  %v2066 = vmul.f32 %v1654, %v1746
  %v2067 = vmul.f32 %v1655, %v1747
  %v2068 = vmul.f32 %v1654, %v1748
  %v2069 = vmul.f32 %v1655, %v1749
  %v2070 = vmul.f32 %v1654, %v1750
  %v2071 = vmul.f32 %v1655, %v1751
  %v2072 = vmul.f32 %v1654, %v1752
  %v2073 = vmul.f32 %v1655, %v1753
  %v2074 = vmul.f32 %v1654, %v1754
  %v2075 = vmul.f32 %v1655, %v1755
  %v2076 = vmul.f32 %v1654, %v1756
  %v2077 = vmul.f32 %v1655, %v1757
  %v2078 = vmul.f32 %v1654, %v1758
  %v2079 = vmul.f32 %v1655, %v1759
  %v2080 = vmul.f32 %v1656, %v1744
  %v2081 = vmul.f32 %v1657, %v1745
  %v2082 = vmul.f32 %v1656, %v1746
  %v2083 = vmul.f32 %v1657, %v1747
  %v2084 = vmul.f32 %v1656, %v1748
  %v2085 = vmul.f32 %v1657, %v1749
  %v2086 = vmul.f32 %v1656, %v1750
  %v2087 = vmul.f32 %v1657, %v1751
  %v2088 = vmul.f32 %v1656, %v1752
  %v2089 = vmul.f32 %v1657, %v1753
  %v2090 = vmul.f32 %v1656, %v1754
  %v2091 = vmul.f32 %v1657, %v1755
  %v2092 = vmul.f32 %v1656, %v1756
  %v2093 = vmul.f32 %v1657, %v1757
  %v2094 = vmul.f32 %v1656, %v1758
  %v2095 = vmul.f32 %v1657, %v1759
  %v2096 = vmul.f32 %v1658, %v1744
  %v2097 = vmul.f32 %v1659, %v1745
  %v2098 = vmul.f32 %v1658, %v1746
  %v2099 = vmul.f32 %v1659, %v1747
  %v2100 = vmul.f32 %v1658, %v1748
  %v2101 = vmul.f32 %v1659, %v1749
  %v2102 = vmul.f32 %v1658, %v1750
  %v2103 = vmul.f32 %v1659, %v1751
  %v2104 = vmul.f32 %v1658, %v1752
  %v2105 = vmul.f32 %v1659, %v1753
  %v2106 = vmul.f32 %v1658, %v1754
  %v2107 = vmul.f32 %v1659, %v1755
  %v2108 = vmul.f32 %v1658, %v1756
  %v2109 = vmul.f32 %v1659, %v1757
  %v2110 = vmul.f32 %v1658, %v1758
  %v2111 = vmul.f32 %v1659, %v1759
  %v2112 = vmul.f32 %v1660, %v1744
  %v2113 = vmul.f32 %v1661, %v1745
  %v2114 = vmul.f32 %v1660, %v1746
  %v2115 = vmul.f32 %v1661, %v1747
  %v2116 = vmul.f32 %v1660, %v1748
  %v2117 = vmul.f32 %v1661, %v1749
  %v2118 = vmul.f32 %v1660, %v1750
  %v2119 = vmul.f32 %v1661, %v1751
  %v2120 = vmul.f32 %v1660, %v1752
  %v2121 = vmul.f32 %v1661, %v1753
  %v2122 = vmul.f32 %v1660, %v1754
  %v2123 = vmul.f32 %v1661, %v1755
  %v2124 = vmul.f32 %v1660, %v1756
  %v2125 = vmul.f32 %v1661, %v1757
  %v2126 = vmul.f32 %v1660, %v1758
  %v2127 = vmul.f32 %v1661, %v1759
  %v2128 = vmul.f32 %v1662, %v1744
  %v2129 = vmul.f32 %v1663, %v1745
  %v2130 = vmul.f32 %v1662, %v1746
  %v2131 = vmul.f32 %v1663, %v1747
  %v2132 = vmul.f32 %v1662, %v1748
  %v2133 = vmul.f32 %v1663, %v1749
  %v2134 = vmul.f32 %v1662, %v1750
  %v2135 = vmul.f32 %v1663, %v1751
  %v2136 = vmul.f32 %v1662, %v1752
  %v2137 = vmul.f32 %v1663, %v1753
  %v2138 = vmul.f32 %v1662, %v1754
  %v2139 = vmul.f32 %v1663, %v1755
  %v2140 = vmul.f32 %v1662, %v1756
  %v2141 = vmul.f32 %v1663, %v1757
  %v2142 = vmul.f32 %v1662, %v1758
  %v2143 = vmul.f32 %v1663, %v1759
  %v2144 = vmul.f32 %v1664, %v1744
  %v2145 = vmul.f32 %v1665, %v1745
  %v2146 = vmul.f32 %v1664, %v1746
  %v2147 = vmul.f32 %v1665, %v1747
  %v2148 = vmul.f32 %v1664, %v1748
  %v2149 = vmul.f32 %v1665, %v1749
  %v2150 = vmul.f32 %v1664, %v1750
  %v2151 = vmul.f32 %v1665, %v1751
  %v2152 = vmul.f32 %v1664, %v1752
  %v2153 = vmul.f32 %v1665, %v1753
  %v2154 = vmul.f32 %v1664, %v1754
  %v2155 = vmul.f32 %v1665, %v1755
  %v2156 = vmul.f32 %v1664, %v1756
  %v2157 = vmul.f32 %v1665, %v1757
  %v2158 = vmul.f32 %v1664, %v1758
  %v2159 = vmul.f32 %v1665, %v1759
  %v2160 = vmul.f32 %v1666, %v1744
  %v2161 = vmul.f32 %v1667, %v1745
  %v2162 = vmul.f32 %v1666, %v1746
  %v2163 = vmul.f32 %v1667, %v1747
  %v2164 = vmul.f32 %v1666, %v1748
  %v2165 = vmul.f32 %v1667, %v1749
  %v2166 = vmul.f32 %v1666, %v1750
  %v2167 = vmul.f32 %v1667, %v1751
  %v2168 = vmul.f32 %v1666, %v1752
  %v2169 = vmul.f32 %v1667, %v1753
  %v2170 = vmul.f32 %v1666, %v1754
  %v2171 = vmul.f32 %v1667, %v1755
  %v2172 = vmul.f32 %v1666, %v1756
  %v2173 = vmul.f32 %v1667, %v1757
  %v2174 = vmul.f32 %v1666, %v1758
  %v2175 = vmul.f32 %v1667, %v1759
  %v2176 = vmul.f32 %v1668, %v1744
  %v2177 = vmul.f32 %v1669, %v1745
  %v2178 = vmul.f32 %v1668, %v1746
  %v2179 = vmul.f32 %v1669, %v1747
  %v2180 = vmul.f32 %v1668, %v1748
  %v2181 = vmul.f32 %v1669, %v1749
  %v2182 = vmul.f32 %v1668, %v1750
  %v2183 = vmul.f32 %v1669, %v1751
  %v2184 = vmul.f32 %v1668, %v1752
  %v2185 = vmul.f32 %v1669, %v1753
  %v2186 = vmul.f32 %v1668, %v1754
  %v2187 = vmul.f32 %v1669, %v1755
  %v2188 = vmul.f32 %v1668, %v1756
  %v2189 = vmul.f32 %v1669, %v1757
  %v2190 = vmul.f32 %v1668, %v1758
  %v2191 = vmul.f32 %v1669, %v1759
  %v2192 = vmul.f32 %v1670, %v1744
  %v2193 = vmul.f32 %v1671, %v1745
  %v2194 = vmul.f32 %v1670, %v1746
  %v2195 = vmul.f32 %v1671, %v1747
  %v2196 = vmul.f32 %v1670, %v1748
  %v2197 = vmul.f32 %v1671, %v1749
  %v2198 = vmul.f32 %v1670, %v1750
  %v2199 = vmul.f32 %v1671, %v1751
  %v2200 = vmul.f32 %v1670, %v1752
  %v2201 = vmul.f32 %v1671, %v1753
  %v2202 = vmul.f32 %v1670, %v1754
  %v2203 = vmul.f32 %v1671, %v1755
  %v2204 = vmul.f32 %v1670, %v1756
  %v2205 = vmul.f32 %v1671, %v1757
  %v2206 = vmul.f32 %v1670, %v1758
  %v2207 = vmul.f32 %v1671, %v1759
  %v2208 = vmul.f32 %v1672, %v1744
  %v2209 = vmul.f32 %v1673, %v1745
  %v2210 = vmul.f32 %v1672, %v1746
  %v2211 = vmul.f32 %v1673, %v1747
  %v2212 = vmul.f32 %v1672, %v1748
  %v2213 = vmul.f32 %v1673, %v1749
  %v2214 = vmul.f32 %v1672, %v1750
  %v2215 = vmul.f32 %v1673, %v1751
  %v2216 = vmul.f32 %v1672, %v1752
  %v2217 = vmul.f32 %v1673, %v1753
  %v2218 = vmul.f32 %v1672, %v1754
  %v2219 = vmul.f32 %v1673, %v1755
  %v2220 = vmul.f32 %v1672, %v1756
  %v2221 = vmul.f32 %v1673, %v1757
  %v2222 = vmul.f32 %v1672, %v1758
  %v2223 = vmul.f32 %v1673, %v1759
  %v2224 = vmul.f32 %v1674, %v1744
  %v2225 = vmul.f32 %v1675, %v1745
  %v2226 = vmul.f32 %v1674, %v1746
  %v2227 = vmul.f32 %v1675, %v1747
  %v2228 = vmul.f32 %v1674, %v1748
  %v2229 = vmul.f32 %v1675, %v1749
  %v2230 = vmul.f32 %v1674, %v1750
  %v2231 = vmul.f32 %v1675, %v1751
  %v2232 = vmul.f32 %v1674, %v1752
  %v2233 = vmul.f32 %v1675, %v1753
  %v2234 = vmul.f32 %v1674, %v1754
  %v2235 = vmul.f32 %v1675, %v1755
  %v2236 = vmul.f32 %v1674, %v1756
  %v2237 = vmul.f32 %v1675, %v1757
  %v2238 = vmul.f32 %v1674, %v1758
  %v2239 = vmul.f32 %v1675, %v1759
  %v2240 = vmul.f32 %v1676, %v1744
  %v2241 = vmul.f32 %v1677, %v1745
  %v2242 = vmul.f32 %v1676, %v1746
  %v2243 = vmul.f32 %v1677, %v1747
  %v2244 = vmul.f32 %v1676, %v1748
  %v2245 = vmul.f32 %v1677, %v1749
  %v2246 = vmul.f32 %v1676, %v1750
  %v2247 = vmul.f32 %v1677, %v1751
  %v2248 = vmul.f32 %v1676, %v1752
  %v2249 = vmul.f32 %v1677, %v1753
  %v2250 = vmul.f32 %v1676, %v1754
  %v2251 = vmul.f32 %v1677, %v1755
  %v2252 = vmul.f32 %v1676, %v1756
  %v2253 = vmul.f32 %v1677, %v1757
  %v2254 = vmul.f32 %v1676, %v1758
  %v2255 = vmul.f32 %v1677, %v1759
  %v2256 = vmul.f32 %v1678, %v1744
  %v2257 = vmul.f32 %v1679, %v1745
  %v2258 = vmul.f32 %v1678, %v1746
  %v2259 = vmul.f32 %v1679, %v1747
  %v2260 = vmul.f32 %v1678, %v1748
  %v2261 = vmul.f32 %v1679, %v1749
  %v2262 = vmul.f32 %v1678, %v1750
  %v2263 = vmul.f32 %v1679, %v1751
  %v2264 = vmul.f32 %v1678, %v1752
  %v2265 = vmul.f32 %v1679, %v1753
  %v2266 = vmul.f32 %v1678, %v1754
  %v2267 = vmul.f32 %v1679, %v1755
  %v2268 = vmul.f32 %v1678, %v1756
  %v2269 = vmul.f32 %v1679, %v1757
  %v2270 = vmul.f32 %v1678, %v1758
  %v2271 = vmul.f32 %v1679, %v1759
  %v2272 = vmul.f32 %v1680, %v1744
  %v2273 = vmul.f32 %v1681, %v1745
  %v2274 = vmul.f32 %v1680, %v1746
  %v2275 = vmul.f32 %v1681, %v1747
  %v2276 = vmul.f32 %v1680, %v1748
  %v2277 = vmul.f32 %v1681, %v1749
  %v2278 = vmul.f32 %v1680, %v1750
  %v2279 = vmul.f32 %v1681, %v1751
  %v2280 = vmul.f32 %v1680, %v1752
  %v2281 = vmul.f32 %v1681, %v1753
  %v2282 = vmul.f32 %v1680, %v1754
  %v2283 = vmul.f32 %v1681, %v1755
  %v2284 = vmul.f32 %v1680, %v1756
  %v2285 = vmul.f32 %v1681, %v1757
  %v2286 = vmul.f32 %v1680, %v1758
  %v2287 = vmul.f32 %v1681, %v1759
  %v2288 = vmul.f32 %v1682, %v1744
  %v2289 = vmul.f32 %v1683, %v1745
  %v2290 = vmul.f32 %v1682, %v1746
  %v2291 = vmul.f32 %v1683, %v1747
  %v2292 = vmul.f32 %v1682, %v1748
  %v2293 = vmul.f32 %v1683, %v1749
  %v2294 = vmul.f32 %v1682, %v1750
  %v2295 = vmul.f32 %v1683, %v1751
  %v2296 = vmul.f32 %v1682, %v1752
  %v2297 = vmul.f32 %v1683, %v1753
  %v2298 = vmul.f32 %v1682, %v1754
  %v2299 = vmul.f32 %v1683, %v1755
  %v2300 = vmul.f32 %v1682, %v1756
  %v2301 = vmul.f32 %v1683, %v1757
  %v2302 = vmul.f32 %v1682, %v1758
  %v2303 = vmul.f32 %v1683, %v1759
  %v2304 = vmul.f32 %v1684, %v1744
  %v2305 = vmul.f32 %v1685, %v1745
  %v2306 = vmul.f32 %v1684, %v1746
  %v2307 = vmul.f32 %v1685, %v1747
  %v2308 = vmul.f32 %v1684, %v1748
  %v2309 = vmul.f32 %v1685, %v1749
  %v2310 = vmul.f32 %v1684, %v1750
  %v2311 = vmul.f32 %v1685, %v1751
  %v2312 = vmul.f32 %v1684, %v1752
  %v2313 = vmul.f32 %v1685, %v1753
  %v2314 = vmul.f32 %v1684, %v1754
  %v2315 = vmul.f32 %v1685, %v1755
  %v2316 = vmul.f32 %v1684, %v1756
  %v2317 = vmul.f32 %v1685, %v1757
  %v2318 = vmul.f32 %v1684, %v1758
  %v2319 = vmul.f32 %v1685, %v1759
  %v2320 = vmul.f32 %v1686, %v1744
  %v2321 = vmul.f32 %v1687, %v1745
  %v2322 = vmul.f32 %v1686, %v1746
  %v2323 = vmul.f32 %v1687, %v1747
  %v2324 = vmul.f32 %v1686, %v1748
  %v2325 = vmul.f32 %v1687, %v1749
  %v2326 = vmul.f32 %v1686, %v1750
  %v2327 = vmul.f32 %v1687, %v1751
  %v2328 = vmul.f32 %v1686, %v1752
  %v2329 = vmul.f32 %v1687, %v1753
  %v2330 = vmul.f32 %v1686, %v1754
  %v2331 = vmul.f32 %v1687, %v1755
  %v2332 = vmul.f32 %v1686, %v1756
  %v2333 = vmul.f32 %v1687, %v1757
  %v2334 = vmul.f32 %v1686, %v1758
  %v2335 = vmul.f32 %v1687, %v1759
  %v2336 = vmul.f32 %v1688, %v1744
  %v2337 = vmul.f32 %v1689, %v1745
  %v2338 = vmul.f32 %v1688, %v1746
  %v2339 = vmul.f32 %v1689, %v1747
  %v2340 = vmul.f32 %v1688, %v1748
  %v2341 = vmul.f32 %v1689, %v1749
  %v2342 = vmul.f32 %v1688, %v1750
  %v2343 = vmul.f32 %v1689, %v1751
  %v2344 = vmul.f32 %v1688, %v1752
  %v2345 = vmul.f32 %v1689, %v1753
  %v2346 = vmul.f32 %v1688, %v1754
  %v2347 = vmul.f32 %v1689, %v1755
  %v2348 = vmul.f32 %v1688, %v1756
  %v2349 = vmul.f32 %v1689, %v1757
  %v2350 = vmul.f32 %v1688, %v1758
  %v2351 = vmul.f32 %v1689, %v1759
  %v2352 = vmul.f32 %v1690, %v1744
  %v2353 = vmul.f32 %v1691, %v1745
  %v2354 = vmul.f32 %v1690, %v1746
  %v2355 = vmul.f32 %v1691, %v1747
  %v2356 = vmul.f32 %v1690, %v1748
  %v2357 = vmul.f32 %v1691, %v1749
  %v2358 = vmul.f32 %v1690, %v1750
  %v2359 = vmul.f32 %v1691, %v1751
  %v2360 = vmul.f32 %v1690, %v1752
  %v2361 = vmul.f32 %v1691, %v1753
  %v2362 = vmul.f32 %v1690, %v1754
  %v2363 = vmul.f32 %v1691, %v1755
  %v2364 = vmul.f32 %v1690, %v1756
  %v2365 = vmul.f32 %v1691, %v1757
  %v2366 = vmul.f32 %v1690, %v1758
  %v2367 = vmul.f32 %v1691, %v1759
  %v2368 = vmul.f32 %v1692, %v1744
  %v2369 = vmul.f32 %v1693, %v1745
  %v2370 = vmul.f32 %v1692, %v1746
  %v2371 = vmul.f32 %v1693, %v1747
  %v2372 = vmul.f32 %v1692, %v1748
  %v2373 = vmul.f32 %v1693, %v1749
  %v2374 = vmul.f32 %v1692, %v1750
  %v2375 = vmul.f32 %v1693, %v1751
  %v2376 = vmul.f32 %v1692, %v1752
  %v2377 = vmul.f32 %v1693, %v1753
  %v2378 = vmul.f32 %v1692, %v1754
  %v2379 = vmul.f32 %v1693, %v1755
  %v2380 = vmul.f32 %v1692, %v1756
  %v2381 = vmul.f32 %v1693, %v1757
  %v2382 = vmul.f32 %v1692, %v1758
  %v2383 = vmul.f32 %v1693, %v1759
  %v2384 = vmul.f32 %v1694, %v1744
  %v2385 = vmul.f32 %v1695, %v1745
  %v2386 = vmul.f32 %v1694, %v1746
  %v2387 = vmul.f32 %v1695, %v1747
  %v2388 = vmul.f32 %v1694, %v1748
  %v2389 = vmul.f32 %v1695, %v1749
  %v2390 = vmul.f32 %v1694, %v1750
  %v2391 = vmul.f32 %v1695, %v1751
  %v2392 = vmul.f32 %v1694, %v1752
  %v2393 = vmul.f32 %v1695, %v1753
  %v2394 = vmul.f32 %v1694, %v1754
  %v2395 = vmul.f32 %v1695, %v1755
  %v2396 = vmul.f32 %v1694, %v1756
  %v2397 = vmul.f32 %v1695, %v1757
  %v2398 = vmul.f32 %v1694, %v1758
  %v2399 = vmul.f32 %v1695, %v1759
  %v2400 = vmul.f32 %v1696, %v1744
  %v2401 = vmul.f32 %v1697, %v1745
  %v2402 = vmul.f32 %v1696, %v1746
  %v2403 = vmul.f32 %v1697, %v1747
  %v2404 = vmul.f32 %v1696, %v1748
  %v2405 = vmul.f32 %v1697, %v1749
  %v2406 = vmul.f32 %v1696, %v1750
  %v2407 = vmul.f32 %v1697, %v1751
  %v2408 = vmul.f32 %v1696, %v1752
  %v2409 = vmul.f32 %v1697, %v1753
  %v2410 = vmul.f32 %v1696, %v1754
  %v2411 = vmul.f32 %v1697, %v1755
  %v2412 = vmul.f32 %v1696, %v1756
  %v2413 = vmul.f32 %v1697, %v1757
  %v2414 = vmul.f32 %v1696, %v1758
  %v2415 = vmul.f32 %v1697, %v1759
  %v2416 = vmul.f32 %v1698, %v1744
  %v2417 = vmul.f32 %v1699, %v1745
  %v2418 = vmul.f32 %v1698, %v1746
  %v2419 = vmul.f32 %v1699, %v1747
  %v2420 = vmul.f32 %v1698, %v1748
  %v2421 = vmul.f32 %v1699, %v1749
  %v2422 = vmul.f32 %v1698, %v1750
  %v2423 = vmul.f32 %v1699, %v1751
  %v2424 = vmul.f32 %v1698, %v1752
  %v2425 = vmul.f32 %v1699, %v1753
  %v2426 = vmul.f32 %v1698, %v1754
  %v2427 = vmul.f32 %v1699, %v1755
  %v2428 = vmul.f32 %v1698, %v1756
  %v2429 = vmul.f32 %v1699, %v1757
  %v2430 = vmul.f32 %v1698, %v1758
  %v2431 = vmul.f32 %v1699, %v1759
  %v2432 = vmul.f32 %v1700, %v1744
  %v2433 = vmul.f32 %v1701, %v1745
  %v2434 = vmul.f32 %v1700, %v1746
  %v2435 = vmul.f32 %v1701, %v1747
  %v2436 = vmul.f32 %v1700, %v1748
  %v2437 = vmul.f32 %v1701, %v1749
  %v2438 = vmul.f32 %v1700, %v1750
  %v2439 = vmul.f32 %v1701, %v1751
  %v2440 = vmul.f32 %v1700, %v1752
  %v2441 = vmul.f32 %v1701, %v1753
  %v2442 = vmul.f32 %v1700, %v1754
  %v2443 = vmul.f32 %v1701, %v1755
  %v2444 = vmul.f32 %v1700, %v1756
  %v2445 = vmul.f32 %v1701, %v1757
  %v2446 = vmul.f32 %v1700, %v1758
  %v2447 = vmul.f32 %v1701, %v1759
  %v2448 = vmul.f32 %v1702, %v1744
  %v2449 = vmul.f32 %v1703, %v1745
  %v2450 = vmul.f32 %v1702, %v1746
  %v2451 = vmul.f32 %v1703, %v1747
  %v2452 = vmul.f32 %v1702, %v1748
  %v2453 = vmul.f32 %v1703, %v1749
  %v2454 = vmul.f32 %v1702, %v1750
  %v2455 = vmul.f32 %v1703, %v1751
  %v2456 = vmul.f32 %v1702, %v1752
  %v2457 = vmul.f32 %v1703, %v1753
  %v2458 = vmul.f32 %v1702, %v1754
  %v2459 = vmul.f32 %v1703, %v1755
  %v2460 = vmul.f32 %v1702, %v1756
  %v2461 = vmul.f32 %v1703, %v1757
  %v2462 = vmul.f32 %v1702, %v1758
  %v2463 = vmul.f32 %v1703, %v1759
  %v2464 = vmul.f32 %v1704, %v1744
  %v2465 = vmul.f32 %v1705, %v1745
  %v2466 = vmul.f32 %v1704, %v1746
  %v2467 = vmul.f32 %v1705, %v1747
  %v2468 = vmul.f32 %v1704, %v1748
  %v2469 = vmul.f32 %v1705, %v1749
  %v2470 = vmul.f32 %v1704, %v1750
  %v2471 = vmul.f32 %v1705, %v1751
  %v2472 = vmul.f32 %v1704, %v1752
  %v2473 = vmul.f32 %v1705, %v1753
  %v2474 = vmul.f32 %v1704, %v1754
  %v2475 = vmul.f32 %v1705, %v1755
  %v2476 = vmul.f32 %v1704, %v1756
  %v2477 = vmul.f32 %v1705, %v1757
  %v2478 = vmul.f32 %v1704, %v1758
  %v2479 = vmul.f32 %v1705, %v1759
  %v2480 = vmul.f32 %v1706, %v1744
  %v2481 = vmul.f32 %v1707, %v1745
  %v2482 = vmul.f32 %v1706, %v1746
  %v2483 = vmul.f32 %v1707, %v1747
  %v2484 = vmul.f32 %v1706, %v1748
  %v2485 = vmul.f32 %v1707, %v1749
  %v2486 = vmul.f32 %v1706, %v1750
  %v2487 = vmul.f32 %v1707, %v1751
  %v2488 = vmul.f32 %v1706, %v1752
  %v2489 = vmul.f32 %v1707, %v1753
  %v2490 = vmul.f32 %v1706, %v1754
  %v2491 = vmul.f32 %v1707, %v1755
  %v2492 = vmul.f32 %v1706, %v1756
  %v2493 = vmul.f32 %v1707, %v1757
  %v2494 = vmul.f32 %v1706, %v1758
  %v2495 = vmul.f32 %v1707, %v1759
  %v2496 = vmul.f32 %v1708, %v1744
  %v2497 = vmul.f32 %v1709, %v1745
  %v2498 = vmul.f32 %v1708, %v1746
  %v2499 = vmul.f32 %v1709, %v1747
  %v2500 = vmul.f32 %v1708, %v1748
  %v2501 = vmul.f32 %v1709, %v1749
  %v2502 = vmul.f32 %v1708, %v1750
  %v2503 = vmul.f32 %v1709, %v1751
  %v2504 = vmul.f32 %v1708, %v1752
  %v2505 = vmul.f32 %v1709, %v1753
  %v2506 = vmul.f32 %v1708, %v1754
  %v2507 = vmul.f32 %v1709, %v1755
  %v2508 = vmul.f32 %v1708, %v1756
  %v2509 = vmul.f32 %v1709, %v1757
  %v2510 = vmul.f32 %v1708, %v1758
  %v2511 = vmul.f32 %v1709, %v1759
  %v2512 = vmul.f32 %v1710, %v1744
  %v2513 = vmul.f32 %v1711, %v1745
  %v2514 = vmul.f32 %v1710, %v1746
  %v2515 = vmul.f32 %v1711, %v1747
  %v2516 = vmul.f32 %v1710, %v1748
  %v2517 = vmul.f32 %v1711, %v1749
  %v2518 = vmul.f32 %v1710, %v1750
  %v2519 = vmul.f32 %v1711, %v1751
  %v2520 = vmul.f32 %v1710, %v1752
  %v2521 = vmul.f32 %v1711, %v1753
  %v2522 = vmul.f32 %v1710, %v1754
  %v2523 = vmul.f32 %v1711, %v1755
  %v2524 = vmul.f32 %v1710, %v1756
  %v2525 = vmul.f32 %v1711, %v1757
  %v2526 = vmul.f32 %v1710, %v1758
  %v2527 = vmul.f32 %v1711, %v1759
  %v2528 = vmul.f32 %v1712, %v1744
  %v2529 = vmul.f32 %v1713, %v1745
  %v2530 = vmul.f32 %v1712, %v1746
  %v2531 = vmul.f32 %v1713, %v1747
  %v2532 = vmul.f32 %v1712, %v1748
  %v2533 = vmul.f32 %v1713, %v1749
  %v2534 = vmul.f32 %v1712, %v1750
  %v2535 = vmul.f32 %v1713, %v1751
  %v2536 = vmul.f32 %v1712, %v1752
  %v2537 = vmul.f32 %v1713, %v1753
  %v2538 = vmul.f32 %v1712, %v1754
  %v2539 = vmul.f32 %v1713, %v1755
  %v2540 = vmul.f32 %v1712, %v1756
  %v2541 = vmul.f32 %v1713, %v1757
  %v2542 = vmul.f32 %v1712, %v1758
  %v2543 = vmul.f32 %v1713, %v1759
  %v2544 = vmul.f32 %v1714, %v1744
  %v2545 = vmul.f32 %v1715, %v1745
  %v2546 = vmul.f32 %v1714, %v1746
  %v2547 = vmul.f32 %v1715, %v1747
  %v2548 = vmul.f32 %v1714, %v1748
  %v2549 = vmul.f32 %v1715, %v1749
  %v2550 = vmul.f32 %v1714, %v1750
  %v2551 = vmul.f32 %v1715, %v1751
  %v2552 = vmul.f32 %v1714, %v1752
  %v2553 = vmul.f32 %v1715, %v1753
  %v2554 = vmul.f32 %v1714, %v1754
  %v2555 = vmul.f32 %v1715, %v1755
  %v2556 = vmul.f32 %v1714, %v1756
  %v2557 = vmul.f32 %v1715, %v1757
  %v2558 = vmul.f32 %v1714, %v1758
  %v2559 = vmul.f32 %v1715, %v1759
  %v2560 = vmul.f32 %v1716, %v1744
  %v2561 = vmul.f32 %v1717, %v1745
  %v2562 = vmul.f32 %v1716, %v1746
  %v2563 = vmul.f32 %v1717, %v1747
  %v2564 = vmul.f32 %v1716, %v1748
  %v2565 = vmul.f32 %v1717, %v1749
  %v2566 = vmul.f32 %v1716, %v1750
  %v2567 = vmul.f32 %v1717, %v1751
  %v2568 = vmul.f32 %v1716, %v1752
  %v2569 = vmul.f32 %v1717, %v1753
  %v2570 = vmul.f32 %v1716, %v1754
  %v2571 = vmul.f32 %v1717, %v1755
  %v2572 = vmul.f32 %v1716, %v1756
  %v2573 = vmul.f32 %v1717, %v1757
  %v2574 = vmul.f32 %v1716, %v1758
  %v2575 = vmul.f32 %v1717, %v1759
  %v2576 = vmul.f32 %v1718, %v1744
  %v2577 = vmul.f32 %v1719, %v1745
  %v2578 = vmul.f32 %v1718, %v1746
  %v2579 = vmul.f32 %v1719, %v1747
  %v2580 = vmul.f32 %v1718, %v1748
  %v2581 = vmul.f32 %v1719, %v1749
  %v2582 = vmul.f32 %v1718, %v1750
  %v2583 = vmul.f32 %v1719, %v1751
  %v2584 = vmul.f32 %v1718, %v1752
  %v2585 = vmul.f32 %v1719, %v1753
  %v2586 = vmul.f32 %v1718, %v1754
  %v2587 = vmul.f32 %v1719, %v1755
  %v2588 = vmul.f32 %v1718, %v1756
  %v2589 = vmul.f32 %v1719, %v1757
  %v2590 = vmul.f32 %v1718, %v1758
  %v2591 = vmul.f32 %v1719, %v1759
  %v2592 = vmul.f32 %v1720, %v1744
  %v2593 = vmul.f32 %v1721, %v1745
  %v2594 = vmul.f32 %v1720, %v1746
  %v2595 = vmul.f32 %v1721, %v1747
  %v2596 = vmul.f32 %v1720, %v1748
  %v2597 = vmul.f32 %v1721, %v1749
  %v2598 = vmul.f32 %v1720, %v1750
  %v2599 = vmul.f32 %v1721, %v1751
  %v2600 = vmul.f32 %v1720, %v1752
  %v2601 = vmul.f32 %v1721, %v1753
  %v2602 = vmul.f32 %v1720, %v1754
  %v2603 = vmul.f32 %v1721, %v1755
  %v2604 = vmul.f32 %v1720, %v1756
  %v2605 = vmul.f32 %v1721, %v1757
  %v2606 = vmul.f32 %v1720, %v1758
  %v2607 = vmul.f32 %v1721, %v1759
  %v2608 = vmul.f32 %v1722, %v1744
  %v2609 = vmul.f32 %v1723, %v1745
  %v2610 = vmul.f32 %v1722, %v1746
  %v2611 = vmul.f32 %v1723, %v1747
  %v2612 = vmul.f32 %v1722, %v1748
  %v2613 = vmul.f32 %v1723, %v1749
  %v2614 = vmul.f32 %v1722, %v1750
  %v2615 = vmul.f32 %v1723, %v1751
  %v2616 = vmul.f32 %v1722, %v1752
  %v2617 = vmul.f32 %v1723, %v1753
  %v2618 = vmul.f32 %v1722, %v1754
  %v2619 = vmul.f32 %v1723, %v1755
  %v2620 = vmul.f32 %v1722, %v1756
  %v2621 = vmul.f32 %v1723, %v1757
  %v2622 = vmul.f32 %v1722, %v1758
  %v2623 = vmul.f32 %v1723, %v1759
  %v2624 = vmul.f32 %v1724, %v1744
  %v2625 = vmul.f32 %v1725, %v1745
  %v2626 = vmul.f32 %v1724, %v1746
  %v2627 = vmul.f32 %v1725, %v1747
  %v2628 = vmul.f32 %v1724, %v1748
  %v2629 = vmul.f32 %v1725, %v1749
  %v2630 = vmul.f32 %v1724, %v1750
  %v2631 = vmul.f32 %v1725, %v1751
  %v2632 = vmul.f32 %v1724, %v1752
  %v2633 = vmul.f32 %v1725, %v1753
  %v2634 = vmul.f32 %v1724, %v1754
  %v2635 = vmul.f32 %v1725, %v1755
  %v2636 = vmul.f32 %v1724, %v1756
  %v2637 = vmul.f32 %v1725, %v1757
  %v2638 = vmul.f32 %v1724, %v1758
  %v2639 = vmul.f32 %v1725, %v1759
  %v2640 = vmul.f32 %v1726, %v1744
  %v2641 = vmul.f32 %v1727, %v1745
  %v2642 = vmul.f32 %v1726, %v1746
  %v2643 = vmul.f32 %v1727, %v1747
  %v2644 = vmul.f32 %v1726, %v1748
  %v2645 = vmul.f32 %v1727, %v1749
  %v2646 = vmul.f32 %v1726, %v1750
  %v2647 = vmul.f32 %v1727, %v1751
  %v2648 = vmul.f32 %v1726, %v1752
  %v2649 = vmul.f32 %v1727, %v1753
  %v2650 = vmul.f32 %v1726, %v1754
  %v2651 = vmul.f32 %v1727, %v1755
  %v2652 = vmul.f32 %v1726, %v1756
  %v2653 = vmul.f32 %v1727, %v1757
  %v2654 = vmul.f32 %v1726, %v1758
  %v2655 = vmul.f32 %v1727, %v1759
  %v2656 = vmul.f32 %v1728, %v1744
  %v2657 = vmul.f32 %v1729, %v1745
  %v2658 = vmul.f32 %v1728, %v1746
  %v2659 = vmul.f32 %v1729, %v1747
  %v2660 = vmul.f32 %v1728, %v1748
  %v2661 = vmul.f32 %v1729, %v1749
  %v2662 = vmul.f32 %v1728, %v1750
  %v2663 = vmul.f32 %v1729, %v1751
  %v2664 = vmul.f32 %v1728, %v1752
  %v2665 = vmul.f32 %v1729, %v1753
  %v2666 = vmul.f32 %v1728, %v1754
  %v2667 = vmul.f32 %v1729, %v1755
  %v2668 = vmul.f32 %v1728, %v1756
  %v2669 = vmul.f32 %v1729, %v1757
  %v2670 = vmul.f32 %v1728, %v1758
  %v2671 = vmul.f32 %v1729, %v1759
  %v2672 = vmul.f32 %v1730, %v1744
  %v2673 = vmul.f32 %v1731, %v1745
  %v2674 = vmul.f32 %v1730, %v1746
  %v2675 = vmul.f32 %v1731, %v1747
  %v2676 = vmul.f32 %v1730, %v1748
  %v2677 = vmul.f32 %v1731, %v1749
  %v2678 = vmul.f32 %v1730, %v1750
  %v2679 = vmul.f32 %v1731, %v1751
  %v2680 = vmul.f32 %v1730, %v1752
  %v2681 = vmul.f32 %v1731, %v1753
  %v2682 = vmul.f32 %v1730, %v1754
  %v2683 = vmul.f32 %v1731, %v1755
  %v2684 = vmul.f32 %v1730, %v1756
  %v2685 = vmul.f32 %v1731, %v1757
  %v2686 = vmul.f32 %v1730, %v1758
  %v2687 = vmul.f32 %v1731, %v1759
  %v2688 = vmul.f32 %v1732, %v1744
  %v2689 = vmul.f32 %v1733, %v1745
  %v2690 = vmul.f32 %v1732, %v1746
  %v2691 = vmul.f32 %v1733, %v1747
  %v2692 = vmul.f32 %v1732, %v1748
  %v2693 = vmul.f32 %v1733, %v1749
  %v2694 = vmul.f32 %v1732, %v1750
  %v2695 = vmul.f32 %v1733, %v1751
  %v2696 = vmul.f32 %v1732, %v1752
  %v2697 = vmul.f32 %v1733, %v1753
  %v2698 = vmul.f32 %v1732, %v1754
  %v2699 = vmul.f32 %v1733, %v1755
  %v2700 = vmul.f32 %v1732, %v1756
  %v2701 = vmul.f32 %v1733, %v1757
  %v2702 = vmul.f32 %v1732, %v1758
  %v2703 = vmul.f32 %v1733, %v1759
  %v2704 = vmul.f32 %v1734, %v1744
  %v2705 = vmul.f32 %v1735, %v1745
  %v2706 = vmul.f32 %v1734, %v1746
  %v2707 = vmul.f32 %v1735, %v1747
  %v2708 = vmul.f32 %v1734, %v1748
  %v2709 = vmul.f32 %v1735, %v1749
  %v2710 = vmul.f32 %v1734, %v1750
  %v2711 = vmul.f32 %v1735, %v1751
  %v2712 = vmul.f32 %v1734, %v1752
  %v2713 = vmul.f32 %v1735, %v1753
  %v2714 = vmul.f32 %v1734, %v1754
  %v2715 = vmul.f32 %v1735, %v1755
  %v2716 = vmul.f32 %v1734, %v1756
  %v2717 = vmul.f32 %v1735, %v1757
  %v2718 = vmul.f32 %v1734, %v1758
  %v2719 = vmul.f32 %v1735, %v1759
  %v2720 = vmul.f32 %v1736, %v1744
  %v2721 = vmul.f32 %v1737, %v1745
  %v2722 = vmul.f32 %v1736, %v1746
  %v2723 = vmul.f32 %v1737, %v1747
  %v2724 = vmul.f32 %v1736, %v1748
  %v2725 = vmul.f32 %v1737, %v1749
  %v2726 = vmul.f32 %v1736, %v1750
  %v2727 = vmul.f32 %v1737, %v1751
  %v2728 = vmul.f32 %v1736, %v1752
  %v2729 = vmul.f32 %v1737, %v1753
  %v2730 = vmul.f32 %v1736, %v1754
  %v2731 = vmul.f32 %v1737, %v1755
  %v2732 = vmul.f32 %v1736, %v1756
  %v2733 = vmul.f32 %v1737, %v1757
  %v2734 = vmul.f32 %v1736, %v1758
  %v2735 = vmul.f32 %v1737, %v1759
  %v2736 = vmul.f32 %v1738, %v1744
  %v2737 = vmul.f32 %v1739, %v1745
  %v2738 = vmul.f32 %v1738, %v1746
  %v2739 = vmul.f32 %v1739, %v1747
  %v2740 = vmul.f32 %v1738, %v1748
  %v2741 = vmul.f32 %v1739, %v1749
  %v2742 = vmul.f32 %v1738, %v1750
  %v2743 = vmul.f32 %v1739, %v1751
  %v2744 = vmul.f32 %v1738, %v1752
  %v2745 = vmul.f32 %v1739, %v1753
  %v2746 = vmul.f32 %v1738, %v1754
  %v2747 = vmul.f32 %v1739, %v1755
  %v2748 = vmul.f32 %v1738, %v1756
  %v2749 = vmul.f32 %v1739, %v1757
  %v2750 = vmul.f32 %v1738, %v1758
  %v2751 = vmul.f32 %v1739, %v1759
  %v2752 = vmul.f32 %v1740, %v1744
  %v2753 = vmul.f32 %v1741, %v1745
  %v2754 = vmul.f32 %v1740, %v1746
  %v2755 = vmul.f32 %v1741, %v1747
  %v2756 = vmul.f32 %v1740, %v1748
  %v2757 = vmul.f32 %v1741, %v1749
  %v2758 = vmul.f32 %v1740, %v1750
  %v2759 = vmul.f32 %v1741, %v1751
  %v2760 = vmul.f32 %v1740, %v1752
  %v2761 = vmul.f32 %v1741, %v1753
  %v2762 = vmul.f32 %v1740, %v1754
  %v2763 = vmul.f32 %v1741, %v1755
  %v2764 = vmul.f32 %v1740, %v1756
  %v2765 = vmul.f32 %v1741, %v1757
  %v2766 = vmul.f32 %v1740, %v1758
  %v2767 = vmul.f32 %v1741, %v1759
  %v2768 = vmul.f32 %v1742, %v1744
  %v2769 = vmul.f32 %v1743, %v1745
  %v2770 = vmul.f32 %v1742, %v1746
  %v2771 = vmul.f32 %v1743, %v1747
  %v2772 = vmul.f32 %v1742, %v1748
  %v2773 = vmul.f32 %v1743, %v1749
  %v2774 = vmul.f32 %v1742, %v1750
  %v2775 = vmul.f32 %v1743, %v1751
  %v2776 = vmul.f32 %v1742, %v1752
  %v2777 = vmul.f32 %v1743, %v1753
  %v2778 = vmul.f32 %v1742, %v1754
  %v2779 = vmul.f32 %v1743, %v1755
  %v2780 = vmul.f32 %v1742, %v1756
  %v2781 = vmul.f32 %v1743, %v1757
  %v2782 = vmul.f32 %v1742, %v1758
  %v2783 = vmul.f32 %v1743, %v1759
  %v2784 = vpack.c.bf16 %v1761, %v1760
  %v2785 = vpack.c.bf16 %v1763, %v1762
  %v2786 = vpack.c.bf16 %v1765, %v1764
  %v2787 = vpack.c.bf16 %v1767, %v1766
  %v2788 = vpack.c.bf16 %v1769, %v1768
  %v2789 = vpack.c.bf16 %v1771, %v1770
  %v2790 = vpack.c.bf16 %v1773, %v1772
  %v2791 = vpack.c.bf16 %v1775, %v1774
  %v2792 = vpack.c.bf16 %v1777, %v1776
  %v2793 = vpack.c.bf16 %v1779, %v1778
  %v2794 = vpack.c.bf16 %v1781, %v1780
  %v2795 = vpack.c.bf16 %v1783, %v1782
  %v2796 = vpack.c.bf16 %v1785, %v1784
  %v2797 = vpack.c.bf16 %v1787, %v1786
  %v2798 = vpack.c.bf16 %v1789, %v1788
  %v2799 = vpack.c.bf16 %v1791, %v1790
  %v2800 = vpack.c.bf16 %v1793, %v1792
  %v2801 = vpack.c.bf16 %v1795, %v1794
  %v2802 = vpack.c.bf16 %v1797, %v1796
  %v2803 = vpack.c.bf16 %v1799, %v1798
  %v2804 = vpack.c.bf16 %v1801, %v1800
  %v2805 = vpack.c.bf16 %v1803, %v1802
  %v2806 = vpack.c.bf16 %v1805, %v1804
  %v2807 = vpack.c.bf16 %v1807, %v1806
  %v2808 = vpack.c.bf16 %v1809, %v1808
  %v2809 = vpack.c.bf16 %v1811, %v1810
  %v2810 = vpack.c.bf16 %v1813, %v1812
  %v2811 = vpack.c.bf16 %v1815, %v1814
  %v2812 = vpack.c.bf16 %v1817, %v1816
  %v2813 = vpack.c.bf16 %v1819, %v1818
  %v2814 = vpack.c.bf16 %v1821, %v1820
  %v2815 = vpack.c.bf16 %v1823, %v1822
  %v2816 = vpack.c.bf16 %v1825, %v1824
  %v2817 = vpack.c.bf16 %v1827, %v1826
  %v2818 = vpack.c.bf16 %v1829, %v1828
  %v2819 = vpack.c.bf16 %v1831, %v1830
  %v2820 = vpack.c.bf16 %v1833, %v1832
  %v2821 = vpack.c.bf16 %v1835, %v1834
  %v2822 = vpack.c.bf16 %v1837, %v1836
  %v2823 = vpack.c.bf16 %v1839, %v1838
  %v2824 = vpack.c.bf16 %v1841, %v1840
  %v2825 = vpack.c.bf16 %v1843, %v1842
  %v2826 = vpack.c.bf16 %v1845, %v1844
  %v2827 = vpack.c.bf16 %v1847, %v1846
  %v2828 = vpack.c.bf16 %v1849, %v1848
  %v2829 = vpack.c.bf16 %v1851, %v1850
  %v2830 = vpack.c.bf16 %v1853, %v1852
  %v2831 = vpack.c.bf16 %v1855, %v1854
  %v2832 = vpack.c.bf16 %v1857, %v1856
  %v2833 = vpack.c.bf16 %v1859, %v1858
  %v2834 = vpack.c.bf16 %v1861, %v1860
  %v2835 = vpack.c.bf16 %v1863, %v1862
  %v2836 = vpack.c.bf16 %v1865, %v1864
  %v2837 = vpack.c.bf16 %v1867, %v1866
  %v2838 = vpack.c.bf16 %v1869, %v1868
  %v2839 = vpack.c.bf16 %v1871, %v1870
  %v2840 = vpack.c.bf16 %v1873, %v1872
  %v2841 = vpack.c.bf16 %v1875, %v1874
  %v2842 = vpack.c.bf16 %v1877, %v1876
  %v2843 = vpack.c.bf16 %v1879, %v1878
  %v2844 = vpack.c.bf16 %v1881, %v1880
  %v2845 = vpack.c.bf16 %v1883, %v1882
  %v2846 = vpack.c.bf16 %v1885, %v1884
  %v2847 = vpack.c.bf16 %v1887, %v1886
  %v2848 = vpack.c.bf16 %v1889, %v1888
  %v2849 = vpack.c.bf16 %v1891, %v1890
  %v2850 = vpack.c.bf16 %v1893, %v1892
  %v2851 = vpack.c.bf16 %v1895, %v1894
  %v2852 = vpack.c.bf16 %v1897, %v1896
  %v2853 = vpack.c.bf16 %v1899, %v1898
  %v2854 = vpack.c.bf16 %v1901, %v1900
  %v2855 = vpack.c.bf16 %v1903, %v1902
  %v2856 = vpack.c.bf16 %v1905, %v1904
  %v2857 = vpack.c.bf16 %v1907, %v1906
  %v2858 = vpack.c.bf16 %v1909, %v1908
  %v2859 = vpack.c.bf16 %v1911, %v1910
  %v2860 = vpack.c.bf16 %v1913, %v1912
  %v2861 = vpack.c.bf16 %v1915, %v1914
  %v2862 = vpack.c.bf16 %v1917, %v1916
  %v2863 = vpack.c.bf16 %v1919, %v1918
  %v2864 = vpack.c.bf16 %v1921, %v1920
  %v2865 = vpack.c.bf16 %v1923, %v1922
  %v2866 = vpack.c.bf16 %v1925, %v1924
  %v2867 = vpack.c.bf16 %v1927, %v1926
  %v2868 = vpack.c.bf16 %v1929, %v1928
  %v2869 = vpack.c.bf16 %v1931, %v1930
  %v2870 = vpack.c.bf16 %v1933, %v1932
  %v2871 = vpack.c.bf16 %v1935, %v1934
  %v2872 = vpack.c.bf16 %v1937, %v1936
  %v2873 = vpack.c.bf16 %v1939, %v1938
  %v2874 = vpack.c.bf16 %v1941, %v1940
  %v2875 = vpack.c.bf16 %v1943, %v1942
  %v2876 = vpack.c.bf16 %v1945, %v1944
  %v2877 = vpack.c.bf16 %v1947, %v1946
  %v2878 = vpack.c.bf16 %v1949, %v1948
  %v2879 = vpack.c.bf16 %v1951, %v1950
  %v2880 = vpack.c.bf16 %v1953, %v1952
  %v2881 = vpack.c.bf16 %v1955, %v1954
  %v2882 = vpack.c.bf16 %v1957, %v1956
  %v2883 = vpack.c.bf16 %v1959, %v1958
  %v2884 = vpack.c.bf16 %v1961, %v1960
  %v2885 = vpack.c.bf16 %v1963, %v1962
  %v2886 = vpack.c.bf16 %v1965, %v1964
  %v2887 = vpack.c.bf16 %v1967, %v1966
  %v2888 = vpack.c.bf16 %v1969, %v1968
  %v2889 = vpack.c.bf16 %v1971, %v1970
  %v2890 = vpack.c.bf16 %v1973, %v1972
  %v2891 = vpack.c.bf16 %v1975, %v1974
  %v2892 = vpack.c.bf16 %v1977, %v1976
  %v2893 = vpack.c.bf16 %v1979, %v1978
  %v2894 = vpack.c.bf16 %v1981, %v1980
  %v2895 = vpack.c.bf16 %v1983, %v1982
  %v2896 = vpack.c.bf16 %v1985, %v1984
  %v2897 = vpack.c.bf16 %v1987, %v1986
  %v2898 = vpack.c.bf16 %v1989, %v1988
  %v2899 = vpack.c.bf16 %v1991, %v1990
  %v2900 = vpack.c.bf16 %v1993, %v1992
  %v2901 = vpack.c.bf16 %v1995, %v1994
  %v2902 = vpack.c.bf16 %v1997, %v1996
  %v2903 = vpack.c.bf16 %v1999, %v1998
  %v2904 = vpack.c.bf16 %v2001, %v2000
  %v2905 = vpack.c.bf16 %v2003, %v2002
  %v2906 = vpack.c.bf16 %v2005, %v2004
  %v2907 = vpack.c.bf16 %v2007, %v2006
  %v2908 = vpack.c.bf16 %v2009, %v2008
  %v2909 = vpack.c.bf16 %v2011, %v2010
  %v2910 = vpack.c.bf16 %v2013, %v2012
  %v2911 = vpack.c.bf16 %v2015, %v2014
  %v2912 = vpack.c.bf16 %v2017, %v2016
  %v2913 = vpack.c.bf16 %v2019, %v2018
  %v2914 = vpack.c.bf16 %v2021, %v2020
  %v2915 = vpack.c.bf16 %v2023, %v2022
  %v2916 = vpack.c.bf16 %v2025, %v2024
  %v2917 = vpack.c.bf16 %v2027, %v2026
  %v2918 = vpack.c.bf16 %v2029, %v2028
  %v2919 = vpack.c.bf16 %v2031, %v2030
  %v2920 = vpack.c.bf16 %v2033, %v2032
  %v2921 = vpack.c.bf16 %v2035, %v2034
  %v2922 = vpack.c.bf16 %v2037, %v2036
  %v2923 = vpack.c.bf16 %v2039, %v2038
  %v2924 = vpack.c.bf16 %v2041, %v2040
  %v2925 = vpack.c.bf16 %v2043, %v2042
  %v2926 = vpack.c.bf16 %v2045, %v2044
  %v2927 = vpack.c.bf16 %v2047, %v2046
  %v2928 = vpack.c.bf16 %v2049, %v2048
  %v2929 = vpack.c.bf16 %v2051, %v2050
  %v2930 = vpack.c.bf16 %v2053, %v2052
  %v2931 = vpack.c.bf16 %v2055, %v2054
  %v2932 = vpack.c.bf16 %v2057, %v2056
  %v2933 = vpack.c.bf16 %v2059, %v2058
  %v2934 = vpack.c.bf16 %v2061, %v2060
  %v2935 = vpack.c.bf16 %v2063, %v2062
  %v2936 = vpack.c.bf16 %v2065, %v2064
  %v2937 = vpack.c.bf16 %v2067, %v2066
  %v2938 = vpack.c.bf16 %v2069, %v2068
  %v2939 = vpack.c.bf16 %v2071, %v2070
  %v2940 = vpack.c.bf16 %v2073, %v2072
  %v2941 = vpack.c.bf16 %v2075, %v2074
  %v2942 = vpack.c.bf16 %v2077, %v2076
  %v2943 = vpack.c.bf16 %v2079, %v2078
  %v2944 = vpack.c.bf16 %v2081, %v2080
  %v2945 = vpack.c.bf16 %v2083, %v2082
  %v2946 = vpack.c.bf16 %v2085, %v2084
  %v2947 = vpack.c.bf16 %v2087, %v2086
  %v2948 = vpack.c.bf16 %v2089, %v2088
  %v2949 = vpack.c.bf16 %v2091, %v2090
  %v2950 = vpack.c.bf16 %v2093, %v2092
  %v2951 = vpack.c.bf16 %v2095, %v2094
  %v2952 = vpack.c.bf16 %v2097, %v2096
  %v2953 = vpack.c.bf16 %v2099, %v2098
  %v2954 = vpack.c.bf16 %v2101, %v2100
  %v2955 = vpack.c.bf16 %v2103, %v2102
  %v2956 = vpack.c.bf16 %v2105, %v2104
  %v2957 = vpack.c.bf16 %v2107, %v2106
  %v2958 = vpack.c.bf16 %v2109, %v2108
  %v2959 = vpack.c.bf16 %v2111, %v2110
  %v2960 = vpack.c.bf16 %v2113, %v2112
  %v2961 = vpack.c.bf16 %v2115, %v2114
  %v2962 = vpack.c.bf16 %v2117, %v2116
  %v2963 = vpack.c.bf16 %v2119, %v2118
  %v2964 = vpack.c.bf16 %v2121, %v2120
  %v2965 = vpack.c.bf16 %v2123, %v2122
  %v2966 = vpack.c.bf16 %v2125, %v2124
  %v2967 = vpack.c.bf16 %v2127, %v2126
  %v2968 = vpack.c.bf16 %v2129, %v2128
  %v2969 = vpack.c.bf16 %v2131, %v2130
  %v2970 = vpack.c.bf16 %v2133, %v2132
  %v2971 = vpack.c.bf16 %v2135, %v2134
  %v2972 = vpack.c.bf16 %v2137, %v2136
  %v2973 = vpack.c.bf16 %v2139, %v2138
  %v2974 = vpack.c.bf16 %v2141, %v2140
  %v2975 = vpack.c.bf16 %v2143, %v2142
  %v2976 = vpack.c.bf16 %v2145, %v2144
  %v2977 = vpack.c.bf16 %v2147, %v2146
  %v2978 = vpack.c.bf16 %v2149, %v2148
  %v2979 = vpack.c.bf16 %v2151, %v2150
  %v2980 = vpack.c.bf16 %v2153, %v2152
  %v2981 = vpack.c.bf16 %v2155, %v2154
  %v2982 = vpack.c.bf16 %v2157, %v2156
  %v2983 = vpack.c.bf16 %v2159, %v2158
  %v2984 = vpack.c.bf16 %v2161, %v2160
  %v2985 = vpack.c.bf16 %v2163, %v2162
  %v2986 = vpack.c.bf16 %v2165, %v2164
  %v2987 = vpack.c.bf16 %v2167, %v2166
  %v2988 = vpack.c.bf16 %v2169, %v2168
  %v2989 = vpack.c.bf16 %v2171, %v2170
  %v2990 = vpack.c.bf16 %v2173, %v2172
  %v2991 = vpack.c.bf16 %v2175, %v2174
  %v2992 = vpack.c.bf16 %v2177, %v2176
  %v2993 = vpack.c.bf16 %v2179, %v2178
  %v2994 = vpack.c.bf16 %v2181, %v2180
  %v2995 = vpack.c.bf16 %v2183, %v2182
  %v2996 = vpack.c.bf16 %v2185, %v2184
  %v2997 = vpack.c.bf16 %v2187, %v2186
  %v2998 = vpack.c.bf16 %v2189, %v2188
  %v2999 = vpack.c.bf16 %v2191, %v2190
  %v3000 = vpack.c.bf16 %v2193, %v2192
  %v3001 = vpack.c.bf16 %v2195, %v2194
  %v3002 = vpack.c.bf16 %v2197, %v2196
  %v3003 = vpack.c.bf16 %v2199, %v2198
  %v3004 = vpack.c.bf16 %v2201, %v2200
  %v3005 = vpack.c.bf16 %v2203, %v2202
  %v3006 = vpack.c.bf16 %v2205, %v2204
  %v3007 = vpack.c.bf16 %v2207, %v2206
  %v3008 = vpack.c.bf16 %v2209, %v2208
  %v3009 = vpack.c.bf16 %v2211, %v2210
  %v3010 = vpack.c.bf16 %v2213, %v2212
  %v3011 = vpack.c.bf16 %v2215, %v2214
  %v3012 = vpack.c.bf16 %v2217, %v2216
  %v3013 = vpack.c.bf16 %v2219, %v2218
  %v3014 = vpack.c.bf16 %v2221, %v2220
  %v3015 = vpack.c.bf16 %v2223, %v2222
  %v3016 = vpack.c.bf16 %v2225, %v2224
  %v3017 = vpack.c.bf16 %v2227, %v2226
  %v3018 = vpack.c.bf16 %v2229, %v2228
  %v3019 = vpack.c.bf16 %v2231, %v2230
  %v3020 = vpack.c.bf16 %v2233, %v2232
  %v3021 = vpack.c.bf16 %v2235, %v2234
  %v3022 = vpack.c.bf16 %v2237, %v2236
  %v3023 = vpack.c.bf16 %v2239, %v2238
  %v3024 = vpack.c.bf16 %v2241, %v2240
  %v3025 = vpack.c.bf16 %v2243, %v2242
  %v3026 = vpack.c.bf16 %v2245, %v2244
  %v3027 = vpack.c.bf16 %v2247, %v2246
  %v3028 = vpack.c.bf16 %v2249, %v2248
  %v3029 = vpack.c.bf16 %v2251, %v2250
  %v3030 = vpack.c.bf16 %v2253, %v2252
  %v3031 = vpack.c.bf16 %v2255, %v2254
  %v3032 = vpack.c.bf16 %v2257, %v2256
  %v3033 = vpack.c.bf16 %v2259, %v2258
  %v3034 = vpack.c.bf16 %v2261, %v2260
  %v3035 = vpack.c.bf16 %v2263, %v2262
  %v3036 = vpack.c.bf16 %v2265, %v2264
  %v3037 = vpack.c.bf16 %v2267, %v2266
  %v3038 = vpack.c.bf16 %v2269, %v2268
  %v3039 = vpack.c.bf16 %v2271, %v2270
  %v3040 = vpack.c.bf16 %v2273, %v2272
  %v3041 = vpack.c.bf16 %v2275, %v2274
  %v3042 = vpack.c.bf16 %v2277, %v2276
  %v3043 = vpack.c.bf16 %v2279, %v2278
  %v3044 = vpack.c.bf16 %v2281, %v2280
  %v3045 = vpack.c.bf16 %v2283, %v2282
  %v3046 = vpack.c.bf16 %v2285, %v2284
  %v3047 = vpack.c.bf16 %v2287, %v2286
  %v3048 = vpack.c.bf16 %v2289, %v2288
  %v3049 = vpack.c.bf16 %v2291, %v2290
  %v3050 = vpack.c.bf16 %v2293, %v2292
  %v3051 = vpack.c.bf16 %v2295, %v2294
  %v3052 = vpack.c.bf16 %v2297, %v2296
  %v3053 = vpack.c.bf16 %v2299, %v2298
  %v3054 = vpack.c.bf16 %v2301, %v2300
  %v3055 = vpack.c.bf16 %v2303, %v2302
  %v3056 = vpack.c.bf16 %v2305, %v2304
  %v3057 = vpack.c.bf16 %v2307, %v2306
  %v3058 = vpack.c.bf16 %v2309, %v2308
  %v3059 = vpack.c.bf16 %v2311, %v2310
  %v3060 = vpack.c.bf16 %v2313, %v2312
  %v3061 = vpack.c.bf16 %v2315, %v2314
  %v3062 = vpack.c.bf16 %v2317, %v2316
  %v3063 = vpack.c.bf16 %v2319, %v2318
  %v3064 = vpack.c.bf16 %v2321, %v2320
  %v3065 = vpack.c.bf16 %v2323, %v2322
  %v3066 = vpack.c.bf16 %v2325, %v2324
  %v3067 = vpack.c.bf16 %v2327, %v2326
  %v3068 = vpack.c.bf16 %v2329, %v2328
  %v3069 = vpack.c.bf16 %v2331, %v2330
  %v3070 = vpack.c.bf16 %v2333, %v2332
  %v3071 = vpack.c.bf16 %v2335, %v2334
  %v3072 = vpack.c.bf16 %v2337, %v2336
  %v3073 = vpack.c.bf16 %v2339, %v2338
  %v3074 = vpack.c.bf16 %v2341, %v2340
  %v3075 = vpack.c.bf16 %v2343, %v2342
  %v3076 = vpack.c.bf16 %v2345, %v2344
  %v3077 = vpack.c.bf16 %v2347, %v2346
  %v3078 = vpack.c.bf16 %v2349, %v2348
  %v3079 = vpack.c.bf16 %v2351, %v2350
  %v3080 = vpack.c.bf16 %v2353, %v2352
  %v3081 = vpack.c.bf16 %v2355, %v2354
  %v3082 = vpack.c.bf16 %v2357, %v2356
  %v3083 = vpack.c.bf16 %v2359, %v2358
  %v3084 = vpack.c.bf16 %v2361, %v2360
  %v3085 = vpack.c.bf16 %v2363, %v2362
  %v3086 = vpack.c.bf16 %v2365, %v2364
  %v3087 = vpack.c.bf16 %v2367, %v2366
  %v3088 = vpack.c.bf16 %v2369, %v2368
  %v3089 = vpack.c.bf16 %v2371, %v2370
  %v3090 = vpack.c.bf16 %v2373, %v2372
  %v3091 = vpack.c.bf16 %v2375, %v2374
  %v3092 = vpack.c.bf16 %v2377, %v2376
  %v3093 = vpack.c.bf16 %v2379, %v2378
  %v3094 = vpack.c.bf16 %v2381, %v2380
  %v3095 = vpack.c.bf16 %v2383, %v2382
  %v3096 = vpack.c.bf16 %v2385, %v2384
  %v3097 = vpack.c.bf16 %v2387, %v2386
  %v3098 = vpack.c.bf16 %v2389, %v2388
  %v3099 = vpack.c.bf16 %v2391, %v2390
  %v3100 = vpack.c.bf16 %v2393, %v2392
  %v3101 = vpack.c.bf16 %v2395, %v2394
  %v3102 = vpack.c.bf16 %v2397, %v2396
  %v3103 = vpack.c.bf16 %v2399, %v2398
  %v3104 = vpack.c.bf16 %v2401, %v2400
  %v3105 = vpack.c.bf16 %v2403, %v2402
  %v3106 = vpack.c.bf16 %v2405, %v2404
  %v3107 = vpack.c.bf16 %v2407, %v2406
  %v3108 = vpack.c.bf16 %v2409, %v2408
  %v3109 = vpack.c.bf16 %v2411, %v2410
  %v3110 = vpack.c.bf16 %v2413, %v2412
  %v3111 = vpack.c.bf16 %v2415, %v2414
  %v3112 = vpack.c.bf16 %v2417, %v2416
  %v3113 = vpack.c.bf16 %v2419, %v2418
  %v3114 = vpack.c.bf16 %v2421, %v2420
  %v3115 = vpack.c.bf16 %v2423, %v2422
  %v3116 = vpack.c.bf16 %v2425, %v2424
  %v3117 = vpack.c.bf16 %v2427, %v2426
  %v3118 = vpack.c.bf16 %v2429, %v2428
  %v3119 = vpack.c.bf16 %v2431, %v2430
  %v3120 = vpack.c.bf16 %v2433, %v2432
  %v3121 = vpack.c.bf16 %v2435, %v2434
  %v3122 = vpack.c.bf16 %v2437, %v2436
  %v3123 = vpack.c.bf16 %v2439, %v2438
  %v3124 = vpack.c.bf16 %v2441, %v2440
  %v3125 = vpack.c.bf16 %v2443, %v2442
  %v3126 = vpack.c.bf16 %v2445, %v2444
  %v3127 = vpack.c.bf16 %v2447, %v2446
  %v3128 = vpack.c.bf16 %v2449, %v2448
  %v3129 = vpack.c.bf16 %v2451, %v2450
  %v3130 = vpack.c.bf16 %v2453, %v2452
  %v3131 = vpack.c.bf16 %v2455, %v2454
  %v3132 = vpack.c.bf16 %v2457, %v2456
  %v3133 = vpack.c.bf16 %v2459, %v2458
  %v3134 = vpack.c.bf16 %v2461, %v2460
  %v3135 = vpack.c.bf16 %v2463, %v2462
  %v3136 = vpack.c.bf16 %v2465, %v2464
  %v3137 = vpack.c.bf16 %v2467, %v2466
  %v3138 = vpack.c.bf16 %v2469, %v2468
  %v3139 = vpack.c.bf16 %v2471, %v2470
  %v3140 = vpack.c.bf16 %v2473, %v2472
  %v3141 = vpack.c.bf16 %v2475, %v2474
  %v3142 = vpack.c.bf16 %v2477, %v2476
  %v3143 = vpack.c.bf16 %v2479, %v2478
  %v3144 = vpack.c.bf16 %v2481, %v2480
  %v3145 = vpack.c.bf16 %v2483, %v2482
  %v3146 = vpack.c.bf16 %v2485, %v2484
  %v3147 = vpack.c.bf16 %v2487, %v2486
  %v3148 = vpack.c.bf16 %v2489, %v2488
  %v3149 = vpack.c.bf16 %v2491, %v2490
  %v3150 = vpack.c.bf16 %v2493, %v2492
  %v3151 = vpack.c.bf16 %v2495, %v2494
  %v3152 = vpack.c.bf16 %v2497, %v2496
  %v3153 = vpack.c.bf16 %v2499, %v2498
  %v3154 = vpack.c.bf16 %v2501, %v2500
  %v3155 = vpack.c.bf16 %v2503, %v2502
  %v3156 = vpack.c.bf16 %v2505, %v2504
  %v3157 = vpack.c.bf16 %v2507, %v2506
  %v3158 = vpack.c.bf16 %v2509, %v2508
  %v3159 = vpack.c.bf16 %v2511, %v2510
  %v3160 = vpack.c.bf16 %v2513, %v2512
  %v3161 = vpack.c.bf16 %v2515, %v2514
  %v3162 = vpack.c.bf16 %v2517, %v2516
  %v3163 = vpack.c.bf16 %v2519, %v2518
  %v3164 = vpack.c.bf16 %v2521, %v2520
  %v3165 = vpack.c.bf16 %v2523, %v2522
  %v3166 = vpack.c.bf16 %v2525, %v2524
  %v3167 = vpack.c.bf16 %v2527, %v2526
  %v3168 = vpack.c.bf16 %v2529, %v2528
  %v3169 = vpack.c.bf16 %v2531, %v2530
  %v3170 = vpack.c.bf16 %v2533, %v2532
  %v3171 = vpack.c.bf16 %v2535, %v2534
  %v3172 = vpack.c.bf16 %v2537, %v2536
  %v3173 = vpack.c.bf16 %v2539, %v2538
  %v3174 = vpack.c.bf16 %v2541, %v2540
  %v3175 = vpack.c.bf16 %v2543, %v2542
  %v3176 = vpack.c.bf16 %v2545, %v2544
  %v3177 = vpack.c.bf16 %v2547, %v2546
  %v3178 = vpack.c.bf16 %v2549, %v2548
  %v3179 = vpack.c.bf16 %v2551, %v2550
  %v3180 = vpack.c.bf16 %v2553, %v2552
  %v3181 = vpack.c.bf16 %v2555, %v2554
  %v3182 = vpack.c.bf16 %v2557, %v2556
  %v3183 = vpack.c.bf16 %v2559, %v2558
  %v3184 = vpack.c.bf16 %v2561, %v2560
  %v3185 = vpack.c.bf16 %v2563, %v2562
  %v3186 = vpack.c.bf16 %v2565, %v2564
  %v3187 = vpack.c.bf16 %v2567, %v2566
  %v3188 = vpack.c.bf16 %v2569, %v2568
  %v3189 = vpack.c.bf16 %v2571, %v2570
  %v3190 = vpack.c.bf16 %v2573, %v2572
  %v3191 = vpack.c.bf16 %v2575, %v2574
  %v3192 = vpack.c.bf16 %v2577, %v2576
  %v3193 = vpack.c.bf16 %v2579, %v2578
  %v3194 = vpack.c.bf16 %v2581, %v2580
  %v3195 = vpack.c.bf16 %v2583, %v2582
  %v3196 = vpack.c.bf16 %v2585, %v2584
  %v3197 = vpack.c.bf16 %v2587, %v2586
  %v3198 = vpack.c.bf16 %v2589, %v2588
  %v3199 = vpack.c.bf16 %v2591, %v2590
  %v3200 = vpack.c.bf16 %v2593, %v2592
  %v3201 = vpack.c.bf16 %v2595, %v2594
  %v3202 = vpack.c.bf16 %v2597, %v2596
  %v3203 = vpack.c.bf16 %v2599, %v2598
  %v3204 = vpack.c.bf16 %v2601, %v2600
  %v3205 = vpack.c.bf16 %v2603, %v2602
  %v3206 = vpack.c.bf16 %v2605, %v2604
  %v3207 = vpack.c.bf16 %v2607, %v2606
  %v3208 = vpack.c.bf16 %v2609, %v2608
  %v3209 = vpack.c.bf16 %v2611, %v2610
  %v3210 = vpack.c.bf16 %v2613, %v2612
  %v3211 = vpack.c.bf16 %v2615, %v2614
  %v3212 = vpack.c.bf16 %v2617, %v2616
  %v3213 = vpack.c.bf16 %v2619, %v2618
  %v3214 = vpack.c.bf16 %v2621, %v2620
  %v3215 = vpack.c.bf16 %v2623, %v2622
  %v3216 = vpack.c.bf16 %v2625, %v2624
  %v3217 = vpack.c.bf16 %v2627, %v2626
  %v3218 = vpack.c.bf16 %v2629, %v2628
  %v3219 = vpack.c.bf16 %v2631, %v2630
  %v3220 = vpack.c.bf16 %v2633, %v2632
  %v3221 = vpack.c.bf16 %v2635, %v2634
  %v3222 = vpack.c.bf16 %v2637, %v2636
  %v3223 = vpack.c.bf16 %v2639, %v2638
  %v3224 = vpack.c.bf16 %v2641, %v2640
  %v3225 = vpack.c.bf16 %v2643, %v2642
  %v3226 = vpack.c.bf16 %v2645, %v2644
  %v3227 = vpack.c.bf16 %v2647, %v2646
  %v3228 = vpack.c.bf16 %v2649, %v2648
  %v3229 = vpack.c.bf16 %v2651, %v2650
  %v3230 = vpack.c.bf16 %v2653, %v2652
  %v3231 = vpack.c.bf16 %v2655, %v2654
  %v3232 = vpack.c.bf16 %v2657, %v2656
  %v3233 = vpack.c.bf16 %v2659, %v2658
  %v3234 = vpack.c.bf16 %v2661, %v2660
  %v3235 = vpack.c.bf16 %v2663, %v2662
  %v3236 = vpack.c.bf16 %v2665, %v2664
  %v3237 = vpack.c.bf16 %v2667, %v2666
  %v3238 = vpack.c.bf16 %v2669, %v2668
  %v3239 = vpack.c.bf16 %v2671, %v2670
  %v3240 = vpack.c.bf16 %v2673, %v2672
  %v3241 = vpack.c.bf16 %v2675, %v2674
  %v3242 = vpack.c.bf16 %v2677, %v2676
  %v3243 = vpack.c.bf16 %v2679, %v2678
  %v3244 = vpack.c.bf16 %v2681, %v2680
  %v3245 = vpack.c.bf16 %v2683, %v2682
  %v3246 = vpack.c.bf16 %v2685, %v2684
  %v3247 = vpack.c.bf16 %v2687, %v2686
  %v3248 = vpack.c.bf16 %v2689, %v2688
  %v3249 = vpack.c.bf16 %v2691, %v2690
  %v3250 = vpack.c.bf16 %v2693, %v2692
  %v3251 = vpack.c.bf16 %v2695, %v2694
  %v3252 = vpack.c.bf16 %v2697, %v2696
  %v3253 = vpack.c.bf16 %v2699, %v2698
  %v3254 = vpack.c.bf16 %v2701, %v2700
  %v3255 = vpack.c.bf16 %v2703, %v2702
  %v3256 = vpack.c.bf16 %v2705, %v2704
  %v3257 = vpack.c.bf16 %v2707, %v2706
  %v3258 = vpack.c.bf16 %v2709, %v2708
  %v3259 = vpack.c.bf16 %v2711, %v2710
  %v3260 = vpack.c.bf16 %v2713, %v2712
  %v3261 = vpack.c.bf16 %v2715, %v2714
  %v3262 = vpack.c.bf16 %v2717, %v2716
  %v3263 = vpack.c.bf16 %v2719, %v2718
  %v3264 = vpack.c.bf16 %v2721, %v2720
  %v3265 = vpack.c.bf16 %v2723, %v2722
  %v3266 = vpack.c.bf16 %v2725, %v2724
  %v3267 = vpack.c.bf16 %v2727, %v2726
  %v3268 = vpack.c.bf16 %v2729, %v2728
  %v3269 = vpack.c.bf16 %v2731, %v2730
  %v3270 = vpack.c.bf16 %v2733, %v2732
  %v3271 = vpack.c.bf16 %v2735, %v2734
  %v3272 = vpack.c.bf16 %v2737, %v2736
  %v3273 = vpack.c.bf16 %v2739, %v2738
  %v3274 = vpack.c.bf16 %v2741, %v2740
  %v3275 = vpack.c.bf16 %v2743, %v2742
  %v3276 = vpack.c.bf16 %v2745, %v2744
  %v3277 = vpack.c.bf16 %v2747, %v2746
  %v3278 = vpack.c.bf16 %v2749, %v2748
  %v3279 = vpack.c.bf16 %v2751, %v2750
  %v3280 = vpack.c.bf16 %v2753, %v2752
  %v3281 = vpack.c.bf16 %v2755, %v2754
  %v3282 = vpack.c.bf16 %v2757, %v2756
  %v3283 = vpack.c.bf16 %v2759, %v2758
  %v3284 = vpack.c.bf16 %v2761, %v2760
  %v3285 = vpack.c.bf16 %v2763, %v2762
  %v3286 = vpack.c.bf16 %v2765, %v2764
  %v3287 = vpack.c.bf16 %v2767, %v2766
  %v3288 = vpack.c.bf16 %v2769, %v2768
  %v3289 = vpack.c.bf16 %v2771, %v2770
  %v3290 = vpack.c.bf16 %v2773, %v2772
  %v3291 = vpack.c.bf16 %v2775, %v2774
  %v3292 = vpack.c.bf16 %v2777, %v2776
  %v3293 = vpack.c.bf16 %v2779, %v2778
  %v3294 = vpack.c.bf16 %v2781, %v2780
  %v3295 = vpack.c.bf16 %v2783, %v2782
  %v3808 = vunpack.c.l.b16 %v2784
  %v3809 = vunpack.c.h.b16 %v2784
  %v3810 = vunpack.c.l.b16 %v2785
  %v3811 = vunpack.c.h.b16 %v2785
  %v3812 = vunpack.c.l.b16 %v2786
  %v3813 = vunpack.c.h.b16 %v2786
  %v3814 = vunpack.c.l.b16 %v2787
  %v3815 = vunpack.c.h.b16 %v2787
  %v3816 = vunpack.c.l.b16 %v2788
  %v3817 = vunpack.c.h.b16 %v2788
  %v3818 = vunpack.c.l.b16 %v2789
  %v3819 = vunpack.c.h.b16 %v2789
  %v3820 = vunpack.c.l.b16 %v2790
  %v3821 = vunpack.c.h.b16 %v2790
  %v3822 = vunpack.c.l.b16 %v2791
  %v3823 = vunpack.c.h.b16 %v2791
  %v3824 = vunpack.c.l.b16 %v2792
  %v3825 = vunpack.c.h.b16 %v2792
  %v3826 = vunpack.c.l.b16 %v2793
  %v3827 = vunpack.c.h.b16 %v2793
  %v3828 = vunpack.c.l.b16 %v2794
  %v3829 = vunpack.c.h.b16 %v2794
  %v3830 = vunpack.c.l.b16 %v2795
  %v3831 = vunpack.c.h.b16 %v2795
  %v3832 = vunpack.c.l.b16 %v2796
  %v3833 = vunpack.c.h.b16 %v2796
  %v3834 = vunpack.c.l.b16 %v2797
  %v3835 = vunpack.c.h.b16 %v2797
  %v3836 = vunpack.c.l.b16 %v2798
  %v3837 = vunpack.c.h.b16 %v2798
  %v3838 = vunpack.c.l.b16 %v2799
  %v3839 = vunpack.c.h.b16 %v2799
  %v3840 = vunpack.c.l.b16 %v2800
  %v3841 = vunpack.c.h.b16 %v2800
  %v3842 = vunpack.c.l.b16 %v2801
  %v3843 = vunpack.c.h.b16 %v2801
  %v3844 = vunpack.c.l.b16 %v2802
  %v3845 = vunpack.c.h.b16 %v2802
  %v3846 = vunpack.c.l.b16 %v2803
  %v3847 = vunpack.c.h.b16 %v2803
  %v3848 = vunpack.c.l.b16 %v2804
  %v3849 = vunpack.c.h.b16 %v2804
  %v3850 = vunpack.c.l.b16 %v2805
  %v3851 = vunpack.c.h.b16 %v2805
  %v3852 = vunpack.c.l.b16 %v2806
  %v3853 = vunpack.c.h.b16 %v2806
  %v3854 = vunpack.c.l.b16 %v2807
  %v3855 = vunpack.c.h.b16 %v2807
  %v3856 = vunpack.c.l.b16 %v2808
  %v3857 = vunpack.c.h.b16 %v2808
  %v3858 = vunpack.c.l.b16 %v2809
  %v3859 = vunpack.c.h.b16 %v2809
  %v3860 = vunpack.c.l.b16 %v2810
  %v3861 = vunpack.c.h.b16 %v2810
  %v3862 = vunpack.c.l.b16 %v2811
  %v3863 = vunpack.c.h.b16 %v2811
  %v3864 = vunpack.c.l.b16 %v2812
  %v3865 = vunpack.c.h.b16 %v2812
  %v3866 = vunpack.c.l.b16 %v2813
  %v3867 = vunpack.c.h.b16 %v2813
  %v3868 = vunpack.c.l.b16 %v2814
  %v3869 = vunpack.c.h.b16 %v2814
  %v3870 = vunpack.c.l.b16 %v2815
  %v3871 = vunpack.c.h.b16 %v2815
  %v3872 = vunpack.c.l.b16 %v2816
  %v3873 = vunpack.c.h.b16 %v2816
  %v3874 = vunpack.c.l.b16 %v2817
  %v3875 = vunpack.c.h.b16 %v2817
  %v3876 = vunpack.c.l.b16 %v2818
  %v3877 = vunpack.c.h.b16 %v2818
  %v3878 = vunpack.c.l.b16 %v2819
  %v3879 = vunpack.c.h.b16 %v2819
  %v3880 = vunpack.c.l.b16 %v2820
  %v3881 = vunpack.c.h.b16 %v2820
  %v3882 = vunpack.c.l.b16 %v2821
  %v3883 = vunpack.c.h.b16 %v2821
  %v3884 = vunpack.c.l.b16 %v2822
  %v3885 = vunpack.c.h.b16 %v2822
  %v3886 = vunpack.c.l.b16 %v2823
  %v3887 = vunpack.c.h.b16 %v2823
  %v3888 = vunpack.c.l.b16 %v2824
  %v3889 = vunpack.c.h.b16 %v2824
  %v3890 = vunpack.c.l.b16 %v2825
  %v3891 = vunpack.c.h.b16 %v2825
  %v3892 = vunpack.c.l.b16 %v2826
  %v3893 = vunpack.c.h.b16 %v2826
  %v3894 = vunpack.c.l.b16 %v2827
  %v3895 = vunpack.c.h.b16 %v2827
  %v3896 = vunpack.c.l.b16 %v2828
  %v3897 = vunpack.c.h.b16 %v2828
  %v3898 = vunpack.c.l.b16 %v2829
  %v3899 = vunpack.c.h.b16 %v2829
  %v3900 = vunpack.c.l.b16 %v2830
  %v3901 = vunpack.c.h.b16 %v2830
  %v3902 = vunpack.c.l.b16 %v2831
  %v3903 = vunpack.c.h.b16 %v2831
  %v3904 = vunpack.c.l.b16 %v2832
  %v3905 = vunpack.c.h.b16 %v2832
  %v3906 = vunpack.c.l.b16 %v2833
  %v3907 = vunpack.c.h.b16 %v2833
  %v3908 = vunpack.c.l.b16 %v2834
  %v3909 = vunpack.c.h.b16 %v2834
  %v3910 = vunpack.c.l.b16 %v2835
  %v3911 = vunpack.c.h.b16 %v2835
  %v3912 = vunpack.c.l.b16 %v2836
  %v3913 = vunpack.c.h.b16 %v2836
  %v3914 = vunpack.c.l.b16 %v2837
  %v3915 = vunpack.c.h.b16 %v2837
  %v3916 = vunpack.c.l.b16 %v2838
  %v3917 = vunpack.c.h.b16 %v2838
  %v3918 = vunpack.c.l.b16 %v2839
  %v3919 = vunpack.c.h.b16 %v2839
  %v3920 = vunpack.c.l.b16 %v2840
  %v3921 = vunpack.c.h.b16 %v2840
  %v3922 = vunpack.c.l.b16 %v2841
  %v3923 = vunpack.c.h.b16 %v2841
  %v3924 = vunpack.c.l.b16 %v2842
  %v3925 = vunpack.c.h.b16 %v2842
  %v3926 = vunpack.c.l.b16 %v2843
  %v3927 = vunpack.c.h.b16 %v2843
  %v3928 = vunpack.c.l.b16 %v2844
  %v3929 = vunpack.c.h.b16 %v2844
  %v3930 = vunpack.c.l.b16 %v2845
  %v3931 = vunpack.c.h.b16 %v2845
  %v3932 = vunpack.c.l.b16 %v2846
  %v3933 = vunpack.c.h.b16 %v2846
  %v3934 = vunpack.c.l.b16 %v2847
  %v3935 = vunpack.c.h.b16 %v2847
  %v3936 = vunpack.c.l.b16 %v2848
  %v3937 = vunpack.c.h.b16 %v2848
  %v3938 = vunpack.c.l.b16 %v2849
  %v3939 = vunpack.c.h.b16 %v2849
  %v3940 = vunpack.c.l.b16 %v2850
  %v3941 = vunpack.c.h.b16 %v2850
  %v3942 = vunpack.c.l.b16 %v2851
  %v3943 = vunpack.c.h.b16 %v2851
  %v3944 = vunpack.c.l.b16 %v2852
  %v3945 = vunpack.c.h.b16 %v2852
  %v3946 = vunpack.c.l.b16 %v2853
  %v3947 = vunpack.c.h.b16 %v2853
  %v3948 = vunpack.c.l.b16 %v2854
  %v3949 = vunpack.c.h.b16 %v2854
  %v3950 = vunpack.c.l.b16 %v2855
  %v3951 = vunpack.c.h.b16 %v2855
  %v3952 = vunpack.c.l.b16 %v2856
  %v3953 = vunpack.c.h.b16 %v2856
  %v3954 = vunpack.c.l.b16 %v2857
  %v3955 = vunpack.c.h.b16 %v2857
  %v3956 = vunpack.c.l.b16 %v2858
  %v3957 = vunpack.c.h.b16 %v2858
  %v3958 = vunpack.c.l.b16 %v2859
  %v3959 = vunpack.c.h.b16 %v2859
  %v3960 = vunpack.c.l.b16 %v2860
  %v3961 = vunpack.c.h.b16 %v2860
  %v3962 = vunpack.c.l.b16 %v2861
  %v3963 = vunpack.c.h.b16 %v2861
  %v3964 = vunpack.c.l.b16 %v2862
  %v3965 = vunpack.c.h.b16 %v2862
  %v3966 = vunpack.c.l.b16 %v2863
  %v3967 = vunpack.c.h.b16 %v2863
  %v3968 = vunpack.c.l.b16 %v2864
  %v3969 = vunpack.c.h.b16 %v2864
  %v3970 = vunpack.c.l.b16 %v2865
  %v3971 = vunpack.c.h.b16 %v2865
  %v3972 = vunpack.c.l.b16 %v2866
  %v3973 = vunpack.c.h.b16 %v2866
  %v3974 = vunpack.c.l.b16 %v2867
  %v3975 = vunpack.c.h.b16 %v2867
  %v3976 = vunpack.c.l.b16 %v2868
  %v3977 = vunpack.c.h.b16 %v2868
  %v3978 = vunpack.c.l.b16 %v2869
  %v3979 = vunpack.c.h.b16 %v2869
  %v3980 = vunpack.c.l.b16 %v2870
  %v3981 = vunpack.c.h.b16 %v2870
  %v3982 = vunpack.c.l.b16 %v2871
  %v3983 = vunpack.c.h.b16 %v2871
  %v3984 = vunpack.c.l.b16 %v2872
  %v3985 = vunpack.c.h.b16 %v2872
  %v3986 = vunpack.c.l.b16 %v2873
  %v3987 = vunpack.c.h.b16 %v2873
  %v3988 = vunpack.c.l.b16 %v2874
  %v3989 = vunpack.c.h.b16 %v2874
  %v3990 = vunpack.c.l.b16 %v2875
  %v3991 = vunpack.c.h.b16 %v2875
  %v3992 = vunpack.c.l.b16 %v2876
  %v3993 = vunpack.c.h.b16 %v2876
  %v3994 = vunpack.c.l.b16 %v2877
  %v3995 = vunpack.c.h.b16 %v2877
  %v3996 = vunpack.c.l.b16 %v2878
  %v3997 = vunpack.c.h.b16 %v2878
  %v3998 = vunpack.c.l.b16 %v2879
  %v3999 = vunpack.c.h.b16 %v2879
  %v4000 = vunpack.c.l.b16 %v2880
  %v4001 = vunpack.c.h.b16 %v2880
  %v4002 = vunpack.c.l.b16 %v2881
  %v4003 = vunpack.c.h.b16 %v2881
  %v4004 = vunpack.c.l.b16 %v2882
  %v4005 = vunpack.c.h.b16 %v2882
  %v4006 = vunpack.c.l.b16 %v2883
  %v4007 = vunpack.c.h.b16 %v2883
  %v4008 = vunpack.c.l.b16 %v2884
  %v4009 = vunpack.c.h.b16 %v2884
  %v4010 = vunpack.c.l.b16 %v2885
  %v4011 = vunpack.c.h.b16 %v2885
  %v4012 = vunpack.c.l.b16 %v2886
  %v4013 = vunpack.c.h.b16 %v2886
  %v4014 = vunpack.c.l.b16 %v2887
  %v4015 = vunpack.c.h.b16 %v2887
  %v4016 = vunpack.c.l.b16 %v2888
  %v4017 = vunpack.c.h.b16 %v2888
  %v4018 = vunpack.c.l.b16 %v2889
  %v4019 = vunpack.c.h.b16 %v2889
  %v4020 = vunpack.c.l.b16 %v2890
  %v4021 = vunpack.c.h.b16 %v2890
  %v4022 = vunpack.c.l.b16 %v2891
  %v4023 = vunpack.c.h.b16 %v2891
  %v4024 = vunpack.c.l.b16 %v2892
  %v4025 = vunpack.c.h.b16 %v2892
  %v4026 = vunpack.c.l.b16 %v2893
  %v4027 = vunpack.c.h.b16 %v2893
  %v4028 = vunpack.c.l.b16 %v2894
  %v4029 = vunpack.c.h.b16 %v2894
  %v4030 = vunpack.c.l.b16 %v2895
  %v4031 = vunpack.c.h.b16 %v2895
  %v4032 = vunpack.c.l.b16 %v2896
  %v4033 = vunpack.c.h.b16 %v2896
  %v4034 = vunpack.c.l.b16 %v2897
  %v4035 = vunpack.c.h.b16 %v2897
  %v4036 = vunpack.c.l.b16 %v2898
  %v4037 = vunpack.c.h.b16 %v2898
  %v4038 = vunpack.c.l.b16 %v2899
  %v4039 = vunpack.c.h.b16 %v2899
  %v4040 = vunpack.c.l.b16 %v2900
  %v4041 = vunpack.c.h.b16 %v2900
  %v4042 = vunpack.c.l.b16 %v2901
  %v4043 = vunpack.c.h.b16 %v2901
  %v4044 = vunpack.c.l.b16 %v2902
  %v4045 = vunpack.c.h.b16 %v2902
  %v4046 = vunpack.c.l.b16 %v2903
  %v4047 = vunpack.c.h.b16 %v2903
  %v4048 = vunpack.c.l.b16 %v2904
  %v4049 = vunpack.c.h.b16 %v2904
  %v4050 = vunpack.c.l.b16 %v2905
  %v4051 = vunpack.c.h.b16 %v2905
  %v4052 = vunpack.c.l.b16 %v2906
  %v4053 = vunpack.c.h.b16 %v2906
  %v4054 = vunpack.c.l.b16 %v2907
  %v4055 = vunpack.c.h.b16 %v2907
  %v4056 = vunpack.c.l.b16 %v2908
  %v4057 = vunpack.c.h.b16 %v2908
  %v4058 = vunpack.c.l.b16 %v2909
  %v4059 = vunpack.c.h.b16 %v2909
  %v4060 = vunpack.c.l.b16 %v2910
  %v4061 = vunpack.c.h.b16 %v2910
  %v4062 = vunpack.c.l.b16 %v2911
  %v4063 = vunpack.c.h.b16 %v2911
  %v4064 = vunpack.c.l.b16 %v2912
  %v4065 = vunpack.c.h.b16 %v2912
  %v4066 = vunpack.c.l.b16 %v2913
  %v4067 = vunpack.c.h.b16 %v2913
  %v4068 = vunpack.c.l.b16 %v2914
  %v4069 = vunpack.c.h.b16 %v2914
  %v4070 = vunpack.c.l.b16 %v2915
  %v4071 = vunpack.c.h.b16 %v2915
  %v4072 = vunpack.c.l.b16 %v2916
  %v4073 = vunpack.c.h.b16 %v2916
  %v4074 = vunpack.c.l.b16 %v2917
  %v4075 = vunpack.c.h.b16 %v2917
  %v4076 = vunpack.c.l.b16 %v2918
  %v4077 = vunpack.c.h.b16 %v2918
  %v4078 = vunpack.c.l.b16 %v2919
  %v4079 = vunpack.c.h.b16 %v2919
  %v4080 = vunpack.c.l.b16 %v2920
  %v4081 = vunpack.c.h.b16 %v2920
  %v4082 = vunpack.c.l.b16 %v2921
  %v4083 = vunpack.c.h.b16 %v2921
  %v4084 = vunpack.c.l.b16 %v2922
  %v4085 = vunpack.c.h.b16 %v2922
  %v4086 = vunpack.c.l.b16 %v2923
  %v4087 = vunpack.c.h.b16 %v2923
  %v4088 = vunpack.c.l.b16 %v2924
  %v4089 = vunpack.c.h.b16 %v2924
  %v4090 = vunpack.c.l.b16 %v2925
  %v4091 = vunpack.c.h.b16 %v2925
  %v4092 = vunpack.c.l.b16 %v2926
  %v4093 = vunpack.c.h.b16 %v2926
  %v4094 = vunpack.c.l.b16 %v2927
  %v4095 = vunpack.c.h.b16 %v2927
  %v4096 = vunpack.c.l.b16 %v2928
  %v4097 = vunpack.c.h.b16 %v2928
  %v4098 = vunpack.c.l.b16 %v2929
  %v4099 = vunpack.c.h.b16 %v2929
  %v4100 = vunpack.c.l.b16 %v2930
  %v4101 = vunpack.c.h.b16 %v2930
  %v4102 = vunpack.c.l.b16 %v2931
  %v4103 = vunpack.c.h.b16 %v2931
  %v4104 = vunpack.c.l.b16 %v2932
  %v4105 = vunpack.c.h.b16 %v2932
  %v4106 = vunpack.c.l.b16 %v2933
  %v4107 = vunpack.c.h.b16 %v2933
  %v4108 = vunpack.c.l.b16 %v2934
  %v4109 = vunpack.c.h.b16 %v2934
  %v4110 = vunpack.c.l.b16 %v2935
  %v4111 = vunpack.c.h.b16 %v2935
  %v4112 = vunpack.c.l.b16 %v2936
  %v4113 = vunpack.c.h.b16 %v2936
  %v4114 = vunpack.c.l.b16 %v2937
  %v4115 = vunpack.c.h.b16 %v2937
  %v4116 = vunpack.c.l.b16 %v2938
  %v4117 = vunpack.c.h.b16 %v2938
  %v4118 = vunpack.c.l.b16 %v2939
  %v4119 = vunpack.c.h.b16 %v2939
  %v4120 = vunpack.c.l.b16 %v2940
  %v4121 = vunpack.c.h.b16 %v2940
  %v4122 = vunpack.c.l.b16 %v2941
  %v4123 = vunpack.c.h.b16 %v2941
  %v4124 = vunpack.c.l.b16 %v2942
  %v4125 = vunpack.c.h.b16 %v2942
  %v4126 = vunpack.c.l.b16 %v2943
  %v4127 = vunpack.c.h.b16 %v2943
  %v4128 = vunpack.c.l.b16 %v2944
  %v4129 = vunpack.c.h.b16 %v2944
  %v4130 = vunpack.c.l.b16 %v2945
  %v4131 = vunpack.c.h.b16 %v2945
  %v4132 = vunpack.c.l.b16 %v2946
  %v4133 = vunpack.c.h.b16 %v2946
  %v4134 = vunpack.c.l.b16 %v2947
  %v4135 = vunpack.c.h.b16 %v2947
  %v4136 = vunpack.c.l.b16 %v2948
  %v4137 = vunpack.c.h.b16 %v2948
  %v4138 = vunpack.c.l.b16 %v2949
  %v4139 = vunpack.c.h.b16 %v2949
  %v4140 = vunpack.c.l.b16 %v2950
  %v4141 = vunpack.c.h.b16 %v2950
  %v4142 = vunpack.c.l.b16 %v2951
  %v4143 = vunpack.c.h.b16 %v2951
  %v4144 = vunpack.c.l.b16 %v2952
  %v4145 = vunpack.c.h.b16 %v2952
  %v4146 = vunpack.c.l.b16 %v2953
  %v4147 = vunpack.c.h.b16 %v2953
  %v4148 = vunpack.c.l.b16 %v2954
  %v4149 = vunpack.c.h.b16 %v2954
  %v4150 = vunpack.c.l.b16 %v2955
  %v4151 = vunpack.c.h.b16 %v2955
  %v4152 = vunpack.c.l.b16 %v2956
  %v4153 = vunpack.c.h.b16 %v2956
  %v4154 = vunpack.c.l.b16 %v2957
  %v4155 = vunpack.c.h.b16 %v2957
  %v4156 = vunpack.c.l.b16 %v2958
  %v4157 = vunpack.c.h.b16 %v2958
  %v4158 = vunpack.c.l.b16 %v2959
  %v4159 = vunpack.c.h.b16 %v2959
  %v4160 = vunpack.c.l.b16 %v2960
  %v4161 = vunpack.c.h.b16 %v2960
  %v4162 = vunpack.c.l.b16 %v2961
  %v4163 = vunpack.c.h.b16 %v2961
  %v4164 = vunpack.c.l.b16 %v2962
  %v4165 = vunpack.c.h.b16 %v2962
  %v4166 = vunpack.c.l.b16 %v2963
  %v4167 = vunpack.c.h.b16 %v2963
  %v4168 = vunpack.c.l.b16 %v2964
  %v4169 = vunpack.c.h.b16 %v2964
  %v4170 = vunpack.c.l.b16 %v2965
  %v4171 = vunpack.c.h.b16 %v2965
  %v4172 = vunpack.c.l.b16 %v2966
  %v4173 = vunpack.c.h.b16 %v2966
  %v4174 = vunpack.c.l.b16 %v2967
  %v4175 = vunpack.c.h.b16 %v2967
  %v4176 = vunpack.c.l.b16 %v2968
  %v4177 = vunpack.c.h.b16 %v2968
  %v4178 = vunpack.c.l.b16 %v2969
  %v4179 = vunpack.c.h.b16 %v2969
  %v4180 = vunpack.c.l.b16 %v2970
  %v4181 = vunpack.c.h.b16 %v2970
  %v4182 = vunpack.c.l.b16 %v2971
  %v4183 = vunpack.c.h.b16 %v2971
  %v4184 = vunpack.c.l.b16 %v2972
  %v4185 = vunpack.c.h.b16 %v2972
  %v4186 = vunpack.c.l.b16 %v2973
  %v4187 = vunpack.c.h.b16 %v2973
  %v4188 = vunpack.c.l.b16 %v2974
  %v4189 = vunpack.c.h.b16 %v2974
  %v4190 = vunpack.c.l.b16 %v2975
  %v4191 = vunpack.c.h.b16 %v2975
  %v4192 = vunpack.c.l.b16 %v2976
  %v4193 = vunpack.c.h.b16 %v2976
  %v4194 = vunpack.c.l.b16 %v2977
  %v4195 = vunpack.c.h.b16 %v2977
  %v4196 = vunpack.c.l.b16 %v2978
  %v4197 = vunpack.c.h.b16 %v2978
  %v4198 = vunpack.c.l.b16 %v2979
  %v4199 = vunpack.c.h.b16 %v2979
  %v4200 = vunpack.c.l.b16 %v2980
  %v4201 = vunpack.c.h.b16 %v2980
  %v4202 = vunpack.c.l.b16 %v2981
  %v4203 = vunpack.c.h.b16 %v2981
  %v4204 = vunpack.c.l.b16 %v2982
  %v4205 = vunpack.c.h.b16 %v2982
  %v4206 = vunpack.c.l.b16 %v2983
  %v4207 = vunpack.c.h.b16 %v2983
  %v4208 = vunpack.c.l.b16 %v2984
  %v4209 = vunpack.c.h.b16 %v2984
  %v4210 = vunpack.c.l.b16 %v2985
  %v4211 = vunpack.c.h.b16 %v2985
  %v4212 = vunpack.c.l.b16 %v2986
  %v4213 = vunpack.c.h.b16 %v2986
  %v4214 = vunpack.c.l.b16 %v2987
  %v4215 = vunpack.c.h.b16 %v2987
  %v4216 = vunpack.c.l.b16 %v2988
  %v4217 = vunpack.c.h.b16 %v2988
  %v4218 = vunpack.c.l.b16 %v2989
  %v4219 = vunpack.c.h.b16 %v2989
  %v4220 = vunpack.c.l.b16 %v2990
  %v4221 = vunpack.c.h.b16 %v2990
  %v4222 = vunpack.c.l.b16 %v2991
  %v4223 = vunpack.c.h.b16 %v2991
  %v4224 = vunpack.c.l.b16 %v2992
  %v4225 = vunpack.c.h.b16 %v2992
  %v4226 = vunpack.c.l.b16 %v2993
  %v4227 = vunpack.c.h.b16 %v2993
  %v4228 = vunpack.c.l.b16 %v2994
  %v4229 = vunpack.c.h.b16 %v2994
  %v4230 = vunpack.c.l.b16 %v2995
  %v4231 = vunpack.c.h.b16 %v2995
  %v4232 = vunpack.c.l.b16 %v2996
  %v4233 = vunpack.c.h.b16 %v2996
  %v4234 = vunpack.c.l.b16 %v2997
  %v4235 = vunpack.c.h.b16 %v2997
  %v4236 = vunpack.c.l.b16 %v2998
  %v4237 = vunpack.c.h.b16 %v2998
  %v4238 = vunpack.c.l.b16 %v2999
  %v4239 = vunpack.c.h.b16 %v2999
  %v4240 = vunpack.c.l.b16 %v3000
  %v4241 = vunpack.c.h.b16 %v3000
  %v4242 = vunpack.c.l.b16 %v3001
  %v4243 = vunpack.c.h.b16 %v3001
  %v4244 = vunpack.c.l.b16 %v3002
  %v4245 = vunpack.c.h.b16 %v3002
  %v4246 = vunpack.c.l.b16 %v3003
  %v4247 = vunpack.c.h.b16 %v3003
  %v4248 = vunpack.c.l.b16 %v3004
  %v4249 = vunpack.c.h.b16 %v3004
  %v4250 = vunpack.c.l.b16 %v3005
  %v4251 = vunpack.c.h.b16 %v3005
  %v4252 = vunpack.c.l.b16 %v3006
  %v4253 = vunpack.c.h.b16 %v3006
  %v4254 = vunpack.c.l.b16 %v3007
  %v4255 = vunpack.c.h.b16 %v3007
  %v4256 = vunpack.c.l.b16 %v3008
  %v4257 = vunpack.c.h.b16 %v3008
  %v4258 = vunpack.c.l.b16 %v3009
  %v4259 = vunpack.c.h.b16 %v3009
  %v4260 = vunpack.c.l.b16 %v3010
  %v4261 = vunpack.c.h.b16 %v3010
  %v4262 = vunpack.c.l.b16 %v3011
  %v4263 = vunpack.c.h.b16 %v3011
  %v4264 = vunpack.c.l.b16 %v3012
  %v4265 = vunpack.c.h.b16 %v3012
  %v4266 = vunpack.c.l.b16 %v3013
  %v4267 = vunpack.c.h.b16 %v3013
  %v4268 = vunpack.c.l.b16 %v3014
  %v4269 = vunpack.c.h.b16 %v3014
  %v4270 = vunpack.c.l.b16 %v3015
  %v4271 = vunpack.c.h.b16 %v3015
  %v4272 = vunpack.c.l.b16 %v3016
  %v4273 = vunpack.c.h.b16 %v3016
  %v4274 = vunpack.c.l.b16 %v3017
  %v4275 = vunpack.c.h.b16 %v3017
  %v4276 = vunpack.c.l.b16 %v3018
  %v4277 = vunpack.c.h.b16 %v3018
  %v4278 = vunpack.c.l.b16 %v3019
  %v4279 = vunpack.c.h.b16 %v3019
  %v4280 = vunpack.c.l.b16 %v3020
  %v4281 = vunpack.c.h.b16 %v3020
  %v4282 = vunpack.c.l.b16 %v3021
  %v4283 = vunpack.c.h.b16 %v3021
  %v4284 = vunpack.c.l.b16 %v3022
  %v4285 = vunpack.c.h.b16 %v3022
  %v4286 = vunpack.c.l.b16 %v3023
  %v4287 = vunpack.c.h.b16 %v3023
  %v4288 = vunpack.c.l.b16 %v3024
  %v4289 = vunpack.c.h.b16 %v3024
  %v4290 = vunpack.c.l.b16 %v3025
  %v4291 = vunpack.c.h.b16 %v3025
  %v4292 = vunpack.c.l.b16 %v3026
  %v4293 = vunpack.c.h.b16 %v3026
  %v4294 = vunpack.c.l.b16 %v3027
  %v4295 = vunpack.c.h.b16 %v3027
  %v4296 = vunpack.c.l.b16 %v3028
  %v4297 = vunpack.c.h.b16 %v3028
  %v4298 = vunpack.c.l.b16 %v3029
  %v4299 = vunpack.c.h.b16 %v3029
  %v4300 = vunpack.c.l.b16 %v3030
  %v4301 = vunpack.c.h.b16 %v3030
  %v4302 = vunpack.c.l.b16 %v3031
  %v4303 = vunpack.c.h.b16 %v3031
  %v4304 = vunpack.c.l.b16 %v3032
  %v4305 = vunpack.c.h.b16 %v3032
  %v4306 = vunpack.c.l.b16 %v3033
  %v4307 = vunpack.c.h.b16 %v3033
  %v4308 = vunpack.c.l.b16 %v3034
  %v4309 = vunpack.c.h.b16 %v3034
  %v4310 = vunpack.c.l.b16 %v3035
  %v4311 = vunpack.c.h.b16 %v3035
  %v4312 = vunpack.c.l.b16 %v3036
  %v4313 = vunpack.c.h.b16 %v3036
  %v4314 = vunpack.c.l.b16 %v3037
  %v4315 = vunpack.c.h.b16 %v3037
  %v4316 = vunpack.c.l.b16 %v3038
  %v4317 = vunpack.c.h.b16 %v3038
  %v4318 = vunpack.c.l.b16 %v3039
  %v4319 = vunpack.c.h.b16 %v3039
  %v4320 = vunpack.c.l.b16 %v3040
  %v4321 = vunpack.c.h.b16 %v3040
  %v4322 = vunpack.c.l.b16 %v3041
  %v4323 = vunpack.c.h.b16 %v3041
  %v4324 = vunpack.c.l.b16 %v3042
  %v4325 = vunpack.c.h.b16 %v3042
  %v4326 = vunpack.c.l.b16 %v3043
  %v4327 = vunpack.c.h.b16 %v3043
  %v4328 = vunpack.c.l.b16 %v3044
  %v4329 = vunpack.c.h.b16 %v3044
  %v4330 = vunpack.c.l.b16 %v3045
  %v4331 = vunpack.c.h.b16 %v3045
  %v4332 = vunpack.c.l.b16 %v3046
  %v4333 = vunpack.c.h.b16 %v3046
  %v4334 = vunpack.c.l.b16 %v3047
  %v4335 = vunpack.c.h.b16 %v3047
  %v4336 = vunpack.c.l.b16 %v3048
  %v4337 = vunpack.c.h.b16 %v3048
  %v4338 = vunpack.c.l.b16 %v3049
  %v4339 = vunpack.c.h.b16 %v3049
  %v4340 = vunpack.c.l.b16 %v3050
  %v4341 = vunpack.c.h.b16 %v3050
  %v4342 = vunpack.c.l.b16 %v3051
  %v4343 = vunpack.c.h.b16 %v3051
  %v4344 = vunpack.c.l.b16 %v3052
  %v4345 = vunpack.c.h.b16 %v3052
  %v4346 = vunpack.c.l.b16 %v3053
  %v4347 = vunpack.c.h.b16 %v3053
  %v4348 = vunpack.c.l.b16 %v3054
  %v4349 = vunpack.c.h.b16 %v3054
  %v4350 = vunpack.c.l.b16 %v3055
  %v4351 = vunpack.c.h.b16 %v3055
  %v4352 = vunpack.c.l.b16 %v3056
  %v4353 = vunpack.c.h.b16 %v3056
  %v4354 = vunpack.c.l.b16 %v3057
  %v4355 = vunpack.c.h.b16 %v3057
  %v4356 = vunpack.c.l.b16 %v3058
  %v4357 = vunpack.c.h.b16 %v3058
  %v4358 = vunpack.c.l.b16 %v3059
  %v4359 = vunpack.c.h.b16 %v3059
  %v4360 = vunpack.c.l.b16 %v3060
  %v4361 = vunpack.c.h.b16 %v3060
  %v4362 = vunpack.c.l.b16 %v3061
  %v4363 = vunpack.c.h.b16 %v3061
  %v4364 = vunpack.c.l.b16 %v3062
  %v4365 = vunpack.c.h.b16 %v3062
  %v4366 = vunpack.c.l.b16 %v3063
  %v4367 = vunpack.c.h.b16 %v3063
  %v4368 = vunpack.c.l.b16 %v3064
  %v4369 = vunpack.c.h.b16 %v3064
  %v4370 = vunpack.c.l.b16 %v3065
  %v4371 = vunpack.c.h.b16 %v3065
  %v4372 = vunpack.c.l.b16 %v3066
  %v4373 = vunpack.c.h.b16 %v3066
  %v4374 = vunpack.c.l.b16 %v3067
  %v4375 = vunpack.c.h.b16 %v3067
  %v4376 = vunpack.c.l.b16 %v3068
  %v4377 = vunpack.c.h.b16 %v3068
  %v4378 = vunpack.c.l.b16 %v3069
  %v4379 = vunpack.c.h.b16 %v3069
  %v4380 = vunpack.c.l.b16 %v3070
  %v4381 = vunpack.c.h.b16 %v3070
  %v4382 = vunpack.c.l.b16 %v3071
  %v4383 = vunpack.c.h.b16 %v3071
  %v4384 = vunpack.c.l.b16 %v3072
  %v4385 = vunpack.c.h.b16 %v3072
  %v4386 = vunpack.c.l.b16 %v3073
  %v4387 = vunpack.c.h.b16 %v3073
  %v4388 = vunpack.c.l.b16 %v3074
  %v4389 = vunpack.c.h.b16 %v3074
  %v4390 = vunpack.c.l.b16 %v3075
  %v4391 = vunpack.c.h.b16 %v3075
  %v4392 = vunpack.c.l.b16 %v3076
  %v4393 = vunpack.c.h.b16 %v3076
  %v4394 = vunpack.c.l.b16 %v3077
  %v4395 = vunpack.c.h.b16 %v3077
  %v4396 = vunpack.c.l.b16 %v3078
  %v4397 = vunpack.c.h.b16 %v3078
  %v4398 = vunpack.c.l.b16 %v3079
  %v4399 = vunpack.c.h.b16 %v3079
  %v4400 = vunpack.c.l.b16 %v3080
  %v4401 = vunpack.c.h.b16 %v3080
  %v4402 = vunpack.c.l.b16 %v3081
  %v4403 = vunpack.c.h.b16 %v3081
  %v4404 = vunpack.c.l.b16 %v3082
  %v4405 = vunpack.c.h.b16 %v3082
  %v4406 = vunpack.c.l.b16 %v3083
  %v4407 = vunpack.c.h.b16 %v3083
  %v4408 = vunpack.c.l.b16 %v3084
  %v4409 = vunpack.c.h.b16 %v3084
  %v4410 = vunpack.c.l.b16 %v3085
  %v4411 = vunpack.c.h.b16 %v3085
  %v4412 = vunpack.c.l.b16 %v3086
  %v4413 = vunpack.c.h.b16 %v3086
  %v4414 = vunpack.c.l.b16 %v3087
  %v4415 = vunpack.c.h.b16 %v3087
  %v4416 = vunpack.c.l.b16 %v3088
  %v4417 = vunpack.c.h.b16 %v3088
  %v4418 = vunpack.c.l.b16 %v3089
  %v4419 = vunpack.c.h.b16 %v3089
  %v4420 = vunpack.c.l.b16 %v3090
  %v4421 = vunpack.c.h.b16 %v3090
  %v4422 = vunpack.c.l.b16 %v3091
  %v4423 = vunpack.c.h.b16 %v3091
  %v4424 = vunpack.c.l.b16 %v3092
  %v4425 = vunpack.c.h.b16 %v3092
  %v4426 = vunpack.c.l.b16 %v3093
  %v4427 = vunpack.c.h.b16 %v3093
  %v4428 = vunpack.c.l.b16 %v3094
  %v4429 = vunpack.c.h.b16 %v3094
  %v4430 = vunpack.c.l.b16 %v3095
  %v4431 = vunpack.c.h.b16 %v3095
  %v4432 = vunpack.c.l.b16 %v3096
  %v4433 = vunpack.c.h.b16 %v3096
  %v4434 = vunpack.c.l.b16 %v3097
  %v4435 = vunpack.c.h.b16 %v3097
  %v4436 = vunpack.c.l.b16 %v3098
  %v4437 = vunpack.c.h.b16 %v3098
  %v4438 = vunpack.c.l.b16 %v3099
  %v4439 = vunpack.c.h.b16 %v3099
  %v4440 = vunpack.c.l.b16 %v3100
  %v4441 = vunpack.c.h.b16 %v3100
  %v4442 = vunpack.c.l.b16 %v3101
  %v4443 = vunpack.c.h.b16 %v3101
  %v4444 = vunpack.c.l.b16 %v3102
  %v4445 = vunpack.c.h.b16 %v3102
  %v4446 = vunpack.c.l.b16 %v3103
  %v4447 = vunpack.c.h.b16 %v3103
  %v4448 = vunpack.c.l.b16 %v3104
  %v4449 = vunpack.c.h.b16 %v3104
  %v4450 = vunpack.c.l.b16 %v3105
  %v4451 = vunpack.c.h.b16 %v3105
  %v4452 = vunpack.c.l.b16 %v3106
  %v4453 = vunpack.c.h.b16 %v3106
  %v4454 = vunpack.c.l.b16 %v3107
  %v4455 = vunpack.c.h.b16 %v3107
  %v4456 = vunpack.c.l.b16 %v3108
  %v4457 = vunpack.c.h.b16 %v3108
  %v4458 = vunpack.c.l.b16 %v3109
  %v4459 = vunpack.c.h.b16 %v3109
  %v4460 = vunpack.c.l.b16 %v3110
  %v4461 = vunpack.c.h.b16 %v3110
  %v4462 = vunpack.c.l.b16 %v3111
  %v4463 = vunpack.c.h.b16 %v3111
  %v4464 = vunpack.c.l.b16 %v3112
  %v4465 = vunpack.c.h.b16 %v3112
  %v4466 = vunpack.c.l.b16 %v3113
  %v4467 = vunpack.c.h.b16 %v3113
  %v4468 = vunpack.c.l.b16 %v3114
  %v4469 = vunpack.c.h.b16 %v3114
  %v4470 = vunpack.c.l.b16 %v3115
  %v4471 = vunpack.c.h.b16 %v3115
  %v4472 = vunpack.c.l.b16 %v3116
  %v4473 = vunpack.c.h.b16 %v3116
  %v4474 = vunpack.c.l.b16 %v3117
  %v4475 = vunpack.c.h.b16 %v3117
  %v4476 = vunpack.c.l.b16 %v3118
  %v4477 = vunpack.c.h.b16 %v3118
  %v4478 = vunpack.c.l.b16 %v3119
  %v4479 = vunpack.c.h.b16 %v3119
  %v4480 = vunpack.c.l.b16 %v3120
  %v4481 = vunpack.c.h.b16 %v3120
  %v4482 = vunpack.c.l.b16 %v3121
  %v4483 = vunpack.c.h.b16 %v3121
  %v4484 = vunpack.c.l.b16 %v3122
  %v4485 = vunpack.c.h.b16 %v3122
  %v4486 = vunpack.c.l.b16 %v3123
  %v4487 = vunpack.c.h.b16 %v3123
  %v4488 = vunpack.c.l.b16 %v3124
  %v4489 = vunpack.c.h.b16 %v3124
  %v4490 = vunpack.c.l.b16 %v3125
  %v4491 = vunpack.c.h.b16 %v3125
  %v4492 = vunpack.c.l.b16 %v3126
  %v4493 = vunpack.c.h.b16 %v3126
  %v4494 = vunpack.c.l.b16 %v3127
  %v4495 = vunpack.c.h.b16 %v3127
  %v4496 = vunpack.c.l.b16 %v3128
  %v4497 = vunpack.c.h.b16 %v3128
  %v4498 = vunpack.c.l.b16 %v3129
  %v4499 = vunpack.c.h.b16 %v3129
  %v4500 = vunpack.c.l.b16 %v3130
  %v4501 = vunpack.c.h.b16 %v3130
  %v4502 = vunpack.c.l.b16 %v3131
  %v4503 = vunpack.c.h.b16 %v3131
  %v4504 = vunpack.c.l.b16 %v3132
  %v4505 = vunpack.c.h.b16 %v3132
  %v4506 = vunpack.c.l.b16 %v3133
  %v4507 = vunpack.c.h.b16 %v3133
  %v4508 = vunpack.c.l.b16 %v3134
  %v4509 = vunpack.c.h.b16 %v3134
  %v4510 = vunpack.c.l.b16 %v3135
  %v4511 = vunpack.c.h.b16 %v3135
  %v4512 = vunpack.c.l.b16 %v3136
  %v4513 = vunpack.c.h.b16 %v3136
  %v4514 = vunpack.c.l.b16 %v3137
  %v4515 = vunpack.c.h.b16 %v3137
  %v4516 = vunpack.c.l.b16 %v3138
  %v4517 = vunpack.c.h.b16 %v3138
  %v4518 = vunpack.c.l.b16 %v3139
  %v4519 = vunpack.c.h.b16 %v3139
  %v4520 = vunpack.c.l.b16 %v3140
  %v4521 = vunpack.c.h.b16 %v3140
  %v4522 = vunpack.c.l.b16 %v3141
  %v4523 = vunpack.c.h.b16 %v3141
  %v4524 = vunpack.c.l.b16 %v3142
  %v4525 = vunpack.c.h.b16 %v3142
  %v4526 = vunpack.c.l.b16 %v3143
  %v4527 = vunpack.c.h.b16 %v3143
  %v4528 = vunpack.c.l.b16 %v3144
  %v4529 = vunpack.c.h.b16 %v3144
  %v4530 = vunpack.c.l.b16 %v3145
  %v4531 = vunpack.c.h.b16 %v3145
  %v4532 = vunpack.c.l.b16 %v3146
  %v4533 = vunpack.c.h.b16 %v3146
  %v4534 = vunpack.c.l.b16 %v3147
  %v4535 = vunpack.c.h.b16 %v3147
  %v4536 = vunpack.c.l.b16 %v3148
  %v4537 = vunpack.c.h.b16 %v3148
  %v4538 = vunpack.c.l.b16 %v3149
  %v4539 = vunpack.c.h.b16 %v3149
  %v4540 = vunpack.c.l.b16 %v3150
  %v4541 = vunpack.c.h.b16 %v3150
  %v4542 = vunpack.c.l.b16 %v3151
  %v4543 = vunpack.c.h.b16 %v3151
  %v4544 = vunpack.c.l.b16 %v3152
  %v4545 = vunpack.c.h.b16 %v3152
  %v4546 = vunpack.c.l.b16 %v3153
  %v4547 = vunpack.c.h.b16 %v3153
  %v4548 = vunpack.c.l.b16 %v3154
  %v4549 = vunpack.c.h.b16 %v3154
  %v4550 = vunpack.c.l.b16 %v3155
  %v4551 = vunpack.c.h.b16 %v3155
  %v4552 = vunpack.c.l.b16 %v3156
  %v4553 = vunpack.c.h.b16 %v3156
  %v4554 = vunpack.c.l.b16 %v3157
  %v4555 = vunpack.c.h.b16 %v3157
  %v4556 = vunpack.c.l.b16 %v3158
  %v4557 = vunpack.c.h.b16 %v3158
  %v4558 = vunpack.c.l.b16 %v3159
  %v4559 = vunpack.c.h.b16 %v3159
  %v4560 = vunpack.c.l.b16 %v3160
  %v4561 = vunpack.c.h.b16 %v3160
  %v4562 = vunpack.c.l.b16 %v3161
  %v4563 = vunpack.c.h.b16 %v3161
  %v4564 = vunpack.c.l.b16 %v3162
  %v4565 = vunpack.c.h.b16 %v3162
  %v4566 = vunpack.c.l.b16 %v3163
  %v4567 = vunpack.c.h.b16 %v3163
  %v4568 = vunpack.c.l.b16 %v3164
  %v4569 = vunpack.c.h.b16 %v3164
  %v4570 = vunpack.c.l.b16 %v3165
  %v4571 = vunpack.c.h.b16 %v3165
  %v4572 = vunpack.c.l.b16 %v3166
  %v4573 = vunpack.c.h.b16 %v3166
  %v4574 = vunpack.c.l.b16 %v3167
  %v4575 = vunpack.c.h.b16 %v3167
  %v4576 = vunpack.c.l.b16 %v3168
  %v4577 = vunpack.c.h.b16 %v3168
  %v4578 = vunpack.c.l.b16 %v3169
  %v4579 = vunpack.c.h.b16 %v3169
  %v4580 = vunpack.c.l.b16 %v3170
  %v4581 = vunpack.c.h.b16 %v3170
  %v4582 = vunpack.c.l.b16 %v3171
  %v4583 = vunpack.c.h.b16 %v3171
  %v4584 = vunpack.c.l.b16 %v3172
  %v4585 = vunpack.c.h.b16 %v3172
  %v4586 = vunpack.c.l.b16 %v3173
  %v4587 = vunpack.c.h.b16 %v3173
  %v4588 = vunpack.c.l.b16 %v3174
  %v4589 = vunpack.c.h.b16 %v3174
  %v4590 = vunpack.c.l.b16 %v3175
  %v4591 = vunpack.c.h.b16 %v3175
  %v4592 = vunpack.c.l.b16 %v3176
  %v4593 = vunpack.c.h.b16 %v3176
  %v4594 = vunpack.c.l.b16 %v3177
  %v4595 = vunpack.c.h.b16 %v3177
  %v4596 = vunpack.c.l.b16 %v3178
  %v4597 = vunpack.c.h.b16 %v3178
  %v4598 = vunpack.c.l.b16 %v3179
  %v4599 = vunpack.c.h.b16 %v3179
  %v4600 = vunpack.c.l.b16 %v3180
  %v4601 = vunpack.c.h.b16 %v3180
  %v4602 = vunpack.c.l.b16 %v3181
  %v4603 = vunpack.c.h.b16 %v3181
  %v4604 = vunpack.c.l.b16 %v3182
  %v4605 = vunpack.c.h.b16 %v3182
  %v4606 = vunpack.c.l.b16 %v3183
  %v4607 = vunpack.c.h.b16 %v3183
  %v4608 = vunpack.c.l.b16 %v3184
  %v4609 = vunpack.c.h.b16 %v3184
  %v4610 = vunpack.c.l.b16 %v3185
  %v4611 = vunpack.c.h.b16 %v3185
  %v4612 = vunpack.c.l.b16 %v3186
  %v4613 = vunpack.c.h.b16 %v3186
  %v4614 = vunpack.c.l.b16 %v3187
  %v4615 = vunpack.c.h.b16 %v3187
  %v4616 = vunpack.c.l.b16 %v3188
  %v4617 = vunpack.c.h.b16 %v3188
  %v4618 = vunpack.c.l.b16 %v3189
  %v4619 = vunpack.c.h.b16 %v3189
  %v4620 = vunpack.c.l.b16 %v3190
  %v4621 = vunpack.c.h.b16 %v3190
  %v4622 = vunpack.c.l.b16 %v3191
  %v4623 = vunpack.c.h.b16 %v3191
  %v4624 = vunpack.c.l.b16 %v3192
  %v4625 = vunpack.c.h.b16 %v3192
  %v4626 = vunpack.c.l.b16 %v3193
  %v4627 = vunpack.c.h.b16 %v3193
  %v4628 = vunpack.c.l.b16 %v3194
  %v4629 = vunpack.c.h.b16 %v3194
  %v4630 = vunpack.c.l.b16 %v3195
  %v4631 = vunpack.c.h.b16 %v3195
  %v4632 = vunpack.c.l.b16 %v3196
  %v4633 = vunpack.c.h.b16 %v3196
  %v4634 = vunpack.c.l.b16 %v3197
  %v4635 = vunpack.c.h.b16 %v3197
  %v4636 = vunpack.c.l.b16 %v3198
  %v4637 = vunpack.c.h.b16 %v3198
  %v4638 = vunpack.c.l.b16 %v3199
  %v4639 = vunpack.c.h.b16 %v3199
  %v4640 = vunpack.c.l.b16 %v3200
  %v4641 = vunpack.c.h.b16 %v3200
  %v4642 = vunpack.c.l.b16 %v3201
  %v4643 = vunpack.c.h.b16 %v3201
  %v4644 = vunpack.c.l.b16 %v3202
  %v4645 = vunpack.c.h.b16 %v3202
  %v4646 = vunpack.c.l.b16 %v3203
  %v4647 = vunpack.c.h.b16 %v3203
  %v4648 = vunpack.c.l.b16 %v3204
  %v4649 = vunpack.c.h.b16 %v3204
  %v4650 = vunpack.c.l.b16 %v3205
  %v4651 = vunpack.c.h.b16 %v3205
  %v4652 = vunpack.c.l.b16 %v3206
  %v4653 = vunpack.c.h.b16 %v3206
  %v4654 = vunpack.c.l.b16 %v3207
  %v4655 = vunpack.c.h.b16 %v3207
  %v4656 = vunpack.c.l.b16 %v3208
  %v4657 = vunpack.c.h.b16 %v3208
  %v4658 = vunpack.c.l.b16 %v3209
  %v4659 = vunpack.c.h.b16 %v3209
  %v4660 = vunpack.c.l.b16 %v3210
  %v4661 = vunpack.c.h.b16 %v3210
  %v4662 = vunpack.c.l.b16 %v3211
  %v4663 = vunpack.c.h.b16 %v3211
  %v4664 = vunpack.c.l.b16 %v3212
  %v4665 = vunpack.c.h.b16 %v3212
  %v4666 = vunpack.c.l.b16 %v3213
  %v4667 = vunpack.c.h.b16 %v3213
  %v4668 = vunpack.c.l.b16 %v3214
  %v4669 = vunpack.c.h.b16 %v3214
  %v4670 = vunpack.c.l.b16 %v3215
  %v4671 = vunpack.c.h.b16 %v3215
  %v4672 = vunpack.c.l.b16 %v3216
  %v4673 = vunpack.c.h.b16 %v3216
  %v4674 = vunpack.c.l.b16 %v3217
  %v4675 = vunpack.c.h.b16 %v3217
  %v4676 = vunpack.c.l.b16 %v3218
  %v4677 = vunpack.c.h.b16 %v3218
  %v4678 = vunpack.c.l.b16 %v3219
  %v4679 = vunpack.c.h.b16 %v3219
  %v4680 = vunpack.c.l.b16 %v3220
  %v4681 = vunpack.c.h.b16 %v3220
  %v4682 = vunpack.c.l.b16 %v3221
  %v4683 = vunpack.c.h.b16 %v3221
  %v4684 = vunpack.c.l.b16 %v3222
  %v4685 = vunpack.c.h.b16 %v3222
  %v4686 = vunpack.c.l.b16 %v3223
  %v4687 = vunpack.c.h.b16 %v3223
  %v4688 = vunpack.c.l.b16 %v3224
  %v4689 = vunpack.c.h.b16 %v3224
  %v4690 = vunpack.c.l.b16 %v3225
  %v4691 = vunpack.c.h.b16 %v3225
  %v4692 = vunpack.c.l.b16 %v3226
  %v4693 = vunpack.c.h.b16 %v3226
  %v4694 = vunpack.c.l.b16 %v3227
  %v4695 = vunpack.c.h.b16 %v3227
  %v4696 = vunpack.c.l.b16 %v3228
  %v4697 = vunpack.c.h.b16 %v3228
  %v4698 = vunpack.c.l.b16 %v3229
  %v4699 = vunpack.c.h.b16 %v3229
  %v4700 = vunpack.c.l.b16 %v3230
  %v4701 = vunpack.c.h.b16 %v3230
  %v4702 = vunpack.c.l.b16 %v3231
  %v4703 = vunpack.c.h.b16 %v3231
  %v4704 = vunpack.c.l.b16 %v3232
  %v4705 = vunpack.c.h.b16 %v3232
  %v4706 = vunpack.c.l.b16 %v3233
  %v4707 = vunpack.c.h.b16 %v3233
  %v4708 = vunpack.c.l.b16 %v3234
  %v4709 = vunpack.c.h.b16 %v3234
  %v4710 = vunpack.c.l.b16 %v3235
  %v4711 = vunpack.c.h.b16 %v3235
  %v4712 = vunpack.c.l.b16 %v3236
  %v4713 = vunpack.c.h.b16 %v3236
  %v4714 = vunpack.c.l.b16 %v3237
  %v4715 = vunpack.c.h.b16 %v3237
  %v4716 = vunpack.c.l.b16 %v3238
  %v4717 = vunpack.c.h.b16 %v3238
  %v4718 = vunpack.c.l.b16 %v3239
  %v4719 = vunpack.c.h.b16 %v3239
  %v4720 = vunpack.c.l.b16 %v3240
  %v4721 = vunpack.c.h.b16 %v3240
  %v4722 = vunpack.c.l.b16 %v3241
  %v4723 = vunpack.c.h.b16 %v3241
  %v4724 = vunpack.c.l.b16 %v3242
  %v4725 = vunpack.c.h.b16 %v3242
  %v4726 = vunpack.c.l.b16 %v3243
  %v4727 = vunpack.c.h.b16 %v3243
  %v4728 = vunpack.c.l.b16 %v3244
  %v4729 = vunpack.c.h.b16 %v3244
  %v4730 = vunpack.c.l.b16 %v3245
  %v4731 = vunpack.c.h.b16 %v3245
  %v4732 = vunpack.c.l.b16 %v3246
  %v4733 = vunpack.c.h.b16 %v3246
  %v4734 = vunpack.c.l.b16 %v3247
  %v4735 = vunpack.c.h.b16 %v3247
  %v4736 = vunpack.c.l.b16 %v3248
  %v4737 = vunpack.c.h.b16 %v3248
  %v4738 = vunpack.c.l.b16 %v3249
  %v4739 = vunpack.c.h.b16 %v3249
  %v4740 = vunpack.c.l.b16 %v3250
  %v4741 = vunpack.c.h.b16 %v3250
  %v4742 = vunpack.c.l.b16 %v3251
  %v4743 = vunpack.c.h.b16 %v3251
  %v4744 = vunpack.c.l.b16 %v3252
  %v4745 = vunpack.c.h.b16 %v3252
  %v4746 = vunpack.c.l.b16 %v3253
  %v4747 = vunpack.c.h.b16 %v3253
  %v4748 = vunpack.c.l.b16 %v3254
  %v4749 = vunpack.c.h.b16 %v3254
  %v4750 = vunpack.c.l.b16 %v3255
  %v4751 = vunpack.c.h.b16 %v3255
  %v4752 = vunpack.c.l.b16 %v3256
  %v4753 = vunpack.c.h.b16 %v3256
  %v4754 = vunpack.c.l.b16 %v3257
  %v4755 = vunpack.c.h.b16 %v3257
  %v4756 = vunpack.c.l.b16 %v3258
  %v4757 = vunpack.c.h.b16 %v3258
  %v4758 = vunpack.c.l.b16 %v3259
  %v4759 = vunpack.c.h.b16 %v3259
  %v4760 = vunpack.c.l.b16 %v3260
  %v4761 = vunpack.c.h.b16 %v3260
  %v4762 = vunpack.c.l.b16 %v3261
  %v4763 = vunpack.c.h.b16 %v3261
  %v4764 = vunpack.c.l.b16 %v3262
  %v4765 = vunpack.c.h.b16 %v3262
  %v4766 = vunpack.c.l.b16 %v3263
  %v4767 = vunpack.c.h.b16 %v3263
  %v4768 = vunpack.c.l.b16 %v3264
  %v4769 = vunpack.c.h.b16 %v3264
  %v4770 = vunpack.c.l.b16 %v3265
  %v4771 = vunpack.c.h.b16 %v3265
  %v4772 = vunpack.c.l.b16 %v3266
  %v4773 = vunpack.c.h.b16 %v3266
  %v4774 = vunpack.c.l.b16 %v3267
  %v4775 = vunpack.c.h.b16 %v3267
  %v4776 = vunpack.c.l.b16 %v3268
  %v4777 = vunpack.c.h.b16 %v3268
  %v4778 = vunpack.c.l.b16 %v3269
  %v4779 = vunpack.c.h.b16 %v3269
  %v4780 = vunpack.c.l.b16 %v3270
  %v4781 = vunpack.c.h.b16 %v3270
  %v4782 = vunpack.c.l.b16 %v3271
  %v4783 = vunpack.c.h.b16 %v3271
  %v4784 = vunpack.c.l.b16 %v3272
  %v4785 = vunpack.c.h.b16 %v3272
  %v4786 = vunpack.c.l.b16 %v3273
  %v4787 = vunpack.c.h.b16 %v3273
  %v4788 = vunpack.c.l.b16 %v3274
  %v4789 = vunpack.c.h.b16 %v3274
  %v4790 = vunpack.c.l.b16 %v3275
  %v4791 = vunpack.c.h.b16 %v3275
  %v4792 = vunpack.c.l.b16 %v3276
  %v4793 = vunpack.c.h.b16 %v3276
  %v4794 = vunpack.c.l.b16 %v3277
  %v4795 = vunpack.c.h.b16 %v3277
  %v4796 = vunpack.c.l.b16 %v3278
  %v4797 = vunpack.c.h.b16 %v3278
  %v4798 = vunpack.c.l.b16 %v3279
  %v4799 = vunpack.c.h.b16 %v3279
  %v4800 = vunpack.c.l.b16 %v3280
  %v4801 = vunpack.c.h.b16 %v3280
  %v4802 = vunpack.c.l.b16 %v3281
  %v4803 = vunpack.c.h.b16 %v3281
  %v4804 = vunpack.c.l.b16 %v3282
  %v4805 = vunpack.c.h.b16 %v3282
  %v4806 = vunpack.c.l.b16 %v3283
  %v4807 = vunpack.c.h.b16 %v3283
  %v4808 = vunpack.c.l.b16 %v3284
  %v4809 = vunpack.c.h.b16 %v3284
  %v4810 = vunpack.c.l.b16 %v3285
  %v4811 = vunpack.c.h.b16 %v3285
  %v4812 = vunpack.c.l.b16 %v3286
  %v4813 = vunpack.c.h.b16 %v3286
  %v4814 = vunpack.c.l.b16 %v3287
  %v4815 = vunpack.c.h.b16 %v3287
  %v4816 = vunpack.c.l.b16 %v3288
  %v4817 = vunpack.c.h.b16 %v3288
  %v4818 = vunpack.c.l.b16 %v3289
  %v4819 = vunpack.c.h.b16 %v3289
  %v4820 = vunpack.c.l.b16 %v3290
  %v4821 = vunpack.c.h.b16 %v3290
  %v4822 = vunpack.c.l.b16 %v3291
  %v4823 = vunpack.c.h.b16 %v3291
  %v4824 = vunpack.c.l.b16 %v3292
  %v4825 = vunpack.c.h.b16 %v3292
  %v4826 = vunpack.c.l.b16 %v3293
  %v4827 = vunpack.c.h.b16 %v3293
  %v4828 = vunpack.c.l.b16 %v3294
  %v4829 = vunpack.c.h.b16 %v3294
  %v4830 = vunpack.c.l.b16 %v3295
  %v4831 = vunpack.c.h.b16 %v3295
  %v4832 = vpack.c.b16 %v3810, %v3808
  %v4833 = vpack.c.b16 %v3811, %v3809
  %v4834 = vpack.c.b16 %v3814, %v3812
  %v4835 = vpack.c.b16 %v3815, %v3813
  %v4836 = vpack.c.b16 %v3818, %v3816
  %v4837 = vpack.c.b16 %v3819, %v3817
  %v4838 = vpack.c.b16 %v3822, %v3820
  %v4839 = vpack.c.b16 %v3823, %v3821
  %v4840 = vpack.c.b16 %v3826, %v3824
  %v4841 = vpack.c.b16 %v3827, %v3825
  %v4842 = vpack.c.b16 %v3830, %v3828
  %v4843 = vpack.c.b16 %v3831, %v3829
  %v4844 = vpack.c.b16 %v3834, %v3832
  %v4845 = vpack.c.b16 %v3835, %v3833
  %v4846 = vpack.c.b16 %v3838, %v3836
  %v4847 = vpack.c.b16 %v3839, %v3837
  %v4848 = vpack.c.b16 %v3842, %v3840
  %v4849 = vpack.c.b16 %v3843, %v3841
  %v4850 = vpack.c.b16 %v3846, %v3844
  %v4851 = vpack.c.b16 %v3847, %v3845
  %v4852 = vpack.c.b16 %v3850, %v3848
  %v4853 = vpack.c.b16 %v3851, %v3849
  %v4854 = vpack.c.b16 %v3854, %v3852
  %v4855 = vpack.c.b16 %v3855, %v3853
  %v4856 = vpack.c.b16 %v3858, %v3856
  %v4857 = vpack.c.b16 %v3859, %v3857
  %v4858 = vpack.c.b16 %v3862, %v3860
  %v4859 = vpack.c.b16 %v3863, %v3861
  %v4860 = vpack.c.b16 %v3866, %v3864
  %v4861 = vpack.c.b16 %v3867, %v3865
  %v4862 = vpack.c.b16 %v3870, %v3868
  %v4863 = vpack.c.b16 %v3871, %v3869
  %v4864 = vpack.c.b16 %v3874, %v3872
  %v4865 = vpack.c.b16 %v3875, %v3873
  %v4866 = vpack.c.b16 %v3878, %v3876
  %v4867 = vpack.c.b16 %v3879, %v3877
  %v4868 = vpack.c.b16 %v3882, %v3880
  %v4869 = vpack.c.b16 %v3883, %v3881
  %v4870 = vpack.c.b16 %v3886, %v3884
  %v4871 = vpack.c.b16 %v3887, %v3885
  %v4872 = vpack.c.b16 %v3890, %v3888
  %v4873 = vpack.c.b16 %v3891, %v3889
  %v4874 = vpack.c.b16 %v3894, %v3892
  %v4875 = vpack.c.b16 %v3895, %v3893
  %v4876 = vpack.c.b16 %v3898, %v3896
  %v4877 = vpack.c.b16 %v3899, %v3897
  %v4878 = vpack.c.b16 %v3902, %v3900
  %v4879 = vpack.c.b16 %v3903, %v3901
  %v4880 = vpack.c.b16 %v3906, %v3904
  %v4881 = vpack.c.b16 %v3907, %v3905
  %v4882 = vpack.c.b16 %v3910, %v3908
  %v4883 = vpack.c.b16 %v3911, %v3909
  %v4884 = vpack.c.b16 %v3914, %v3912
  %v4885 = vpack.c.b16 %v3915, %v3913
  %v4886 = vpack.c.b16 %v3918, %v3916
  %v4887 = vpack.c.b16 %v3919, %v3917
  %v4888 = vpack.c.b16 %v3922, %v3920
  %v4889 = vpack.c.b16 %v3923, %v3921
  %v4890 = vpack.c.b16 %v3926, %v3924
  %v4891 = vpack.c.b16 %v3927, %v3925
  %v4892 = vpack.c.b16 %v3930, %v3928
  %v4893 = vpack.c.b16 %v3931, %v3929
  %v4894 = vpack.c.b16 %v3934, %v3932
  %v4895 = vpack.c.b16 %v3935, %v3933
  %v4896 = vpack.c.b16 %v3938, %v3936
  %v4897 = vpack.c.b16 %v3939, %v3937
  %v4898 = vpack.c.b16 %v3942, %v3940
  %v4899 = vpack.c.b16 %v3943, %v3941
  %v4900 = vpack.c.b16 %v3946, %v3944
  %v4901 = vpack.c.b16 %v3947, %v3945
  %v4902 = vpack.c.b16 %v3950, %v3948
  %v4903 = vpack.c.b16 %v3951, %v3949
  %v4904 = vpack.c.b16 %v3954, %v3952
  %v4905 = vpack.c.b16 %v3955, %v3953
  %v4906 = vpack.c.b16 %v3958, %v3956
  %v4907 = vpack.c.b16 %v3959, %v3957
  %v4908 = vpack.c.b16 %v3962, %v3960
  %v4909 = vpack.c.b16 %v3963, %v3961
  %v4910 = vpack.c.b16 %v3966, %v3964
  %v4911 = vpack.c.b16 %v3967, %v3965
  %v4912 = vpack.c.b16 %v3970, %v3968
  %v4913 = vpack.c.b16 %v3971, %v3969
  %v4914 = vpack.c.b16 %v3974, %v3972
  %v4915 = vpack.c.b16 %v3975, %v3973
  %v4916 = vpack.c.b16 %v3978, %v3976
  %v4917 = vpack.c.b16 %v3979, %v3977
  %v4918 = vpack.c.b16 %v3982, %v3980
  %v4919 = vpack.c.b16 %v3983, %v3981
  %v4920 = vpack.c.b16 %v3986, %v3984
  %v4921 = vpack.c.b16 %v3987, %v3985
  %v4922 = vpack.c.b16 %v3990, %v3988
  %v4923 = vpack.c.b16 %v3991, %v3989
  %v4924 = vpack.c.b16 %v3994, %v3992
  %v4925 = vpack.c.b16 %v3995, %v3993
  %v4926 = vpack.c.b16 %v3998, %v3996
  %v4927 = vpack.c.b16 %v3999, %v3997
  %v4928 = vpack.c.b16 %v4002, %v4000
  %v4929 = vpack.c.b16 %v4003, %v4001
  %v4930 = vpack.c.b16 %v4006, %v4004
  %v4931 = vpack.c.b16 %v4007, %v4005
  %v4932 = vpack.c.b16 %v4010, %v4008
  %v4933 = vpack.c.b16 %v4011, %v4009
  %v4934 = vpack.c.b16 %v4014, %v4012
  %v4935 = vpack.c.b16 %v4015, %v4013
  %v4936 = vpack.c.b16 %v4018, %v4016
  %v4937 = vpack.c.b16 %v4019, %v4017
  %v4938 = vpack.c.b16 %v4022, %v4020
  %v4939 = vpack.c.b16 %v4023, %v4021
  %v4940 = vpack.c.b16 %v4026, %v4024
  %v4941 = vpack.c.b16 %v4027, %v4025
  %v4942 = vpack.c.b16 %v4030, %v4028
  %v4943 = vpack.c.b16 %v4031, %v4029
  %v4944 = vpack.c.b16 %v4034, %v4032
  %v4945 = vpack.c.b16 %v4035, %v4033
  %v4946 = vpack.c.b16 %v4038, %v4036
  %v4947 = vpack.c.b16 %v4039, %v4037
  %v4948 = vpack.c.b16 %v4042, %v4040
  %v4949 = vpack.c.b16 %v4043, %v4041
  %v4950 = vpack.c.b16 %v4046, %v4044
  %v4951 = vpack.c.b16 %v4047, %v4045
  %v4952 = vpack.c.b16 %v4050, %v4048
  %v4953 = vpack.c.b16 %v4051, %v4049
  %v4954 = vpack.c.b16 %v4054, %v4052
  %v4955 = vpack.c.b16 %v4055, %v4053
  %v4956 = vpack.c.b16 %v4058, %v4056
  %v4957 = vpack.c.b16 %v4059, %v4057
  %v4958 = vpack.c.b16 %v4062, %v4060
  %v4959 = vpack.c.b16 %v4063, %v4061
  %v4960 = vpack.c.b16 %v4066, %v4064
  %v4961 = vpack.c.b16 %v4067, %v4065
  %v4962 = vpack.c.b16 %v4070, %v4068
  %v4963 = vpack.c.b16 %v4071, %v4069
  %v4964 = vpack.c.b16 %v4074, %v4072
  %v4965 = vpack.c.b16 %v4075, %v4073
  %v4966 = vpack.c.b16 %v4078, %v4076
  %v4967 = vpack.c.b16 %v4079, %v4077
  %v4968 = vpack.c.b16 %v4082, %v4080
  %v4969 = vpack.c.b16 %v4083, %v4081
  %v4970 = vpack.c.b16 %v4086, %v4084
  %v4971 = vpack.c.b16 %v4087, %v4085
  %v4972 = vpack.c.b16 %v4090, %v4088
  %v4973 = vpack.c.b16 %v4091, %v4089
  %v4974 = vpack.c.b16 %v4094, %v4092
  %v4975 = vpack.c.b16 %v4095, %v4093
  %v4976 = vpack.c.b16 %v4098, %v4096
  %v4977 = vpack.c.b16 %v4099, %v4097
  %v4978 = vpack.c.b16 %v4102, %v4100
  %v4979 = vpack.c.b16 %v4103, %v4101
  %v4980 = vpack.c.b16 %v4106, %v4104
  %v4981 = vpack.c.b16 %v4107, %v4105
  %v4982 = vpack.c.b16 %v4110, %v4108
  %v4983 = vpack.c.b16 %v4111, %v4109
  %v4984 = vpack.c.b16 %v4114, %v4112
  %v4985 = vpack.c.b16 %v4115, %v4113
  %v4986 = vpack.c.b16 %v4118, %v4116
  %v4987 = vpack.c.b16 %v4119, %v4117
  %v4988 = vpack.c.b16 %v4122, %v4120
  %v4989 = vpack.c.b16 %v4123, %v4121
  %v4990 = vpack.c.b16 %v4126, %v4124
  %v4991 = vpack.c.b16 %v4127, %v4125
  %v4992 = vpack.c.b16 %v4130, %v4128
  %v4993 = vpack.c.b16 %v4131, %v4129
  %v4994 = vpack.c.b16 %v4134, %v4132
  %v4995 = vpack.c.b16 %v4135, %v4133
  %v4996 = vpack.c.b16 %v4138, %v4136
  %v4997 = vpack.c.b16 %v4139, %v4137
  %v4998 = vpack.c.b16 %v4142, %v4140
  %v4999 = vpack.c.b16 %v4143, %v4141
  %v5000 = vpack.c.b16 %v4146, %v4144
  %v5001 = vpack.c.b16 %v4147, %v4145
  %v5002 = vpack.c.b16 %v4150, %v4148
  %v5003 = vpack.c.b16 %v4151, %v4149
  %v5004 = vpack.c.b16 %v4154, %v4152
  %v5005 = vpack.c.b16 %v4155, %v4153
  %v5006 = vpack.c.b16 %v4158, %v4156
  %v5007 = vpack.c.b16 %v4159, %v4157
  %v5008 = vpack.c.b16 %v4162, %v4160
  %v5009 = vpack.c.b16 %v4163, %v4161
  %v5010 = vpack.c.b16 %v4166, %v4164
  %v5011 = vpack.c.b16 %v4167, %v4165
  %v5012 = vpack.c.b16 %v4170, %v4168
  %v5013 = vpack.c.b16 %v4171, %v4169
  %v5014 = vpack.c.b16 %v4174, %v4172
  %v5015 = vpack.c.b16 %v4175, %v4173
  %v5016 = vpack.c.b16 %v4178, %v4176
  %v5017 = vpack.c.b16 %v4179, %v4177
  %v5018 = vpack.c.b16 %v4182, %v4180
  %v5019 = vpack.c.b16 %v4183, %v4181
  %v5020 = vpack.c.b16 %v4186, %v4184
  %v5021 = vpack.c.b16 %v4187, %v4185
  %v5022 = vpack.c.b16 %v4190, %v4188
  %v5023 = vpack.c.b16 %v4191, %v4189
  %v5024 = vpack.c.b16 %v4194, %v4192
  %v5025 = vpack.c.b16 %v4195, %v4193
  %v5026 = vpack.c.b16 %v4198, %v4196
  %v5027 = vpack.c.b16 %v4199, %v4197
  %v5028 = vpack.c.b16 %v4202, %v4200
  %v5029 = vpack.c.b16 %v4203, %v4201
  %v5030 = vpack.c.b16 %v4206, %v4204
  %v5031 = vpack.c.b16 %v4207, %v4205
  %v5032 = vpack.c.b16 %v4210, %v4208
  %v5033 = vpack.c.b16 %v4211, %v4209
  %v5034 = vpack.c.b16 %v4214, %v4212
  %v5035 = vpack.c.b16 %v4215, %v4213
  %v5036 = vpack.c.b16 %v4218, %v4216
  %v5037 = vpack.c.b16 %v4219, %v4217
  %v5038 = vpack.c.b16 %v4222, %v4220
  %v5039 = vpack.c.b16 %v4223, %v4221
  %v5040 = vpack.c.b16 %v4226, %v4224
  %v5041 = vpack.c.b16 %v4227, %v4225
  %v5042 = vpack.c.b16 %v4230, %v4228
  %v5043 = vpack.c.b16 %v4231, %v4229
  %v5044 = vpack.c.b16 %v4234, %v4232
  %v5045 = vpack.c.b16 %v4235, %v4233
  %v5046 = vpack.c.b16 %v4238, %v4236
  %v5047 = vpack.c.b16 %v4239, %v4237
  %v5048 = vpack.c.b16 %v4242, %v4240
  %v5049 = vpack.c.b16 %v4243, %v4241
  %v5050 = vpack.c.b16 %v4246, %v4244
  %v5051 = vpack.c.b16 %v4247, %v4245
  %v5052 = vpack.c.b16 %v4250, %v4248
  %v5053 = vpack.c.b16 %v4251, %v4249
  %v5054 = vpack.c.b16 %v4254, %v4252
  %v5055 = vpack.c.b16 %v4255, %v4253
  %v5056 = vpack.c.b16 %v4258, %v4256
  %v5057 = vpack.c.b16 %v4259, %v4257
  %v5058 = vpack.c.b16 %v4262, %v4260
  %v5059 = vpack.c.b16 %v4263, %v4261
  %v5060 = vpack.c.b16 %v4266, %v4264
  %v5061 = vpack.c.b16 %v4267, %v4265
  %v5062 = vpack.c.b16 %v4270, %v4268
  %v5063 = vpack.c.b16 %v4271, %v4269
  %v5064 = vpack.c.b16 %v4274, %v4272
  %v5065 = vpack.c.b16 %v4275, %v4273
  %v5066 = vpack.c.b16 %v4278, %v4276
  %v5067 = vpack.c.b16 %v4279, %v4277
  %v5068 = vpack.c.b16 %v4282, %v4280
  %v5069 = vpack.c.b16 %v4283, %v4281
  %v5070 = vpack.c.b16 %v4286, %v4284
  %v5071 = vpack.c.b16 %v4287, %v4285
  %v5072 = vpack.c.b16 %v4290, %v4288
  %v5073 = vpack.c.b16 %v4291, %v4289
  %v5074 = vpack.c.b16 %v4294, %v4292
  %v5075 = vpack.c.b16 %v4295, %v4293
  %v5076 = vpack.c.b16 %v4298, %v4296
  %v5077 = vpack.c.b16 %v4299, %v4297
  %v5078 = vpack.c.b16 %v4302, %v4300
  %v5079 = vpack.c.b16 %v4303, %v4301
  %v5080 = vpack.c.b16 %v4306, %v4304
  %v5081 = vpack.c.b16 %v4307, %v4305
  %v5082 = vpack.c.b16 %v4310, %v4308
  %v5083 = vpack.c.b16 %v4311, %v4309
  %v5084 = vpack.c.b16 %v4314, %v4312
  %v5085 = vpack.c.b16 %v4315, %v4313
  %v5086 = vpack.c.b16 %v4318, %v4316
  %v5087 = vpack.c.b16 %v4319, %v4317
  %v5088 = vpack.c.b16 %v4322, %v4320
  %v5089 = vpack.c.b16 %v4323, %v4321
  %v5090 = vpack.c.b16 %v4326, %v4324
  %v5091 = vpack.c.b16 %v4327, %v4325
  %v5092 = vpack.c.b16 %v4330, %v4328
  %v5093 = vpack.c.b16 %v4331, %v4329
  %v5094 = vpack.c.b16 %v4334, %v4332
  %v5095 = vpack.c.b16 %v4335, %v4333
  %v5096 = vpack.c.b16 %v4338, %v4336
  %v5097 = vpack.c.b16 %v4339, %v4337
  %v5098 = vpack.c.b16 %v4342, %v4340
  %v5099 = vpack.c.b16 %v4343, %v4341
  %v5100 = vpack.c.b16 %v4346, %v4344
  %v5101 = vpack.c.b16 %v4347, %v4345
  %v5102 = vpack.c.b16 %v4350, %v4348
  %v5103 = vpack.c.b16 %v4351, %v4349
  %v5104 = vpack.c.b16 %v4354, %v4352
  %v5105 = vpack.c.b16 %v4355, %v4353
  %v5106 = vpack.c.b16 %v4358, %v4356
  %v5107 = vpack.c.b16 %v4359, %v4357
  %v5108 = vpack.c.b16 %v4362, %v4360
  %v5109 = vpack.c.b16 %v4363, %v4361
  %v5110 = vpack.c.b16 %v4366, %v4364
  %v5111 = vpack.c.b16 %v4367, %v4365
  %v5112 = vpack.c.b16 %v4370, %v4368
  %v5113 = vpack.c.b16 %v4371, %v4369
  %v5114 = vpack.c.b16 %v4374, %v4372
  %v5115 = vpack.c.b16 %v4375, %v4373
  %v5116 = vpack.c.b16 %v4378, %v4376
  %v5117 = vpack.c.b16 %v4379, %v4377
  %v5118 = vpack.c.b16 %v4382, %v4380
  %v5119 = vpack.c.b16 %v4383, %v4381
  %v5120 = vpack.c.b16 %v4386, %v4384
  %v5121 = vpack.c.b16 %v4387, %v4385
  %v5122 = vpack.c.b16 %v4390, %v4388
  %v5123 = vpack.c.b16 %v4391, %v4389
  %v5124 = vpack.c.b16 %v4394, %v4392
  %v5125 = vpack.c.b16 %v4395, %v4393
  %v5126 = vpack.c.b16 %v4398, %v4396
  %v5127 = vpack.c.b16 %v4399, %v4397
  %v5128 = vpack.c.b16 %v4402, %v4400
  %v5129 = vpack.c.b16 %v4403, %v4401
  %v5130 = vpack.c.b16 %v4406, %v4404
  %v5131 = vpack.c.b16 %v4407, %v4405
  %v5132 = vpack.c.b16 %v4410, %v4408
  %v5133 = vpack.c.b16 %v4411, %v4409
  %v5134 = vpack.c.b16 %v4414, %v4412
  %v5135 = vpack.c.b16 %v4415, %v4413
  %v5136 = vpack.c.b16 %v4418, %v4416
  %v5137 = vpack.c.b16 %v4419, %v4417
  %v5138 = vpack.c.b16 %v4422, %v4420
  %v5139 = vpack.c.b16 %v4423, %v4421
  %v5140 = vpack.c.b16 %v4426, %v4424
  %v5141 = vpack.c.b16 %v4427, %v4425
  %v5142 = vpack.c.b16 %v4430, %v4428
  %v5143 = vpack.c.b16 %v4431, %v4429
  %v5144 = vpack.c.b16 %v4434, %v4432
  %v5145 = vpack.c.b16 %v4435, %v4433
  %v5146 = vpack.c.b16 %v4438, %v4436
  %v5147 = vpack.c.b16 %v4439, %v4437
  %v5148 = vpack.c.b16 %v4442, %v4440
  %v5149 = vpack.c.b16 %v4443, %v4441
  %v5150 = vpack.c.b16 %v4446, %v4444
  %v5151 = vpack.c.b16 %v4447, %v4445
  %v5152 = vpack.c.b16 %v4450, %v4448
  %v5153 = vpack.c.b16 %v4451, %v4449
  %v5154 = vpack.c.b16 %v4454, %v4452
  %v5155 = vpack.c.b16 %v4455, %v4453
  %v5156 = vpack.c.b16 %v4458, %v4456
  %v5157 = vpack.c.b16 %v4459, %v4457
  %v5158 = vpack.c.b16 %v4462, %v4460
  %v5159 = vpack.c.b16 %v4463, %v4461
  %v5160 = vpack.c.b16 %v4466, %v4464
  %v5161 = vpack.c.b16 %v4467, %v4465
  %v5162 = vpack.c.b16 %v4470, %v4468
  %v5163 = vpack.c.b16 %v4471, %v4469
  %v5164 = vpack.c.b16 %v4474, %v4472
  %v5165 = vpack.c.b16 %v4475, %v4473
  %v5166 = vpack.c.b16 %v4478, %v4476
  %v5167 = vpack.c.b16 %v4479, %v4477
  %v5168 = vpack.c.b16 %v4482, %v4480
  %v5169 = vpack.c.b16 %v4483, %v4481
  %v5170 = vpack.c.b16 %v4486, %v4484
  %v5171 = vpack.c.b16 %v4487, %v4485
  %v5172 = vpack.c.b16 %v4490, %v4488
  %v5173 = vpack.c.b16 %v4491, %v4489
  %v5174 = vpack.c.b16 %v4494, %v4492
  %v5175 = vpack.c.b16 %v4495, %v4493
  %v5176 = vpack.c.b16 %v4498, %v4496
  %v5177 = vpack.c.b16 %v4499, %v4497
  %v5178 = vpack.c.b16 %v4502, %v4500
  %v5179 = vpack.c.b16 %v4503, %v4501
  %v5180 = vpack.c.b16 %v4506, %v4504
  %v5181 = vpack.c.b16 %v4507, %v4505
  %v5182 = vpack.c.b16 %v4510, %v4508
  %v5183 = vpack.c.b16 %v4511, %v4509
  %v5184 = vpack.c.b16 %v4514, %v4512
  %v5185 = vpack.c.b16 %v4515, %v4513
  %v5186 = vpack.c.b16 %v4518, %v4516
  %v5187 = vpack.c.b16 %v4519, %v4517
  %v5188 = vpack.c.b16 %v4522, %v4520
  %v5189 = vpack.c.b16 %v4523, %v4521
  %v5190 = vpack.c.b16 %v4526, %v4524
  %v5191 = vpack.c.b16 %v4527, %v4525
  %v5192 = vpack.c.b16 %v4530, %v4528
  %v5193 = vpack.c.b16 %v4531, %v4529
  %v5194 = vpack.c.b16 %v4534, %v4532
  %v5195 = vpack.c.b16 %v4535, %v4533
  %v5196 = vpack.c.b16 %v4538, %v4536
  %v5197 = vpack.c.b16 %v4539, %v4537
  %v5198 = vpack.c.b16 %v4542, %v4540
  %v5199 = vpack.c.b16 %v4543, %v4541
  %v5200 = vpack.c.b16 %v4546, %v4544
  %v5201 = vpack.c.b16 %v4547, %v4545
  %v5202 = vpack.c.b16 %v4550, %v4548
  %v5203 = vpack.c.b16 %v4551, %v4549
  %v5204 = vpack.c.b16 %v4554, %v4552
  %v5205 = vpack.c.b16 %v4555, %v4553
  %v5206 = vpack.c.b16 %v4558, %v4556
  %v5207 = vpack.c.b16 %v4559, %v4557
  %v5208 = vpack.c.b16 %v4562, %v4560
  %v5209 = vpack.c.b16 %v4563, %v4561
  %v5210 = vpack.c.b16 %v4566, %v4564
  %v5211 = vpack.c.b16 %v4567, %v4565
  %v5212 = vpack.c.b16 %v4570, %v4568
  %v5213 = vpack.c.b16 %v4571, %v4569
  %v5214 = vpack.c.b16 %v4574, %v4572
  %v5215 = vpack.c.b16 %v4575, %v4573
  %v5216 = vpack.c.b16 %v4578, %v4576
  %v5217 = vpack.c.b16 %v4579, %v4577
  %v5218 = vpack.c.b16 %v4582, %v4580
  %v5219 = vpack.c.b16 %v4583, %v4581
  %v5220 = vpack.c.b16 %v4586, %v4584
  %v5221 = vpack.c.b16 %v4587, %v4585
  %v5222 = vpack.c.b16 %v4590, %v4588
  %v5223 = vpack.c.b16 %v4591, %v4589
  %v5224 = vpack.c.b16 %v4594, %v4592
  %v5225 = vpack.c.b16 %v4595, %v4593
  %v5226 = vpack.c.b16 %v4598, %v4596
  %v5227 = vpack.c.b16 %v4599, %v4597
  %v5228 = vpack.c.b16 %v4602, %v4600
  %v5229 = vpack.c.b16 %v4603, %v4601
  %v5230 = vpack.c.b16 %v4606, %v4604
  %v5231 = vpack.c.b16 %v4607, %v4605
  %v5232 = vpack.c.b16 %v4610, %v4608
  %v5233 = vpack.c.b16 %v4611, %v4609
  %v5234 = vpack.c.b16 %v4614, %v4612
  %v5235 = vpack.c.b16 %v4615, %v4613
  %v5236 = vpack.c.b16 %v4618, %v4616
  %v5237 = vpack.c.b16 %v4619, %v4617
  %v5238 = vpack.c.b16 %v4622, %v4620
  %v5239 = vpack.c.b16 %v4623, %v4621
  %v5240 = vpack.c.b16 %v4626, %v4624
  %v5241 = vpack.c.b16 %v4627, %v4625
  %v5242 = vpack.c.b16 %v4630, %v4628
  %v5243 = vpack.c.b16 %v4631, %v4629
  %v5244 = vpack.c.b16 %v4634, %v4632
  %v5245 = vpack.c.b16 %v4635, %v4633
  %v5246 = vpack.c.b16 %v4638, %v4636
  %v5247 = vpack.c.b16 %v4639, %v4637
  %v5248 = vpack.c.b16 %v4642, %v4640
  %v5249 = vpack.c.b16 %v4643, %v4641
  %v5250 = vpack.c.b16 %v4646, %v4644
  %v5251 = vpack.c.b16 %v4647, %v4645
  %v5252 = vpack.c.b16 %v4650, %v4648
  %v5253 = vpack.c.b16 %v4651, %v4649
  %v5254 = vpack.c.b16 %v4654, %v4652
  %v5255 = vpack.c.b16 %v4655, %v4653
  %v5256 = vpack.c.b16 %v4658, %v4656
  %v5257 = vpack.c.b16 %v4659, %v4657
  %v5258 = vpack.c.b16 %v4662, %v4660
  %v5259 = vpack.c.b16 %v4663, %v4661
  %v5260 = vpack.c.b16 %v4666, %v4664
  %v5261 = vpack.c.b16 %v4667, %v4665
  %v5262 = vpack.c.b16 %v4670, %v4668
  %v5263 = vpack.c.b16 %v4671, %v4669
  %v5264 = vpack.c.b16 %v4674, %v4672
  %v5265 = vpack.c.b16 %v4675, %v4673
  %v5266 = vpack.c.b16 %v4678, %v4676
  %v5267 = vpack.c.b16 %v4679, %v4677
  %v5268 = vpack.c.b16 %v4682, %v4680
  %v5269 = vpack.c.b16 %v4683, %v4681
  %v5270 = vpack.c.b16 %v4686, %v4684
  %v5271 = vpack.c.b16 %v4687, %v4685
  %v5272 = vpack.c.b16 %v4690, %v4688
  %v5273 = vpack.c.b16 %v4691, %v4689
  %v5274 = vpack.c.b16 %v4694, %v4692
  %v5275 = vpack.c.b16 %v4695, %v4693
  %v5276 = vpack.c.b16 %v4698, %v4696
  %v5277 = vpack.c.b16 %v4699, %v4697
  %v5278 = vpack.c.b16 %v4702, %v4700
  %v5279 = vpack.c.b16 %v4703, %v4701
  %v5280 = vpack.c.b16 %v4706, %v4704
  %v5281 = vpack.c.b16 %v4707, %v4705
  %v5282 = vpack.c.b16 %v4710, %v4708
  %v5283 = vpack.c.b16 %v4711, %v4709
  %v5284 = vpack.c.b16 %v4714, %v4712
  %v5285 = vpack.c.b16 %v4715, %v4713
  %v5286 = vpack.c.b16 %v4718, %v4716
  %v5287 = vpack.c.b16 %v4719, %v4717
  %v5288 = vpack.c.b16 %v4722, %v4720
  %v5289 = vpack.c.b16 %v4723, %v4721
  %v5290 = vpack.c.b16 %v4726, %v4724
  %v5291 = vpack.c.b16 %v4727, %v4725
  %v5292 = vpack.c.b16 %v4730, %v4728
  %v5293 = vpack.c.b16 %v4731, %v4729
  %v5294 = vpack.c.b16 %v4734, %v4732
  %v5295 = vpack.c.b16 %v4735, %v4733
  %v5296 = vpack.c.b16 %v4738, %v4736
  %v5297 = vpack.c.b16 %v4739, %v4737
  %v5298 = vpack.c.b16 %v4742, %v4740
  %v5299 = vpack.c.b16 %v4743, %v4741
  %v5300 = vpack.c.b16 %v4746, %v4744
  %v5301 = vpack.c.b16 %v4747, %v4745
  %v5302 = vpack.c.b16 %v4750, %v4748
  %v5303 = vpack.c.b16 %v4751, %v4749
  %v5304 = vpack.c.b16 %v4754, %v4752
  %v5305 = vpack.c.b16 %v4755, %v4753
  %v5306 = vpack.c.b16 %v4758, %v4756
  %v5307 = vpack.c.b16 %v4759, %v4757
  %v5308 = vpack.c.b16 %v4762, %v4760
  %v5309 = vpack.c.b16 %v4763, %v4761
  %v5310 = vpack.c.b16 %v4766, %v4764
  %v5311 = vpack.c.b16 %v4767, %v4765
  %v5312 = vpack.c.b16 %v4770, %v4768
  %v5313 = vpack.c.b16 %v4771, %v4769
  %v5314 = vpack.c.b16 %v4774, %v4772
  %v5315 = vpack.c.b16 %v4775, %v4773
  %v5316 = vpack.c.b16 %v4778, %v4776
  %v5317 = vpack.c.b16 %v4779, %v4777
  %v5318 = vpack.c.b16 %v4782, %v4780
  %v5319 = vpack.c.b16 %v4783, %v4781
  %v5320 = vpack.c.b16 %v4786, %v4784
  %v5321 = vpack.c.b16 %v4787, %v4785
  %v5322 = vpack.c.b16 %v4790, %v4788
  %v5323 = vpack.c.b16 %v4791, %v4789
  %v5324 = vpack.c.b16 %v4794, %v4792
  %v5325 = vpack.c.b16 %v4795, %v4793
  %v5326 = vpack.c.b16 %v4798, %v4796
  %v5327 = vpack.c.b16 %v4799, %v4797
  %v5328 = vpack.c.b16 %v4802, %v4800
  %v5329 = vpack.c.b16 %v4803, %v4801
  %v5330 = vpack.c.b16 %v4806, %v4804
  %v5331 = vpack.c.b16 %v4807, %v4805
  %v5332 = vpack.c.b16 %v4810, %v4808
  %v5333 = vpack.c.b16 %v4811, %v4809
  %v5334 = vpack.c.b16 %v4814, %v4812
  %v5335 = vpack.c.b16 %v4815, %v4813
  %v5336 = vpack.c.b16 %v4818, %v4816
  %v5337 = vpack.c.b16 %v4819, %v4817
  %v5338 = vpack.c.b16 %v4822, %v4820
  %v5339 = vpack.c.b16 %v4823, %v4821
  %v5340 = vpack.c.b16 %v4826, %v4824
  %v5341 = vpack.c.b16 %v4827, %v4825
  %v5342 = vpack.c.b16 %v4830, %v4828
  %v5343 = vpack.c.b16 %v4831, %v4829
  %5856 = vmatpush.bf16.xpose.msra.mxu0 0
  %5857 = vmatpush.bf16.xpose.msra.mxu0 0
  %5858 = vmatpush.bf16.xpose.msra.mxu0 0
  %5859 = vmatpush.bf16.xpose.msra.mxu0 0
  %5860 = vmatpush.bf16.xpose.msra.mxu0 %v136
  %5861 = vmatpush.bf16.xpose.msra.mxu0 %v134
  %5862 = vmatpush.bf16.xpose.msra.mxu0 %v132
  %5863 = vmatpush.bf16.xpose.msra.mxu0 %v130
  %5864 = vmatmul.bf16.gmra.mxu0 %v4832
  %v5865 = vpop.f32.mrf.mxu0
  %v5866 = vadd.f32 0.0, %v5865
  %v5867 = vpop.f32.mrf.mxu0
  %v5868 = vadd.f32 0.0, %v5867
  %5869 = vmatmul.bf16.gmra.mxu0 %v4834
  %v5870 = vpop.f32.mrf.mxu0
  %v5871 = vadd.f32 0.0, %v5870
  %v5872 = vpop.f32.mrf.mxu0
  %v5873 = vadd.f32 0.0, %v5872
  %5874 = vmatmul.bf16.gmra.mxu0 %v4836
  %v5875 = vpop.f32.mrf.mxu0
  %v5876 = vadd.f32 0.0, %v5875
  %v5877 = vpop.f32.mrf.mxu0
  %v5878 = vadd.f32 0.0, %v5877
  %5879 = vmatmul.bf16.gmra.mxu0 %v4838
  %v5880 = vpop.f32.mrf.mxu0
  %v5881 = vadd.f32 0.0, %v5880
  %v5882 = vpop.f32.mrf.mxu0
  %v5883 = vadd.f32 0.0, %v5882
  %5884 = vmatmul.bf16.gmra.mxu0 %v4840
  %v5885 = vpop.f32.mrf.mxu0
  %v5886 = vadd.f32 0.0, %v5885
  %v5887 = vpop.f32.mrf.mxu0
  %v5888 = vadd.f32 0.0, %v5887
  %5889 = vmatmul.bf16.gmra.mxu0 %v4842
  %v5890 = vpop.f32.mrf.mxu0
  %v5891 = vadd.f32 0.0, %v5890
  %v5892 = vpop.f32.mrf.mxu0
  %v5893 = vadd.f32 0.0, %v5892
  %5894 = vmatmul.bf16.gmra.mxu0 %v4844
  %v5895 = vpop.f32.mrf.mxu0
  %v5896 = vadd.f32 0.0, %v5895
  %v5897 = vpop.f32.mrf.mxu0
  %v5898 = vadd.f32 0.0, %v5897
  %5899 = vmatmul.bf16.gmra.mxu0 %v4846
  %v5900 = vpop.f32.mrf.mxu0
  %v5901 = vadd.f32 0.0, %v5900
  %v5902 = vpop.f32.mrf.mxu0
  %v5903 = vadd.f32 0.0, %v5902
  %5904 = vmatmul.bf16.gmra.mxu0 %v4848
  %v5905 = vpop.f32.mrf.mxu0
  %v5906 = vadd.f32 0.0, %v5905
  %v5907 = vpop.f32.mrf.mxu0
  %v5908 = vadd.f32 0.0, %v5907
  %5909 = vmatmul.bf16.gmra.mxu0 %v4850
  %v5910 = vpop.f32.mrf.mxu0
  %v5911 = vadd.f32 0.0, %v5910
  %v5912 = vpop.f32.mrf.mxu0
  %v5913 = vadd.f32 0.0, %v5912
  %5914 = vmatmul.bf16.gmra.mxu0 %v4852
  %v5915 = vpop.f32.mrf.mxu0
  %v5916 = vadd.f32 0.0, %v5915
  %v5917 = vpop.f32.mrf.mxu0
  %v5918 = vadd.f32 0.0, %v5917
  %5919 = vmatmul.bf16.gmra.mxu0 %v4854
  %v5920 = vpop.f32.mrf.mxu0
  %v5921 = vadd.f32 0.0, %v5920
  %v5922 = vpop.f32.mrf.mxu0
  %v5923 = vadd.f32 0.0, %v5922
  %5924 = vmatmul.bf16.gmra.mxu0 %v4856
  %v5925 = vpop.f32.mrf.mxu0
  %v5926 = vadd.f32 0.0, %v5925
  %v5927 = vpop.f32.mrf.mxu0
  %v5928 = vadd.f32 0.0, %v5927
  %5929 = vmatmul.bf16.gmra.mxu0 %v4858
  %v5930 = vpop.f32.mrf.mxu0
  %v5931 = vadd.f32 0.0, %v5930
  %v5932 = vpop.f32.mrf.mxu0
  %v5933 = vadd.f32 0.0, %v5932
  %5934 = vmatmul.bf16.gmra.mxu0 %v4860
  %v5935 = vpop.f32.mrf.mxu0
  %v5936 = vadd.f32 0.0, %v5935
  %v5937 = vpop.f32.mrf.mxu0
  %v5938 = vadd.f32 0.0, %v5937
  %5939 = vmatmul.bf16.gmra.mxu0 %v4862
  %v5940 = vpop.f32.mrf.mxu0
  %v5941 = vadd.f32 0.0, %v5940
  %v5942 = vpop.f32.mrf.mxu0
  %v5943 = vadd.f32 0.0, %v5942
  %5944 = vmatmul.bf16.gmra.mxu0 %v4864
  %v5945 = vpop.f32.mrf.mxu0
  %v5946 = vadd.f32 0.0, %v5945
  %v5947 = vpop.f32.mrf.mxu0
  %v5948 = vadd.f32 0.0, %v5947
  %5949 = vmatmul.bf16.gmra.mxu0 %v4866
  %v5950 = vpop.f32.mrf.mxu0
  %v5951 = vadd.f32 0.0, %v5950
  %v5952 = vpop.f32.mrf.mxu0
  %v5953 = vadd.f32 0.0, %v5952
  %5954 = vmatmul.bf16.gmra.mxu0 %v4868
  %v5955 = vpop.f32.mrf.mxu0
  %v5956 = vadd.f32 0.0, %v5955
  %v5957 = vpop.f32.mrf.mxu0
  %v5958 = vadd.f32 0.0, %v5957
  %5959 = vmatmul.bf16.gmra.mxu0 %v4870
  %v5960 = vpop.f32.mrf.mxu0
  %v5961 = vadd.f32 0.0, %v5960
  %v5962 = vpop.f32.mrf.mxu0
  %v5963 = vadd.f32 0.0, %v5962
  %5964 = vmatmul.bf16.gmra.mxu0 %v4872
  %v5965 = vpop.f32.mrf.mxu0
  %v5966 = vadd.f32 0.0, %v5965
  %v5967 = vpop.f32.mrf.mxu0
  %v5968 = vadd.f32 0.0, %v5967
  %5969 = vmatmul.bf16.gmra.mxu0 %v4874
  %v5970 = vpop.f32.mrf.mxu0
  %v5971 = vadd.f32 0.0, %v5970
  %v5972 = vpop.f32.mrf.mxu0
  %v5973 = vadd.f32 0.0, %v5972
  %5974 = vmatmul.bf16.gmra.mxu0 %v4876
  %v5975 = vpop.f32.mrf.mxu0
  %v5976 = vadd.f32 0.0, %v5975
  %v5977 = vpop.f32.mrf.mxu0
  %v5978 = vadd.f32 0.0, %v5977
  %5979 = vmatmul.bf16.gmra.mxu0 %v4878
  %v5980 = vpop.f32.mrf.mxu0
  %v5981 = vadd.f32 0.0, %v5980
  %v5982 = vpop.f32.mrf.mxu0
  %v5983 = vadd.f32 0.0, %v5982
  %5984 = vmatmul.bf16.gmra.mxu0 %v4880
  %v5985 = vpop.f32.mrf.mxu0
  %v5986 = vadd.f32 0.0, %v5985
  %v5987 = vpop.f32.mrf.mxu0
  %v5988 = vadd.f32 0.0, %v5987
  %5989 = vmatmul.bf16.gmra.mxu0 %v4882
  %v5990 = vpop.f32.mrf.mxu0
  %v5991 = vadd.f32 0.0, %v5990
  %v5992 = vpop.f32.mrf.mxu0
  %v5993 = vadd.f32 0.0, %v5992
  %5994 = vmatmul.bf16.gmra.mxu0 %v4884
  %v5995 = vpop.f32.mrf.mxu0
  %v5996 = vadd.f32 0.0, %v5995
  %v5997 = vpop.f32.mrf.mxu0
  %v5998 = vadd.f32 0.0, %v5997
  %5999 = vmatmul.bf16.gmra.mxu0 %v4886
  %v6000 = vpop.f32.mrf.mxu0
  %v6001 = vadd.f32 0.0, %v6000
  %v6002 = vpop.f32.mrf.mxu0
  %v6003 = vadd.f32 0.0, %v6002
  %6004 = vmatmul.bf16.gmra.mxu0 %v4888
  %v6005 = vpop.f32.mrf.mxu0
  %v6006 = vadd.f32 0.0, %v6005
  %v6007 = vpop.f32.mrf.mxu0
  %v6008 = vadd.f32 0.0, %v6007
  %6009 = vmatmul.bf16.gmra.mxu0 %v4890
  %v6010 = vpop.f32.mrf.mxu0
  %v6011 = vadd.f32 0.0, %v6010
  %v6012 = vpop.f32.mrf.mxu0
  %v6013 = vadd.f32 0.0, %v6012
  %6014 = vmatmul.bf16.gmra.mxu0 %v4892
  %v6015 = vpop.f32.mrf.mxu0
  %v6016 = vadd.f32 0.0, %v6015
  %v6017 = vpop.f32.mrf.mxu0
  %v6018 = vadd.f32 0.0, %v6017
  %6019 = vmatmul.bf16.gmra.mxu0 %v4894
  %v6020 = vpop.f32.mrf.mxu0
  %v6021 = vadd.f32 0.0, %v6020
  %v6022 = vpop.f32.mrf.mxu0
  %v6023 = vadd.f32 0.0, %v6022
  %6024 = vmatmul.bf16.gmra.mxu0 %v4896
  %v6025 = vpop.f32.mrf.mxu0
  %v6026 = vadd.f32 0.0, %v6025
  %v6027 = vpop.f32.mrf.mxu0
  %v6028 = vadd.f32 0.0, %v6027
  %6029 = vmatmul.bf16.gmra.mxu0 %v4898
  %v6030 = vpop.f32.mrf.mxu0
  %v6031 = vadd.f32 0.0, %v6030
  %v6032 = vpop.f32.mrf.mxu0
  %v6033 = vadd.f32 0.0, %v6032
  %6034 = vmatmul.bf16.gmra.mxu0 %v4900
  %v6035 = vpop.f32.mrf.mxu0
  %v6036 = vadd.f32 0.0, %v6035
  %v6037 = vpop.f32.mrf.mxu0
  %v6038 = vadd.f32 0.0, %v6037
  %6039 = vmatmul.bf16.gmra.mxu0 %v4902
  %v6040 = vpop.f32.mrf.mxu0
  %v6041 = vadd.f32 0.0, %v6040
  %v6042 = vpop.f32.mrf.mxu0
  %v6043 = vadd.f32 0.0, %v6042
  %6044 = vmatmul.bf16.gmra.mxu0 %v4904
  %v6045 = vpop.f32.mrf.mxu0
  %v6046 = vadd.f32 0.0, %v6045
  %v6047 = vpop.f32.mrf.mxu0
  %v6048 = vadd.f32 0.0, %v6047
  %6049 = vmatmul.bf16.gmra.mxu0 %v4906
  %v6050 = vpop.f32.mrf.mxu0
  %v6051 = vadd.f32 0.0, %v6050
  %v6052 = vpop.f32.mrf.mxu0
  %v6053 = vadd.f32 0.0, %v6052
  %6054 = vmatmul.bf16.gmra.mxu0 %v4908
  %v6055 = vpop.f32.mrf.mxu0
  %v6056 = vadd.f32 0.0, %v6055
  %v6057 = vpop.f32.mrf.mxu0
  %v6058 = vadd.f32 0.0, %v6057
  %6059 = vmatmul.bf16.gmra.mxu0 %v4910
  %v6060 = vpop.f32.mrf.mxu0
  %v6061 = vadd.f32 0.0, %v6060
  %v6062 = vpop.f32.mrf.mxu0
  %v6063 = vadd.f32 0.0, %v6062
  %6064 = vmatmul.bf16.gmra.mxu0 %v4912
  %v6065 = vpop.f32.mrf.mxu0
  %v6066 = vadd.f32 0.0, %v6065
  %v6067 = vpop.f32.mrf.mxu0
  %v6068 = vadd.f32 0.0, %v6067
  %6069 = vmatmul.bf16.gmra.mxu0 %v4914
  %v6070 = vpop.f32.mrf.mxu0
  %v6071 = vadd.f32 0.0, %v6070
  %v6072 = vpop.f32.mrf.mxu0
  %v6073 = vadd.f32 0.0, %v6072
  %6074 = vmatmul.bf16.gmra.mxu0 %v4916
  %v6075 = vpop.f32.mrf.mxu0
  %v6076 = vadd.f32 0.0, %v6075
  %v6077 = vpop.f32.mrf.mxu0
  %v6078 = vadd.f32 0.0, %v6077
  %6079 = vmatmul.bf16.gmra.mxu0 %v4918
  %v6080 = vpop.f32.mrf.mxu0
  %v6081 = vadd.f32 0.0, %v6080
  %v6082 = vpop.f32.mrf.mxu0
  %v6083 = vadd.f32 0.0, %v6082
  %6084 = vmatmul.bf16.gmra.mxu0 %v4920
  %v6085 = vpop.f32.mrf.mxu0
  %v6086 = vadd.f32 0.0, %v6085
  %v6087 = vpop.f32.mrf.mxu0
  %v6088 = vadd.f32 0.0, %v6087
  %6089 = vmatmul.bf16.gmra.mxu0 %v4922
  %v6090 = vpop.f32.mrf.mxu0
  %v6091 = vadd.f32 0.0, %v6090
  %v6092 = vpop.f32.mrf.mxu0
  %v6093 = vadd.f32 0.0, %v6092
  %6094 = vmatmul.bf16.gmra.mxu0 %v4924
  %v6095 = vpop.f32.mrf.mxu0
  %v6096 = vadd.f32 0.0, %v6095
  %v6097 = vpop.f32.mrf.mxu0
  %v6098 = vadd.f32 0.0, %v6097
  %6099 = vmatmul.bf16.gmra.mxu0 %v4926
  %v6100 = vpop.f32.mrf.mxu0
  %v6101 = vadd.f32 0.0, %v6100
  %v6102 = vpop.f32.mrf.mxu0
  %v6103 = vadd.f32 0.0, %v6102
  %6104 = vmatmul.bf16.gmra.mxu0 %v4928
  %v6105 = vpop.f32.mrf.mxu0
  %v6106 = vadd.f32 0.0, %v6105
  %v6107 = vpop.f32.mrf.mxu0
  %v6108 = vadd.f32 0.0, %v6107
  %6109 = vmatmul.bf16.gmra.mxu0 %v4930
  %v6110 = vpop.f32.mrf.mxu0
  %v6111 = vadd.f32 0.0, %v6110
  %v6112 = vpop.f32.mrf.mxu0
  %v6113 = vadd.f32 0.0, %v6112
  %6114 = vmatmul.bf16.gmra.mxu0 %v4932
  %v6115 = vpop.f32.mrf.mxu0
  %v6116 = vadd.f32 0.0, %v6115
  %v6117 = vpop.f32.mrf.mxu0
  %v6118 = vadd.f32 0.0, %v6117
  %6119 = vmatmul.bf16.gmra.mxu0 %v4934
  %v6120 = vpop.f32.mrf.mxu0
  %v6121 = vadd.f32 0.0, %v6120
  %v6122 = vpop.f32.mrf.mxu0
  %v6123 = vadd.f32 0.0, %v6122
  %6124 = vmatmul.bf16.gmra.mxu0 %v4936
  %v6125 = vpop.f32.mrf.mxu0
  %v6126 = vadd.f32 0.0, %v6125
  %v6127 = vpop.f32.mrf.mxu0
  %v6128 = vadd.f32 0.0, %v6127
  %6129 = vmatmul.bf16.gmra.mxu0 %v4938
  %v6130 = vpop.f32.mrf.mxu0
  %v6131 = vadd.f32 0.0, %v6130
  %v6132 = vpop.f32.mrf.mxu0
  %v6133 = vadd.f32 0.0, %v6132
  %6134 = vmatmul.bf16.gmra.mxu0 %v4940
  %v6135 = vpop.f32.mrf.mxu0
  %v6136 = vadd.f32 0.0, %v6135
  %v6137 = vpop.f32.mrf.mxu0
  %v6138 = vadd.f32 0.0, %v6137
  %6139 = vmatmul.bf16.gmra.mxu0 %v4942
  %v6140 = vpop.f32.mrf.mxu0
  %v6141 = vadd.f32 0.0, %v6140
  %v6142 = vpop.f32.mrf.mxu0
  %v6143 = vadd.f32 0.0, %v6142
  %6144 = vmatmul.bf16.gmra.mxu0 %v4944
  %v6145 = vpop.f32.mrf.mxu0
  %v6146 = vadd.f32 0.0, %v6145
  %v6147 = vpop.f32.mrf.mxu0
  %v6148 = vadd.f32 0.0, %v6147
  %6149 = vmatmul.bf16.gmra.mxu0 %v4946
  %v6150 = vpop.f32.mrf.mxu0
  %v6151 = vadd.f32 0.0, %v6150
  %v6152 = vpop.f32.mrf.mxu0
  %v6153 = vadd.f32 0.0, %v6152
  %6154 = vmatmul.bf16.gmra.mxu0 %v4948
  %v6155 = vpop.f32.mrf.mxu0
  %v6156 = vadd.f32 0.0, %v6155
  %v6157 = vpop.f32.mrf.mxu0
  %v6158 = vadd.f32 0.0, %v6157
  %6159 = vmatmul.bf16.gmra.mxu0 %v4950
  %v6160 = vpop.f32.mrf.mxu0
  %v6161 = vadd.f32 0.0, %v6160
  %v6162 = vpop.f32.mrf.mxu0
  %v6163 = vadd.f32 0.0, %v6162
  %6164 = vmatmul.bf16.gmra.mxu0 %v4952
  %v6165 = vpop.f32.mrf.mxu0
  %v6166 = vadd.f32 0.0, %v6165
  %v6167 = vpop.f32.mrf.mxu0
  %v6168 = vadd.f32 0.0, %v6167
  %6169 = vmatmul.bf16.gmra.mxu0 %v4954
  %v6170 = vpop.f32.mrf.mxu0
  %v6171 = vadd.f32 0.0, %v6170
  %v6172 = vpop.f32.mrf.mxu0
  %v6173 = vadd.f32 0.0, %v6172
  %6174 = vmatmul.bf16.gmra.mxu0 %v4956
  %v6175 = vpop.f32.mrf.mxu0
  %v6176 = vadd.f32 0.0, %v6175
  %v6177 = vpop.f32.mrf.mxu0
  %v6178 = vadd.f32 0.0, %v6177
  %6179 = vmatmul.bf16.gmra.mxu0 %v4958
  %v6180 = vpop.f32.mrf.mxu0
  %v6181 = vadd.f32 0.0, %v6180
  %v6182 = vpop.f32.mrf.mxu0
  %v6183 = vadd.f32 0.0, %v6182
  %6184 = vmatmul.bf16.gmra.mxu0 %v4960
  %v6185 = vpop.f32.mrf.mxu0
  %v6186 = vadd.f32 0.0, %v6185
  %v6187 = vpop.f32.mrf.mxu0
  %v6188 = vadd.f32 0.0, %v6187
  %6189 = vmatmul.bf16.gmra.mxu0 %v4962
  %v6190 = vpop.f32.mrf.mxu0
  %v6191 = vadd.f32 0.0, %v6190
  %v6192 = vpop.f32.mrf.mxu0
  %v6193 = vadd.f32 0.0, %v6192
  %6194 = vmatmul.bf16.gmra.mxu0 %v4964
  %v6195 = vpop.f32.mrf.mxu0
  %v6196 = vadd.f32 0.0, %v6195
  %v6197 = vpop.f32.mrf.mxu0
  %v6198 = vadd.f32 0.0, %v6197
  %6199 = vmatmul.bf16.gmra.mxu0 %v4966
  %v6200 = vpop.f32.mrf.mxu0
  %v6201 = vadd.f32 0.0, %v6200
  %v6202 = vpop.f32.mrf.mxu0
  %v6203 = vadd.f32 0.0, %v6202
  %6204 = vmatmul.bf16.gmra.mxu0 %v4968
  %v6205 = vpop.f32.mrf.mxu0
  %v6206 = vadd.f32 0.0, %v6205
  %v6207 = vpop.f32.mrf.mxu0
  %v6208 = vadd.f32 0.0, %v6207
  %6209 = vmatmul.bf16.gmra.mxu0 %v4970
  %v6210 = vpop.f32.mrf.mxu0
  %v6211 = vadd.f32 0.0, %v6210
  %v6212 = vpop.f32.mrf.mxu0
  %v6213 = vadd.f32 0.0, %v6212
  %6214 = vmatmul.bf16.gmra.mxu0 %v4972
  %v6215 = vpop.f32.mrf.mxu0
  %v6216 = vadd.f32 0.0, %v6215
  %v6217 = vpop.f32.mrf.mxu0
  %v6218 = vadd.f32 0.0, %v6217
  %6219 = vmatmul.bf16.gmra.mxu0 %v4974
  %v6220 = vpop.f32.mrf.mxu0
  %v6221 = vadd.f32 0.0, %v6220
  %v6222 = vpop.f32.mrf.mxu0
  %v6223 = vadd.f32 0.0, %v6222
  %6224 = vmatmul.bf16.gmra.mxu0 %v4976
  %v6225 = vpop.f32.mrf.mxu0
  %v6226 = vadd.f32 0.0, %v6225
  %v6227 = vpop.f32.mrf.mxu0
  %v6228 = vadd.f32 0.0, %v6227
  %6229 = vmatmul.bf16.gmra.mxu0 %v4978
  %v6230 = vpop.f32.mrf.mxu0
  %v6231 = vadd.f32 0.0, %v6230
  %v6232 = vpop.f32.mrf.mxu0
  %v6233 = vadd.f32 0.0, %v6232
  %6234 = vmatmul.bf16.gmra.mxu0 %v4980
  %v6235 = vpop.f32.mrf.mxu0
  %v6236 = vadd.f32 0.0, %v6235
  %v6237 = vpop.f32.mrf.mxu0
  %v6238 = vadd.f32 0.0, %v6237
  %6239 = vmatmul.bf16.gmra.mxu0 %v4982
  %v6240 = vpop.f32.mrf.mxu0
  %v6241 = vadd.f32 0.0, %v6240
  %v6242 = vpop.f32.mrf.mxu0
  %v6243 = vadd.f32 0.0, %v6242
  %6244 = vmatmul.bf16.gmra.mxu0 %v4984
  %v6245 = vpop.f32.mrf.mxu0
  %v6246 = vadd.f32 0.0, %v6245
  %v6247 = vpop.f32.mrf.mxu0
  %v6248 = vadd.f32 0.0, %v6247
  %6249 = vmatmul.bf16.gmra.mxu0 %v4986
  %v6250 = vpop.f32.mrf.mxu0
  %v6251 = vadd.f32 0.0, %v6250
  %v6252 = vpop.f32.mrf.mxu0
  %v6253 = vadd.f32 0.0, %v6252
  %6254 = vmatmul.bf16.gmra.mxu0 %v4988
  %v6255 = vpop.f32.mrf.mxu0
  %v6256 = vadd.f32 0.0, %v6255
  %v6257 = vpop.f32.mrf.mxu0
  %v6258 = vadd.f32 0.0, %v6257
  %6259 = vmatmul.bf16.gmra.mxu0 %v4990
  %v6260 = vpop.f32.mrf.mxu0
  %v6261 = vadd.f32 0.0, %v6260
  %v6262 = vpop.f32.mrf.mxu0
  %v6263 = vadd.f32 0.0, %v6262
  %6264 = vmatmul.bf16.gmra.mxu0 %v4992
  %v6265 = vpop.f32.mrf.mxu0
  %v6266 = vadd.f32 0.0, %v6265
  %v6267 = vpop.f32.mrf.mxu0
  %v6268 = vadd.f32 0.0, %v6267
  %6269 = vmatmul.bf16.gmra.mxu0 %v4994
  %v6270 = vpop.f32.mrf.mxu0
  %v6271 = vadd.f32 0.0, %v6270
  %v6272 = vpop.f32.mrf.mxu0
  %v6273 = vadd.f32 0.0, %v6272
  %6274 = vmatmul.bf16.gmra.mxu0 %v4996
  %v6275 = vpop.f32.mrf.mxu0
  %v6276 = vadd.f32 0.0, %v6275
  %v6277 = vpop.f32.mrf.mxu0
  %v6278 = vadd.f32 0.0, %v6277
  %6279 = vmatmul.bf16.gmra.mxu0 %v4998
  %v6280 = vpop.f32.mrf.mxu0
  %v6281 = vadd.f32 0.0, %v6280
  %v6282 = vpop.f32.mrf.mxu0
  %v6283 = vadd.f32 0.0, %v6282
  %6284 = vmatmul.bf16.gmra.mxu0 %v5000
  %v6285 = vpop.f32.mrf.mxu0
  %v6286 = vadd.f32 0.0, %v6285
  %v6287 = vpop.f32.mrf.mxu0
  %v6288 = vadd.f32 0.0, %v6287
  %6289 = vmatmul.bf16.gmra.mxu0 %v5002
  %v6290 = vpop.f32.mrf.mxu0
  %v6291 = vadd.f32 0.0, %v6290
  %v6292 = vpop.f32.mrf.mxu0
  %v6293 = vadd.f32 0.0, %v6292
  %6294 = vmatmul.bf16.gmra.mxu0 %v5004
  %v6295 = vpop.f32.mrf.mxu0
  %v6296 = vadd.f32 0.0, %v6295
  %v6297 = vpop.f32.mrf.mxu0
  %v6298 = vadd.f32 0.0, %v6297
  %6299 = vmatmul.bf16.gmra.mxu0 %v5006
  %v6300 = vpop.f32.mrf.mxu0
  %v6301 = vadd.f32 0.0, %v6300
  %v6302 = vpop.f32.mrf.mxu0
  %v6303 = vadd.f32 0.0, %v6302
  %6304 = vmatmul.bf16.gmra.mxu0 %v5008
  %v6305 = vpop.f32.mrf.mxu0
  %v6306 = vadd.f32 0.0, %v6305
  %v6307 = vpop.f32.mrf.mxu0
  %v6308 = vadd.f32 0.0, %v6307
  %6309 = vmatmul.bf16.gmra.mxu0 %v5010
  %v6310 = vpop.f32.mrf.mxu0
  %v6311 = vadd.f32 0.0, %v6310
  %v6312 = vpop.f32.mrf.mxu0
  %v6313 = vadd.f32 0.0, %v6312
  %6314 = vmatmul.bf16.gmra.mxu0 %v5012
  %v6315 = vpop.f32.mrf.mxu0
  %v6316 = vadd.f32 0.0, %v6315
  %v6317 = vpop.f32.mrf.mxu0
  %v6318 = vadd.f32 0.0, %v6317
  %6319 = vmatmul.bf16.gmra.mxu0 %v5014
  %v6320 = vpop.f32.mrf.mxu0
  %v6321 = vadd.f32 0.0, %v6320
  %v6322 = vpop.f32.mrf.mxu0
  %v6323 = vadd.f32 0.0, %v6322
  %6324 = vmatmul.bf16.gmra.mxu0 %v5016
  %v6325 = vpop.f32.mrf.mxu0
  %v6326 = vadd.f32 0.0, %v6325
  %v6327 = vpop.f32.mrf.mxu0
  %v6328 = vadd.f32 0.0, %v6327
  %6329 = vmatmul.bf16.gmra.mxu0 %v5018
  %v6330 = vpop.f32.mrf.mxu0
  %v6331 = vadd.f32 0.0, %v6330
  %v6332 = vpop.f32.mrf.mxu0
  %v6333 = vadd.f32 0.0, %v6332
  %6334 = vmatmul.bf16.gmra.mxu0 %v5020
  %v6335 = vpop.f32.mrf.mxu0
  %v6336 = vadd.f32 0.0, %v6335
  %v6337 = vpop.f32.mrf.mxu0
  %v6338 = vadd.f32 0.0, %v6337
  %6339 = vmatmul.bf16.gmra.mxu0 %v5022
  %v6340 = vpop.f32.mrf.mxu0
  %v6341 = vadd.f32 0.0, %v6340
  %v6342 = vpop.f32.mrf.mxu0
  %v6343 = vadd.f32 0.0, %v6342
  %6344 = vmatmul.bf16.gmra.mxu0 %v5024
  %v6345 = vpop.f32.mrf.mxu0
  %v6346 = vadd.f32 0.0, %v6345
  %v6347 = vpop.f32.mrf.mxu0
  %v6348 = vadd.f32 0.0, %v6347
  %6349 = vmatmul.bf16.gmra.mxu0 %v5026
  %v6350 = vpop.f32.mrf.mxu0
  %v6351 = vadd.f32 0.0, %v6350
  %v6352 = vpop.f32.mrf.mxu0
  %v6353 = vadd.f32 0.0, %v6352
  %6354 = vmatmul.bf16.gmra.mxu0 %v5028
  %v6355 = vpop.f32.mrf.mxu0
  %v6356 = vadd.f32 0.0, %v6355
  %v6357 = vpop.f32.mrf.mxu0
  %v6358 = vadd.f32 0.0, %v6357
  %6359 = vmatmul.bf16.gmra.mxu0 %v5030
  %v6360 = vpop.f32.mrf.mxu0
  %v6361 = vadd.f32 0.0, %v6360
  %v6362 = vpop.f32.mrf.mxu0
  %v6363 = vadd.f32 0.0, %v6362
  %6364 = vmatmul.bf16.gmra.mxu0 %v5032
  %v6365 = vpop.f32.mrf.mxu0
  %v6366 = vadd.f32 0.0, %v6365
  %v6367 = vpop.f32.mrf.mxu0
  %v6368 = vadd.f32 0.0, %v6367
  %6369 = vmatmul.bf16.gmra.mxu0 %v5034
  %v6370 = vpop.f32.mrf.mxu0
  %v6371 = vadd.f32 0.0, %v6370
  %v6372 = vpop.f32.mrf.mxu0
  %v6373 = vadd.f32 0.0, %v6372
  %6374 = vmatmul.bf16.gmra.mxu0 %v5036
  %v6375 = vpop.f32.mrf.mxu0
  %v6376 = vadd.f32 0.0, %v6375
  %v6377 = vpop.f32.mrf.mxu0
  %v6378 = vadd.f32 0.0, %v6377
  %6379 = vmatmul.bf16.gmra.mxu0 %v5038
  %v6380 = vpop.f32.mrf.mxu0
  %v6381 = vadd.f32 0.0, %v6380
  %v6382 = vpop.f32.mrf.mxu0
  %v6383 = vadd.f32 0.0, %v6382
  %6384 = vmatmul.bf16.gmra.mxu0 %v5040
  %v6385 = vpop.f32.mrf.mxu0
  %v6386 = vadd.f32 0.0, %v6385
  %v6387 = vpop.f32.mrf.mxu0
  %v6388 = vadd.f32 0.0, %v6387
  %6389 = vmatmul.bf16.gmra.mxu0 %v5042
  %v6390 = vpop.f32.mrf.mxu0
  %v6391 = vadd.f32 0.0, %v6390
  %v6392 = vpop.f32.mrf.mxu0
  %v6393 = vadd.f32 0.0, %v6392
  %6394 = vmatmul.bf16.gmra.mxu0 %v5044
  %v6395 = vpop.f32.mrf.mxu0
  %v6396 = vadd.f32 0.0, %v6395
  %v6397 = vpop.f32.mrf.mxu0
  %v6398 = vadd.f32 0.0, %v6397
  %6399 = vmatmul.bf16.gmra.mxu0 %v5046
  %v6400 = vpop.f32.mrf.mxu0
  %v6401 = vadd.f32 0.0, %v6400
  %v6402 = vpop.f32.mrf.mxu0
  %v6403 = vadd.f32 0.0, %v6402
  %6404 = vmatmul.bf16.gmra.mxu0 %v5048
  %v6405 = vpop.f32.mrf.mxu0
  %v6406 = vadd.f32 0.0, %v6405
  %v6407 = vpop.f32.mrf.mxu0
  %v6408 = vadd.f32 0.0, %v6407
  %6409 = vmatmul.bf16.gmra.mxu0 %v5050
  %v6410 = vpop.f32.mrf.mxu0
  %v6411 = vadd.f32 0.0, %v6410
  %v6412 = vpop.f32.mrf.mxu0
  %v6413 = vadd.f32 0.0, %v6412
  %6414 = vmatmul.bf16.gmra.mxu0 %v5052
  %v6415 = vpop.f32.mrf.mxu0
  %v6416 = vadd.f32 0.0, %v6415
  %v6417 = vpop.f32.mrf.mxu0
  %v6418 = vadd.f32 0.0, %v6417
  %6419 = vmatmul.bf16.gmra.mxu0 %v5054
  %v6420 = vpop.f32.mrf.mxu0
  %v6421 = vadd.f32 0.0, %v6420
  %v6422 = vpop.f32.mrf.mxu0
  %v6423 = vadd.f32 0.0, %v6422
  %6424 = vmatmul.bf16.gmra.mxu0 %v5056
  %v6425 = vpop.f32.mrf.mxu0
  %v6426 = vadd.f32 0.0, %v6425
  %v6427 = vpop.f32.mrf.mxu0
  %v6428 = vadd.f32 0.0, %v6427
  %6429 = vmatmul.bf16.gmra.mxu0 %v5058
  %v6430 = vpop.f32.mrf.mxu0
  %v6431 = vadd.f32 0.0, %v6430
  %v6432 = vpop.f32.mrf.mxu0
  %v6433 = vadd.f32 0.0, %v6432
  %6434 = vmatmul.bf16.gmra.mxu0 %v5060
  %v6435 = vpop.f32.mrf.mxu0
  %v6436 = vadd.f32 0.0, %v6435
  %v6437 = vpop.f32.mrf.mxu0
  %v6438 = vadd.f32 0.0, %v6437
  %6439 = vmatmul.bf16.gmra.mxu0 %v5062
  %v6440 = vpop.f32.mrf.mxu0
  %v6441 = vadd.f32 0.0, %v6440
  %v6442 = vpop.f32.mrf.mxu0
  %v6443 = vadd.f32 0.0, %v6442
  %6444 = vmatmul.bf16.gmra.mxu0 %v5064
  %v6445 = vpop.f32.mrf.mxu0
  %v6446 = vadd.f32 0.0, %v6445
  %v6447 = vpop.f32.mrf.mxu0
  %v6448 = vadd.f32 0.0, %v6447
  %6449 = vmatmul.bf16.gmra.mxu0 %v5066
  %v6450 = vpop.f32.mrf.mxu0
  %v6451 = vadd.f32 0.0, %v6450
  %v6452 = vpop.f32.mrf.mxu0
  %v6453 = vadd.f32 0.0, %v6452
  %6454 = vmatmul.bf16.gmra.mxu0 %v5068
  %v6455 = vpop.f32.mrf.mxu0
  %v6456 = vadd.f32 0.0, %v6455
  %v6457 = vpop.f32.mrf.mxu0
  %v6458 = vadd.f32 0.0, %v6457
  %6459 = vmatmul.bf16.gmra.mxu0 %v5070
  %v6460 = vpop.f32.mrf.mxu0
  %v6461 = vadd.f32 0.0, %v6460
  %v6462 = vpop.f32.mrf.mxu0
  %v6463 = vadd.f32 0.0, %v6462
  %6464 = vmatmul.bf16.gmra.mxu0 %v5072
  %v6465 = vpop.f32.mrf.mxu0
  %v6466 = vadd.f32 0.0, %v6465
  %v6467 = vpop.f32.mrf.mxu0
  %v6468 = vadd.f32 0.0, %v6467
  %6469 = vmatmul.bf16.gmra.mxu0 %v5074
  %v6470 = vpop.f32.mrf.mxu0
  %v6471 = vadd.f32 0.0, %v6470
  %v6472 = vpop.f32.mrf.mxu0
  %v6473 = vadd.f32 0.0, %v6472
  %6474 = vmatmul.bf16.gmra.mxu0 %v5076
  %v6475 = vpop.f32.mrf.mxu0
  %v6476 = vadd.f32 0.0, %v6475
  %v6477 = vpop.f32.mrf.mxu0
  %v6478 = vadd.f32 0.0, %v6477
  %6479 = vmatmul.bf16.gmra.mxu0 %v5078
  %v6480 = vpop.f32.mrf.mxu0
  %v6481 = vadd.f32 0.0, %v6480
  %v6482 = vpop.f32.mrf.mxu0
  %v6483 = vadd.f32 0.0, %v6482
  %6484 = vmatmul.bf16.gmra.mxu0 %v5080
  %v6485 = vpop.f32.mrf.mxu0
  %v6486 = vadd.f32 0.0, %v6485
  %v6487 = vpop.f32.mrf.mxu0
  %v6488 = vadd.f32 0.0, %v6487
  %6489 = vmatmul.bf16.gmra.mxu0 %v5082
  %v6490 = vpop.f32.mrf.mxu0
  %v6491 = vadd.f32 0.0, %v6490
  %v6492 = vpop.f32.mrf.mxu0
  %v6493 = vadd.f32 0.0, %v6492
  %6494 = vmatmul.bf16.gmra.mxu0 %v5084
  %v6495 = vpop.f32.mrf.mxu0
  %v6496 = vadd.f32 0.0, %v6495
  %v6497 = vpop.f32.mrf.mxu0
  %v6498 = vadd.f32 0.0, %v6497
  %6499 = vmatmul.bf16.gmra.mxu0 %v5086
  %v6500 = vpop.f32.mrf.mxu0
  %v6501 = vadd.f32 0.0, %v6500
  %v6502 = vpop.f32.mrf.mxu0
  %v6503 = vadd.f32 0.0, %v6502
  %6504 = vmatmul.bf16.gmra.mxu0 %v5088
  %v6505 = vpop.f32.mrf.mxu0
  %v6506 = vadd.f32 0.0, %v6505
  %v6507 = vpop.f32.mrf.mxu0
  %v6508 = vadd.f32 0.0, %v6507
  %6509 = vmatmul.bf16.gmra.mxu0 %v5090
  %v6510 = vpop.f32.mrf.mxu0
  %v6511 = vadd.f32 0.0, %v6510
  %v6512 = vpop.f32.mrf.mxu0
  %v6513 = vadd.f32 0.0, %v6512
  %6514 = vmatmul.bf16.gmra.mxu0 %v5092
  %v6515 = vpop.f32.mrf.mxu0
  %v6516 = vadd.f32 0.0, %v6515
  %v6517 = vpop.f32.mrf.mxu0
  %v6518 = vadd.f32 0.0, %v6517
  %6519 = vmatmul.bf16.gmra.mxu0 %v5094
  %v6520 = vpop.f32.mrf.mxu0
  %v6521 = vadd.f32 0.0, %v6520
  %v6522 = vpop.f32.mrf.mxu0
  %v6523 = vadd.f32 0.0, %v6522
  %6524 = vmatmul.bf16.gmra.mxu0 %v5096
  %v6525 = vpop.f32.mrf.mxu0
  %v6526 = vadd.f32 0.0, %v6525
  %v6527 = vpop.f32.mrf.mxu0
  %v6528 = vadd.f32 0.0, %v6527
  %6529 = vmatmul.bf16.gmra.mxu0 %v5098
  %v6530 = vpop.f32.mrf.mxu0
  %v6531 = vadd.f32 0.0, %v6530
  %v6532 = vpop.f32.mrf.mxu0
  %v6533 = vadd.f32 0.0, %v6532
  %6534 = vmatmul.bf16.gmra.mxu0 %v5100
  %v6535 = vpop.f32.mrf.mxu0
  %v6536 = vadd.f32 0.0, %v6535
  %v6537 = vpop.f32.mrf.mxu0
  %v6538 = vadd.f32 0.0, %v6537
  %6539 = vmatmul.bf16.gmra.mxu0 %v5102
  %v6540 = vpop.f32.mrf.mxu0
  %v6541 = vadd.f32 0.0, %v6540
  %v6542 = vpop.f32.mrf.mxu0
  %v6543 = vadd.f32 0.0, %v6542
  %6544 = vmatmul.bf16.gmra.mxu0 %v5104
  %v6545 = vpop.f32.mrf.mxu0
  %v6546 = vadd.f32 0.0, %v6545
  %v6547 = vpop.f32.mrf.mxu0
  %v6548 = vadd.f32 0.0, %v6547
  %6549 = vmatmul.bf16.gmra.mxu0 %v5106
  %v6550 = vpop.f32.mrf.mxu0
  %v6551 = vadd.f32 0.0, %v6550
  %v6552 = vpop.f32.mrf.mxu0
  %v6553 = vadd.f32 0.0, %v6552
  %6554 = vmatmul.bf16.gmra.mxu0 %v5108
  %v6555 = vpop.f32.mrf.mxu0
  %v6556 = vadd.f32 0.0, %v6555
  %v6557 = vpop.f32.mrf.mxu0
  %v6558 = vadd.f32 0.0, %v6557
  %6559 = vmatmul.bf16.gmra.mxu0 %v5110
  %v6560 = vpop.f32.mrf.mxu0
  %v6561 = vadd.f32 0.0, %v6560
  %v6562 = vpop.f32.mrf.mxu0
  %v6563 = vadd.f32 0.0, %v6562
  %6564 = vmatmul.bf16.gmra.mxu0 %v5112
  %v6565 = vpop.f32.mrf.mxu0
  %v6566 = vadd.f32 0.0, %v6565
  %v6567 = vpop.f32.mrf.mxu0
  %v6568 = vadd.f32 0.0, %v6567
  %6569 = vmatmul.bf16.gmra.mxu0 %v5114
  %v6570 = vpop.f32.mrf.mxu0
  %v6571 = vadd.f32 0.0, %v6570
  %v6572 = vpop.f32.mrf.mxu0
  %v6573 = vadd.f32 0.0, %v6572
  %6574 = vmatmul.bf16.gmra.mxu0 %v5116
  %v6575 = vpop.f32.mrf.mxu0
  %v6576 = vadd.f32 0.0, %v6575
  %v6577 = vpop.f32.mrf.mxu0
  %v6578 = vadd.f32 0.0, %v6577
  %6579 = vmatmul.bf16.gmra.mxu0 %v5118
  %v6580 = vpop.f32.mrf.mxu0
  %v6581 = vadd.f32 0.0, %v6580
  %v6582 = vpop.f32.mrf.mxu0
  %v6583 = vadd.f32 0.0, %v6582
  %6584 = vmatmul.bf16.gmra.mxu0 %v5120
  %v6585 = vpop.f32.mrf.mxu0
  %v6586 = vadd.f32 0.0, %v6585
  %v6587 = vpop.f32.mrf.mxu0
  %v6588 = vadd.f32 0.0, %v6587
  %6589 = vmatmul.bf16.gmra.mxu0 %v5122
  %v6590 = vpop.f32.mrf.mxu0
  %v6591 = vadd.f32 0.0, %v6590
  %v6592 = vpop.f32.mrf.mxu0
  %v6593 = vadd.f32 0.0, %v6592
  %6594 = vmatmul.bf16.gmra.mxu0 %v5124
  %v6595 = vpop.f32.mrf.mxu0
  %v6596 = vadd.f32 0.0, %v6595
  %v6597 = vpop.f32.mrf.mxu0
  %v6598 = vadd.f32 0.0, %v6597
  %6599 = vmatmul.bf16.gmra.mxu0 %v5126
  %v6600 = vpop.f32.mrf.mxu0
  %v6601 = vadd.f32 0.0, %v6600
  %v6602 = vpop.f32.mrf.mxu0
  %v6603 = vadd.f32 0.0, %v6602
  %6604 = vmatmul.bf16.gmra.mxu0 %v5128
  %v6605 = vpop.f32.mrf.mxu0
  %v6606 = vadd.f32 0.0, %v6605
  %v6607 = vpop.f32.mrf.mxu0
  %v6608 = vadd.f32 0.0, %v6607
  %6609 = vmatmul.bf16.gmra.mxu0 %v5130
  %v6610 = vpop.f32.mrf.mxu0
  %v6611 = vadd.f32 0.0, %v6610
  %v6612 = vpop.f32.mrf.mxu0
  %v6613 = vadd.f32 0.0, %v6612
  %6614 = vmatmul.bf16.gmra.mxu0 %v5132
  %v6615 = vpop.f32.mrf.mxu0
  %v6616 = vadd.f32 0.0, %v6615
  %v6617 = vpop.f32.mrf.mxu0
  %v6618 = vadd.f32 0.0, %v6617
  %6619 = vmatmul.bf16.gmra.mxu0 %v5134
  %v6620 = vpop.f32.mrf.mxu0
  %v6621 = vadd.f32 0.0, %v6620
  %v6622 = vpop.f32.mrf.mxu0
  %v6623 = vadd.f32 0.0, %v6622
  %6624 = vmatmul.bf16.gmra.mxu0 %v5136
  %v6625 = vpop.f32.mrf.mxu0
  %v6626 = vadd.f32 0.0, %v6625
  %v6627 = vpop.f32.mrf.mxu0
  %v6628 = vadd.f32 0.0, %v6627
  %6629 = vmatmul.bf16.gmra.mxu0 %v5138
  %v6630 = vpop.f32.mrf.mxu0
  %v6631 = vadd.f32 0.0, %v6630
  %v6632 = vpop.f32.mrf.mxu0
  %v6633 = vadd.f32 0.0, %v6632
  %6634 = vmatmul.bf16.gmra.mxu0 %v5140
  %v6635 = vpop.f32.mrf.mxu0
  %v6636 = vadd.f32 0.0, %v6635
  %v6637 = vpop.f32.mrf.mxu0
  %v6638 = vadd.f32 0.0, %v6637
  %6639 = vmatmul.bf16.gmra.mxu0 %v5142
  %v6640 = vpop.f32.mrf.mxu0
  %v6641 = vadd.f32 0.0, %v6640
  %v6642 = vpop.f32.mrf.mxu0
  %v6643 = vadd.f32 0.0, %v6642
  %6644 = vmatmul.bf16.gmra.mxu0 %v5144
  %v6645 = vpop.f32.mrf.mxu0
  %v6646 = vadd.f32 0.0, %v6645
  %v6647 = vpop.f32.mrf.mxu0
  %v6648 = vadd.f32 0.0, %v6647
  %6649 = vmatmul.bf16.gmra.mxu0 %v5146
  %v6650 = vpop.f32.mrf.mxu0
  %v6651 = vadd.f32 0.0, %v6650
  %v6652 = vpop.f32.mrf.mxu0
  %v6653 = vadd.f32 0.0, %v6652
  %6654 = vmatmul.bf16.gmra.mxu0 %v5148
  %v6655 = vpop.f32.mrf.mxu0
  %v6656 = vadd.f32 0.0, %v6655
  %v6657 = vpop.f32.mrf.mxu0
  %v6658 = vadd.f32 0.0, %v6657
  %6659 = vmatmul.bf16.gmra.mxu0 %v5150
  %v6660 = vpop.f32.mrf.mxu0
  %v6661 = vadd.f32 0.0, %v6660
  %v6662 = vpop.f32.mrf.mxu0
  %v6663 = vadd.f32 0.0, %v6662
  %6664 = vmatmul.bf16.gmra.mxu0 %v5152
  %v6665 = vpop.f32.mrf.mxu0
  %v6666 = vadd.f32 0.0, %v6665
  %v6667 = vpop.f32.mrf.mxu0
  %v6668 = vadd.f32 0.0, %v6667
  %6669 = vmatmul.bf16.gmra.mxu0 %v5154
  %v6670 = vpop.f32.mrf.mxu0
  %v6671 = vadd.f32 0.0, %v6670
  %v6672 = vpop.f32.mrf.mxu0
  %v6673 = vadd.f32 0.0, %v6672
  %6674 = vmatmul.bf16.gmra.mxu0 %v5156
  %v6675 = vpop.f32.mrf.mxu0
  %v6676 = vadd.f32 0.0, %v6675
  %v6677 = vpop.f32.mrf.mxu0
  %v6678 = vadd.f32 0.0, %v6677
  %6679 = vmatmul.bf16.gmra.mxu0 %v5158
  %v6680 = vpop.f32.mrf.mxu0
  %v6681 = vadd.f32 0.0, %v6680
  %v6682 = vpop.f32.mrf.mxu0
  %v6683 = vadd.f32 0.0, %v6682
  %6684 = vmatmul.bf16.gmra.mxu0 %v5160
  %v6685 = vpop.f32.mrf.mxu0
  %v6686 = vadd.f32 0.0, %v6685
  %v6687 = vpop.f32.mrf.mxu0
  %v6688 = vadd.f32 0.0, %v6687
  %6689 = vmatmul.bf16.gmra.mxu0 %v5162
  %v6690 = vpop.f32.mrf.mxu0
  %v6691 = vadd.f32 0.0, %v6690
  %v6692 = vpop.f32.mrf.mxu0
  %v6693 = vadd.f32 0.0, %v6692
  %6694 = vmatmul.bf16.gmra.mxu0 %v5164
  %v6695 = vpop.f32.mrf.mxu0
  %v6696 = vadd.f32 0.0, %v6695
  %v6697 = vpop.f32.mrf.mxu0
  %v6698 = vadd.f32 0.0, %v6697
  %6699 = vmatmul.bf16.gmra.mxu0 %v5166
  %v6700 = vpop.f32.mrf.mxu0
  %v6701 = vadd.f32 0.0, %v6700
  %v6702 = vpop.f32.mrf.mxu0
  %v6703 = vadd.f32 0.0, %v6702
  %6704 = vmatmul.bf16.gmra.mxu0 %v5168
  %v6705 = vpop.f32.mrf.mxu0
  %v6706 = vadd.f32 0.0, %v6705
  %v6707 = vpop.f32.mrf.mxu0
  %v6708 = vadd.f32 0.0, %v6707
  %6709 = vmatmul.bf16.gmra.mxu0 %v5170
  %v6710 = vpop.f32.mrf.mxu0
  %v6711 = vadd.f32 0.0, %v6710
  %v6712 = vpop.f32.mrf.mxu0
  %v6713 = vadd.f32 0.0, %v6712
  %6714 = vmatmul.bf16.gmra.mxu0 %v5172
  %v6715 = vpop.f32.mrf.mxu0
  %v6716 = vadd.f32 0.0, %v6715
  %v6717 = vpop.f32.mrf.mxu0
  %v6718 = vadd.f32 0.0, %v6717
  %6719 = vmatmul.bf16.gmra.mxu0 %v5174
  %v6720 = vpop.f32.mrf.mxu0
  %v6721 = vadd.f32 0.0, %v6720
  %v6722 = vpop.f32.mrf.mxu0
  %v6723 = vadd.f32 0.0, %v6722
  %6724 = vmatmul.bf16.gmra.mxu0 %v5176
  %v6725 = vpop.f32.mrf.mxu0
  %v6726 = vadd.f32 0.0, %v6725
  %v6727 = vpop.f32.mrf.mxu0
  %v6728 = vadd.f32 0.0, %v6727
  %6729 = vmatmul.bf16.gmra.mxu0 %v5178
  %v6730 = vpop.f32.mrf.mxu0
  %v6731 = vadd.f32 0.0, %v6730
  %v6732 = vpop.f32.mrf.mxu0
  %v6733 = vadd.f32 0.0, %v6732
  %6734 = vmatmul.bf16.gmra.mxu0 %v5180
  %v6735 = vpop.f32.mrf.mxu0
  %v6736 = vadd.f32 0.0, %v6735
  %v6737 = vpop.f32.mrf.mxu0
  %v6738 = vadd.f32 0.0, %v6737
  %6739 = vmatmul.bf16.gmra.mxu0 %v5182
  %v6740 = vpop.f32.mrf.mxu0
  %v6741 = vadd.f32 0.0, %v6740
  %v6742 = vpop.f32.mrf.mxu0
  %v6743 = vadd.f32 0.0, %v6742
  %6744 = vmatmul.bf16.gmra.mxu0 %v5184
  %v6745 = vpop.f32.mrf.mxu0
  %v6746 = vadd.f32 0.0, %v6745
  %v6747 = vpop.f32.mrf.mxu0
  %v6748 = vadd.f32 0.0, %v6747
  %6749 = vmatmul.bf16.gmra.mxu0 %v5186
  %v6750 = vpop.f32.mrf.mxu0
  %v6751 = vadd.f32 0.0, %v6750
  %v6752 = vpop.f32.mrf.mxu0
  %v6753 = vadd.f32 0.0, %v6752
  %6754 = vmatmul.bf16.gmra.mxu0 %v5188
  %v6755 = vpop.f32.mrf.mxu0
  %v6756 = vadd.f32 0.0, %v6755
  %v6757 = vpop.f32.mrf.mxu0
  %v6758 = vadd.f32 0.0, %v6757
  %6759 = vmatmul.bf16.gmra.mxu0 %v5190
  %v6760 = vpop.f32.mrf.mxu0
  %v6761 = vadd.f32 0.0, %v6760
  %v6762 = vpop.f32.mrf.mxu0
  %v6763 = vadd.f32 0.0, %v6762
  %6764 = vmatmul.bf16.gmra.mxu0 %v5192
  %v6765 = vpop.f32.mrf.mxu0
  %v6766 = vadd.f32 0.0, %v6765
  %v6767 = vpop.f32.mrf.mxu0
  %v6768 = vadd.f32 0.0, %v6767
  %6769 = vmatmul.bf16.gmra.mxu0 %v5194
  %v6770 = vpop.f32.mrf.mxu0
  %v6771 = vadd.f32 0.0, %v6770
  %v6772 = vpop.f32.mrf.mxu0
  %v6773 = vadd.f32 0.0, %v6772
  %6774 = vmatmul.bf16.gmra.mxu0 %v5196
  %v6775 = vpop.f32.mrf.mxu0
  %v6776 = vadd.f32 0.0, %v6775
  %v6777 = vpop.f32.mrf.mxu0
  %v6778 = vadd.f32 0.0, %v6777
  %6779 = vmatmul.bf16.gmra.mxu0 %v5198
  %v6780 = vpop.f32.mrf.mxu0
  %v6781 = vadd.f32 0.0, %v6780
  %v6782 = vpop.f32.mrf.mxu0
  %v6783 = vadd.f32 0.0, %v6782
  %6784 = vmatmul.bf16.gmra.mxu0 %v5200
  %v6785 = vpop.f32.mrf.mxu0
  %v6786 = vadd.f32 0.0, %v6785
  %v6787 = vpop.f32.mrf.mxu0
  %v6788 = vadd.f32 0.0, %v6787
  %6789 = vmatmul.bf16.gmra.mxu0 %v5202
  %v6790 = vpop.f32.mrf.mxu0
  %v6791 = vadd.f32 0.0, %v6790
  %v6792 = vpop.f32.mrf.mxu0
  %v6793 = vadd.f32 0.0, %v6792
  %6794 = vmatmul.bf16.gmra.mxu0 %v5204
  %v6795 = vpop.f32.mrf.mxu0
  %v6796 = vadd.f32 0.0, %v6795
  %v6797 = vpop.f32.mrf.mxu0
  %v6798 = vadd.f32 0.0, %v6797
  %6799 = vmatmul.bf16.gmra.mxu0 %v5206
  %v6800 = vpop.f32.mrf.mxu0
  %v6801 = vadd.f32 0.0, %v6800
  %v6802 = vpop.f32.mrf.mxu0
  %v6803 = vadd.f32 0.0, %v6802
  %6804 = vmatmul.bf16.gmra.mxu0 %v5208
  %v6805 = vpop.f32.mrf.mxu0
  %v6806 = vadd.f32 0.0, %v6805
  %v6807 = vpop.f32.mrf.mxu0
  %v6808 = vadd.f32 0.0, %v6807
  %6809 = vmatmul.bf16.gmra.mxu0 %v5210
  %v6810 = vpop.f32.mrf.mxu0
  %v6811 = vadd.f32 0.0, %v6810
  %v6812 = vpop.f32.mrf.mxu0
  %v6813 = vadd.f32 0.0, %v6812
  %6814 = vmatmul.bf16.gmra.mxu0 %v5212
  %v6815 = vpop.f32.mrf.mxu0
  %v6816 = vadd.f32 0.0, %v6815
  %v6817 = vpop.f32.mrf.mxu0
  %v6818 = vadd.f32 0.0, %v6817
  %6819 = vmatmul.bf16.gmra.mxu0 %v5214
  %v6820 = vpop.f32.mrf.mxu0
  %v6821 = vadd.f32 0.0, %v6820
  %v6822 = vpop.f32.mrf.mxu0
  %v6823 = vadd.f32 0.0, %v6822
  %6824 = vmatmul.bf16.gmra.mxu0 %v5216
  %v6825 = vpop.f32.mrf.mxu0
  %v6826 = vadd.f32 0.0, %v6825
  %v6827 = vpop.f32.mrf.mxu0
  %v6828 = vadd.f32 0.0, %v6827
  %6829 = vmatmul.bf16.gmra.mxu0 %v5218
  %v6830 = vpop.f32.mrf.mxu0
  %v6831 = vadd.f32 0.0, %v6830
  %v6832 = vpop.f32.mrf.mxu0
  %v6833 = vadd.f32 0.0, %v6832
  %6834 = vmatmul.bf16.gmra.mxu0 %v5220
  %v6835 = vpop.f32.mrf.mxu0
  %v6836 = vadd.f32 0.0, %v6835
  %v6837 = vpop.f32.mrf.mxu0
  %v6838 = vadd.f32 0.0, %v6837
  %6839 = vmatmul.bf16.gmra.mxu0 %v5222
  %v6840 = vpop.f32.mrf.mxu0
  %v6841 = vadd.f32 0.0, %v6840
  %v6842 = vpop.f32.mrf.mxu0
  %v6843 = vadd.f32 0.0, %v6842
  %6844 = vmatmul.bf16.gmra.mxu0 %v5224
  %v6845 = vpop.f32.mrf.mxu0
  %v6846 = vadd.f32 0.0, %v6845
  %v6847 = vpop.f32.mrf.mxu0
  %v6848 = vadd.f32 0.0, %v6847
  %6849 = vmatmul.bf16.gmra.mxu0 %v5226
  %v6850 = vpop.f32.mrf.mxu0
  %v6851 = vadd.f32 0.0, %v6850
  %v6852 = vpop.f32.mrf.mxu0
  %v6853 = vadd.f32 0.0, %v6852
  %6854 = vmatmul.bf16.gmra.mxu0 %v5228
  %v6855 = vpop.f32.mrf.mxu0
  %v6856 = vadd.f32 0.0, %v6855
  %v6857 = vpop.f32.mrf.mxu0
  %v6858 = vadd.f32 0.0, %v6857
  %6859 = vmatmul.bf16.gmra.mxu0 %v5230
  %v6860 = vpop.f32.mrf.mxu0
  %v6861 = vadd.f32 0.0, %v6860
  %v6862 = vpop.f32.mrf.mxu0
  %v6863 = vadd.f32 0.0, %v6862
  %6864 = vmatmul.bf16.gmra.mxu0 %v5232
  %v6865 = vpop.f32.mrf.mxu0
  %v6866 = vadd.f32 0.0, %v6865
  %v6867 = vpop.f32.mrf.mxu0
  %v6868 = vadd.f32 0.0, %v6867
  %6869 = vmatmul.bf16.gmra.mxu0 %v5234
  %v6870 = vpop.f32.mrf.mxu0
  %v6871 = vadd.f32 0.0, %v6870
  %v6872 = vpop.f32.mrf.mxu0
  %v6873 = vadd.f32 0.0, %v6872
  %6874 = vmatmul.bf16.gmra.mxu0 %v5236
  %v6875 = vpop.f32.mrf.mxu0
  %v6876 = vadd.f32 0.0, %v6875
  %v6877 = vpop.f32.mrf.mxu0
  %v6878 = vadd.f32 0.0, %v6877
  %6879 = vmatmul.bf16.gmra.mxu0 %v5238
  %v6880 = vpop.f32.mrf.mxu0
  %v6881 = vadd.f32 0.0, %v6880
  %v6882 = vpop.f32.mrf.mxu0
  %v6883 = vadd.f32 0.0, %v6882
  %6884 = vmatmul.bf16.gmra.mxu0 %v5240
  %v6885 = vpop.f32.mrf.mxu0
  %v6886 = vadd.f32 0.0, %v6885
  %v6887 = vpop.f32.mrf.mxu0
  %v6888 = vadd.f32 0.0, %v6887
  %6889 = vmatmul.bf16.gmra.mxu0 %v5242
  %v6890 = vpop.f32.mrf.mxu0
  %v6891 = vadd.f32 0.0, %v6890
  %v6892 = vpop.f32.mrf.mxu0
  %v6893 = vadd.f32 0.0, %v6892
  %6894 = vmatmul.bf16.gmra.mxu0 %v5244
  %v6895 = vpop.f32.mrf.mxu0
  %v6896 = vadd.f32 0.0, %v6895
  %v6897 = vpop.f32.mrf.mxu0
  %v6898 = vadd.f32 0.0, %v6897
  %6899 = vmatmul.bf16.gmra.mxu0 %v5246
  %v6900 = vpop.f32.mrf.mxu0
  %v6901 = vadd.f32 0.0, %v6900
  %v6902 = vpop.f32.mrf.mxu0
  %v6903 = vadd.f32 0.0, %v6902
  %6904 = vmatmul.bf16.gmra.mxu0 %v5248
  %v6905 = vpop.f32.mrf.mxu0
  %v6906 = vadd.f32 0.0, %v6905
  %v6907 = vpop.f32.mrf.mxu0
  %v6908 = vadd.f32 0.0, %v6907
  %6909 = vmatmul.bf16.gmra.mxu0 %v5250
  %v6910 = vpop.f32.mrf.mxu0
  %v6911 = vadd.f32 0.0, %v6910
  %v6912 = vpop.f32.mrf.mxu0
  %v6913 = vadd.f32 0.0, %v6912
  %6914 = vmatmul.bf16.gmra.mxu0 %v5252
  %v6915 = vpop.f32.mrf.mxu0
  %v6916 = vadd.f32 0.0, %v6915
  %v6917 = vpop.f32.mrf.mxu0
  %v6918 = vadd.f32 0.0, %v6917
  %6919 = vmatmul.bf16.gmra.mxu0 %v5254
  %v6920 = vpop.f32.mrf.mxu0
  %v6921 = vadd.f32 0.0, %v6920
  %v6922 = vpop.f32.mrf.mxu0
  %v6923 = vadd.f32 0.0, %v6922
  %6924 = vmatmul.bf16.gmra.mxu0 %v5256
  %v6925 = vpop.f32.mrf.mxu0
  %v6926 = vadd.f32 0.0, %v6925
  %v6927 = vpop.f32.mrf.mxu0
  %v6928 = vadd.f32 0.0, %v6927
  %6929 = vmatmul.bf16.gmra.mxu0 %v5258
  %v6930 = vpop.f32.mrf.mxu0
  %v6931 = vadd.f32 0.0, %v6930
  %v6932 = vpop.f32.mrf.mxu0
  %v6933 = vadd.f32 0.0, %v6932
  %6934 = vmatmul.bf16.gmra.mxu0 %v5260
  %v6935 = vpop.f32.mrf.mxu0
  %v6936 = vadd.f32 0.0, %v6935
  %v6937 = vpop.f32.mrf.mxu0
  %v6938 = vadd.f32 0.0, %v6937
  %6939 = vmatmul.bf16.gmra.mxu0 %v5262
  %v6940 = vpop.f32.mrf.mxu0
  %v6941 = vadd.f32 0.0, %v6940
  %v6942 = vpop.f32.mrf.mxu0
  %v6943 = vadd.f32 0.0, %v6942
  %6944 = vmatmul.bf16.gmra.mxu0 %v5264
  %v6945 = vpop.f32.mrf.mxu0
  %v6946 = vadd.f32 0.0, %v6945
  %v6947 = vpop.f32.mrf.mxu0
  %v6948 = vadd.f32 0.0, %v6947
  %6949 = vmatmul.bf16.gmra.mxu0 %v5266
  %v6950 = vpop.f32.mrf.mxu0
  %v6951 = vadd.f32 0.0, %v6950
  %v6952 = vpop.f32.mrf.mxu0
  %v6953 = vadd.f32 0.0, %v6952
  %6954 = vmatmul.bf16.gmra.mxu0 %v5268
  %v6955 = vpop.f32.mrf.mxu0
  %v6956 = vadd.f32 0.0, %v6955
  %v6957 = vpop.f32.mrf.mxu0
  %v6958 = vadd.f32 0.0, %v6957
  %6959 = vmatmul.bf16.gmra.mxu0 %v5270
  %v6960 = vpop.f32.mrf.mxu0
  %v6961 = vadd.f32 0.0, %v6960
  %v6962 = vpop.f32.mrf.mxu0
  %v6963 = vadd.f32 0.0, %v6962
  %6964 = vmatmul.bf16.gmra.mxu0 %v5272
  %v6965 = vpop.f32.mrf.mxu0
  %v6966 = vadd.f32 0.0, %v6965
  %v6967 = vpop.f32.mrf.mxu0
  %v6968 = vadd.f32 0.0, %v6967
  %6969 = vmatmul.bf16.gmra.mxu0 %v5274
  %v6970 = vpop.f32.mrf.mxu0
  %v6971 = vadd.f32 0.0, %v6970
  %v6972 = vpop.f32.mrf.mxu0
  %v6973 = vadd.f32 0.0, %v6972
  %6974 = vmatmul.bf16.gmra.mxu0 %v5276
  %v6975 = vpop.f32.mrf.mxu0
  %v6976 = vadd.f32 0.0, %v6975
  %v6977 = vpop.f32.mrf.mxu0
  %v6978 = vadd.f32 0.0, %v6977
  %6979 = vmatmul.bf16.gmra.mxu0 %v5278
  %v6980 = vpop.f32.mrf.mxu0
  %v6981 = vadd.f32 0.0, %v6980
  %v6982 = vpop.f32.mrf.mxu0
  %v6983 = vadd.f32 0.0, %v6982
  %6984 = vmatmul.bf16.gmra.mxu0 %v5280
  %v6985 = vpop.f32.mrf.mxu0
  %v6986 = vadd.f32 0.0, %v6985
  %v6987 = vpop.f32.mrf.mxu0
  %v6988 = vadd.f32 0.0, %v6987
  %6989 = vmatmul.bf16.gmra.mxu0 %v5282
  %v6990 = vpop.f32.mrf.mxu0
  %v6991 = vadd.f32 0.0, %v6990
  %v6992 = vpop.f32.mrf.mxu0
  %v6993 = vadd.f32 0.0, %v6992
  %6994 = vmatmul.bf16.gmra.mxu0 %v5284
  %v6995 = vpop.f32.mrf.mxu0
  %v6996 = vadd.f32 0.0, %v6995
  %v6997 = vpop.f32.mrf.mxu0
  %v6998 = vadd.f32 0.0, %v6997
  %6999 = vmatmul.bf16.gmra.mxu0 %v5286
  %v7000 = vpop.f32.mrf.mxu0
  %v7001 = vadd.f32 0.0, %v7000
  %v7002 = vpop.f32.mrf.mxu0
  %v7003 = vadd.f32 0.0, %v7002
  %7004 = vmatmul.bf16.gmra.mxu0 %v5288
  %v7005 = vpop.f32.mrf.mxu0
  %v7006 = vadd.f32 0.0, %v7005
  %v7007 = vpop.f32.mrf.mxu0
  %v7008 = vadd.f32 0.0, %v7007
  %7009 = vmatmul.bf16.gmra.mxu0 %v5290
  %v7010 = vpop.f32.mrf.mxu0
  %v7011 = vadd.f32 0.0, %v7010
  %v7012 = vpop.f32.mrf.mxu0
  %v7013 = vadd.f32 0.0, %v7012
  %7014 = vmatmul.bf16.gmra.mxu0 %v5292
  %v7015 = vpop.f32.mrf.mxu0
  %v7016 = vadd.f32 0.0, %v7015
  %v7017 = vpop.f32.mrf.mxu0
  %v7018 = vadd.f32 0.0, %v7017
  %7019 = vmatmul.bf16.gmra.mxu0 %v5294
  %v7020 = vpop.f32.mrf.mxu0
  %v7021 = vadd.f32 0.0, %v7020
  %v7022 = vpop.f32.mrf.mxu0
  %v7023 = vadd.f32 0.0, %v7022
  %7024 = vmatmul.bf16.gmra.mxu0 %v5296
  %v7025 = vpop.f32.mrf.mxu0
  %v7026 = vadd.f32 0.0, %v7025
  %v7027 = vpop.f32.mrf.mxu0
  %v7028 = vadd.f32 0.0, %v7027
  %7029 = vmatmul.bf16.gmra.mxu0 %v5298
  %v7030 = vpop.f32.mrf.mxu0
  %v7031 = vadd.f32 0.0, %v7030
  %v7032 = vpop.f32.mrf.mxu0
  %v7033 = vadd.f32 0.0, %v7032
  %7034 = vmatmul.bf16.gmra.mxu0 %v5300
  %v7035 = vpop.f32.mrf.mxu0
  %v7036 = vadd.f32 0.0, %v7035
  %v7037 = vpop.f32.mrf.mxu0
  %v7038 = vadd.f32 0.0, %v7037
  %7039 = vmatmul.bf16.gmra.mxu0 %v5302
  %v7040 = vpop.f32.mrf.mxu0
  %v7041 = vadd.f32 0.0, %v7040
  %v7042 = vpop.f32.mrf.mxu0
  %v7043 = vadd.f32 0.0, %v7042
  %7044 = vmatmul.bf16.gmra.mxu0 %v5304
  %v7045 = vpop.f32.mrf.mxu0
  %v7046 = vadd.f32 0.0, %v7045
  %v7047 = vpop.f32.mrf.mxu0
  %v7048 = vadd.f32 0.0, %v7047
  %7049 = vmatmul.bf16.gmra.mxu0 %v5306
  %v7050 = vpop.f32.mrf.mxu0
  %v7051 = vadd.f32 0.0, %v7050
  %v7052 = vpop.f32.mrf.mxu0
  %v7053 = vadd.f32 0.0, %v7052
  %7054 = vmatmul.bf16.gmra.mxu0 %v5308
  %v7055 = vpop.f32.mrf.mxu0
  %v7056 = vadd.f32 0.0, %v7055
  %v7057 = vpop.f32.mrf.mxu0
  %v7058 = vadd.f32 0.0, %v7057
  %7059 = vmatmul.bf16.gmra.mxu0 %v5310
  %v7060 = vpop.f32.mrf.mxu0
  %v7061 = vadd.f32 0.0, %v7060
  %v7062 = vpop.f32.mrf.mxu0
  %v7063 = vadd.f32 0.0, %v7062
  %7064 = vmatmul.bf16.gmra.mxu0 %v5312
  %v7065 = vpop.f32.mrf.mxu0
  %v7066 = vadd.f32 0.0, %v7065
  %v7067 = vpop.f32.mrf.mxu0
  %v7068 = vadd.f32 0.0, %v7067
  %7069 = vmatmul.bf16.gmra.mxu0 %v5314
  %v7070 = vpop.f32.mrf.mxu0
  %v7071 = vadd.f32 0.0, %v7070
  %v7072 = vpop.f32.mrf.mxu0
  %v7073 = vadd.f32 0.0, %v7072
  %7074 = vmatmul.bf16.gmra.mxu0 %v5316
  %v7075 = vpop.f32.mrf.mxu0
  %v7076 = vadd.f32 0.0, %v7075
  %v7077 = vpop.f32.mrf.mxu0
  %v7078 = vadd.f32 0.0, %v7077
  %7079 = vmatmul.bf16.gmra.mxu0 %v5318
  %v7080 = vpop.f32.mrf.mxu0
  %v7081 = vadd.f32 0.0, %v7080
  %v7082 = vpop.f32.mrf.mxu0
  %v7083 = vadd.f32 0.0, %v7082
  %7084 = vmatmul.bf16.gmra.mxu0 %v5320
  %v7085 = vpop.f32.mrf.mxu0
  %v7086 = vadd.f32 0.0, %v7085
  %v7087 = vpop.f32.mrf.mxu0
  %v7088 = vadd.f32 0.0, %v7087
  %7089 = vmatmul.bf16.gmra.mxu0 %v5322
  %v7090 = vpop.f32.mrf.mxu0
  %v7091 = vadd.f32 0.0, %v7090
  %v7092 = vpop.f32.mrf.mxu0
  %v7093 = vadd.f32 0.0, %v7092
  %7094 = vmatmul.bf16.gmra.mxu0 %v5324
  %v7095 = vpop.f32.mrf.mxu0
  %v7096 = vadd.f32 0.0, %v7095
  %v7097 = vpop.f32.mrf.mxu0
  %v7098 = vadd.f32 0.0, %v7097
  %7099 = vmatmul.bf16.gmra.mxu0 %v5326
  %v7100 = vpop.f32.mrf.mxu0
  %v7101 = vadd.f32 0.0, %v7100
  %v7102 = vpop.f32.mrf.mxu0
  %v7103 = vadd.f32 0.0, %v7102
  %7104 = vmatmul.bf16.gmra.mxu0 %v5328
  %v7105 = vpop.f32.mrf.mxu0
  %v7106 = vadd.f32 0.0, %v7105
  %v7107 = vpop.f32.mrf.mxu0
  %v7108 = vadd.f32 0.0, %v7107
  %7109 = vmatmul.bf16.gmra.mxu0 %v5330
  %v7110 = vpop.f32.mrf.mxu0
  %v7111 = vadd.f32 0.0, %v7110
  %v7112 = vpop.f32.mrf.mxu0
  %v7113 = vadd.f32 0.0, %v7112
  %7114 = vmatmul.bf16.gmra.mxu0 %v5332
  %v7115 = vpop.f32.mrf.mxu0
  %v7116 = vadd.f32 0.0, %v7115
  %v7117 = vpop.f32.mrf.mxu0
  %v7118 = vadd.f32 0.0, %v7117
  %7119 = vmatmul.bf16.gmra.mxu0 %v5334
  %v7120 = vpop.f32.mrf.mxu0
  %v7121 = vadd.f32 0.0, %v7120
  %v7122 = vpop.f32.mrf.mxu0
  %v7123 = vadd.f32 0.0, %v7122
  %7124 = vmatmul.bf16.gmra.mxu0 %v5336
  %v7125 = vpop.f32.mrf.mxu0
  %v7126 = vadd.f32 0.0, %v7125
  %v7127 = vpop.f32.mrf.mxu0
  %v7128 = vadd.f32 0.0, %v7127
  %7129 = vmatmul.bf16.gmra.mxu0 %v5338
  %v7130 = vpop.f32.mrf.mxu0
  %v7131 = vadd.f32 0.0, %v7130
  %v7132 = vpop.f32.mrf.mxu0
  %v7133 = vadd.f32 0.0, %v7132
  %7134 = vmatmul.bf16.gmra.mxu0 %v5340
  %v7135 = vpop.f32.mrf.mxu0
  %v7136 = vadd.f32 0.0, %v7135
  %v7137 = vpop.f32.mrf.mxu0
  %v7138 = vadd.f32 0.0, %v7137
  %7139 = vmatmul.bf16.gmra.mxu0 %v5342
  %v7140 = vpop.f32.mrf.mxu0
  %v7141 = vadd.f32 0.0, %v7140
  %v7142 = vpop.f32.mrf.mxu0
  %v7143 = vadd.f32 0.0, %v7142
  %7144 = vdwg.mxu0
  %7145 = vmatpush.bf16.xpose.msra.mxu0 0
  %7146 = vmatpush.bf16.xpose.msra.mxu0 0
  %7147 = vmatpush.bf16.xpose.msra.mxu0 0
  %7148 = vmatpush.bf16.xpose.msra.mxu0 0
  %7149 = vmatpush.bf16.xpose.msra.mxu0 %v137
  %7150 = vmatpush.bf16.xpose.msra.mxu0 %v135
  %7151 = vmatpush.bf16.xpose.msra.mxu0 %v133
  %7152 = vmatpush.bf16.xpose.msra.mxu0 %v131
  %7153 = vmatmul.bf16.gmra.mxu0 %v4833
  %v7154 = vpop.f32.mrf.mxu0
  %v7155 = vadd.f32 %v5866, %v7154
  %v7156 = vpop.f32.mrf.mxu0
  %v7157 = vadd.f32 %v5868, %v7156
  %7158 = vmatmul.bf16.gmra.mxu0 %v4835
  %v7159 = vpop.f32.mrf.mxu0
  %v7160 = vadd.f32 %v5871, %v7159
  %v7161 = vpop.f32.mrf.mxu0
  %v7162 = vadd.f32 %v5873, %v7161
  %7163 = vmatmul.bf16.gmra.mxu0 %v4837
  %v7164 = vpop.f32.mrf.mxu0
  %v7165 = vadd.f32 %v5876, %v7164
  %v7166 = vpop.f32.mrf.mxu0
  %v7167 = vadd.f32 %v5878, %v7166
  %7168 = vmatmul.bf16.gmra.mxu0 %v4839
  %v7169 = vpop.f32.mrf.mxu0
  %v7170 = vadd.f32 %v5881, %v7169
  %v7171 = vpop.f32.mrf.mxu0
  %v7172 = vadd.f32 %v5883, %v7171
  %7173 = vmatmul.bf16.gmra.mxu0 %v4841
  %v7174 = vpop.f32.mrf.mxu0
  %v7175 = vadd.f32 %v5886, %v7174
  %v7176 = vpop.f32.mrf.mxu0
  %v7177 = vadd.f32 %v5888, %v7176
  %7178 = vmatmul.bf16.gmra.mxu0 %v4843
  %v7179 = vpop.f32.mrf.mxu0
  %v7180 = vadd.f32 %v5891, %v7179
  %v7181 = vpop.f32.mrf.mxu0
  %v7182 = vadd.f32 %v5893, %v7181
  %7183 = vmatmul.bf16.gmra.mxu0 %v4845
  %v7184 = vpop.f32.mrf.mxu0
  %v7185 = vadd.f32 %v5896, %v7184
  %v7186 = vpop.f32.mrf.mxu0
  %v7187 = vadd.f32 %v5898, %v7186
  %7188 = vmatmul.bf16.gmra.mxu0 %v4847
  %v7189 = vpop.f32.mrf.mxu0
  %v7190 = vadd.f32 %v5901, %v7189
  %v7191 = vpop.f32.mrf.mxu0
  %v7192 = vadd.f32 %v5903, %v7191
  %7193 = vmatmul.bf16.gmra.mxu0 %v4849
  %v7194 = vpop.f32.mrf.mxu0
  %v7195 = vadd.f32 %v5906, %v7194
  %v7196 = vpop.f32.mrf.mxu0
  %v7197 = vadd.f32 %v5908, %v7196
  %7198 = vmatmul.bf16.gmra.mxu0 %v4851
  %v7199 = vpop.f32.mrf.mxu0
  %v7200 = vadd.f32 %v5911, %v7199
  %v7201 = vpop.f32.mrf.mxu0
  %v7202 = vadd.f32 %v5913, %v7201
  %7203 = vmatmul.bf16.gmra.mxu0 %v4853
  %v7204 = vpop.f32.mrf.mxu0
  %v7205 = vadd.f32 %v5916, %v7204
  %v7206 = vpop.f32.mrf.mxu0
  %v7207 = vadd.f32 %v5918, %v7206
  %7208 = vmatmul.bf16.gmra.mxu0 %v4855
  %v7209 = vpop.f32.mrf.mxu0
  %v7210 = vadd.f32 %v5921, %v7209
  %v7211 = vpop.f32.mrf.mxu0
  %v7212 = vadd.f32 %v5923, %v7211
  %7213 = vmatmul.bf16.gmra.mxu0 %v4857
  %v7214 = vpop.f32.mrf.mxu0
  %v7215 = vadd.f32 %v5926, %v7214
  %v7216 = vpop.f32.mrf.mxu0
  %v7217 = vadd.f32 %v5928, %v7216
  %7218 = vmatmul.bf16.gmra.mxu0 %v4859
  %v7219 = vpop.f32.mrf.mxu0
  %v7220 = vadd.f32 %v5931, %v7219
  %v7221 = vpop.f32.mrf.mxu0
  %v7222 = vadd.f32 %v5933, %v7221
  %7223 = vmatmul.bf16.gmra.mxu0 %v4861
  %v7224 = vpop.f32.mrf.mxu0
  %v7225 = vadd.f32 %v5936, %v7224
  %v7226 = vpop.f32.mrf.mxu0
  %v7227 = vadd.f32 %v5938, %v7226
  %7228 = vmatmul.bf16.gmra.mxu0 %v4863
  %v7229 = vpop.f32.mrf.mxu0
  %v7230 = vadd.f32 %v5941, %v7229
  %v7231 = vpop.f32.mrf.mxu0
  %v7232 = vadd.f32 %v5943, %v7231
  %7233 = vmatmul.bf16.gmra.mxu0 %v4865
  %v7234 = vpop.f32.mrf.mxu0
  %v7235 = vadd.f32 %v5946, %v7234
  %v7236 = vpop.f32.mrf.mxu0
  %v7237 = vadd.f32 %v5948, %v7236
  %7238 = vmatmul.bf16.gmra.mxu0 %v4867
  %v7239 = vpop.f32.mrf.mxu0
  %v7240 = vadd.f32 %v5951, %v7239
  %v7241 = vpop.f32.mrf.mxu0
  %v7242 = vadd.f32 %v5953, %v7241
  %7243 = vmatmul.bf16.gmra.mxu0 %v4869
  %v7244 = vpop.f32.mrf.mxu0
  %v7245 = vadd.f32 %v5956, %v7244
  %v7246 = vpop.f32.mrf.mxu0
  %v7247 = vadd.f32 %v5958, %v7246
  %7248 = vmatmul.bf16.gmra.mxu0 %v4871
  %v7249 = vpop.f32.mrf.mxu0
  %v7250 = vadd.f32 %v5961, %v7249
  %v7251 = vpop.f32.mrf.mxu0
  %v7252 = vadd.f32 %v5963, %v7251
  %7253 = vmatmul.bf16.gmra.mxu0 %v4873
  %v7254 = vpop.f32.mrf.mxu0
  %v7255 = vadd.f32 %v5966, %v7254
  %v7256 = vpop.f32.mrf.mxu0
  %v7257 = vadd.f32 %v5968, %v7256
  %7258 = vmatmul.bf16.gmra.mxu0 %v4875
  %v7259 = vpop.f32.mrf.mxu0
  %v7260 = vadd.f32 %v5971, %v7259
  %v7261 = vpop.f32.mrf.mxu0
  %v7262 = vadd.f32 %v5973, %v7261
  %7263 = vmatmul.bf16.gmra.mxu0 %v4877
  %v7264 = vpop.f32.mrf.mxu0
  %v7265 = vadd.f32 %v5976, %v7264
  %v7266 = vpop.f32.mrf.mxu0
  %v7267 = vadd.f32 %v5978, %v7266
  %7268 = vmatmul.bf16.gmra.mxu0 %v4879
  %v7269 = vpop.f32.mrf.mxu0
  %v7270 = vadd.f32 %v5981, %v7269
  %v7271 = vpop.f32.mrf.mxu0
  %v7272 = vadd.f32 %v5983, %v7271
  %7273 = vmatmul.bf16.gmra.mxu0 %v4881
  %v7274 = vpop.f32.mrf.mxu0
  %v7275 = vadd.f32 %v5986, %v7274
  %v7276 = vpop.f32.mrf.mxu0
  %v7277 = vadd.f32 %v5988, %v7276
  %7278 = vmatmul.bf16.gmra.mxu0 %v4883
  %v7279 = vpop.f32.mrf.mxu0
  %v7280 = vadd.f32 %v5991, %v7279
  %v7281 = vpop.f32.mrf.mxu0
  %v7282 = vadd.f32 %v5993, %v7281
  %7283 = vmatmul.bf16.gmra.mxu0 %v4885
  %v7284 = vpop.f32.mrf.mxu0
  %v7285 = vadd.f32 %v5996, %v7284
  %v7286 = vpop.f32.mrf.mxu0
  %v7287 = vadd.f32 %v5998, %v7286
  %7288 = vmatmul.bf16.gmra.mxu0 %v4887
  %v7289 = vpop.f32.mrf.mxu0
  %v7290 = vadd.f32 %v6001, %v7289
  %v7291 = vpop.f32.mrf.mxu0
  %v7292 = vadd.f32 %v6003, %v7291
  %7293 = vmatmul.bf16.gmra.mxu0 %v4889
  %v7294 = vpop.f32.mrf.mxu0
  %v7295 = vadd.f32 %v6006, %v7294
  %v7296 = vpop.f32.mrf.mxu0
  %v7297 = vadd.f32 %v6008, %v7296
  %7298 = vmatmul.bf16.gmra.mxu0 %v4891
  %v7299 = vpop.f32.mrf.mxu0
  %v7300 = vadd.f32 %v6011, %v7299
  %v7301 = vpop.f32.mrf.mxu0
  %v7302 = vadd.f32 %v6013, %v7301
  %7303 = vmatmul.bf16.gmra.mxu0 %v4893
  %v7304 = vpop.f32.mrf.mxu0
  %v7305 = vadd.f32 %v6016, %v7304
  %v7306 = vpop.f32.mrf.mxu0
  %v7307 = vadd.f32 %v6018, %v7306
  %7308 = vmatmul.bf16.gmra.mxu0 %v4895
  %v7309 = vpop.f32.mrf.mxu0
  %v7310 = vadd.f32 %v6021, %v7309
  %v7311 = vpop.f32.mrf.mxu0
  %v7312 = vadd.f32 %v6023, %v7311
  %7313 = vmatmul.bf16.gmra.mxu0 %v4897
  %v7314 = vpop.f32.mrf.mxu0
  %v7315 = vadd.f32 %v6026, %v7314
  %v7316 = vpop.f32.mrf.mxu0
  %v7317 = vadd.f32 %v6028, %v7316
  %7318 = vmatmul.bf16.gmra.mxu0 %v4899
  %v7319 = vpop.f32.mrf.mxu0
  %v7320 = vadd.f32 %v6031, %v7319
  %v7321 = vpop.f32.mrf.mxu0
  %v7322 = vadd.f32 %v6033, %v7321
  %7323 = vmatmul.bf16.gmra.mxu0 %v4901
  %v7324 = vpop.f32.mrf.mxu0
  %v7325 = vadd.f32 %v6036, %v7324
  %v7326 = vpop.f32.mrf.mxu0
  %v7327 = vadd.f32 %v6038, %v7326
  %7328 = vmatmul.bf16.gmra.mxu0 %v4903
  %v7329 = vpop.f32.mrf.mxu0
  %v7330 = vadd.f32 %v6041, %v7329
  %v7331 = vpop.f32.mrf.mxu0
  %v7332 = vadd.f32 %v6043, %v7331
  %7333 = vmatmul.bf16.gmra.mxu0 %v4905
  %v7334 = vpop.f32.mrf.mxu0
  %v7335 = vadd.f32 %v6046, %v7334
  %v7336 = vpop.f32.mrf.mxu0
  %v7337 = vadd.f32 %v6048, %v7336
  %7338 = vmatmul.bf16.gmra.mxu0 %v4907
  %v7339 = vpop.f32.mrf.mxu0
  %v7340 = vadd.f32 %v6051, %v7339
  %v7341 = vpop.f32.mrf.mxu0
  %v7342 = vadd.f32 %v6053, %v7341
  %7343 = vmatmul.bf16.gmra.mxu0 %v4909
  %v7344 = vpop.f32.mrf.mxu0
  %v7345 = vadd.f32 %v6056, %v7344
  %v7346 = vpop.f32.mrf.mxu0
  %v7347 = vadd.f32 %v6058, %v7346
  %7348 = vmatmul.bf16.gmra.mxu0 %v4911
  %v7349 = vpop.f32.mrf.mxu0
  %v7350 = vadd.f32 %v6061, %v7349
  %v7351 = vpop.f32.mrf.mxu0
  %v7352 = vadd.f32 %v6063, %v7351
  %7353 = vmatmul.bf16.gmra.mxu0 %v4913
  %v7354 = vpop.f32.mrf.mxu0
  %v7355 = vadd.f32 %v6066, %v7354
  %v7356 = vpop.f32.mrf.mxu0
  %v7357 = vadd.f32 %v6068, %v7356
  %7358 = vmatmul.bf16.gmra.mxu0 %v4915
  %v7359 = vpop.f32.mrf.mxu0
  %v7360 = vadd.f32 %v6071, %v7359
  %v7361 = vpop.f32.mrf.mxu0
  %v7362 = vadd.f32 %v6073, %v7361
  %7363 = vmatmul.bf16.gmra.mxu0 %v4917
  %v7364 = vpop.f32.mrf.mxu0
  %v7365 = vadd.f32 %v6076, %v7364
  %v7366 = vpop.f32.mrf.mxu0
  %v7367 = vadd.f32 %v6078, %v7366
  %7368 = vmatmul.bf16.gmra.mxu0 %v4919
  %v7369 = vpop.f32.mrf.mxu0
  %v7370 = vadd.f32 %v6081, %v7369
  %v7371 = vpop.f32.mrf.mxu0
  %v7372 = vadd.f32 %v6083, %v7371
  %7373 = vmatmul.bf16.gmra.mxu0 %v4921
  %v7374 = vpop.f32.mrf.mxu0
  %v7375 = vadd.f32 %v6086, %v7374
  %v7376 = vpop.f32.mrf.mxu0
  %v7377 = vadd.f32 %v6088, %v7376
  %7378 = vmatmul.bf16.gmra.mxu0 %v4923
  %v7379 = vpop.f32.mrf.mxu0
  %v7380 = vadd.f32 %v6091, %v7379
  %v7381 = vpop.f32.mrf.mxu0
  %v7382 = vadd.f32 %v6093, %v7381
  %7383 = vmatmul.bf16.gmra.mxu0 %v4925
  %v7384 = vpop.f32.mrf.mxu0
  %v7385 = vadd.f32 %v6096, %v7384
  %v7386 = vpop.f32.mrf.mxu0
  %v7387 = vadd.f32 %v6098, %v7386
  %7388 = vmatmul.bf16.gmra.mxu0 %v4927
  %v7389 = vpop.f32.mrf.mxu0
  %v7390 = vadd.f32 %v6101, %v7389
  %v7391 = vpop.f32.mrf.mxu0
  %v7392 = vadd.f32 %v6103, %v7391
  %7393 = vmatmul.bf16.gmra.mxu0 %v4929
  %v7394 = vpop.f32.mrf.mxu0
  %v7395 = vadd.f32 %v6106, %v7394
  %v7396 = vpop.f32.mrf.mxu0
  %v7397 = vadd.f32 %v6108, %v7396
  %7398 = vmatmul.bf16.gmra.mxu0 %v4931
  %v7399 = vpop.f32.mrf.mxu0
  %v7400 = vadd.f32 %v6111, %v7399
  %v7401 = vpop.f32.mrf.mxu0
  %v7402 = vadd.f32 %v6113, %v7401
  %7403 = vmatmul.bf16.gmra.mxu0 %v4933
  %v7404 = vpop.f32.mrf.mxu0
  %v7405 = vadd.f32 %v6116, %v7404
  %v7406 = vpop.f32.mrf.mxu0
  %v7407 = vadd.f32 %v6118, %v7406
  %7408 = vmatmul.bf16.gmra.mxu0 %v4935
  %v7409 = vpop.f32.mrf.mxu0
  %v7410 = vadd.f32 %v6121, %v7409
  %v7411 = vpop.f32.mrf.mxu0
  %v7412 = vadd.f32 %v6123, %v7411
  %7413 = vmatmul.bf16.gmra.mxu0 %v4937
  %v7414 = vpop.f32.mrf.mxu0
  %v7415 = vadd.f32 %v6126, %v7414
  %v7416 = vpop.f32.mrf.mxu0
  %v7417 = vadd.f32 %v6128, %v7416
  %7418 = vmatmul.bf16.gmra.mxu0 %v4939
  %v7419 = vpop.f32.mrf.mxu0
  %v7420 = vadd.f32 %v6131, %v7419
  %v7421 = vpop.f32.mrf.mxu0
  %v7422 = vadd.f32 %v6133, %v7421
  %7423 = vmatmul.bf16.gmra.mxu0 %v4941
  %v7424 = vpop.f32.mrf.mxu0
  %v7425 = vadd.f32 %v6136, %v7424
  %v7426 = vpop.f32.mrf.mxu0
  %v7427 = vadd.f32 %v6138, %v7426
  %7428 = vmatmul.bf16.gmra.mxu0 %v4943
  %v7429 = vpop.f32.mrf.mxu0
  %v7430 = vadd.f32 %v6141, %v7429
  %v7431 = vpop.f32.mrf.mxu0
  %v7432 = vadd.f32 %v6143, %v7431
  %7433 = vmatmul.bf16.gmra.mxu0 %v4945
  %v7434 = vpop.f32.mrf.mxu0
  %v7435 = vadd.f32 %v6146, %v7434
  %v7436 = vpop.f32.mrf.mxu0
  %v7437 = vadd.f32 %v6148, %v7436
  %7438 = vmatmul.bf16.gmra.mxu0 %v4947
  %v7439 = vpop.f32.mrf.mxu0
  %v7440 = vadd.f32 %v6151, %v7439
  %v7441 = vpop.f32.mrf.mxu0
  %v7442 = vadd.f32 %v6153, %v7441
  %7443 = vmatmul.bf16.gmra.mxu0 %v4949
  %v7444 = vpop.f32.mrf.mxu0
  %v7445 = vadd.f32 %v6156, %v7444
  %v7446 = vpop.f32.mrf.mxu0
  %v7447 = vadd.f32 %v6158, %v7446
  %7448 = vmatmul.bf16.gmra.mxu0 %v4951
  %v7449 = vpop.f32.mrf.mxu0
  %v7450 = vadd.f32 %v6161, %v7449
  %v7451 = vpop.f32.mrf.mxu0
  %v7452 = vadd.f32 %v6163, %v7451
  %7453 = vmatmul.bf16.gmra.mxu0 %v4953
  %v7454 = vpop.f32.mrf.mxu0
  %v7455 = vadd.f32 %v6166, %v7454
  %v7456 = vpop.f32.mrf.mxu0
  %v7457 = vadd.f32 %v6168, %v7456
  %7458 = vmatmul.bf16.gmra.mxu0 %v4955
  %v7459 = vpop.f32.mrf.mxu0
  %v7460 = vadd.f32 %v6171, %v7459
  %v7461 = vpop.f32.mrf.mxu0
  %v7462 = vadd.f32 %v6173, %v7461
  %7463 = vmatmul.bf16.gmra.mxu0 %v4957
  %v7464 = vpop.f32.mrf.mxu0
  %v7465 = vadd.f32 %v6176, %v7464
  %v7466 = vpop.f32.mrf.mxu0
  %v7467 = vadd.f32 %v6178, %v7466
  %7468 = vmatmul.bf16.gmra.mxu0 %v4959
  %v7469 = vpop.f32.mrf.mxu0
  %v7470 = vadd.f32 %v6181, %v7469
  %v7471 = vpop.f32.mrf.mxu0
  %v7472 = vadd.f32 %v6183, %v7471
  %7473 = vmatmul.bf16.gmra.mxu0 %v4961
  %v7474 = vpop.f32.mrf.mxu0
  %v7475 = vadd.f32 %v6186, %v7474
  %v7476 = vpop.f32.mrf.mxu0
  %v7477 = vadd.f32 %v6188, %v7476
  %7478 = vmatmul.bf16.gmra.mxu0 %v4963
  %v7479 = vpop.f32.mrf.mxu0
  %v7480 = vadd.f32 %v6191, %v7479
  %v7481 = vpop.f32.mrf.mxu0
  %v7482 = vadd.f32 %v6193, %v7481
  %7483 = vmatmul.bf16.gmra.mxu0 %v4965
  %v7484 = vpop.f32.mrf.mxu0
  %v7485 = vadd.f32 %v6196, %v7484
  %v7486 = vpop.f32.mrf.mxu0
  %v7487 = vadd.f32 %v6198, %v7486
  %7488 = vmatmul.bf16.gmra.mxu0 %v4967
  %v7489 = vpop.f32.mrf.mxu0
  %v7490 = vadd.f32 %v6201, %v7489
  %v7491 = vpop.f32.mrf.mxu0
  %v7492 = vadd.f32 %v6203, %v7491
  %7493 = vmatmul.bf16.gmra.mxu0 %v4969
  %v7494 = vpop.f32.mrf.mxu0
  %v7495 = vadd.f32 %v6206, %v7494
  %v7496 = vpop.f32.mrf.mxu0
  %v7497 = vadd.f32 %v6208, %v7496
  %7498 = vmatmul.bf16.gmra.mxu0 %v4971
  %v7499 = vpop.f32.mrf.mxu0
  %v7500 = vadd.f32 %v6211, %v7499
  %v7501 = vpop.f32.mrf.mxu0
  %v7502 = vadd.f32 %v6213, %v7501
  %7503 = vmatmul.bf16.gmra.mxu0 %v4973
  %v7504 = vpop.f32.mrf.mxu0
  %v7505 = vadd.f32 %v6216, %v7504
  %v7506 = vpop.f32.mrf.mxu0
  %v7507 = vadd.f32 %v6218, %v7506
  %7508 = vmatmul.bf16.gmra.mxu0 %v4975
  %v7509 = vpop.f32.mrf.mxu0
  %v7510 = vadd.f32 %v6221, %v7509
  %v7511 = vpop.f32.mrf.mxu0
  %v7512 = vadd.f32 %v6223, %v7511
  %7513 = vmatmul.bf16.gmra.mxu0 %v4977
  %v7514 = vpop.f32.mrf.mxu0
  %v7515 = vadd.f32 %v6226, %v7514
  %v7516 = vpop.f32.mrf.mxu0
  %v7517 = vadd.f32 %v6228, %v7516
  %7518 = vmatmul.bf16.gmra.mxu0 %v4979
  %v7519 = vpop.f32.mrf.mxu0
  %v7520 = vadd.f32 %v6231, %v7519
  %v7521 = vpop.f32.mrf.mxu0
  %v7522 = vadd.f32 %v6233, %v7521
  %7523 = vmatmul.bf16.gmra.mxu0 %v4981
  %v7524 = vpop.f32.mrf.mxu0
  %v7525 = vadd.f32 %v6236, %v7524
  %v7526 = vpop.f32.mrf.mxu0
  %v7527 = vadd.f32 %v6238, %v7526
  %7528 = vmatmul.bf16.gmra.mxu0 %v4983
  %v7529 = vpop.f32.mrf.mxu0
  %v7530 = vadd.f32 %v6241, %v7529
  %v7531 = vpop.f32.mrf.mxu0
  %v7532 = vadd.f32 %v6243, %v7531
  %7533 = vmatmul.bf16.gmra.mxu0 %v4985
  %v7534 = vpop.f32.mrf.mxu0
  %v7535 = vadd.f32 %v6246, %v7534
  %v7536 = vpop.f32.mrf.mxu0
  %v7537 = vadd.f32 %v6248, %v7536
  %7538 = vmatmul.bf16.gmra.mxu0 %v4987
  %v7539 = vpop.f32.mrf.mxu0
  %v7540 = vadd.f32 %v6251, %v7539
  %v7541 = vpop.f32.mrf.mxu0
  %v7542 = vadd.f32 %v6253, %v7541
  %7543 = vmatmul.bf16.gmra.mxu0 %v4989
  %v7544 = vpop.f32.mrf.mxu0
  %v7545 = vadd.f32 %v6256, %v7544
  %v7546 = vpop.f32.mrf.mxu0
  %v7547 = vadd.f32 %v6258, %v7546
  %7548 = vmatmul.bf16.gmra.mxu0 %v4991
  %v7549 = vpop.f32.mrf.mxu0
  %v7550 = vadd.f32 %v6261, %v7549
  %v7551 = vpop.f32.mrf.mxu0
  %v7552 = vadd.f32 %v6263, %v7551
  %7553 = vmatmul.bf16.gmra.mxu0 %v4993
  %v7554 = vpop.f32.mrf.mxu0
  %v7555 = vadd.f32 %v6266, %v7554
  %v7556 = vpop.f32.mrf.mxu0
  %v7557 = vadd.f32 %v6268, %v7556
  %7558 = vmatmul.bf16.gmra.mxu0 %v4995
  %v7559 = vpop.f32.mrf.mxu0
  %v7560 = vadd.f32 %v6271, %v7559
  %v7561 = vpop.f32.mrf.mxu0
  %v7562 = vadd.f32 %v6273, %v7561
  %7563 = vmatmul.bf16.gmra.mxu0 %v4997
  %v7564 = vpop.f32.mrf.mxu0
  %v7565 = vadd.f32 %v6276, %v7564
  %v7566 = vpop.f32.mrf.mxu0
  %v7567 = vadd.f32 %v6278, %v7566
  %7568 = vmatmul.bf16.gmra.mxu0 %v4999
  %v7569 = vpop.f32.mrf.mxu0
  %v7570 = vadd.f32 %v6281, %v7569
  %v7571 = vpop.f32.mrf.mxu0
  %v7572 = vadd.f32 %v6283, %v7571
  %7573 = vmatmul.bf16.gmra.mxu0 %v5001
  %v7574 = vpop.f32.mrf.mxu0
  %v7575 = vadd.f32 %v6286, %v7574
  %v7576 = vpop.f32.mrf.mxu0
  %v7577 = vadd.f32 %v6288, %v7576
  %7578 = vmatmul.bf16.gmra.mxu0 %v5003
  %v7579 = vpop.f32.mrf.mxu0
  %v7580 = vadd.f32 %v6291, %v7579
  %v7581 = vpop.f32.mrf.mxu0
  %v7582 = vadd.f32 %v6293, %v7581
  %7583 = vmatmul.bf16.gmra.mxu0 %v5005
  %v7584 = vpop.f32.mrf.mxu0
  %v7585 = vadd.f32 %v6296, %v7584
  %v7586 = vpop.f32.mrf.mxu0
  %v7587 = vadd.f32 %v6298, %v7586
  %7588 = vmatmul.bf16.gmra.mxu0 %v5007
  %v7589 = vpop.f32.mrf.mxu0
  %v7590 = vadd.f32 %v6301, %v7589
  %v7591 = vpop.f32.mrf.mxu0
  %v7592 = vadd.f32 %v6303, %v7591
  %7593 = vmatmul.bf16.gmra.mxu0 %v5009
  %v7594 = vpop.f32.mrf.mxu0
  %v7595 = vadd.f32 %v6306, %v7594
  %v7596 = vpop.f32.mrf.mxu0
  %v7597 = vadd.f32 %v6308, %v7596
  %7598 = vmatmul.bf16.gmra.mxu0 %v5011
  %v7599 = vpop.f32.mrf.mxu0
  %v7600 = vadd.f32 %v6311, %v7599
  %v7601 = vpop.f32.mrf.mxu0
  %v7602 = vadd.f32 %v6313, %v7601
  %7603 = vmatmul.bf16.gmra.mxu0 %v5013
  %v7604 = vpop.f32.mrf.mxu0
  %v7605 = vadd.f32 %v6316, %v7604
  %v7606 = vpop.f32.mrf.mxu0
  %v7607 = vadd.f32 %v6318, %v7606
  %7608 = vmatmul.bf16.gmra.mxu0 %v5015
  %v7609 = vpop.f32.mrf.mxu0
  %v7610 = vadd.f32 %v6321, %v7609
  %v7611 = vpop.f32.mrf.mxu0
  %v7612 = vadd.f32 %v6323, %v7611
  %7613 = vmatmul.bf16.gmra.mxu0 %v5017
  %v7614 = vpop.f32.mrf.mxu0
  %v7615 = vadd.f32 %v6326, %v7614
  %v7616 = vpop.f32.mrf.mxu0
  %v7617 = vadd.f32 %v6328, %v7616
  %7618 = vmatmul.bf16.gmra.mxu0 %v5019
  %v7619 = vpop.f32.mrf.mxu0
  %v7620 = vadd.f32 %v6331, %v7619
  %v7621 = vpop.f32.mrf.mxu0
  %v7622 = vadd.f32 %v6333, %v7621
  %7623 = vmatmul.bf16.gmra.mxu0 %v5021
  %v7624 = vpop.f32.mrf.mxu0
  %v7625 = vadd.f32 %v6336, %v7624
  %v7626 = vpop.f32.mrf.mxu0
  %v7627 = vadd.f32 %v6338, %v7626
  %7628 = vmatmul.bf16.gmra.mxu0 %v5023
  %v7629 = vpop.f32.mrf.mxu0
  %v7630 = vadd.f32 %v6341, %v7629
  %v7631 = vpop.f32.mrf.mxu0
  %v7632 = vadd.f32 %v6343, %v7631
  %7633 = vmatmul.bf16.gmra.mxu0 %v5025
  %v7634 = vpop.f32.mrf.mxu0
  %v7635 = vadd.f32 %v6346, %v7634
  %v7636 = vpop.f32.mrf.mxu0
  %v7637 = vadd.f32 %v6348, %v7636
  %7638 = vmatmul.bf16.gmra.mxu0 %v5027
  %v7639 = vpop.f32.mrf.mxu0
  %v7640 = vadd.f32 %v6351, %v7639
  %v7641 = vpop.f32.mrf.mxu0
  %v7642 = vadd.f32 %v6353, %v7641
  %7643 = vmatmul.bf16.gmra.mxu0 %v5029
  %v7644 = vpop.f32.mrf.mxu0
  %v7645 = vadd.f32 %v6356, %v7644
  %v7646 = vpop.f32.mrf.mxu0
  %v7647 = vadd.f32 %v6358, %v7646
  %7648 = vmatmul.bf16.gmra.mxu0 %v5031
  %v7649 = vpop.f32.mrf.mxu0
  %v7650 = vadd.f32 %v6361, %v7649
  %v7651 = vpop.f32.mrf.mxu0
  %v7652 = vadd.f32 %v6363, %v7651
  %7653 = vmatmul.bf16.gmra.mxu0 %v5033
  %v7654 = vpop.f32.mrf.mxu0
  %v7655 = vadd.f32 %v6366, %v7654
  %v7656 = vpop.f32.mrf.mxu0
  %v7657 = vadd.f32 %v6368, %v7656
  %7658 = vmatmul.bf16.gmra.mxu0 %v5035
  %v7659 = vpop.f32.mrf.mxu0
  %v7660 = vadd.f32 %v6371, %v7659
  %v7661 = vpop.f32.mrf.mxu0
  %v7662 = vadd.f32 %v6373, %v7661
  %7663 = vmatmul.bf16.gmra.mxu0 %v5037
  %v7664 = vpop.f32.mrf.mxu0
  %v7665 = vadd.f32 %v6376, %v7664
  %v7666 = vpop.f32.mrf.mxu0
  %v7667 = vadd.f32 %v6378, %v7666
  %7668 = vmatmul.bf16.gmra.mxu0 %v5039
  %v7669 = vpop.f32.mrf.mxu0
  %v7670 = vadd.f32 %v6381, %v7669
  %v7671 = vpop.f32.mrf.mxu0
  %v7672 = vadd.f32 %v6383, %v7671
  %7673 = vmatmul.bf16.gmra.mxu0 %v5041
  %v7674 = vpop.f32.mrf.mxu0
  %v7675 = vadd.f32 %v6386, %v7674
  %v7676 = vpop.f32.mrf.mxu0
  %v7677 = vadd.f32 %v6388, %v7676
  %7678 = vmatmul.bf16.gmra.mxu0 %v5043
  %v7679 = vpop.f32.mrf.mxu0
  %v7680 = vadd.f32 %v6391, %v7679
  %v7681 = vpop.f32.mrf.mxu0
  %v7682 = vadd.f32 %v6393, %v7681
  %7683 = vmatmul.bf16.gmra.mxu0 %v5045
  %v7684 = vpop.f32.mrf.mxu0
  %v7685 = vadd.f32 %v6396, %v7684
  %v7686 = vpop.f32.mrf.mxu0
  %v7687 = vadd.f32 %v6398, %v7686
  %7688 = vmatmul.bf16.gmra.mxu0 %v5047
  %v7689 = vpop.f32.mrf.mxu0
  %v7690 = vadd.f32 %v6401, %v7689
  %v7691 = vpop.f32.mrf.mxu0
  %v7692 = vadd.f32 %v6403, %v7691
  %7693 = vmatmul.bf16.gmra.mxu0 %v5049
  %v7694 = vpop.f32.mrf.mxu0
  %v7695 = vadd.f32 %v6406, %v7694
  %v7696 = vpop.f32.mrf.mxu0
  %v7697 = vadd.f32 %v6408, %v7696
  %7698 = vmatmul.bf16.gmra.mxu0 %v5051
  %v7699 = vpop.f32.mrf.mxu0
  %v7700 = vadd.f32 %v6411, %v7699
  %v7701 = vpop.f32.mrf.mxu0
  %v7702 = vadd.f32 %v6413, %v7701
  %7703 = vmatmul.bf16.gmra.mxu0 %v5053
  %v7704 = vpop.f32.mrf.mxu0
  %v7705 = vadd.f32 %v6416, %v7704
  %v7706 = vpop.f32.mrf.mxu0
  %v7707 = vadd.f32 %v6418, %v7706
  %7708 = vmatmul.bf16.gmra.mxu0 %v5055
  %v7709 = vpop.f32.mrf.mxu0
  %v7710 = vadd.f32 %v6421, %v7709
  %v7711 = vpop.f32.mrf.mxu0
  %v7712 = vadd.f32 %v6423, %v7711
  %7713 = vmatmul.bf16.gmra.mxu0 %v5057
  %v7714 = vpop.f32.mrf.mxu0
  %v7715 = vadd.f32 %v6426, %v7714
  %v7716 = vpop.f32.mrf.mxu0
  %v7717 = vadd.f32 %v6428, %v7716
  %7718 = vmatmul.bf16.gmra.mxu0 %v5059
  %v7719 = vpop.f32.mrf.mxu0
  %v7720 = vadd.f32 %v6431, %v7719
  %v7721 = vpop.f32.mrf.mxu0
  %v7722 = vadd.f32 %v6433, %v7721
  %7723 = vmatmul.bf16.gmra.mxu0 %v5061
  %v7724 = vpop.f32.mrf.mxu0
  %v7725 = vadd.f32 %v6436, %v7724
  %v7726 = vpop.f32.mrf.mxu0
  %v7727 = vadd.f32 %v6438, %v7726
  %7728 = vmatmul.bf16.gmra.mxu0 %v5063
  %v7729 = vpop.f32.mrf.mxu0
  %v7730 = vadd.f32 %v6441, %v7729
  %v7731 = vpop.f32.mrf.mxu0
  %v7732 = vadd.f32 %v6443, %v7731
  %7733 = vmatmul.bf16.gmra.mxu0 %v5065
  %v7734 = vpop.f32.mrf.mxu0
  %v7735 = vadd.f32 %v6446, %v7734
  %v7736 = vpop.f32.mrf.mxu0
  %v7737 = vadd.f32 %v6448, %v7736
  %7738 = vmatmul.bf16.gmra.mxu0 %v5067
  %v7739 = vpop.f32.mrf.mxu0
  %v7740 = vadd.f32 %v6451, %v7739
  %v7741 = vpop.f32.mrf.mxu0
  %v7742 = vadd.f32 %v6453, %v7741
  %7743 = vmatmul.bf16.gmra.mxu0 %v5069
  %v7744 = vpop.f32.mrf.mxu0
  %v7745 = vadd.f32 %v6456, %v7744
  %v7746 = vpop.f32.mrf.mxu0
  %v7747 = vadd.f32 %v6458, %v7746
  %7748 = vmatmul.bf16.gmra.mxu0 %v5071
  %v7749 = vpop.f32.mrf.mxu0
  %v7750 = vadd.f32 %v6461, %v7749
  %v7751 = vpop.f32.mrf.mxu0
  %v7752 = vadd.f32 %v6463, %v7751
  %7753 = vmatmul.bf16.gmra.mxu0 %v5073
  %v7754 = vpop.f32.mrf.mxu0
  %v7755 = vadd.f32 %v6466, %v7754
  %v7756 = vpop.f32.mrf.mxu0
  %v7757 = vadd.f32 %v6468, %v7756
  %7758 = vmatmul.bf16.gmra.mxu0 %v5075
  %v7759 = vpop.f32.mrf.mxu0
  %v7760 = vadd.f32 %v6471, %v7759
  %v7761 = vpop.f32.mrf.mxu0
  %v7762 = vadd.f32 %v6473, %v7761
  %7763 = vmatmul.bf16.gmra.mxu0 %v5077
  %v7764 = vpop.f32.mrf.mxu0
  %v7765 = vadd.f32 %v6476, %v7764
  %v7766 = vpop.f32.mrf.mxu0
  %v7767 = vadd.f32 %v6478, %v7766
  %7768 = vmatmul.bf16.gmra.mxu0 %v5079
  %v7769 = vpop.f32.mrf.mxu0
  %v7770 = vadd.f32 %v6481, %v7769
  %v7771 = vpop.f32.mrf.mxu0
  %v7772 = vadd.f32 %v6483, %v7771
  %7773 = vmatmul.bf16.gmra.mxu0 %v5081
  %v7774 = vpop.f32.mrf.mxu0
  %v7775 = vadd.f32 %v6486, %v7774
  %v7776 = vpop.f32.mrf.mxu0
  %v7777 = vadd.f32 %v6488, %v7776
  %7778 = vmatmul.bf16.gmra.mxu0 %v5083
  %v7779 = vpop.f32.mrf.mxu0
  %v7780 = vadd.f32 %v6491, %v7779
  %v7781 = vpop.f32.mrf.mxu0
  %v7782 = vadd.f32 %v6493, %v7781
  %7783 = vmatmul.bf16.gmra.mxu0 %v5085
  %v7784 = vpop.f32.mrf.mxu0
  %v7785 = vadd.f32 %v6496, %v7784
  %v7786 = vpop.f32.mrf.mxu0
  %v7787 = vadd.f32 %v6498, %v7786
  %7788 = vmatmul.bf16.gmra.mxu0 %v5087
  %v7789 = vpop.f32.mrf.mxu0
  %v7790 = vadd.f32 %v6501, %v7789
  %v7791 = vpop.f32.mrf.mxu0
  %v7792 = vadd.f32 %v6503, %v7791
  %7793 = vmatmul.bf16.gmra.mxu0 %v5089
  %v7794 = vpop.f32.mrf.mxu0
  %v7795 = vadd.f32 %v6506, %v7794
  %v7796 = vpop.f32.mrf.mxu0
  %v7797 = vadd.f32 %v6508, %v7796
  %7798 = vmatmul.bf16.gmra.mxu0 %v5091
  %v7799 = vpop.f32.mrf.mxu0
  %v7800 = vadd.f32 %v6511, %v7799
  %v7801 = vpop.f32.mrf.mxu0
  %v7802 = vadd.f32 %v6513, %v7801
  %7803 = vmatmul.bf16.gmra.mxu0 %v5093
  %v7804 = vpop.f32.mrf.mxu0
  %v7805 = vadd.f32 %v6516, %v7804
  %v7806 = vpop.f32.mrf.mxu0
  %v7807 = vadd.f32 %v6518, %v7806
  %7808 = vmatmul.bf16.gmra.mxu0 %v5095
  %v7809 = vpop.f32.mrf.mxu0
  %v7810 = vadd.f32 %v6521, %v7809
  %v7811 = vpop.f32.mrf.mxu0
  %v7812 = vadd.f32 %v6523, %v7811
  %7813 = vmatmul.bf16.gmra.mxu0 %v5097
  %v7814 = vpop.f32.mrf.mxu0
  %v7815 = vadd.f32 %v6526, %v7814
  %v7816 = vpop.f32.mrf.mxu0
  %v7817 = vadd.f32 %v6528, %v7816
  %7818 = vmatmul.bf16.gmra.mxu0 %v5099
  %v7819 = vpop.f32.mrf.mxu0
  %v7820 = vadd.f32 %v6531, %v7819
  %v7821 = vpop.f32.mrf.mxu0
  %v7822 = vadd.f32 %v6533, %v7821
  %7823 = vmatmul.bf16.gmra.mxu0 %v5101
  %v7824 = vpop.f32.mrf.mxu0
  %v7825 = vadd.f32 %v6536, %v7824
  %v7826 = vpop.f32.mrf.mxu0
  %v7827 = vadd.f32 %v6538, %v7826
  %7828 = vmatmul.bf16.gmra.mxu0 %v5103
  %v7829 = vpop.f32.mrf.mxu0
  %v7830 = vadd.f32 %v6541, %v7829
  %v7831 = vpop.f32.mrf.mxu0
  %v7832 = vadd.f32 %v6543, %v7831
  %7833 = vmatmul.bf16.gmra.mxu0 %v5105
  %v7834 = vpop.f32.mrf.mxu0
  %v7835 = vadd.f32 %v6546, %v7834
  %v7836 = vpop.f32.mrf.mxu0
  %v7837 = vadd.f32 %v6548, %v7836
  %7838 = vmatmul.bf16.gmra.mxu0 %v5107
  %v7839 = vpop.f32.mrf.mxu0
  %v7840 = vadd.f32 %v6551, %v7839
  %v7841 = vpop.f32.mrf.mxu0
  %v7842 = vadd.f32 %v6553, %v7841
  %7843 = vmatmul.bf16.gmra.mxu0 %v5109
  %v7844 = vpop.f32.mrf.mxu0
  %v7845 = vadd.f32 %v6556, %v7844
  %v7846 = vpop.f32.mrf.mxu0
  %v7847 = vadd.f32 %v6558, %v7846
  %7848 = vmatmul.bf16.gmra.mxu0 %v5111
  %v7849 = vpop.f32.mrf.mxu0
  %v7850 = vadd.f32 %v6561, %v7849
  %v7851 = vpop.f32.mrf.mxu0
  %v7852 = vadd.f32 %v6563, %v7851
  %7853 = vmatmul.bf16.gmra.mxu0 %v5113
  %v7854 = vpop.f32.mrf.mxu0
  %v7855 = vadd.f32 %v6566, %v7854
  %v7856 = vpop.f32.mrf.mxu0
  %v7857 = vadd.f32 %v6568, %v7856
  %7858 = vmatmul.bf16.gmra.mxu0 %v5115
  %v7859 = vpop.f32.mrf.mxu0
  %v7860 = vadd.f32 %v6571, %v7859
  %v7861 = vpop.f32.mrf.mxu0
  %v7862 = vadd.f32 %v6573, %v7861
  %7863 = vmatmul.bf16.gmra.mxu0 %v5117
  %v7864 = vpop.f32.mrf.mxu0
  %v7865 = vadd.f32 %v6576, %v7864
  %v7866 = vpop.f32.mrf.mxu0
  %v7867 = vadd.f32 %v6578, %v7866
  %7868 = vmatmul.bf16.gmra.mxu0 %v5119
  %v7869 = vpop.f32.mrf.mxu0
  %v7870 = vadd.f32 %v6581, %v7869
  %v7871 = vpop.f32.mrf.mxu0
  %v7872 = vadd.f32 %v6583, %v7871
  %7873 = vmatmul.bf16.gmra.mxu0 %v5121
  %v7874 = vpop.f32.mrf.mxu0
  %v7875 = vadd.f32 %v6586, %v7874
  %v7876 = vpop.f32.mrf.mxu0
  %v7877 = vadd.f32 %v6588, %v7876
  %7878 = vmatmul.bf16.gmra.mxu0 %v5123
  %v7879 = vpop.f32.mrf.mxu0
  %v7880 = vadd.f32 %v6591, %v7879
  %v7881 = vpop.f32.mrf.mxu0
  %v7882 = vadd.f32 %v6593, %v7881
  %7883 = vmatmul.bf16.gmra.mxu0 %v5125
  %v7884 = vpop.f32.mrf.mxu0
  %v7885 = vadd.f32 %v6596, %v7884
  %v7886 = vpop.f32.mrf.mxu0
  %v7887 = vadd.f32 %v6598, %v7886
  %7888 = vmatmul.bf16.gmra.mxu0 %v5127
  %v7889 = vpop.f32.mrf.mxu0
  %v7890 = vadd.f32 %v6601, %v7889
  %v7891 = vpop.f32.mrf.mxu0
  %v7892 = vadd.f32 %v6603, %v7891
  %7893 = vmatmul.bf16.gmra.mxu0 %v5129
  %v7894 = vpop.f32.mrf.mxu0
  %v7895 = vadd.f32 %v6606, %v7894
  %v7896 = vpop.f32.mrf.mxu0
  %v7897 = vadd.f32 %v6608, %v7896
  %7898 = vmatmul.bf16.gmra.mxu0 %v5131
  %v7899 = vpop.f32.mrf.mxu0
  %v7900 = vadd.f32 %v6611, %v7899
  %v7901 = vpop.f32.mrf.mxu0
  %v7902 = vadd.f32 %v6613, %v7901
  %7903 = vmatmul.bf16.gmra.mxu0 %v5133
  %v7904 = vpop.f32.mrf.mxu0
  %v7905 = vadd.f32 %v6616, %v7904
  %v7906 = vpop.f32.mrf.mxu0
  %v7907 = vadd.f32 %v6618, %v7906
  %7908 = vmatmul.bf16.gmra.mxu0 %v5135
  %v7909 = vpop.f32.mrf.mxu0
  %v7910 = vadd.f32 %v6621, %v7909
  %v7911 = vpop.f32.mrf.mxu0
  %v7912 = vadd.f32 %v6623, %v7911
  %7913 = vmatmul.bf16.gmra.mxu0 %v5137
  %v7914 = vpop.f32.mrf.mxu0
  %v7915 = vadd.f32 %v6626, %v7914
  %v7916 = vpop.f32.mrf.mxu0
  %v7917 = vadd.f32 %v6628, %v7916
  %7918 = vmatmul.bf16.gmra.mxu0 %v5139
  %v7919 = vpop.f32.mrf.mxu0
  %v7920 = vadd.f32 %v6631, %v7919
  %v7921 = vpop.f32.mrf.mxu0
  %v7922 = vadd.f32 %v6633, %v7921
  %7923 = vmatmul.bf16.gmra.mxu0 %v5141
  %v7924 = vpop.f32.mrf.mxu0
  %v7925 = vadd.f32 %v6636, %v7924
  %v7926 = vpop.f32.mrf.mxu0
  %v7927 = vadd.f32 %v6638, %v7926
  %7928 = vmatmul.bf16.gmra.mxu0 %v5143
  %v7929 = vpop.f32.mrf.mxu0
  %v7930 = vadd.f32 %v6641, %v7929
  %v7931 = vpop.f32.mrf.mxu0
  %v7932 = vadd.f32 %v6643, %v7931
  %7933 = vmatmul.bf16.gmra.mxu0 %v5145
  %v7934 = vpop.f32.mrf.mxu0
  %v7935 = vadd.f32 %v6646, %v7934
  %v7936 = vpop.f32.mrf.mxu0
  %v7937 = vadd.f32 %v6648, %v7936
  %7938 = vmatmul.bf16.gmra.mxu0 %v5147
  %v7939 = vpop.f32.mrf.mxu0
  %v7940 = vadd.f32 %v6651, %v7939
  %v7941 = vpop.f32.mrf.mxu0
  %v7942 = vadd.f32 %v6653, %v7941
  %7943 = vmatmul.bf16.gmra.mxu0 %v5149
  %v7944 = vpop.f32.mrf.mxu0
  %v7945 = vadd.f32 %v6656, %v7944
  %v7946 = vpop.f32.mrf.mxu0
  %v7947 = vadd.f32 %v6658, %v7946
  %7948 = vmatmul.bf16.gmra.mxu0 %v5151
  %v7949 = vpop.f32.mrf.mxu0
  %v7950 = vadd.f32 %v6661, %v7949
  %v7951 = vpop.f32.mrf.mxu0
  %v7952 = vadd.f32 %v6663, %v7951
  %7953 = vmatmul.bf16.gmra.mxu0 %v5153
  %v7954 = vpop.f32.mrf.mxu0
  %v7955 = vadd.f32 %v6666, %v7954
  %v7956 = vpop.f32.mrf.mxu0
  %v7957 = vadd.f32 %v6668, %v7956
  %7958 = vmatmul.bf16.gmra.mxu0 %v5155
  %v7959 = vpop.f32.mrf.mxu0
  %v7960 = vadd.f32 %v6671, %v7959
  %v7961 = vpop.f32.mrf.mxu0
  %v7962 = vadd.f32 %v6673, %v7961
  %7963 = vmatmul.bf16.gmra.mxu0 %v5157
  %v7964 = vpop.f32.mrf.mxu0
  %v7965 = vadd.f32 %v6676, %v7964
  %v7966 = vpop.f32.mrf.mxu0
  %v7967 = vadd.f32 %v6678, %v7966
  %7968 = vmatmul.bf16.gmra.mxu0 %v5159
  %v7969 = vpop.f32.mrf.mxu0
  %v7970 = vadd.f32 %v6681, %v7969
  %v7971 = vpop.f32.mrf.mxu0
  %v7972 = vadd.f32 %v6683, %v7971
  %7973 = vmatmul.bf16.gmra.mxu0 %v5161
  %v7974 = vpop.f32.mrf.mxu0
  %v7975 = vadd.f32 %v6686, %v7974
  %v7976 = vpop.f32.mrf.mxu0
  %v7977 = vadd.f32 %v6688, %v7976
  %7978 = vmatmul.bf16.gmra.mxu0 %v5163
  %v7979 = vpop.f32.mrf.mxu0
  %v7980 = vadd.f32 %v6691, %v7979
  %v7981 = vpop.f32.mrf.mxu0
  %v7982 = vadd.f32 %v6693, %v7981
  %7983 = vmatmul.bf16.gmra.mxu0 %v5165
  %v7984 = vpop.f32.mrf.mxu0
  %v7985 = vadd.f32 %v6696, %v7984
  %v7986 = vpop.f32.mrf.mxu0
  %v7987 = vadd.f32 %v6698, %v7986
  %7988 = vmatmul.bf16.gmra.mxu0 %v5167
  %v7989 = vpop.f32.mrf.mxu0
  %v7990 = vadd.f32 %v6701, %v7989
  %v7991 = vpop.f32.mrf.mxu0
  %v7992 = vadd.f32 %v6703, %v7991
  %7993 = vmatmul.bf16.gmra.mxu0 %v5169
  %v7994 = vpop.f32.mrf.mxu0
  %v7995 = vadd.f32 %v6706, %v7994
  %v7996 = vpop.f32.mrf.mxu0
  %v7997 = vadd.f32 %v6708, %v7996
  %7998 = vmatmul.bf16.gmra.mxu0 %v5171
  %v7999 = vpop.f32.mrf.mxu0
  %v8000 = vadd.f32 %v6711, %v7999
  %v8001 = vpop.f32.mrf.mxu0
  %v8002 = vadd.f32 %v6713, %v8001
  %8003 = vmatmul.bf16.gmra.mxu0 %v5173
  %v8004 = vpop.f32.mrf.mxu0
  %v8005 = vadd.f32 %v6716, %v8004
  %v8006 = vpop.f32.mrf.mxu0
  %v8007 = vadd.f32 %v6718, %v8006
  %8008 = vmatmul.bf16.gmra.mxu0 %v5175
  %v8009 = vpop.f32.mrf.mxu0
  %v8010 = vadd.f32 %v6721, %v8009
  %v8011 = vpop.f32.mrf.mxu0
  %v8012 = vadd.f32 %v6723, %v8011
  %8013 = vmatmul.bf16.gmra.mxu0 %v5177
  %v8014 = vpop.f32.mrf.mxu0
  %v8015 = vadd.f32 %v6726, %v8014
  %v8016 = vpop.f32.mrf.mxu0
  %v8017 = vadd.f32 %v6728, %v8016
  %8018 = vmatmul.bf16.gmra.mxu0 %v5179
  %v8019 = vpop.f32.mrf.mxu0
  %v8020 = vadd.f32 %v6731, %v8019
  %v8021 = vpop.f32.mrf.mxu0
  %v8022 = vadd.f32 %v6733, %v8021
  %8023 = vmatmul.bf16.gmra.mxu0 %v5181
  %v8024 = vpop.f32.mrf.mxu0
  %v8025 = vadd.f32 %v6736, %v8024
  %v8026 = vpop.f32.mrf.mxu0
  %v8027 = vadd.f32 %v6738, %v8026
  %8028 = vmatmul.bf16.gmra.mxu0 %v5183
  %v8029 = vpop.f32.mrf.mxu0
  %v8030 = vadd.f32 %v6741, %v8029
  %v8031 = vpop.f32.mrf.mxu0
  %v8032 = vadd.f32 %v6743, %v8031
  %8033 = vmatmul.bf16.gmra.mxu0 %v5185
  %v8034 = vpop.f32.mrf.mxu0
  %v8035 = vadd.f32 %v6746, %v8034
  %v8036 = vpop.f32.mrf.mxu0
  %v8037 = vadd.f32 %v6748, %v8036
  %8038 = vmatmul.bf16.gmra.mxu0 %v5187
  %v8039 = vpop.f32.mrf.mxu0
  %v8040 = vadd.f32 %v6751, %v8039
  %v8041 = vpop.f32.mrf.mxu0
  %v8042 = vadd.f32 %v6753, %v8041
  %8043 = vmatmul.bf16.gmra.mxu0 %v5189
  %v8044 = vpop.f32.mrf.mxu0
  %v8045 = vadd.f32 %v6756, %v8044
  %v8046 = vpop.f32.mrf.mxu0
  %v8047 = vadd.f32 %v6758, %v8046
  %8048 = vmatmul.bf16.gmra.mxu0 %v5191
  %v8049 = vpop.f32.mrf.mxu0
  %v8050 = vadd.f32 %v6761, %v8049
  %v8051 = vpop.f32.mrf.mxu0
  %v8052 = vadd.f32 %v6763, %v8051
  %8053 = vmatmul.bf16.gmra.mxu0 %v5193
  %v8054 = vpop.f32.mrf.mxu0
  %v8055 = vadd.f32 %v6766, %v8054
  %v8056 = vpop.f32.mrf.mxu0
  %v8057 = vadd.f32 %v6768, %v8056
  %8058 = vmatmul.bf16.gmra.mxu0 %v5195
  %v8059 = vpop.f32.mrf.mxu0
  %v8060 = vadd.f32 %v6771, %v8059
  %v8061 = vpop.f32.mrf.mxu0
  %v8062 = vadd.f32 %v6773, %v8061
  %8063 = vmatmul.bf16.gmra.mxu0 %v5197
  %v8064 = vpop.f32.mrf.mxu0
  %v8065 = vadd.f32 %v6776, %v8064
  %v8066 = vpop.f32.mrf.mxu0
  %v8067 = vadd.f32 %v6778, %v8066
  %8068 = vmatmul.bf16.gmra.mxu0 %v5199
  %v8069 = vpop.f32.mrf.mxu0
  %v8070 = vadd.f32 %v6781, %v8069
  %v8071 = vpop.f32.mrf.mxu0
  %v8072 = vadd.f32 %v6783, %v8071
  %8073 = vmatmul.bf16.gmra.mxu0 %v5201
  %v8074 = vpop.f32.mrf.mxu0
  %v8075 = vadd.f32 %v6786, %v8074
  %v8076 = vpop.f32.mrf.mxu0
  %v8077 = vadd.f32 %v6788, %v8076
  %8078 = vmatmul.bf16.gmra.mxu0 %v5203
  %v8079 = vpop.f32.mrf.mxu0
  %v8080 = vadd.f32 %v6791, %v8079
  %v8081 = vpop.f32.mrf.mxu0
  %v8082 = vadd.f32 %v6793, %v8081
  %8083 = vmatmul.bf16.gmra.mxu0 %v5205
  %v8084 = vpop.f32.mrf.mxu0
  %v8085 = vadd.f32 %v6796, %v8084
  %v8086 = vpop.f32.mrf.mxu0
  %v8087 = vadd.f32 %v6798, %v8086
  %8088 = vmatmul.bf16.gmra.mxu0 %v5207
  %v8089 = vpop.f32.mrf.mxu0
  %v8090 = vadd.f32 %v6801, %v8089
  %v8091 = vpop.f32.mrf.mxu0
  %v8092 = vadd.f32 %v6803, %v8091
  %8093 = vmatmul.bf16.gmra.mxu0 %v5209
  %v8094 = vpop.f32.mrf.mxu0
  %v8095 = vadd.f32 %v6806, %v8094
  %v8096 = vpop.f32.mrf.mxu0
  %v8097 = vadd.f32 %v6808, %v8096
  %8098 = vmatmul.bf16.gmra.mxu0 %v5211
  %v8099 = vpop.f32.mrf.mxu0
  %v8100 = vadd.f32 %v6811, %v8099
  %v8101 = vpop.f32.mrf.mxu0
  %v8102 = vadd.f32 %v6813, %v8101
  %8103 = vmatmul.bf16.gmra.mxu0 %v5213
  %v8104 = vpop.f32.mrf.mxu0
  %v8105 = vadd.f32 %v6816, %v8104
  %v8106 = vpop.f32.mrf.mxu0
  %v8107 = vadd.f32 %v6818, %v8106
  %8108 = vmatmul.bf16.gmra.mxu0 %v5215
  %v8109 = vpop.f32.mrf.mxu0
  %v8110 = vadd.f32 %v6821, %v8109
  %v8111 = vpop.f32.mrf.mxu0
  %v8112 = vadd.f32 %v6823, %v8111
  %8113 = vmatmul.bf16.gmra.mxu0 %v5217
  %v8114 = vpop.f32.mrf.mxu0
  %v8115 = vadd.f32 %v6826, %v8114
  %v8116 = vpop.f32.mrf.mxu0
  %v8117 = vadd.f32 %v6828, %v8116
  %8118 = vmatmul.bf16.gmra.mxu0 %v5219
  %v8119 = vpop.f32.mrf.mxu0
  %v8120 = vadd.f32 %v6831, %v8119
  %v8121 = vpop.f32.mrf.mxu0
  %v8122 = vadd.f32 %v6833, %v8121
  %8123 = vmatmul.bf16.gmra.mxu0 %v5221
  %v8124 = vpop.f32.mrf.mxu0
  %v8125 = vadd.f32 %v6836, %v8124
  %v8126 = vpop.f32.mrf.mxu0
  %v8127 = vadd.f32 %v6838, %v8126
  %8128 = vmatmul.bf16.gmra.mxu0 %v5223
  %v8129 = vpop.f32.mrf.mxu0
  %v8130 = vadd.f32 %v6841, %v8129
  %v8131 = vpop.f32.mrf.mxu0
  %v8132 = vadd.f32 %v6843, %v8131
  %8133 = vmatmul.bf16.gmra.mxu0 %v5225
  %v8134 = vpop.f32.mrf.mxu0
  %v8135 = vadd.f32 %v6846, %v8134
  %v8136 = vpop.f32.mrf.mxu0
  %v8137 = vadd.f32 %v6848, %v8136
  %8138 = vmatmul.bf16.gmra.mxu0 %v5227
  %v8139 = vpop.f32.mrf.mxu0
  %v8140 = vadd.f32 %v6851, %v8139
  %v8141 = vpop.f32.mrf.mxu0
  %v8142 = vadd.f32 %v6853, %v8141
  %8143 = vmatmul.bf16.gmra.mxu0 %v5229
  %v8144 = vpop.f32.mrf.mxu0
  %v8145 = vadd.f32 %v6856, %v8144
  %v8146 = vpop.f32.mrf.mxu0
  %v8147 = vadd.f32 %v6858, %v8146
  %8148 = vmatmul.bf16.gmra.mxu0 %v5231
  %v8149 = vpop.f32.mrf.mxu0
  %v8150 = vadd.f32 %v6861, %v8149
  %v8151 = vpop.f32.mrf.mxu0
  %v8152 = vadd.f32 %v6863, %v8151
  %8153 = vmatmul.bf16.gmra.mxu0 %v5233
  %v8154 = vpop.f32.mrf.mxu0
  %v8155 = vadd.f32 %v6866, %v8154
  %v8156 = vpop.f32.mrf.mxu0
  %v8157 = vadd.f32 %v6868, %v8156
  %8158 = vmatmul.bf16.gmra.mxu0 %v5235
  %v8159 = vpop.f32.mrf.mxu0
  %v8160 = vadd.f32 %v6871, %v8159
  %v8161 = vpop.f32.mrf.mxu0
  %v8162 = vadd.f32 %v6873, %v8161
  %8163 = vmatmul.bf16.gmra.mxu0 %v5237
  %v8164 = vpop.f32.mrf.mxu0
  %v8165 = vadd.f32 %v6876, %v8164
  %v8166 = vpop.f32.mrf.mxu0
  %v8167 = vadd.f32 %v6878, %v8166
  %8168 = vmatmul.bf16.gmra.mxu0 %v5239
  %v8169 = vpop.f32.mrf.mxu0
  %v8170 = vadd.f32 %v6881, %v8169
  %v8171 = vpop.f32.mrf.mxu0
  %v8172 = vadd.f32 %v6883, %v8171
  %8173 = vmatmul.bf16.gmra.mxu0 %v5241
  %v8174 = vpop.f32.mrf.mxu0
  %v8175 = vadd.f32 %v6886, %v8174
  %v8176 = vpop.f32.mrf.mxu0
  %v8177 = vadd.f32 %v6888, %v8176
  %8178 = vmatmul.bf16.gmra.mxu0 %v5243
  %v8179 = vpop.f32.mrf.mxu0
  %v8180 = vadd.f32 %v6891, %v8179
  %v8181 = vpop.f32.mrf.mxu0
  %v8182 = vadd.f32 %v6893, %v8181
  %8183 = vmatmul.bf16.gmra.mxu0 %v5245
  %v8184 = vpop.f32.mrf.mxu0
  %v8185 = vadd.f32 %v6896, %v8184
  %v8186 = vpop.f32.mrf.mxu0
  %v8187 = vadd.f32 %v6898, %v8186
  %8188 = vmatmul.bf16.gmra.mxu0 %v5247
  %v8189 = vpop.f32.mrf.mxu0
  %v8190 = vadd.f32 %v6901, %v8189
  %v8191 = vpop.f32.mrf.mxu0
  %v8192 = vadd.f32 %v6903, %v8191
  %8193 = vmatmul.bf16.gmra.mxu0 %v5249
  %v8194 = vpop.f32.mrf.mxu0
  %v8195 = vadd.f32 %v6906, %v8194
  %v8196 = vpop.f32.mrf.mxu0
  %v8197 = vadd.f32 %v6908, %v8196
  %8198 = vmatmul.bf16.gmra.mxu0 %v5251
  %v8199 = vpop.f32.mrf.mxu0
  %v8200 = vadd.f32 %v6911, %v8199
  %v8201 = vpop.f32.mrf.mxu0
  %v8202 = vadd.f32 %v6913, %v8201
  %8203 = vmatmul.bf16.gmra.mxu0 %v5253
  %v8204 = vpop.f32.mrf.mxu0
  %v8205 = vadd.f32 %v6916, %v8204
  %v8206 = vpop.f32.mrf.mxu0
  %v8207 = vadd.f32 %v6918, %v8206
  %8208 = vmatmul.bf16.gmra.mxu0 %v5255
  %v8209 = vpop.f32.mrf.mxu0
  %v8210 = vadd.f32 %v6921, %v8209
  %v8211 = vpop.f32.mrf.mxu0
  %v8212 = vadd.f32 %v6923, %v8211
  %8213 = vmatmul.bf16.gmra.mxu0 %v5257
  %v8214 = vpop.f32.mrf.mxu0
  %v8215 = vadd.f32 %v6926, %v8214
  %v8216 = vpop.f32.mrf.mxu0
  %v8217 = vadd.f32 %v6928, %v8216
  %8218 = vmatmul.bf16.gmra.mxu0 %v5259
  %v8219 = vpop.f32.mrf.mxu0
  %v8220 = vadd.f32 %v6931, %v8219
  %v8221 = vpop.f32.mrf.mxu0
  %v8222 = vadd.f32 %v6933, %v8221
  %8223 = vmatmul.bf16.gmra.mxu0 %v5261
  %v8224 = vpop.f32.mrf.mxu0
  %v8225 = vadd.f32 %v6936, %v8224
  %v8226 = vpop.f32.mrf.mxu0
  %v8227 = vadd.f32 %v6938, %v8226
  %8228 = vmatmul.bf16.gmra.mxu0 %v5263
  %v8229 = vpop.f32.mrf.mxu0
  %v8230 = vadd.f32 %v6941, %v8229
  %v8231 = vpop.f32.mrf.mxu0
  %v8232 = vadd.f32 %v6943, %v8231
  %8233 = vmatmul.bf16.gmra.mxu0 %v5265
  %v8234 = vpop.f32.mrf.mxu0
  %v8235 = vadd.f32 %v6946, %v8234
  %v8236 = vpop.f32.mrf.mxu0
  %v8237 = vadd.f32 %v6948, %v8236
  %8238 = vmatmul.bf16.gmra.mxu0 %v5267
  %v8239 = vpop.f32.mrf.mxu0
  %v8240 = vadd.f32 %v6951, %v8239
  %v8241 = vpop.f32.mrf.mxu0
  %v8242 = vadd.f32 %v6953, %v8241
  %8243 = vmatmul.bf16.gmra.mxu0 %v5269
  %v8244 = vpop.f32.mrf.mxu0
  %v8245 = vadd.f32 %v6956, %v8244
  %v8246 = vpop.f32.mrf.mxu0
  %v8247 = vadd.f32 %v6958, %v8246
  %8248 = vmatmul.bf16.gmra.mxu0 %v5271
  %v8249 = vpop.f32.mrf.mxu0
  %v8250 = vadd.f32 %v6961, %v8249
  %v8251 = vpop.f32.mrf.mxu0
  %v8252 = vadd.f32 %v6963, %v8251
  %8253 = vmatmul.bf16.gmra.mxu0 %v5273
  %v8254 = vpop.f32.mrf.mxu0
  %v8255 = vadd.f32 %v6966, %v8254
  %v8256 = vpop.f32.mrf.mxu0
  %v8257 = vadd.f32 %v6968, %v8256
  %8258 = vmatmul.bf16.gmra.mxu0 %v5275
  %v8259 = vpop.f32.mrf.mxu0
  %v8260 = vadd.f32 %v6971, %v8259
  %v8261 = vpop.f32.mrf.mxu0
  %v8262 = vadd.f32 %v6973, %v8261
  %8263 = vmatmul.bf16.gmra.mxu0 %v5277
  %v8264 = vpop.f32.mrf.mxu0
  %v8265 = vadd.f32 %v6976, %v8264
  %v8266 = vpop.f32.mrf.mxu0
  %v8267 = vadd.f32 %v6978, %v8266
  %8268 = vmatmul.bf16.gmra.mxu0 %v5279
  %v8269 = vpop.f32.mrf.mxu0
  %v8270 = vadd.f32 %v6981, %v8269
  %v8271 = vpop.f32.mrf.mxu0
  %v8272 = vadd.f32 %v6983, %v8271
  %8273 = vmatmul.bf16.gmra.mxu0 %v5281
  %v8274 = vpop.f32.mrf.mxu0
  %v8275 = vadd.f32 %v6986, %v8274
  %v8276 = vpop.f32.mrf.mxu0
  %v8277 = vadd.f32 %v6988, %v8276
  %8278 = vmatmul.bf16.gmra.mxu0 %v5283
  %v8279 = vpop.f32.mrf.mxu0
  %v8280 = vadd.f32 %v6991, %v8279
  %v8281 = vpop.f32.mrf.mxu0
  %v8282 = vadd.f32 %v6993, %v8281
  %8283 = vmatmul.bf16.gmra.mxu0 %v5285
  %v8284 = vpop.f32.mrf.mxu0
  %v8285 = vadd.f32 %v6996, %v8284
  %v8286 = vpop.f32.mrf.mxu0
  %v8287 = vadd.f32 %v6998, %v8286
  %8288 = vmatmul.bf16.gmra.mxu0 %v5287
  %v8289 = vpop.f32.mrf.mxu0
  %v8290 = vadd.f32 %v7001, %v8289
  %v8291 = vpop.f32.mrf.mxu0
  %v8292 = vadd.f32 %v7003, %v8291
  %8293 = vmatmul.bf16.gmra.mxu0 %v5289
  %v8294 = vpop.f32.mrf.mxu0
  %v8295 = vadd.f32 %v7006, %v8294
  %v8296 = vpop.f32.mrf.mxu0
  %v8297 = vadd.f32 %v7008, %v8296
  %8298 = vmatmul.bf16.gmra.mxu0 %v5291
  %v8299 = vpop.f32.mrf.mxu0
  %v8300 = vadd.f32 %v7011, %v8299
  %v8301 = vpop.f32.mrf.mxu0
  %v8302 = vadd.f32 %v7013, %v8301
  %8303 = vmatmul.bf16.gmra.mxu0 %v5293
  %v8304 = vpop.f32.mrf.mxu0
  %v8305 = vadd.f32 %v7016, %v8304
  %v8306 = vpop.f32.mrf.mxu0
  %v8307 = vadd.f32 %v7018, %v8306
  %8308 = vmatmul.bf16.gmra.mxu0 %v5295
  %v8309 = vpop.f32.mrf.mxu0
  %v8310 = vadd.f32 %v7021, %v8309
  %v8311 = vpop.f32.mrf.mxu0
  %v8312 = vadd.f32 %v7023, %v8311
  %8313 = vmatmul.bf16.gmra.mxu0 %v5297
  %v8314 = vpop.f32.mrf.mxu0
  %v8315 = vadd.f32 %v7026, %v8314
  %v8316 = vpop.f32.mrf.mxu0
  %v8317 = vadd.f32 %v7028, %v8316
  %8318 = vmatmul.bf16.gmra.mxu0 %v5299
  %v8319 = vpop.f32.mrf.mxu0
  %v8320 = vadd.f32 %v7031, %v8319
  %v8321 = vpop.f32.mrf.mxu0
  %v8322 = vadd.f32 %v7033, %v8321
  %8323 = vmatmul.bf16.gmra.mxu0 %v5301
  %v8324 = vpop.f32.mrf.mxu0
  %v8325 = vadd.f32 %v7036, %v8324
  %v8326 = vpop.f32.mrf.mxu0
  %v8327 = vadd.f32 %v7038, %v8326
  %8328 = vmatmul.bf16.gmra.mxu0 %v5303
  %v8329 = vpop.f32.mrf.mxu0
  %v8330 = vadd.f32 %v7041, %v8329
  %v8331 = vpop.f32.mrf.mxu0
  %v8332 = vadd.f32 %v7043, %v8331
  %8333 = vmatmul.bf16.gmra.mxu0 %v5305
  %v8334 = vpop.f32.mrf.mxu0
  %v8335 = vadd.f32 %v7046, %v8334
  %v8336 = vpop.f32.mrf.mxu0
  %v8337 = vadd.f32 %v7048, %v8336
  %8338 = vmatmul.bf16.gmra.mxu0 %v5307
  %v8339 = vpop.f32.mrf.mxu0
  %v8340 = vadd.f32 %v7051, %v8339
  %v8341 = vpop.f32.mrf.mxu0
  %v8342 = vadd.f32 %v7053, %v8341
  %8343 = vmatmul.bf16.gmra.mxu0 %v5309
  %v8344 = vpop.f32.mrf.mxu0
  %v8345 = vadd.f32 %v7056, %v8344
  %v8346 = vpop.f32.mrf.mxu0
  %v8347 = vadd.f32 %v7058, %v8346
  %8348 = vmatmul.bf16.gmra.mxu0 %v5311
  %v8349 = vpop.f32.mrf.mxu0
  %v8350 = vadd.f32 %v7061, %v8349
  %v8351 = vpop.f32.mrf.mxu0
  %v8352 = vadd.f32 %v7063, %v8351
  %8353 = vmatmul.bf16.gmra.mxu0 %v5313
  %v8354 = vpop.f32.mrf.mxu0
  %v8355 = vadd.f32 %v7066, %v8354
  %v8356 = vpop.f32.mrf.mxu0
  %v8357 = vadd.f32 %v7068, %v8356
  %8358 = vmatmul.bf16.gmra.mxu0 %v5315
  %v8359 = vpop.f32.mrf.mxu0
  %v8360 = vadd.f32 %v7071, %v8359
  %v8361 = vpop.f32.mrf.mxu0
  %v8362 = vadd.f32 %v7073, %v8361
  %8363 = vmatmul.bf16.gmra.mxu0 %v5317
  %v8364 = vpop.f32.mrf.mxu0
  %v8365 = vadd.f32 %v7076, %v8364
  %v8366 = vpop.f32.mrf.mxu0
  %v8367 = vadd.f32 %v7078, %v8366
  %8368 = vmatmul.bf16.gmra.mxu0 %v5319
  %v8369 = vpop.f32.mrf.mxu0
  %v8370 = vadd.f32 %v7081, %v8369
  %v8371 = vpop.f32.mrf.mxu0
  %v8372 = vadd.f32 %v7083, %v8371
  %8373 = vmatmul.bf16.gmra.mxu0 %v5321
  %v8374 = vpop.f32.mrf.mxu0
  %v8375 = vadd.f32 %v7086, %v8374
  %v8376 = vpop.f32.mrf.mxu0
  %v8377 = vadd.f32 %v7088, %v8376
  %8378 = vmatmul.bf16.gmra.mxu0 %v5323
  %v8379 = vpop.f32.mrf.mxu0
  %v8380 = vadd.f32 %v7091, %v8379
  %v8381 = vpop.f32.mrf.mxu0
  %v8382 = vadd.f32 %v7093, %v8381
  %8383 = vmatmul.bf16.gmra.mxu0 %v5325
  %v8384 = vpop.f32.mrf.mxu0
  %v8385 = vadd.f32 %v7096, %v8384
  %v8386 = vpop.f32.mrf.mxu0
  %v8387 = vadd.f32 %v7098, %v8386
  %8388 = vmatmul.bf16.gmra.mxu0 %v5327
  %v8389 = vpop.f32.mrf.mxu0
  %v8390 = vadd.f32 %v7101, %v8389
  %v8391 = vpop.f32.mrf.mxu0
  %v8392 = vadd.f32 %v7103, %v8391
  %8393 = vmatmul.bf16.gmra.mxu0 %v5329
  %v8394 = vpop.f32.mrf.mxu0
  %v8395 = vadd.f32 %v7106, %v8394
  %v8396 = vpop.f32.mrf.mxu0
  %v8397 = vadd.f32 %v7108, %v8396
  %8398 = vmatmul.bf16.gmra.mxu0 %v5331
  %v8399 = vpop.f32.mrf.mxu0
  %v8400 = vadd.f32 %v7111, %v8399
  %v8401 = vpop.f32.mrf.mxu0
  %v8402 = vadd.f32 %v7113, %v8401
  %8403 = vmatmul.bf16.gmra.mxu0 %v5333
  %v8404 = vpop.f32.mrf.mxu0
  %v8405 = vadd.f32 %v7116, %v8404
  %v8406 = vpop.f32.mrf.mxu0
  %v8407 = vadd.f32 %v7118, %v8406
  %8408 = vmatmul.bf16.gmra.mxu0 %v5335
  %v8409 = vpop.f32.mrf.mxu0
  %v8410 = vadd.f32 %v7121, %v8409
  %v8411 = vpop.f32.mrf.mxu0
  %v8412 = vadd.f32 %v7123, %v8411
  %8413 = vmatmul.bf16.gmra.mxu0 %v5337
  %v8414 = vpop.f32.mrf.mxu0
  %v8415 = vadd.f32 %v7126, %v8414
  %v8416 = vpop.f32.mrf.mxu0
  %v8417 = vadd.f32 %v7128, %v8416
  %8418 = vmatmul.bf16.gmra.mxu0 %v5339
  %v8419 = vpop.f32.mrf.mxu0
  %v8420 = vadd.f32 %v7131, %v8419
  %v8421 = vpop.f32.mrf.mxu0
  %v8422 = vadd.f32 %v7133, %v8421
  %8423 = vmatmul.bf16.gmra.mxu0 %v5341
  %v8424 = vpop.f32.mrf.mxu0
  %v8425 = vadd.f32 %v7136, %v8424
  %v8426 = vpop.f32.mrf.mxu0
  %v8427 = vadd.f32 %v7138, %v8426
  %8428 = vmatmul.bf16.gmra.mxu0 %v5343
  %v8429 = vpop.f32.mrf.mxu0
  %v8430 = vadd.f32 %v7141, %v8429
  %v8431 = vpop.f32.mrf.mxu0
  %v8432 = vadd.f32 %v7143, %v8431
  %8433 = vdwg.mxu0
  %v8434 = vmax.f32 %v7155, 0.0
  %v8435 = vmax.f32 %v7157, 0.0
  %v8436 = vmax.f32 %v7160, 0.0
  %v8437 = vmax.f32 %v7162, 0.0
  %v8438 = vmax.f32 %v7165, 0.0
  %v8439 = vmax.f32 %v7167, 0.0
  %v8440 = vmax.f32 %v7170, 0.0
  %v8441 = vmax.f32 %v7172, 0.0
  %v8442 = vmax.f32 %v7175, 0.0
  %v8443 = vmax.f32 %v7177, 0.0
  %v8444 = vmax.f32 %v7180, 0.0
  %v8445 = vmax.f32 %v7182, 0.0
  %v8446 = vmax.f32 %v7185, 0.0
  %v8447 = vmax.f32 %v7187, 0.0
  %v8448 = vmax.f32 %v7190, 0.0
  %v8449 = vmax.f32 %v7192, 0.0
  %v8450 = vmax.f32 %v7195, 0.0
  %v8451 = vmax.f32 %v7197, 0.0
  %v8452 = vmax.f32 %v7200, 0.0
  %v8453 = vmax.f32 %v7202, 0.0
  %v8454 = vmax.f32 %v7205, 0.0
  %v8455 = vmax.f32 %v7207, 0.0
  %v8456 = vmax.f32 %v7210, 0.0
  %v8457 = vmax.f32 %v7212, 0.0
  %v8458 = vmax.f32 %v7215, 0.0
  %v8459 = vmax.f32 %v7217, 0.0
  %v8460 = vmax.f32 %v7220, 0.0
  %v8461 = vmax.f32 %v7222, 0.0
  %v8462 = vmax.f32 %v7225, 0.0
  %v8463 = vmax.f32 %v7227, 0.0
  %v8464 = vmax.f32 %v7230, 0.0
  %v8465 = vmax.f32 %v7232, 0.0
  %v8466 = vmax.f32 %v7235, 0.0
  %v8467 = vmax.f32 %v7237, 0.0
  %v8468 = vmax.f32 %v7240, 0.0
  %v8469 = vmax.f32 %v7242, 0.0
  %v8470 = vmax.f32 %v7245, 0.0
  %v8471 = vmax.f32 %v7247, 0.0
  %v8472 = vmax.f32 %v7250, 0.0
  %v8473 = vmax.f32 %v7252, 0.0
  %v8474 = vmax.f32 %v7255, 0.0
  %v8475 = vmax.f32 %v7257, 0.0
  %v8476 = vmax.f32 %v7260, 0.0
  %v8477 = vmax.f32 %v7262, 0.0
  %v8478 = vmax.f32 %v7265, 0.0
  %v8479 = vmax.f32 %v7267, 0.0
  %v8480 = vmax.f32 %v7270, 0.0
  %v8481 = vmax.f32 %v7272, 0.0
  %v8482 = vmax.f32 %v7275, 0.0
  %v8483 = vmax.f32 %v7277, 0.0
  %v8484 = vmax.f32 %v7280, 0.0
  %v8485 = vmax.f32 %v7282, 0.0
  %v8486 = vmax.f32 %v7285, 0.0
  %v8487 = vmax.f32 %v7287, 0.0
  %v8488 = vmax.f32 %v7290, 0.0
  %v8489 = vmax.f32 %v7292, 0.0
  %v8490 = vmax.f32 %v7295, 0.0
  %v8491 = vmax.f32 %v7297, 0.0
  %v8492 = vmax.f32 %v7300, 0.0
  %v8493 = vmax.f32 %v7302, 0.0
  %v8494 = vmax.f32 %v7305, 0.0
  %v8495 = vmax.f32 %v7307, 0.0
  %v8496 = vmax.f32 %v7310, 0.0
  %v8497 = vmax.f32 %v7312, 0.0
  %v8498 = vmax.f32 %v7315, 0.0
  %v8499 = vmax.f32 %v7317, 0.0
  %v8500 = vmax.f32 %v7320, 0.0
  %v8501 = vmax.f32 %v7322, 0.0
  %v8502 = vmax.f32 %v7325, 0.0
  %v8503 = vmax.f32 %v7327, 0.0
  %v8504 = vmax.f32 %v7330, 0.0
  %v8505 = vmax.f32 %v7332, 0.0
  %v8506 = vmax.f32 %v7335, 0.0
  %v8507 = vmax.f32 %v7337, 0.0
  %v8508 = vmax.f32 %v7340, 0.0
  %v8509 = vmax.f32 %v7342, 0.0
  %v8510 = vmax.f32 %v7345, 0.0
  %v8511 = vmax.f32 %v7347, 0.0
  %v8512 = vmax.f32 %v7350, 0.0
  %v8513 = vmax.f32 %v7352, 0.0
  %v8514 = vmax.f32 %v7355, 0.0
  %v8515 = vmax.f32 %v7357, 0.0
  %v8516 = vmax.f32 %v7360, 0.0
  %v8517 = vmax.f32 %v7362, 0.0
  %v8518 = vmax.f32 %v7365, 0.0
  %v8519 = vmax.f32 %v7367, 0.0
  %v8520 = vmax.f32 %v7370, 0.0
  %v8521 = vmax.f32 %v7372, 0.0
  %v8522 = vmax.f32 %v7375, 0.0
  %v8523 = vmax.f32 %v7377, 0.0
  %v8524 = vmax.f32 %v7380, 0.0
  %v8525 = vmax.f32 %v7382, 0.0
  %v8526 = vmax.f32 %v7385, 0.0
  %v8527 = vmax.f32 %v7387, 0.0
  %v8528 = vmax.f32 %v7390, 0.0
  %v8529 = vmax.f32 %v7392, 0.0
  %v8530 = vmax.f32 %v7395, 0.0
  %v8531 = vmax.f32 %v7397, 0.0
  %v8532 = vmax.f32 %v7400, 0.0
  %v8533 = vmax.f32 %v7402, 0.0
  %v8534 = vmax.f32 %v7405, 0.0
  %v8535 = vmax.f32 %v7407, 0.0
  %v8536 = vmax.f32 %v7410, 0.0
  %v8537 = vmax.f32 %v7412, 0.0
  %v8538 = vmax.f32 %v7415, 0.0
  %v8539 = vmax.f32 %v7417, 0.0
  %v8540 = vmax.f32 %v7420, 0.0
  %v8541 = vmax.f32 %v7422, 0.0
  %v8542 = vmax.f32 %v7425, 0.0
  %v8543 = vmax.f32 %v7427, 0.0
  %v8544 = vmax.f32 %v7430, 0.0
  %v8545 = vmax.f32 %v7432, 0.0
  %v8546 = vmax.f32 %v7435, 0.0
  %v8547 = vmax.f32 %v7437, 0.0
  %v8548 = vmax.f32 %v7440, 0.0
  %v8549 = vmax.f32 %v7442, 0.0
  %v8550 = vmax.f32 %v7445, 0.0
  %v8551 = vmax.f32 %v7447, 0.0
  %v8552 = vmax.f32 %v7450, 0.0
  %v8553 = vmax.f32 %v7452, 0.0
  %v8554 = vmax.f32 %v7455, 0.0
  %v8555 = vmax.f32 %v7457, 0.0
  %v8556 = vmax.f32 %v7460, 0.0
  %v8557 = vmax.f32 %v7462, 0.0
  %v8558 = vmax.f32 %v7465, 0.0
  %v8559 = vmax.f32 %v7467, 0.0
  %v8560 = vmax.f32 %v7470, 0.0
  %v8561 = vmax.f32 %v7472, 0.0
  %v8562 = vmax.f32 %v7475, 0.0
  %v8563 = vmax.f32 %v7477, 0.0
  %v8564 = vmax.f32 %v7480, 0.0
  %v8565 = vmax.f32 %v7482, 0.0
  %v8566 = vmax.f32 %v7485, 0.0
  %v8567 = vmax.f32 %v7487, 0.0
  %v8568 = vmax.f32 %v7490, 0.0
  %v8569 = vmax.f32 %v7492, 0.0
  %v8570 = vmax.f32 %v7495, 0.0
  %v8571 = vmax.f32 %v7497, 0.0
  %v8572 = vmax.f32 %v7500, 0.0
  %v8573 = vmax.f32 %v7502, 0.0
  %v8574 = vmax.f32 %v7505, 0.0
  %v8575 = vmax.f32 %v7507, 0.0
  %v8576 = vmax.f32 %v7510, 0.0
  %v8577 = vmax.f32 %v7512, 0.0
  %v8578 = vmax.f32 %v7515, 0.0
  %v8579 = vmax.f32 %v7517, 0.0
  %v8580 = vmax.f32 %v7520, 0.0
  %v8581 = vmax.f32 %v7522, 0.0
  %v8582 = vmax.f32 %v7525, 0.0
  %v8583 = vmax.f32 %v7527, 0.0
  %v8584 = vmax.f32 %v7530, 0.0
  %v8585 = vmax.f32 %v7532, 0.0
  %v8586 = vmax.f32 %v7535, 0.0
  %v8587 = vmax.f32 %v7537, 0.0
  %v8588 = vmax.f32 %v7540, 0.0
  %v8589 = vmax.f32 %v7542, 0.0
  %v8590 = vmax.f32 %v7545, 0.0
  %v8591 = vmax.f32 %v7547, 0.0
  %v8592 = vmax.f32 %v7550, 0.0
  %v8593 = vmax.f32 %v7552, 0.0
  %v8594 = vmax.f32 %v7555, 0.0
  %v8595 = vmax.f32 %v7557, 0.0
  %v8596 = vmax.f32 %v7560, 0.0
  %v8597 = vmax.f32 %v7562, 0.0
  %v8598 = vmax.f32 %v7565, 0.0
  %v8599 = vmax.f32 %v7567, 0.0
  %v8600 = vmax.f32 %v7570, 0.0
  %v8601 = vmax.f32 %v7572, 0.0
  %v8602 = vmax.f32 %v7575, 0.0
  %v8603 = vmax.f32 %v7577, 0.0
  %v8604 = vmax.f32 %v7580, 0.0
  %v8605 = vmax.f32 %v7582, 0.0
  %v8606 = vmax.f32 %v7585, 0.0
  %v8607 = vmax.f32 %v7587, 0.0
  %v8608 = vmax.f32 %v7590, 0.0
  %v8609 = vmax.f32 %v7592, 0.0
  %v8610 = vmax.f32 %v7595, 0.0
  %v8611 = vmax.f32 %v7597, 0.0
  %v8612 = vmax.f32 %v7600, 0.0
  %v8613 = vmax.f32 %v7602, 0.0
  %v8614 = vmax.f32 %v7605, 0.0
  %v8615 = vmax.f32 %v7607, 0.0
  %v8616 = vmax.f32 %v7610, 0.0
  %v8617 = vmax.f32 %v7612, 0.0
  %v8618 = vmax.f32 %v7615, 0.0
  %v8619 = vmax.f32 %v7617, 0.0
  %v8620 = vmax.f32 %v7620, 0.0
  %v8621 = vmax.f32 %v7622, 0.0
  %v8622 = vmax.f32 %v7625, 0.0
  %v8623 = vmax.f32 %v7627, 0.0
  %v8624 = vmax.f32 %v7630, 0.0
  %v8625 = vmax.f32 %v7632, 0.0
  %v8626 = vmax.f32 %v7635, 0.0
  %v8627 = vmax.f32 %v7637, 0.0
  %v8628 = vmax.f32 %v7640, 0.0
  %v8629 = vmax.f32 %v7642, 0.0
  %v8630 = vmax.f32 %v7645, 0.0
  %v8631 = vmax.f32 %v7647, 0.0
  %v8632 = vmax.f32 %v7650, 0.0
  %v8633 = vmax.f32 %v7652, 0.0
  %v8634 = vmax.f32 %v7655, 0.0
  %v8635 = vmax.f32 %v7657, 0.0
  %v8636 = vmax.f32 %v7660, 0.0
  %v8637 = vmax.f32 %v7662, 0.0
  %v8638 = vmax.f32 %v7665, 0.0
  %v8639 = vmax.f32 %v7667, 0.0
  %v8640 = vmax.f32 %v7670, 0.0
  %v8641 = vmax.f32 %v7672, 0.0
  %v8642 = vmax.f32 %v7675, 0.0
  %v8643 = vmax.f32 %v7677, 0.0
  %v8644 = vmax.f32 %v7680, 0.0
  %v8645 = vmax.f32 %v7682, 0.0
  %v8646 = vmax.f32 %v7685, 0.0
  %v8647 = vmax.f32 %v7687, 0.0
  %v8648 = vmax.f32 %v7690, 0.0
  %v8649 = vmax.f32 %v7692, 0.0
  %v8650 = vmax.f32 %v7695, 0.0
  %v8651 = vmax.f32 %v7697, 0.0
  %v8652 = vmax.f32 %v7700, 0.0
  %v8653 = vmax.f32 %v7702, 0.0
  %v8654 = vmax.f32 %v7705, 0.0
  %v8655 = vmax.f32 %v7707, 0.0
  %v8656 = vmax.f32 %v7710, 0.0
  %v8657 = vmax.f32 %v7712, 0.0
  %v8658 = vmax.f32 %v7715, 0.0
  %v8659 = vmax.f32 %v7717, 0.0
  %v8660 = vmax.f32 %v7720, 0.0
  %v8661 = vmax.f32 %v7722, 0.0
  %v8662 = vmax.f32 %v7725, 0.0
  %v8663 = vmax.f32 %v7727, 0.0
  %v8664 = vmax.f32 %v7730, 0.0
  %v8665 = vmax.f32 %v7732, 0.0
  %v8666 = vmax.f32 %v7735, 0.0
  %v8667 = vmax.f32 %v7737, 0.0
  %v8668 = vmax.f32 %v7740, 0.0
  %v8669 = vmax.f32 %v7742, 0.0
  %v8670 = vmax.f32 %v7745, 0.0
  %v8671 = vmax.f32 %v7747, 0.0
  %v8672 = vmax.f32 %v7750, 0.0
  %v8673 = vmax.f32 %v7752, 0.0
  %v8674 = vmax.f32 %v7755, 0.0
  %v8675 = vmax.f32 %v7757, 0.0
  %v8676 = vmax.f32 %v7760, 0.0
  %v8677 = vmax.f32 %v7762, 0.0
  %v8678 = vmax.f32 %v7765, 0.0
  %v8679 = vmax.f32 %v7767, 0.0
  %v8680 = vmax.f32 %v7770, 0.0
  %v8681 = vmax.f32 %v7772, 0.0
  %v8682 = vmax.f32 %v7775, 0.0
  %v8683 = vmax.f32 %v7777, 0.0
  %v8684 = vmax.f32 %v7780, 0.0
  %v8685 = vmax.f32 %v7782, 0.0
  %v8686 = vmax.f32 %v7785, 0.0
  %v8687 = vmax.f32 %v7787, 0.0
  %v8688 = vmax.f32 %v7790, 0.0
  %v8689 = vmax.f32 %v7792, 0.0
  %v8690 = vmax.f32 %v7795, 0.0
  %v8691 = vmax.f32 %v7797, 0.0
  %v8692 = vmax.f32 %v7800, 0.0
  %v8693 = vmax.f32 %v7802, 0.0
  %v8694 = vmax.f32 %v7805, 0.0
  %v8695 = vmax.f32 %v7807, 0.0
  %v8696 = vmax.f32 %v7810, 0.0
  %v8697 = vmax.f32 %v7812, 0.0
  %v8698 = vmax.f32 %v7815, 0.0
  %v8699 = vmax.f32 %v7817, 0.0
  %v8700 = vmax.f32 %v7820, 0.0
  %v8701 = vmax.f32 %v7822, 0.0
  %v8702 = vmax.f32 %v7825, 0.0
  %v8703 = vmax.f32 %v7827, 0.0
  %v8704 = vmax.f32 %v7830, 0.0
  %v8705 = vmax.f32 %v7832, 0.0
  %v8706 = vmax.f32 %v7835, 0.0
  %v8707 = vmax.f32 %v7837, 0.0
  %v8708 = vmax.f32 %v7840, 0.0
  %v8709 = vmax.f32 %v7842, 0.0
  %v8710 = vmax.f32 %v7845, 0.0
  %v8711 = vmax.f32 %v7847, 0.0
  %v8712 = vmax.f32 %v7850, 0.0
  %v8713 = vmax.f32 %v7852, 0.0
  %v8714 = vmax.f32 %v7855, 0.0
  %v8715 = vmax.f32 %v7857, 0.0
  %v8716 = vmax.f32 %v7860, 0.0
  %v8717 = vmax.f32 %v7862, 0.0
  %v8718 = vmax.f32 %v7865, 0.0
  %v8719 = vmax.f32 %v7867, 0.0
  %v8720 = vmax.f32 %v7870, 0.0
  %v8721 = vmax.f32 %v7872, 0.0
  %v8722 = vmax.f32 %v7875, 0.0
  %v8723 = vmax.f32 %v7877, 0.0
  %v8724 = vmax.f32 %v7880, 0.0
  %v8725 = vmax.f32 %v7882, 0.0
  %v8726 = vmax.f32 %v7885, 0.0
  %v8727 = vmax.f32 %v7887, 0.0
  %v8728 = vmax.f32 %v7890, 0.0
  %v8729 = vmax.f32 %v7892, 0.0
  %v8730 = vmax.f32 %v7895, 0.0
  %v8731 = vmax.f32 %v7897, 0.0
  %v8732 = vmax.f32 %v7900, 0.0
  %v8733 = vmax.f32 %v7902, 0.0
  %v8734 = vmax.f32 %v7905, 0.0
  %v8735 = vmax.f32 %v7907, 0.0
  %v8736 = vmax.f32 %v7910, 0.0
  %v8737 = vmax.f32 %v7912, 0.0
  %v8738 = vmax.f32 %v7915, 0.0
  %v8739 = vmax.f32 %v7917, 0.0
  %v8740 = vmax.f32 %v7920, 0.0
  %v8741 = vmax.f32 %v7922, 0.0
  %v8742 = vmax.f32 %v7925, 0.0
  %v8743 = vmax.f32 %v7927, 0.0
  %v8744 = vmax.f32 %v7930, 0.0
  %v8745 = vmax.f32 %v7932, 0.0
  %v8746 = vmax.f32 %v7935, 0.0
  %v8747 = vmax.f32 %v7937, 0.0
  %v8748 = vmax.f32 %v7940, 0.0
  %v8749 = vmax.f32 %v7942, 0.0
  %v8750 = vmax.f32 %v7945, 0.0
  %v8751 = vmax.f32 %v7947, 0.0
  %v8752 = vmax.f32 %v7950, 0.0
  %v8753 = vmax.f32 %v7952, 0.0
  %v8754 = vmax.f32 %v7955, 0.0
  %v8755 = vmax.f32 %v7957, 0.0
  %v8756 = vmax.f32 %v7960, 0.0
  %v8757 = vmax.f32 %v7962, 0.0
  %v8758 = vmax.f32 %v7965, 0.0
  %v8759 = vmax.f32 %v7967, 0.0
  %v8760 = vmax.f32 %v7970, 0.0
  %v8761 = vmax.f32 %v7972, 0.0
  %v8762 = vmax.f32 %v7975, 0.0
  %v8763 = vmax.f32 %v7977, 0.0
  %v8764 = vmax.f32 %v7980, 0.0
  %v8765 = vmax.f32 %v7982, 0.0
  %v8766 = vmax.f32 %v7985, 0.0
  %v8767 = vmax.f32 %v7987, 0.0
  %v8768 = vmax.f32 %v7990, 0.0
  %v8769 = vmax.f32 %v7992, 0.0
  %v8770 = vmax.f32 %v7995, 0.0
  %v8771 = vmax.f32 %v7997, 0.0
  %v8772 = vmax.f32 %v8000, 0.0
  %v8773 = vmax.f32 %v8002, 0.0
  %v8774 = vmax.f32 %v8005, 0.0
  %v8775 = vmax.f32 %v8007, 0.0
  %v8776 = vmax.f32 %v8010, 0.0
  %v8777 = vmax.f32 %v8012, 0.0
  %v8778 = vmax.f32 %v8015, 0.0
  %v8779 = vmax.f32 %v8017, 0.0
  %v8780 = vmax.f32 %v8020, 0.0
  %v8781 = vmax.f32 %v8022, 0.0
  %v8782 = vmax.f32 %v8025, 0.0
  %v8783 = vmax.f32 %v8027, 0.0
  %v8784 = vmax.f32 %v8030, 0.0
  %v8785 = vmax.f32 %v8032, 0.0
  %v8786 = vmax.f32 %v8035, 0.0
  %v8787 = vmax.f32 %v8037, 0.0
  %v8788 = vmax.f32 %v8040, 0.0
  %v8789 = vmax.f32 %v8042, 0.0
  %v8790 = vmax.f32 %v8045, 0.0
  %v8791 = vmax.f32 %v8047, 0.0
  %v8792 = vmax.f32 %v8050, 0.0
  %v8793 = vmax.f32 %v8052, 0.0
  %v8794 = vmax.f32 %v8055, 0.0
  %v8795 = vmax.f32 %v8057, 0.0
  %v8796 = vmax.f32 %v8060, 0.0
  %v8797 = vmax.f32 %v8062, 0.0
  %v8798 = vmax.f32 %v8065, 0.0
  %v8799 = vmax.f32 %v8067, 0.0
  %v8800 = vmax.f32 %v8070, 0.0
  %v8801 = vmax.f32 %v8072, 0.0
  %v8802 = vmax.f32 %v8075, 0.0
  %v8803 = vmax.f32 %v8077, 0.0
  %v8804 = vmax.f32 %v8080, 0.0
  %v8805 = vmax.f32 %v8082, 0.0
  %v8806 = vmax.f32 %v8085, 0.0
  %v8807 = vmax.f32 %v8087, 0.0
  %v8808 = vmax.f32 %v8090, 0.0
  %v8809 = vmax.f32 %v8092, 0.0
  %v8810 = vmax.f32 %v8095, 0.0
  %v8811 = vmax.f32 %v8097, 0.0
  %v8812 = vmax.f32 %v8100, 0.0
  %v8813 = vmax.f32 %v8102, 0.0
  %v8814 = vmax.f32 %v8105, 0.0
  %v8815 = vmax.f32 %v8107, 0.0
  %v8816 = vmax.f32 %v8110, 0.0
  %v8817 = vmax.f32 %v8112, 0.0
  %v8818 = vmax.f32 %v8115, 0.0
  %v8819 = vmax.f32 %v8117, 0.0
  %v8820 = vmax.f32 %v8120, 0.0
  %v8821 = vmax.f32 %v8122, 0.0
  %v8822 = vmax.f32 %v8125, 0.0
  %v8823 = vmax.f32 %v8127, 0.0
  %v8824 = vmax.f32 %v8130, 0.0
  %v8825 = vmax.f32 %v8132, 0.0
  %v8826 = vmax.f32 %v8135, 0.0
  %v8827 = vmax.f32 %v8137, 0.0
  %v8828 = vmax.f32 %v8140, 0.0
  %v8829 = vmax.f32 %v8142, 0.0
  %v8830 = vmax.f32 %v8145, 0.0
  %v8831 = vmax.f32 %v8147, 0.0
  %v8832 = vmax.f32 %v8150, 0.0
  %v8833 = vmax.f32 %v8152, 0.0
  %v8834 = vmax.f32 %v8155, 0.0
  %v8835 = vmax.f32 %v8157, 0.0
  %v8836 = vmax.f32 %v8160, 0.0
  %v8837 = vmax.f32 %v8162, 0.0
  %v8838 = vmax.f32 %v8165, 0.0
  %v8839 = vmax.f32 %v8167, 0.0
  %v8840 = vmax.f32 %v8170, 0.0
  %v8841 = vmax.f32 %v8172, 0.0
  %v8842 = vmax.f32 %v8175, 0.0
  %v8843 = vmax.f32 %v8177, 0.0
  %v8844 = vmax.f32 %v8180, 0.0
  %v8845 = vmax.f32 %v8182, 0.0
  %v8846 = vmax.f32 %v8185, 0.0
  %v8847 = vmax.f32 %v8187, 0.0
  %v8848 = vmax.f32 %v8190, 0.0
  %v8849 = vmax.f32 %v8192, 0.0
  %v8850 = vmax.f32 %v8195, 0.0
  %v8851 = vmax.f32 %v8197, 0.0
  %v8852 = vmax.f32 %v8200, 0.0
  %v8853 = vmax.f32 %v8202, 0.0
  %v8854 = vmax.f32 %v8205, 0.0
  %v8855 = vmax.f32 %v8207, 0.0
  %v8856 = vmax.f32 %v8210, 0.0
  %v8857 = vmax.f32 %v8212, 0.0
  %v8858 = vmax.f32 %v8215, 0.0
  %v8859 = vmax.f32 %v8217, 0.0
  %v8860 = vmax.f32 %v8220, 0.0
  %v8861 = vmax.f32 %v8222, 0.0
  %v8862 = vmax.f32 %v8225, 0.0
  %v8863 = vmax.f32 %v8227, 0.0
  %v8864 = vmax.f32 %v8230, 0.0
  %v8865 = vmax.f32 %v8232, 0.0
  %v8866 = vmax.f32 %v8235, 0.0
  %v8867 = vmax.f32 %v8237, 0.0
  %v8868 = vmax.f32 %v8240, 0.0
  %v8869 = vmax.f32 %v8242, 0.0
  %v8870 = vmax.f32 %v8245, 0.0
  %v8871 = vmax.f32 %v8247, 0.0
  %v8872 = vmax.f32 %v8250, 0.0
  %v8873 = vmax.f32 %v8252, 0.0
  %v8874 = vmax.f32 %v8255, 0.0
  %v8875 = vmax.f32 %v8257, 0.0
  %v8876 = vmax.f32 %v8260, 0.0
  %v8877 = vmax.f32 %v8262, 0.0
  %v8878 = vmax.f32 %v8265, 0.0
  %v8879 = vmax.f32 %v8267, 0.0
  %v8880 = vmax.f32 %v8270, 0.0
  %v8881 = vmax.f32 %v8272, 0.0
  %v8882 = vmax.f32 %v8275, 0.0
  %v8883 = vmax.f32 %v8277, 0.0
  %v8884 = vmax.f32 %v8280, 0.0
  %v8885 = vmax.f32 %v8282, 0.0
  %v8886 = vmax.f32 %v8285, 0.0
  %v8887 = vmax.f32 %v8287, 0.0
  %v8888 = vmax.f32 %v8290, 0.0
  %v8889 = vmax.f32 %v8292, 0.0
  %v8890 = vmax.f32 %v8295, 0.0
  %v8891 = vmax.f32 %v8297, 0.0
  %v8892 = vmax.f32 %v8300, 0.0
  %v8893 = vmax.f32 %v8302, 0.0
  %v8894 = vmax.f32 %v8305, 0.0
  %v8895 = vmax.f32 %v8307, 0.0
  %v8896 = vmax.f32 %v8310, 0.0
  %v8897 = vmax.f32 %v8312, 0.0
  %v8898 = vmax.f32 %v8315, 0.0
  %v8899 = vmax.f32 %v8317, 0.0
  %v8900 = vmax.f32 %v8320, 0.0
  %v8901 = vmax.f32 %v8322, 0.0
  %v8902 = vmax.f32 %v8325, 0.0
  %v8903 = vmax.f32 %v8327, 0.0
  %v8904 = vmax.f32 %v8330, 0.0
  %v8905 = vmax.f32 %v8332, 0.0
  %v8906 = vmax.f32 %v8335, 0.0
  %v8907 = vmax.f32 %v8337, 0.0
  %v8908 = vmax.f32 %v8340, 0.0
  %v8909 = vmax.f32 %v8342, 0.0
  %v8910 = vmax.f32 %v8345, 0.0
  %v8911 = vmax.f32 %v8347, 0.0
  %v8912 = vmax.f32 %v8350, 0.0
  %v8913 = vmax.f32 %v8352, 0.0
  %v8914 = vmax.f32 %v8355, 0.0
  %v8915 = vmax.f32 %v8357, 0.0
  %v8916 = vmax.f32 %v8360, 0.0
  %v8917 = vmax.f32 %v8362, 0.0
  %v8918 = vmax.f32 %v8365, 0.0
  %v8919 = vmax.f32 %v8367, 0.0
  %v8920 = vmax.f32 %v8370, 0.0
  %v8921 = vmax.f32 %v8372, 0.0
  %v8922 = vmax.f32 %v8375, 0.0
  %v8923 = vmax.f32 %v8377, 0.0
  %v8924 = vmax.f32 %v8380, 0.0
  %v8925 = vmax.f32 %v8382, 0.0
  %v8926 = vmax.f32 %v8385, 0.0
  %v8927 = vmax.f32 %v8387, 0.0
  %v8928 = vmax.f32 %v8390, 0.0
  %v8929 = vmax.f32 %v8392, 0.0
  %v8930 = vmax.f32 %v8395, 0.0
  %v8931 = vmax.f32 %v8397, 0.0
  %v8932 = vmax.f32 %v8400, 0.0
  %v8933 = vmax.f32 %v8402, 0.0
  %v8934 = vmax.f32 %v8405, 0.0
  %v8935 = vmax.f32 %v8407, 0.0
  %v8936 = vmax.f32 %v8410, 0.0
  %v8937 = vmax.f32 %v8412, 0.0
  %v8938 = vmax.f32 %v8415, 0.0
  %v8939 = vmax.f32 %v8417, 0.0
  %v8940 = vmax.f32 %v8420, 0.0
  %v8941 = vmax.f32 %v8422, 0.0
  %v8942 = vmax.f32 %v8425, 0.0
  %v8943 = vmax.f32 %v8427, 0.0
  %v8944 = vmax.f32 %v8430, 0.0
  %v8945 = vmax.f32 %v8432, 0.0
  %v8946 = vsel %vm252, %v8434, 0.0
  %v8947 = vsel %vm252, %v8435, 0.0
  %v8948 = vadd.f32 %v8946, %v8947
  %v8949 = vsel %vm252, %v8436, 0.0
  %v8950 = vadd.f32 %v8948, %v8949
  %v8951 = vsel %vm252, %v8437, 0.0
  %v8952 = vadd.f32 %v8950, %v8951
  %v8953 = vsel %vm252, %v8438, 0.0
  %v8954 = vadd.f32 %v8952, %v8953
  %v8955 = vsel %vm252, %v8439, 0.0
  %v8956 = vadd.f32 %v8954, %v8955
  %v8957 = vsel %vm252, %v8440, 0.0
  %v8958 = vadd.f32 %v8956, %v8957
  %v8959 = vsel %vm252, %v8441, 0.0
  %v8960 = vadd.f32 %v8958, %v8959
  %v8961 = vrot.slane %v8960, 4
  %v8962 = vadd.f32 %v8960, %v8961
  %v8963 = vrot.slane %v8962, 2
  %v8964 = vadd.f32 %v8962, %v8963
  %v8965 = vrot.slane %v8964, 1
  %v8966 = vadd.f32 %v8964, %v8965
  %v8967 = vsel %vm252, %v8442, 0.0
  %v8968 = vsel %vm252, %v8443, 0.0
  %v8969 = vadd.f32 %v8967, %v8968
  %v8970 = vsel %vm252, %v8444, 0.0
  %v8971 = vadd.f32 %v8969, %v8970
  %v8972 = vsel %vm252, %v8445, 0.0
  %v8973 = vadd.f32 %v8971, %v8972
  %v8974 = vsel %vm252, %v8446, 0.0
  %v8975 = vadd.f32 %v8973, %v8974
  %v8976 = vsel %vm252, %v8447, 0.0
  %v8977 = vadd.f32 %v8975, %v8976
  %v8978 = vsel %vm252, %v8448, 0.0
  %v8979 = vadd.f32 %v8977, %v8978
  %v8980 = vsel %vm252, %v8449, 0.0
  %v8981 = vadd.f32 %v8979, %v8980
  %v8982 = vrot.slane %v8981, 4
  %v8983 = vadd.f32 %v8981, %v8982
  %v8984 = vrot.slane %v8983, 2
  %v8985 = vadd.f32 %v8983, %v8984
  %v8986 = vrot.slane %v8985, 1
  %v8987 = vadd.f32 %v8985, %v8986
  %v8988 = vsel %vm252, %v8450, 0.0
  %v8989 = vsel %vm252, %v8451, 0.0
  %v8990 = vadd.f32 %v8988, %v8989
  %v8991 = vsel %vm252, %v8452, 0.0
  %v8992 = vadd.f32 %v8990, %v8991
  %v8993 = vsel %vm252, %v8453, 0.0
  %v8994 = vadd.f32 %v8992, %v8993
  %v8995 = vsel %vm252, %v8454, 0.0
  %v8996 = vadd.f32 %v8994, %v8995
  %v8997 = vsel %vm252, %v8455, 0.0
  %v8998 = vadd.f32 %v8996, %v8997
  %v8999 = vsel %vm252, %v8456, 0.0
  %v9000 = vadd.f32 %v8998, %v8999
  %v9001 = vsel %vm252, %v8457, 0.0
  %v9002 = vadd.f32 %v9000, %v9001
  %v9003 = vrot.slane %v9002, 4
  %v9004 = vadd.f32 %v9002, %v9003
  %v9005 = vrot.slane %v9004, 2
  %v9006 = vadd.f32 %v9004, %v9005
  %v9007 = vrot.slane %v9006, 1
  %v9008 = vadd.f32 %v9006, %v9007
  %v9009 = vsel %vm252, %v8458, 0.0
  %v9010 = vsel %vm252, %v8459, 0.0
  %v9011 = vadd.f32 %v9009, %v9010
  %v9012 = vsel %vm252, %v8460, 0.0
  %v9013 = vadd.f32 %v9011, %v9012
  %v9014 = vsel %vm252, %v8461, 0.0
  %v9015 = vadd.f32 %v9013, %v9014
  %v9016 = vsel %vm252, %v8462, 0.0
  %v9017 = vadd.f32 %v9015, %v9016
  %v9018 = vsel %vm252, %v8463, 0.0
  %v9019 = vadd.f32 %v9017, %v9018
  %v9020 = vsel %vm252, %v8464, 0.0
  %v9021 = vadd.f32 %v9019, %v9020
  %v9022 = vsel %vm252, %v8465, 0.0
  %v9023 = vadd.f32 %v9021, %v9022
  %v9024 = vrot.slane %v9023, 4
  %v9025 = vadd.f32 %v9023, %v9024
  %v9026 = vrot.slane %v9025, 2
  %v9027 = vadd.f32 %v9025, %v9026
  %v9028 = vrot.slane %v9027, 1
  %v9029 = vadd.f32 %v9027, %v9028
  %v9030 = vsel %vm252, %v8466, 0.0
  %v9031 = vsel %vm252, %v8467, 0.0
  %v9032 = vadd.f32 %v9030, %v9031
  %v9033 = vsel %vm252, %v8468, 0.0
  %v9034 = vadd.f32 %v9032, %v9033
  %v9035 = vsel %vm252, %v8469, 0.0
  %v9036 = vadd.f32 %v9034, %v9035
  %v9037 = vsel %vm252, %v8470, 0.0
  %v9038 = vadd.f32 %v9036, %v9037
  %v9039 = vsel %vm252, %v8471, 0.0
  %v9040 = vadd.f32 %v9038, %v9039
  %v9041 = vsel %vm252, %v8472, 0.0
  %v9042 = vadd.f32 %v9040, %v9041
  %v9043 = vsel %vm252, %v8473, 0.0
  %v9044 = vadd.f32 %v9042, %v9043
  %v9045 = vrot.slane %v9044, 4
  %v9046 = vadd.f32 %v9044, %v9045
  %v9047 = vrot.slane %v9046, 2
  %v9048 = vadd.f32 %v9046, %v9047
  %v9049 = vrot.slane %v9048, 1
  %v9050 = vadd.f32 %v9048, %v9049
  %v9051 = vsel %vm252, %v8474, 0.0
  %v9052 = vsel %vm252, %v8475, 0.0
  %v9053 = vadd.f32 %v9051, %v9052
  %v9054 = vsel %vm252, %v8476, 0.0
  %v9055 = vadd.f32 %v9053, %v9054
  %v9056 = vsel %vm252, %v8477, 0.0
  %v9057 = vadd.f32 %v9055, %v9056
  %v9058 = vsel %vm252, %v8478, 0.0
  %v9059 = vadd.f32 %v9057, %v9058
  %v9060 = vsel %vm252, %v8479, 0.0
  %v9061 = vadd.f32 %v9059, %v9060
  %v9062 = vsel %vm252, %v8480, 0.0
  %v9063 = vadd.f32 %v9061, %v9062
  %v9064 = vsel %vm252, %v8481, 0.0
  %v9065 = vadd.f32 %v9063, %v9064
  %v9066 = vrot.slane %v9065, 4
  %v9067 = vadd.f32 %v9065, %v9066
  %v9068 = vrot.slane %v9067, 2
  %v9069 = vadd.f32 %v9067, %v9068
  %v9070 = vrot.slane %v9069, 1
  %v9071 = vadd.f32 %v9069, %v9070
  %v9072 = vsel %vm252, %v8482, 0.0
  %v9073 = vsel %vm252, %v8483, 0.0
  %v9074 = vadd.f32 %v9072, %v9073
  %v9075 = vsel %vm252, %v8484, 0.0
  %v9076 = vadd.f32 %v9074, %v9075
  %v9077 = vsel %vm252, %v8485, 0.0
  %v9078 = vadd.f32 %v9076, %v9077
  %v9079 = vsel %vm252, %v8486, 0.0
  %v9080 = vadd.f32 %v9078, %v9079
  %v9081 = vsel %vm252, %v8487, 0.0
  %v9082 = vadd.f32 %v9080, %v9081
  %v9083 = vsel %vm252, %v8488, 0.0
  %v9084 = vadd.f32 %v9082, %v9083
  %v9085 = vsel %vm252, %v8489, 0.0
  %v9086 = vadd.f32 %v9084, %v9085
  %v9087 = vrot.slane %v9086, 4
  %v9088 = vadd.f32 %v9086, %v9087
  %v9089 = vrot.slane %v9088, 2
  %v9090 = vadd.f32 %v9088, %v9089
  %v9091 = vrot.slane %v9090, 1
  %v9092 = vadd.f32 %v9090, %v9091
  %v9093 = vsel %vm252, %v8490, 0.0
  %v9094 = vsel %vm252, %v8491, 0.0
  %v9095 = vadd.f32 %v9093, %v9094
  %v9096 = vsel %vm252, %v8492, 0.0
  %v9097 = vadd.f32 %v9095, %v9096
  %v9098 = vsel %vm252, %v8493, 0.0
  %v9099 = vadd.f32 %v9097, %v9098
  %v9100 = vsel %vm252, %v8494, 0.0
  %v9101 = vadd.f32 %v9099, %v9100
  %v9102 = vsel %vm252, %v8495, 0.0
  %v9103 = vadd.f32 %v9101, %v9102
  %v9104 = vsel %vm252, %v8496, 0.0
  %v9105 = vadd.f32 %v9103, %v9104
  %v9106 = vsel %vm252, %v8497, 0.0
  %v9107 = vadd.f32 %v9105, %v9106
  %v9108 = vrot.slane %v9107, 4
  %v9109 = vadd.f32 %v9107, %v9108
  %v9110 = vrot.slane %v9109, 2
  %v9111 = vadd.f32 %v9109, %v9110
  %v9112 = vrot.slane %v9111, 1
  %v9113 = vadd.f32 %v9111, %v9112
  %v9114 = vsel %vm252, %v8498, 0.0
  %v9115 = vsel %vm252, %v8499, 0.0
  %v9116 = vadd.f32 %v9114, %v9115
  %v9117 = vsel %vm252, %v8500, 0.0
  %v9118 = vadd.f32 %v9116, %v9117
  %v9119 = vsel %vm252, %v8501, 0.0
  %v9120 = vadd.f32 %v9118, %v9119
  %v9121 = vsel %vm252, %v8502, 0.0
  %v9122 = vadd.f32 %v9120, %v9121
  %v9123 = vsel %vm252, %v8503, 0.0
  %v9124 = vadd.f32 %v9122, %v9123
  %v9125 = vsel %vm252, %v8504, 0.0
  %v9126 = vadd.f32 %v9124, %v9125
  %v9127 = vsel %vm252, %v8505, 0.0
  %v9128 = vadd.f32 %v9126, %v9127
  %v9129 = vrot.slane %v9128, 4
  %v9130 = vadd.f32 %v9128, %v9129
  %v9131 = vrot.slane %v9130, 2
  %v9132 = vadd.f32 %v9130, %v9131
  %v9133 = vrot.slane %v9132, 1
  %v9134 = vadd.f32 %v9132, %v9133
  %v9135 = vsel %vm252, %v8506, 0.0
  %v9136 = vsel %vm252, %v8507, 0.0
  %v9137 = vadd.f32 %v9135, %v9136
  %v9138 = vsel %vm252, %v8508, 0.0
  %v9139 = vadd.f32 %v9137, %v9138
  %v9140 = vsel %vm252, %v8509, 0.0
  %v9141 = vadd.f32 %v9139, %v9140
  %v9142 = vsel %vm252, %v8510, 0.0
  %v9143 = vadd.f32 %v9141, %v9142
  %v9144 = vsel %vm252, %v8511, 0.0
  %v9145 = vadd.f32 %v9143, %v9144
  %v9146 = vsel %vm252, %v8512, 0.0
  %v9147 = vadd.f32 %v9145, %v9146
  %v9148 = vsel %vm252, %v8513, 0.0
  %v9149 = vadd.f32 %v9147, %v9148
  %v9150 = vrot.slane %v9149, 4
  %v9151 = vadd.f32 %v9149, %v9150
  %v9152 = vrot.slane %v9151, 2
  %v9153 = vadd.f32 %v9151, %v9152
  %v9154 = vrot.slane %v9153, 1
  %v9155 = vadd.f32 %v9153, %v9154
  %v9156 = vsel %vm252, %v8514, 0.0
  %v9157 = vsel %vm252, %v8515, 0.0
  %v9158 = vadd.f32 %v9156, %v9157
  %v9159 = vsel %vm252, %v8516, 0.0
  %v9160 = vadd.f32 %v9158, %v9159
  %v9161 = vsel %vm252, %v8517, 0.0
  %v9162 = vadd.f32 %v9160, %v9161
  %v9163 = vsel %vm252, %v8518, 0.0
  %v9164 = vadd.f32 %v9162, %v9163
  %v9165 = vsel %vm252, %v8519, 0.0
  %v9166 = vadd.f32 %v9164, %v9165
  %v9167 = vsel %vm252, %v8520, 0.0
  %v9168 = vadd.f32 %v9166, %v9167
  %v9169 = vsel %vm252, %v8521, 0.0
  %v9170 = vadd.f32 %v9168, %v9169
  %v9171 = vrot.slane %v9170, 4
  %v9172 = vadd.f32 %v9170, %v9171
  %v9173 = vrot.slane %v9172, 2
  %v9174 = vadd.f32 %v9172, %v9173
  %v9175 = vrot.slane %v9174, 1
  %v9176 = vadd.f32 %v9174, %v9175
  %v9177 = vsel %vm252, %v8522, 0.0
  %v9178 = vsel %vm252, %v8523, 0.0
  %v9179 = vadd.f32 %v9177, %v9178
  %v9180 = vsel %vm252, %v8524, 0.0
  %v9181 = vadd.f32 %v9179, %v9180
  %v9182 = vsel %vm252, %v8525, 0.0
  %v9183 = vadd.f32 %v9181, %v9182
  %v9184 = vsel %vm252, %v8526, 0.0
  %v9185 = vadd.f32 %v9183, %v9184
  %v9186 = vsel %vm252, %v8527, 0.0
  %v9187 = vadd.f32 %v9185, %v9186
  %v9188 = vsel %vm252, %v8528, 0.0
  %v9189 = vadd.f32 %v9187, %v9188
  %v9190 = vsel %vm252, %v8529, 0.0
  %v9191 = vadd.f32 %v9189, %v9190
  %v9192 = vrot.slane %v9191, 4
  %v9193 = vadd.f32 %v9191, %v9192
  %v9194 = vrot.slane %v9193, 2
  %v9195 = vadd.f32 %v9193, %v9194
  %v9196 = vrot.slane %v9195, 1
  %v9197 = vadd.f32 %v9195, %v9196
  %v9198 = vsel %vm252, %v8530, 0.0
  %v9199 = vsel %vm252, %v8531, 0.0
  %v9200 = vadd.f32 %v9198, %v9199
  %v9201 = vsel %vm252, %v8532, 0.0
  %v9202 = vadd.f32 %v9200, %v9201
  %v9203 = vsel %vm252, %v8533, 0.0
  %v9204 = vadd.f32 %v9202, %v9203
  %v9205 = vsel %vm252, %v8534, 0.0
  %v9206 = vadd.f32 %v9204, %v9205
  %v9207 = vsel %vm252, %v8535, 0.0
  %v9208 = vadd.f32 %v9206, %v9207
  %v9209 = vsel %vm252, %v8536, 0.0
  %v9210 = vadd.f32 %v9208, %v9209
  %v9211 = vsel %vm252, %v8537, 0.0
  %v9212 = vadd.f32 %v9210, %v9211
  %v9213 = vrot.slane %v9212, 4
  %v9214 = vadd.f32 %v9212, %v9213
  %v9215 = vrot.slane %v9214, 2
  %v9216 = vadd.f32 %v9214, %v9215
  %v9217 = vrot.slane %v9216, 1
  %v9218 = vadd.f32 %v9216, %v9217
  %v9219 = vsel %vm252, %v8538, 0.0
  %v9220 = vsel %vm252, %v8539, 0.0
  %v9221 = vadd.f32 %v9219, %v9220
  %v9222 = vsel %vm252, %v8540, 0.0
  %v9223 = vadd.f32 %v9221, %v9222
  %v9224 = vsel %vm252, %v8541, 0.0
  %v9225 = vadd.f32 %v9223, %v9224
  %v9226 = vsel %vm252, %v8542, 0.0
  %v9227 = vadd.f32 %v9225, %v9226
  %v9228 = vsel %vm252, %v8543, 0.0
  %v9229 = vadd.f32 %v9227, %v9228
  %v9230 = vsel %vm252, %v8544, 0.0
  %v9231 = vadd.f32 %v9229, %v9230
  %v9232 = vsel %vm252, %v8545, 0.0
  %v9233 = vadd.f32 %v9231, %v9232
  %v9234 = vrot.slane %v9233, 4
  %v9235 = vadd.f32 %v9233, %v9234
  %v9236 = vrot.slane %v9235, 2
  %v9237 = vadd.f32 %v9235, %v9236
  %v9238 = vrot.slane %v9237, 1
  %v9239 = vadd.f32 %v9237, %v9238
  %v9240 = vsel %vm252, %v8546, 0.0
  %v9241 = vsel %vm252, %v8547, 0.0
  %v9242 = vadd.f32 %v9240, %v9241
  %v9243 = vsel %vm252, %v8548, 0.0
  %v9244 = vadd.f32 %v9242, %v9243
  %v9245 = vsel %vm252, %v8549, 0.0
  %v9246 = vadd.f32 %v9244, %v9245
  %v9247 = vsel %vm252, %v8550, 0.0
  %v9248 = vadd.f32 %v9246, %v9247
  %v9249 = vsel %vm252, %v8551, 0.0
  %v9250 = vadd.f32 %v9248, %v9249
  %v9251 = vsel %vm252, %v8552, 0.0
  %v9252 = vadd.f32 %v9250, %v9251
  %v9253 = vsel %vm252, %v8553, 0.0
  %v9254 = vadd.f32 %v9252, %v9253
  %v9255 = vrot.slane %v9254, 4
  %v9256 = vadd.f32 %v9254, %v9255
  %v9257 = vrot.slane %v9256, 2
  %v9258 = vadd.f32 %v9256, %v9257
  %v9259 = vrot.slane %v9258, 1
  %v9260 = vadd.f32 %v9258, %v9259
  %v9261 = vsel %vm252, %v8554, 0.0
  %v9262 = vsel %vm252, %v8555, 0.0
  %v9263 = vadd.f32 %v9261, %v9262
  %v9264 = vsel %vm252, %v8556, 0.0
  %v9265 = vadd.f32 %v9263, %v9264
  %v9266 = vsel %vm252, %v8557, 0.0
  %v9267 = vadd.f32 %v9265, %v9266
  %v9268 = vsel %vm252, %v8558, 0.0
  %v9269 = vadd.f32 %v9267, %v9268
  %v9270 = vsel %vm252, %v8559, 0.0
  %v9271 = vadd.f32 %v9269, %v9270
  %v9272 = vsel %vm252, %v8560, 0.0
  %v9273 = vadd.f32 %v9271, %v9272
  %v9274 = vsel %vm252, %v8561, 0.0
  %v9275 = vadd.f32 %v9273, %v9274
  %v9276 = vrot.slane %v9275, 4
  %v9277 = vadd.f32 %v9275, %v9276
  %v9278 = vrot.slane %v9277, 2
  %v9279 = vadd.f32 %v9277, %v9278
  %v9280 = vrot.slane %v9279, 1
  %v9281 = vadd.f32 %v9279, %v9280
  %v9282 = vsel %vm252, %v8562, 0.0
  %v9283 = vsel %vm252, %v8563, 0.0
  %v9284 = vadd.f32 %v9282, %v9283
  %v9285 = vsel %vm252, %v8564, 0.0
  %v9286 = vadd.f32 %v9284, %v9285
  %v9287 = vsel %vm252, %v8565, 0.0
  %v9288 = vadd.f32 %v9286, %v9287
  %v9289 = vsel %vm252, %v8566, 0.0
  %v9290 = vadd.f32 %v9288, %v9289
  %v9291 = vsel %vm252, %v8567, 0.0
  %v9292 = vadd.f32 %v9290, %v9291
  %v9293 = vsel %vm252, %v8568, 0.0
  %v9294 = vadd.f32 %v9292, %v9293
  %v9295 = vsel %vm252, %v8569, 0.0
  %v9296 = vadd.f32 %v9294, %v9295
  %v9297 = vrot.slane %v9296, 4
  %v9298 = vadd.f32 %v9296, %v9297
  %v9299 = vrot.slane %v9298, 2
  %v9300 = vadd.f32 %v9298, %v9299
  %v9301 = vrot.slane %v9300, 1
  %v9302 = vadd.f32 %v9300, %v9301
  %v9303 = vsel %vm252, %v8570, 0.0
  %v9304 = vsel %vm252, %v8571, 0.0
  %v9305 = vadd.f32 %v9303, %v9304
  %v9306 = vsel %vm252, %v8572, 0.0
  %v9307 = vadd.f32 %v9305, %v9306
  %v9308 = vsel %vm252, %v8573, 0.0
  %v9309 = vadd.f32 %v9307, %v9308
  %v9310 = vsel %vm252, %v8574, 0.0
  %v9311 = vadd.f32 %v9309, %v9310
  %v9312 = vsel %vm252, %v8575, 0.0
  %v9313 = vadd.f32 %v9311, %v9312
  %v9314 = vsel %vm252, %v8576, 0.0
  %v9315 = vadd.f32 %v9313, %v9314
  %v9316 = vsel %vm252, %v8577, 0.0
  %v9317 = vadd.f32 %v9315, %v9316
  %v9318 = vrot.slane %v9317, 4
  %v9319 = vadd.f32 %v9317, %v9318
  %v9320 = vrot.slane %v9319, 2
  %v9321 = vadd.f32 %v9319, %v9320
  %v9322 = vrot.slane %v9321, 1
  %v9323 = vadd.f32 %v9321, %v9322
  %v9324 = vsel %vm252, %v8578, 0.0
  %v9325 = vsel %vm252, %v8579, 0.0
  %v9326 = vadd.f32 %v9324, %v9325
  %v9327 = vsel %vm252, %v8580, 0.0
  %v9328 = vadd.f32 %v9326, %v9327
  %v9329 = vsel %vm252, %v8581, 0.0
  %v9330 = vadd.f32 %v9328, %v9329
  %v9331 = vsel %vm252, %v8582, 0.0
  %v9332 = vadd.f32 %v9330, %v9331
  %v9333 = vsel %vm252, %v8583, 0.0
  %v9334 = vadd.f32 %v9332, %v9333
  %v9335 = vsel %vm252, %v8584, 0.0
  %v9336 = vadd.f32 %v9334, %v9335
  %v9337 = vsel %vm252, %v8585, 0.0
  %v9338 = vadd.f32 %v9336, %v9337
  %v9339 = vrot.slane %v9338, 4
  %v9340 = vadd.f32 %v9338, %v9339
  %v9341 = vrot.slane %v9340, 2
  %v9342 = vadd.f32 %v9340, %v9341
  %v9343 = vrot.slane %v9342, 1
  %v9344 = vadd.f32 %v9342, %v9343
  %v9345 = vsel %vm252, %v8586, 0.0
  %v9346 = vsel %vm252, %v8587, 0.0
  %v9347 = vadd.f32 %v9345, %v9346
  %v9348 = vsel %vm252, %v8588, 0.0
  %v9349 = vadd.f32 %v9347, %v9348
  %v9350 = vsel %vm252, %v8589, 0.0
  %v9351 = vadd.f32 %v9349, %v9350
  %v9352 = vsel %vm252, %v8590, 0.0
  %v9353 = vadd.f32 %v9351, %v9352
  %v9354 = vsel %vm252, %v8591, 0.0
  %v9355 = vadd.f32 %v9353, %v9354
  %v9356 = vsel %vm252, %v8592, 0.0
  %v9357 = vadd.f32 %v9355, %v9356
  %v9358 = vsel %vm252, %v8593, 0.0
  %v9359 = vadd.f32 %v9357, %v9358
  %v9360 = vrot.slane %v9359, 4
  %v9361 = vadd.f32 %v9359, %v9360
  %v9362 = vrot.slane %v9361, 2
  %v9363 = vadd.f32 %v9361, %v9362
  %v9364 = vrot.slane %v9363, 1
  %v9365 = vadd.f32 %v9363, %v9364
  %v9366 = vsel %vm252, %v8594, 0.0
  %v9367 = vsel %vm252, %v8595, 0.0
  %v9368 = vadd.f32 %v9366, %v9367
  %v9369 = vsel %vm252, %v8596, 0.0
  %v9370 = vadd.f32 %v9368, %v9369
  %v9371 = vsel %vm252, %v8597, 0.0
  %v9372 = vadd.f32 %v9370, %v9371
  %v9373 = vsel %vm252, %v8598, 0.0
  %v9374 = vadd.f32 %v9372, %v9373
  %v9375 = vsel %vm252, %v8599, 0.0
  %v9376 = vadd.f32 %v9374, %v9375
  %v9377 = vsel %vm252, %v8600, 0.0
  %v9378 = vadd.f32 %v9376, %v9377
  %v9379 = vsel %vm252, %v8601, 0.0
  %v9380 = vadd.f32 %v9378, %v9379
  %v9381 = vrot.slane %v9380, 4
  %v9382 = vadd.f32 %v9380, %v9381
  %v9383 = vrot.slane %v9382, 2
  %v9384 = vadd.f32 %v9382, %v9383
  %v9385 = vrot.slane %v9384, 1
  %v9386 = vadd.f32 %v9384, %v9385
  %v9387 = vsel %vm252, %v8602, 0.0
  %v9388 = vsel %vm252, %v8603, 0.0
  %v9389 = vadd.f32 %v9387, %v9388
  %v9390 = vsel %vm252, %v8604, 0.0
  %v9391 = vadd.f32 %v9389, %v9390
  %v9392 = vsel %vm252, %v8605, 0.0
  %v9393 = vadd.f32 %v9391, %v9392
  %v9394 = vsel %vm252, %v8606, 0.0
  %v9395 = vadd.f32 %v9393, %v9394
  %v9396 = vsel %vm252, %v8607, 0.0
  %v9397 = vadd.f32 %v9395, %v9396
  %v9398 = vsel %vm252, %v8608, 0.0
  %v9399 = vadd.f32 %v9397, %v9398
  %v9400 = vsel %vm252, %v8609, 0.0
  %v9401 = vadd.f32 %v9399, %v9400
  %v9402 = vrot.slane %v9401, 4
  %v9403 = vadd.f32 %v9401, %v9402
  %v9404 = vrot.slane %v9403, 2
  %v9405 = vadd.f32 %v9403, %v9404
  %v9406 = vrot.slane %v9405, 1
  %v9407 = vadd.f32 %v9405, %v9406
  %v9408 = vsel %vm252, %v8610, 0.0
  %v9409 = vsel %vm252, %v8611, 0.0
  %v9410 = vadd.f32 %v9408, %v9409
  %v9411 = vsel %vm252, %v8612, 0.0
  %v9412 = vadd.f32 %v9410, %v9411
  %v9413 = vsel %vm252, %v8613, 0.0
  %v9414 = vadd.f32 %v9412, %v9413
  %v9415 = vsel %vm252, %v8614, 0.0
  %v9416 = vadd.f32 %v9414, %v9415
  %v9417 = vsel %vm252, %v8615, 0.0
  %v9418 = vadd.f32 %v9416, %v9417
  %v9419 = vsel %vm252, %v8616, 0.0
  %v9420 = vadd.f32 %v9418, %v9419
  %v9421 = vsel %vm252, %v8617, 0.0
  %v9422 = vadd.f32 %v9420, %v9421
  %v9423 = vrot.slane %v9422, 4
  %v9424 = vadd.f32 %v9422, %v9423
  %v9425 = vrot.slane %v9424, 2
  %v9426 = vadd.f32 %v9424, %v9425
  %v9427 = vrot.slane %v9426, 1
  %v9428 = vadd.f32 %v9426, %v9427
  %v9429 = vsel %vm252, %v8618, 0.0
  %v9430 = vsel %vm252, %v8619, 0.0
  %v9431 = vadd.f32 %v9429, %v9430
  %v9432 = vsel %vm252, %v8620, 0.0
  %v9433 = vadd.f32 %v9431, %v9432
  %v9434 = vsel %vm252, %v8621, 0.0
  %v9435 = vadd.f32 %v9433, %v9434
  %v9436 = vsel %vm252, %v8622, 0.0
  %v9437 = vadd.f32 %v9435, %v9436
  %v9438 = vsel %vm252, %v8623, 0.0
  %v9439 = vadd.f32 %v9437, %v9438
  %v9440 = vsel %vm252, %v8624, 0.0
  %v9441 = vadd.f32 %v9439, %v9440
  %v9442 = vsel %vm252, %v8625, 0.0
  %v9443 = vadd.f32 %v9441, %v9442
  %v9444 = vrot.slane %v9443, 4
  %v9445 = vadd.f32 %v9443, %v9444
  %v9446 = vrot.slane %v9445, 2
  %v9447 = vadd.f32 %v9445, %v9446
  %v9448 = vrot.slane %v9447, 1
  %v9449 = vadd.f32 %v9447, %v9448
  %v9450 = vsel %vm252, %v8626, 0.0
  %v9451 = vsel %vm252, %v8627, 0.0
  %v9452 = vadd.f32 %v9450, %v9451
  %v9453 = vsel %vm252, %v8628, 0.0
  %v9454 = vadd.f32 %v9452, %v9453
  %v9455 = vsel %vm252, %v8629, 0.0
  %v9456 = vadd.f32 %v9454, %v9455
  %v9457 = vsel %vm252, %v8630, 0.0
  %v9458 = vadd.f32 %v9456, %v9457
  %v9459 = vsel %vm252, %v8631, 0.0
  %v9460 = vadd.f32 %v9458, %v9459
  %v9461 = vsel %vm252, %v8632, 0.0
  %v9462 = vadd.f32 %v9460, %v9461
  %v9463 = vsel %vm252, %v8633, 0.0
  %v9464 = vadd.f32 %v9462, %v9463
  %v9465 = vrot.slane %v9464, 4
  %v9466 = vadd.f32 %v9464, %v9465
  %v9467 = vrot.slane %v9466, 2
  %v9468 = vadd.f32 %v9466, %v9467
  %v9469 = vrot.slane %v9468, 1
  %v9470 = vadd.f32 %v9468, %v9469
  %v9471 = vsel %vm252, %v8634, 0.0
  %v9472 = vsel %vm252, %v8635, 0.0
  %v9473 = vadd.f32 %v9471, %v9472
  %v9474 = vsel %vm252, %v8636, 0.0
  %v9475 = vadd.f32 %v9473, %v9474
  %v9476 = vsel %vm252, %v8637, 0.0
  %v9477 = vadd.f32 %v9475, %v9476
  %v9478 = vsel %vm252, %v8638, 0.0
  %v9479 = vadd.f32 %v9477, %v9478
  %v9480 = vsel %vm252, %v8639, 0.0
  %v9481 = vadd.f32 %v9479, %v9480
  %v9482 = vsel %vm252, %v8640, 0.0
  %v9483 = vadd.f32 %v9481, %v9482
  %v9484 = vsel %vm252, %v8641, 0.0
  %v9485 = vadd.f32 %v9483, %v9484
  %v9486 = vrot.slane %v9485, 4
  %v9487 = vadd.f32 %v9485, %v9486
  %v9488 = vrot.slane %v9487, 2
  %v9489 = vadd.f32 %v9487, %v9488
  %v9490 = vrot.slane %v9489, 1
  %v9491 = vadd.f32 %v9489, %v9490
  %v9492 = vsel %vm252, %v8642, 0.0
  %v9493 = vsel %vm252, %v8643, 0.0
  %v9494 = vadd.f32 %v9492, %v9493
  %v9495 = vsel %vm252, %v8644, 0.0
  %v9496 = vadd.f32 %v9494, %v9495
  %v9497 = vsel %vm252, %v8645, 0.0
  %v9498 = vadd.f32 %v9496, %v9497
  %v9499 = vsel %vm252, %v8646, 0.0
  %v9500 = vadd.f32 %v9498, %v9499
  %v9501 = vsel %vm252, %v8647, 0.0
  %v9502 = vadd.f32 %v9500, %v9501
  %v9503 = vsel %vm252, %v8648, 0.0
  %v9504 = vadd.f32 %v9502, %v9503
  %v9505 = vsel %vm252, %v8649, 0.0
  %v9506 = vadd.f32 %v9504, %v9505
  %v9507 = vrot.slane %v9506, 4
  %v9508 = vadd.f32 %v9506, %v9507
  %v9509 = vrot.slane %v9508, 2
  %v9510 = vadd.f32 %v9508, %v9509
  %v9511 = vrot.slane %v9510, 1
  %v9512 = vadd.f32 %v9510, %v9511
  %v9513 = vsel %vm252, %v8650, 0.0
  %v9514 = vsel %vm252, %v8651, 0.0
  %v9515 = vadd.f32 %v9513, %v9514
  %v9516 = vsel %vm252, %v8652, 0.0
  %v9517 = vadd.f32 %v9515, %v9516
  %v9518 = vsel %vm252, %v8653, 0.0
  %v9519 = vadd.f32 %v9517, %v9518
  %v9520 = vsel %vm252, %v8654, 0.0
  %v9521 = vadd.f32 %v9519, %v9520
  %v9522 = vsel %vm252, %v8655, 0.0
  %v9523 = vadd.f32 %v9521, %v9522
  %v9524 = vsel %vm252, %v8656, 0.0
  %v9525 = vadd.f32 %v9523, %v9524
  %v9526 = vsel %vm252, %v8657, 0.0
  %v9527 = vadd.f32 %v9525, %v9526
  %v9528 = vrot.slane %v9527, 4
  %v9529 = vadd.f32 %v9527, %v9528
  %v9530 = vrot.slane %v9529, 2
  %v9531 = vadd.f32 %v9529, %v9530
  %v9532 = vrot.slane %v9531, 1
  %v9533 = vadd.f32 %v9531, %v9532
  %v9534 = vsel %vm252, %v8658, 0.0
  %v9535 = vsel %vm252, %v8659, 0.0
  %v9536 = vadd.f32 %v9534, %v9535
  %v9537 = vsel %vm252, %v8660, 0.0
  %v9538 = vadd.f32 %v9536, %v9537
  %v9539 = vsel %vm252, %v8661, 0.0
  %v9540 = vadd.f32 %v9538, %v9539
  %v9541 = vsel %vm252, %v8662, 0.0
  %v9542 = vadd.f32 %v9540, %v9541
  %v9543 = vsel %vm252, %v8663, 0.0
  %v9544 = vadd.f32 %v9542, %v9543
  %v9545 = vsel %vm252, %v8664, 0.0
  %v9546 = vadd.f32 %v9544, %v9545
  %v9547 = vsel %vm252, %v8665, 0.0
  %v9548 = vadd.f32 %v9546, %v9547
  %v9549 = vrot.slane %v9548, 4
  %v9550 = vadd.f32 %v9548, %v9549
  %v9551 = vrot.slane %v9550, 2
  %v9552 = vadd.f32 %v9550, %v9551
  %v9553 = vrot.slane %v9552, 1
  %v9554 = vadd.f32 %v9552, %v9553
  %v9555 = vsel %vm252, %v8666, 0.0
  %v9556 = vsel %vm252, %v8667, 0.0
  %v9557 = vadd.f32 %v9555, %v9556
  %v9558 = vsel %vm252, %v8668, 0.0
  %v9559 = vadd.f32 %v9557, %v9558
  %v9560 = vsel %vm252, %v8669, 0.0
  %v9561 = vadd.f32 %v9559, %v9560
  %v9562 = vsel %vm252, %v8670, 0.0
  %v9563 = vadd.f32 %v9561, %v9562
  %v9564 = vsel %vm252, %v8671, 0.0
  %v9565 = vadd.f32 %v9563, %v9564
  %v9566 = vsel %vm252, %v8672, 0.0
  %v9567 = vadd.f32 %v9565, %v9566
  %v9568 = vsel %vm252, %v8673, 0.0
  %v9569 = vadd.f32 %v9567, %v9568
  %v9570 = vrot.slane %v9569, 4
  %v9571 = vadd.f32 %v9569, %v9570
  %v9572 = vrot.slane %v9571, 2
  %v9573 = vadd.f32 %v9571, %v9572
  %v9574 = vrot.slane %v9573, 1
  %v9575 = vadd.f32 %v9573, %v9574
  %v9576 = vsel %vm252, %v8674, 0.0
  %v9577 = vsel %vm252, %v8675, 0.0
  %v9578 = vadd.f32 %v9576, %v9577
  %v9579 = vsel %vm252, %v8676, 0.0
  %v9580 = vadd.f32 %v9578, %v9579
  %v9581 = vsel %vm252, %v8677, 0.0
  %v9582 = vadd.f32 %v9580, %v9581
  %v9583 = vsel %vm252, %v8678, 0.0
  %v9584 = vadd.f32 %v9582, %v9583
  %v9585 = vsel %vm252, %v8679, 0.0
  %v9586 = vadd.f32 %v9584, %v9585
  %v9587 = vsel %vm252, %v8680, 0.0
  %v9588 = vadd.f32 %v9586, %v9587
  %v9589 = vsel %vm252, %v8681, 0.0
  %v9590 = vadd.f32 %v9588, %v9589
  %v9591 = vrot.slane %v9590, 4
  %v9592 = vadd.f32 %v9590, %v9591
  %v9593 = vrot.slane %v9592, 2
  %v9594 = vadd.f32 %v9592, %v9593
  %v9595 = vrot.slane %v9594, 1
  %v9596 = vadd.f32 %v9594, %v9595
  %v9597 = vsel %vm252, %v8682, 0.0
  %v9598 = vsel %vm252, %v8683, 0.0
  %v9599 = vadd.f32 %v9597, %v9598
  %v9600 = vsel %vm252, %v8684, 0.0
  %v9601 = vadd.f32 %v9599, %v9600
  %v9602 = vsel %vm252, %v8685, 0.0
  %v9603 = vadd.f32 %v9601, %v9602
  %v9604 = vsel %vm252, %v8686, 0.0
  %v9605 = vadd.f32 %v9603, %v9604
  %v9606 = vsel %vm252, %v8687, 0.0
  %v9607 = vadd.f32 %v9605, %v9606
  %v9608 = vsel %vm252, %v8688, 0.0
  %v9609 = vadd.f32 %v9607, %v9608
  %v9610 = vsel %vm252, %v8689, 0.0
  %v9611 = vadd.f32 %v9609, %v9610
  %v9612 = vrot.slane %v9611, 4
  %v9613 = vadd.f32 %v9611, %v9612
  %v9614 = vrot.slane %v9613, 2
  %v9615 = vadd.f32 %v9613, %v9614
  %v9616 = vrot.slane %v9615, 1
  %v9617 = vadd.f32 %v9615, %v9616
  %v9618 = vsel %vm252, %v8690, 0.0
  %v9619 = vsel %vm252, %v8691, 0.0
  %v9620 = vadd.f32 %v9618, %v9619
  %v9621 = vsel %vm252, %v8692, 0.0
  %v9622 = vadd.f32 %v9620, %v9621
  %v9623 = vsel %vm252, %v8693, 0.0
  %v9624 = vadd.f32 %v9622, %v9623
  %v9625 = vsel %vm252, %v8694, 0.0
  %v9626 = vadd.f32 %v9624, %v9625
  %v9627 = vsel %vm252, %v8695, 0.0
  %v9628 = vadd.f32 %v9626, %v9627
  %v9629 = vsel %vm252, %v8696, 0.0
  %v9630 = vadd.f32 %v9628, %v9629
  %v9631 = vsel %vm252, %v8697, 0.0
  %v9632 = vadd.f32 %v9630, %v9631
  %v9633 = vrot.slane %v9632, 4
  %v9634 = vadd.f32 %v9632, %v9633
  %v9635 = vrot.slane %v9634, 2
  %v9636 = vadd.f32 %v9634, %v9635
  %v9637 = vrot.slane %v9636, 1
  %v9638 = vadd.f32 %v9636, %v9637
  %v9639 = vsel %vm252, %v8698, 0.0
  %v9640 = vsel %vm252, %v8699, 0.0
  %v9641 = vadd.f32 %v9639, %v9640
  %v9642 = vsel %vm252, %v8700, 0.0
  %v9643 = vadd.f32 %v9641, %v9642
  %v9644 = vsel %vm252, %v8701, 0.0
  %v9645 = vadd.f32 %v9643, %v9644
  %v9646 = vsel %vm252, %v8702, 0.0
  %v9647 = vadd.f32 %v9645, %v9646
  %v9648 = vsel %vm252, %v8703, 0.0
  %v9649 = vadd.f32 %v9647, %v9648
  %v9650 = vsel %vm252, %v8704, 0.0
  %v9651 = vadd.f32 %v9649, %v9650
  %v9652 = vsel %vm252, %v8705, 0.0
  %v9653 = vadd.f32 %v9651, %v9652
  %v9654 = vrot.slane %v9653, 4
  %v9655 = vadd.f32 %v9653, %v9654
  %v9656 = vrot.slane %v9655, 2
  %v9657 = vadd.f32 %v9655, %v9656
  %v9658 = vrot.slane %v9657, 1
  %v9659 = vadd.f32 %v9657, %v9658
  %v9660 = vsel %vm252, %v8706, 0.0
  %v9661 = vsel %vm252, %v8707, 0.0
  %v9662 = vadd.f32 %v9660, %v9661
  %v9663 = vsel %vm252, %v8708, 0.0
  %v9664 = vadd.f32 %v9662, %v9663
  %v9665 = vsel %vm252, %v8709, 0.0
  %v9666 = vadd.f32 %v9664, %v9665
  %v9667 = vsel %vm252, %v8710, 0.0
  %v9668 = vadd.f32 %v9666, %v9667
  %v9669 = vsel %vm252, %v8711, 0.0
  %v9670 = vadd.f32 %v9668, %v9669
  %v9671 = vsel %vm252, %v8712, 0.0
  %v9672 = vadd.f32 %v9670, %v9671
  %v9673 = vsel %vm252, %v8713, 0.0
  %v9674 = vadd.f32 %v9672, %v9673
  %v9675 = vrot.slane %v9674, 4
  %v9676 = vadd.f32 %v9674, %v9675
  %v9677 = vrot.slane %v9676, 2
  %v9678 = vadd.f32 %v9676, %v9677
  %v9679 = vrot.slane %v9678, 1
  %v9680 = vadd.f32 %v9678, %v9679
  %v9681 = vsel %vm252, %v8714, 0.0
  %v9682 = vsel %vm252, %v8715, 0.0
  %v9683 = vadd.f32 %v9681, %v9682
  %v9684 = vsel %vm252, %v8716, 0.0
  %v9685 = vadd.f32 %v9683, %v9684
  %v9686 = vsel %vm252, %v8717, 0.0
  %v9687 = vadd.f32 %v9685, %v9686
  %v9688 = vsel %vm252, %v8718, 0.0
  %v9689 = vadd.f32 %v9687, %v9688
  %v9690 = vsel %vm252, %v8719, 0.0
  %v9691 = vadd.f32 %v9689, %v9690
  %v9692 = vsel %vm252, %v8720, 0.0
  %v9693 = vadd.f32 %v9691, %v9692
  %v9694 = vsel %vm252, %v8721, 0.0
  %v9695 = vadd.f32 %v9693, %v9694
  %v9696 = vrot.slane %v9695, 4
  %v9697 = vadd.f32 %v9695, %v9696
  %v9698 = vrot.slane %v9697, 2
  %v9699 = vadd.f32 %v9697, %v9698
  %v9700 = vrot.slane %v9699, 1
  %v9701 = vadd.f32 %v9699, %v9700
  %v9702 = vsel %vm252, %v8722, 0.0
  %v9703 = vsel %vm252, %v8723, 0.0
  %v9704 = vadd.f32 %v9702, %v9703
  %v9705 = vsel %vm252, %v8724, 0.0
  %v9706 = vadd.f32 %v9704, %v9705
  %v9707 = vsel %vm252, %v8725, 0.0
  %v9708 = vadd.f32 %v9706, %v9707
  %v9709 = vsel %vm252, %v8726, 0.0
  %v9710 = vadd.f32 %v9708, %v9709
  %v9711 = vsel %vm252, %v8727, 0.0
  %v9712 = vadd.f32 %v9710, %v9711
  %v9713 = vsel %vm252, %v8728, 0.0
  %v9714 = vadd.f32 %v9712, %v9713
  %v9715 = vsel %vm252, %v8729, 0.0
  %v9716 = vadd.f32 %v9714, %v9715
  %v9717 = vrot.slane %v9716, 4
  %v9718 = vadd.f32 %v9716, %v9717
  %v9719 = vrot.slane %v9718, 2
  %v9720 = vadd.f32 %v9718, %v9719
  %v9721 = vrot.slane %v9720, 1
  %v9722 = vadd.f32 %v9720, %v9721
  %v9723 = vsel %vm252, %v8730, 0.0
  %v9724 = vsel %vm252, %v8731, 0.0
  %v9725 = vadd.f32 %v9723, %v9724
  %v9726 = vsel %vm252, %v8732, 0.0
  %v9727 = vadd.f32 %v9725, %v9726
  %v9728 = vsel %vm252, %v8733, 0.0
  %v9729 = vadd.f32 %v9727, %v9728
  %v9730 = vsel %vm252, %v8734, 0.0
  %v9731 = vadd.f32 %v9729, %v9730
  %v9732 = vsel %vm252, %v8735, 0.0
  %v9733 = vadd.f32 %v9731, %v9732
  %v9734 = vsel %vm252, %v8736, 0.0
  %v9735 = vadd.f32 %v9733, %v9734
  %v9736 = vsel %vm252, %v8737, 0.0
  %v9737 = vadd.f32 %v9735, %v9736
  %v9738 = vrot.slane %v9737, 4
  %v9739 = vadd.f32 %v9737, %v9738
  %v9740 = vrot.slane %v9739, 2
  %v9741 = vadd.f32 %v9739, %v9740
  %v9742 = vrot.slane %v9741, 1
  %v9743 = vadd.f32 %v9741, %v9742
  %v9744 = vsel %vm252, %v8738, 0.0
  %v9745 = vsel %vm252, %v8739, 0.0
  %v9746 = vadd.f32 %v9744, %v9745
  %v9747 = vsel %vm252, %v8740, 0.0
  %v9748 = vadd.f32 %v9746, %v9747
  %v9749 = vsel %vm252, %v8741, 0.0
  %v9750 = vadd.f32 %v9748, %v9749
  %v9751 = vsel %vm252, %v8742, 0.0
  %v9752 = vadd.f32 %v9750, %v9751
  %v9753 = vsel %vm252, %v8743, 0.0
  %v9754 = vadd.f32 %v9752, %v9753
  %v9755 = vsel %vm252, %v8744, 0.0
  %v9756 = vadd.f32 %v9754, %v9755
  %v9757 = vsel %vm252, %v8745, 0.0
  %v9758 = vadd.f32 %v9756, %v9757
  %v9759 = vrot.slane %v9758, 4
  %v9760 = vadd.f32 %v9758, %v9759
  %v9761 = vrot.slane %v9760, 2
  %v9762 = vadd.f32 %v9760, %v9761
  %v9763 = vrot.slane %v9762, 1
  %v9764 = vadd.f32 %v9762, %v9763
  %v9765 = vsel %vm252, %v8746, 0.0
  %v9766 = vsel %vm252, %v8747, 0.0
  %v9767 = vadd.f32 %v9765, %v9766
  %v9768 = vsel %vm252, %v8748, 0.0
  %v9769 = vadd.f32 %v9767, %v9768
  %v9770 = vsel %vm252, %v8749, 0.0
  %v9771 = vadd.f32 %v9769, %v9770
  %v9772 = vsel %vm252, %v8750, 0.0
  %v9773 = vadd.f32 %v9771, %v9772
  %v9774 = vsel %vm252, %v8751, 0.0
  %v9775 = vadd.f32 %v9773, %v9774
  %v9776 = vsel %vm252, %v8752, 0.0
  %v9777 = vadd.f32 %v9775, %v9776
  %v9778 = vsel %vm252, %v8753, 0.0
  %v9779 = vadd.f32 %v9777, %v9778
  %v9780 = vrot.slane %v9779, 4
  %v9781 = vadd.f32 %v9779, %v9780
  %v9782 = vrot.slane %v9781, 2
  %v9783 = vadd.f32 %v9781, %v9782
  %v9784 = vrot.slane %v9783, 1
  %v9785 = vadd.f32 %v9783, %v9784
  %v9786 = vsel %vm252, %v8754, 0.0
  %v9787 = vsel %vm252, %v8755, 0.0
  %v9788 = vadd.f32 %v9786, %v9787
  %v9789 = vsel %vm252, %v8756, 0.0
  %v9790 = vadd.f32 %v9788, %v9789
  %v9791 = vsel %vm252, %v8757, 0.0
  %v9792 = vadd.f32 %v9790, %v9791
  %v9793 = vsel %vm252, %v8758, 0.0
  %v9794 = vadd.f32 %v9792, %v9793
  %v9795 = vsel %vm252, %v8759, 0.0
  %v9796 = vadd.f32 %v9794, %v9795
  %v9797 = vsel %vm252, %v8760, 0.0
  %v9798 = vadd.f32 %v9796, %v9797
  %v9799 = vsel %vm252, %v8761, 0.0
  %v9800 = vadd.f32 %v9798, %v9799
  %v9801 = vrot.slane %v9800, 4
  %v9802 = vadd.f32 %v9800, %v9801
  %v9803 = vrot.slane %v9802, 2
  %v9804 = vadd.f32 %v9802, %v9803
  %v9805 = vrot.slane %v9804, 1
  %v9806 = vadd.f32 %v9804, %v9805
  %v9807 = vsel %vm252, %v8762, 0.0
  %v9808 = vsel %vm252, %v8763, 0.0
  %v9809 = vadd.f32 %v9807, %v9808
  %v9810 = vsel %vm252, %v8764, 0.0
  %v9811 = vadd.f32 %v9809, %v9810
  %v9812 = vsel %vm252, %v8765, 0.0
  %v9813 = vadd.f32 %v9811, %v9812
  %v9814 = vsel %vm252, %v8766, 0.0
  %v9815 = vadd.f32 %v9813, %v9814
  %v9816 = vsel %vm252, %v8767, 0.0
  %v9817 = vadd.f32 %v9815, %v9816
  %v9818 = vsel %vm252, %v8768, 0.0
  %v9819 = vadd.f32 %v9817, %v9818
  %v9820 = vsel %vm252, %v8769, 0.0
  %v9821 = vadd.f32 %v9819, %v9820
  %v9822 = vrot.slane %v9821, 4
  %v9823 = vadd.f32 %v9821, %v9822
  %v9824 = vrot.slane %v9823, 2
  %v9825 = vadd.f32 %v9823, %v9824
  %v9826 = vrot.slane %v9825, 1
  %v9827 = vadd.f32 %v9825, %v9826
  %v9828 = vsel %vm252, %v8770, 0.0
  %v9829 = vsel %vm252, %v8771, 0.0
  %v9830 = vadd.f32 %v9828, %v9829
  %v9831 = vsel %vm252, %v8772, 0.0
  %v9832 = vadd.f32 %v9830, %v9831
  %v9833 = vsel %vm252, %v8773, 0.0
  %v9834 = vadd.f32 %v9832, %v9833
  %v9835 = vsel %vm252, %v8774, 0.0
  %v9836 = vadd.f32 %v9834, %v9835
  %v9837 = vsel %vm252, %v8775, 0.0
  %v9838 = vadd.f32 %v9836, %v9837
  %v9839 = vsel %vm252, %v8776, 0.0
  %v9840 = vadd.f32 %v9838, %v9839
  %v9841 = vsel %vm252, %v8777, 0.0
  %v9842 = vadd.f32 %v9840, %v9841
  %v9843 = vrot.slane %v9842, 4
  %v9844 = vadd.f32 %v9842, %v9843
  %v9845 = vrot.slane %v9844, 2
  %v9846 = vadd.f32 %v9844, %v9845
  %v9847 = vrot.slane %v9846, 1
  %v9848 = vadd.f32 %v9846, %v9847
  %v9849 = vsel %vm252, %v8778, 0.0
  %v9850 = vsel %vm252, %v8779, 0.0
  %v9851 = vadd.f32 %v9849, %v9850
  %v9852 = vsel %vm252, %v8780, 0.0
  %v9853 = vadd.f32 %v9851, %v9852
  %v9854 = vsel %vm252, %v8781, 0.0
  %v9855 = vadd.f32 %v9853, %v9854
  %v9856 = vsel %vm252, %v8782, 0.0
  %v9857 = vadd.f32 %v9855, %v9856
  %v9858 = vsel %vm252, %v8783, 0.0
  %v9859 = vadd.f32 %v9857, %v9858
  %v9860 = vsel %vm252, %v8784, 0.0
  %v9861 = vadd.f32 %v9859, %v9860
  %v9862 = vsel %vm252, %v8785, 0.0
  %v9863 = vadd.f32 %v9861, %v9862
  %v9864 = vrot.slane %v9863, 4
  %v9865 = vadd.f32 %v9863, %v9864
  %v9866 = vrot.slane %v9865, 2
  %v9867 = vadd.f32 %v9865, %v9866
  %v9868 = vrot.slane %v9867, 1
  %v9869 = vadd.f32 %v9867, %v9868
  %v9870 = vsel %vm252, %v8786, 0.0
  %v9871 = vsel %vm252, %v8787, 0.0
  %v9872 = vadd.f32 %v9870, %v9871
  %v9873 = vsel %vm252, %v8788, 0.0
  %v9874 = vadd.f32 %v9872, %v9873
  %v9875 = vsel %vm252, %v8789, 0.0
  %v9876 = vadd.f32 %v9874, %v9875
  %v9877 = vsel %vm252, %v8790, 0.0
  %v9878 = vadd.f32 %v9876, %v9877
  %v9879 = vsel %vm252, %v8791, 0.0
  %v9880 = vadd.f32 %v9878, %v9879
  %v9881 = vsel %vm252, %v8792, 0.0
  %v9882 = vadd.f32 %v9880, %v9881
  %v9883 = vsel %vm252, %v8793, 0.0
  %v9884 = vadd.f32 %v9882, %v9883
  %v9885 = vrot.slane %v9884, 4
  %v9886 = vadd.f32 %v9884, %v9885
  %v9887 = vrot.slane %v9886, 2
  %v9888 = vadd.f32 %v9886, %v9887
  %v9889 = vrot.slane %v9888, 1
  %v9890 = vadd.f32 %v9888, %v9889
  %v9891 = vsel %vm252, %v8794, 0.0
  %v9892 = vsel %vm252, %v8795, 0.0
  %v9893 = vadd.f32 %v9891, %v9892
  %v9894 = vsel %vm252, %v8796, 0.0
  %v9895 = vadd.f32 %v9893, %v9894
  %v9896 = vsel %vm252, %v8797, 0.0
  %v9897 = vadd.f32 %v9895, %v9896
  %v9898 = vsel %vm252, %v8798, 0.0
  %v9899 = vadd.f32 %v9897, %v9898
  %v9900 = vsel %vm252, %v8799, 0.0
  %v9901 = vadd.f32 %v9899, %v9900
  %v9902 = vsel %vm252, %v8800, 0.0
  %v9903 = vadd.f32 %v9901, %v9902
  %v9904 = vsel %vm252, %v8801, 0.0
  %v9905 = vadd.f32 %v9903, %v9904
  %v9906 = vrot.slane %v9905, 4
  %v9907 = vadd.f32 %v9905, %v9906
  %v9908 = vrot.slane %v9907, 2
  %v9909 = vadd.f32 %v9907, %v9908
  %v9910 = vrot.slane %v9909, 1
  %v9911 = vadd.f32 %v9909, %v9910
  %v9912 = vsel %vm252, %v8802, 0.0
  %v9913 = vsel %vm252, %v8803, 0.0
  %v9914 = vadd.f32 %v9912, %v9913
  %v9915 = vsel %vm252, %v8804, 0.0
  %v9916 = vadd.f32 %v9914, %v9915
  %v9917 = vsel %vm252, %v8805, 0.0
  %v9918 = vadd.f32 %v9916, %v9917
  %v9919 = vsel %vm252, %v8806, 0.0
  %v9920 = vadd.f32 %v9918, %v9919
  %v9921 = vsel %vm252, %v8807, 0.0
  %v9922 = vadd.f32 %v9920, %v9921
  %v9923 = vsel %vm252, %v8808, 0.0
  %v9924 = vadd.f32 %v9922, %v9923
  %v9925 = vsel %vm252, %v8809, 0.0
  %v9926 = vadd.f32 %v9924, %v9925
  %v9927 = vrot.slane %v9926, 4
  %v9928 = vadd.f32 %v9926, %v9927
  %v9929 = vrot.slane %v9928, 2
  %v9930 = vadd.f32 %v9928, %v9929
  %v9931 = vrot.slane %v9930, 1
  %v9932 = vadd.f32 %v9930, %v9931
  %v9933 = vsel %vm252, %v8810, 0.0
  %v9934 = vsel %vm252, %v8811, 0.0
  %v9935 = vadd.f32 %v9933, %v9934
  %v9936 = vsel %vm252, %v8812, 0.0
  %v9937 = vadd.f32 %v9935, %v9936
  %v9938 = vsel %vm252, %v8813, 0.0
  %v9939 = vadd.f32 %v9937, %v9938
  %v9940 = vsel %vm252, %v8814, 0.0
  %v9941 = vadd.f32 %v9939, %v9940
  %v9942 = vsel %vm252, %v8815, 0.0
  %v9943 = vadd.f32 %v9941, %v9942
  %v9944 = vsel %vm252, %v8816, 0.0
  %v9945 = vadd.f32 %v9943, %v9944
  %v9946 = vsel %vm252, %v8817, 0.0
  %v9947 = vadd.f32 %v9945, %v9946
  %v9948 = vrot.slane %v9947, 4
  %v9949 = vadd.f32 %v9947, %v9948
  %v9950 = vrot.slane %v9949, 2
  %v9951 = vadd.f32 %v9949, %v9950
  %v9952 = vrot.slane %v9951, 1
  %v9953 = vadd.f32 %v9951, %v9952
  %v9954 = vsel %vm252, %v8818, 0.0
  %v9955 = vsel %vm252, %v8819, 0.0
  %v9956 = vadd.f32 %v9954, %v9955
  %v9957 = vsel %vm252, %v8820, 0.0
  %v9958 = vadd.f32 %v9956, %v9957
  %v9959 = vsel %vm252, %v8821, 0.0
  %v9960 = vadd.f32 %v9958, %v9959
  %v9961 = vsel %vm252, %v8822, 0.0
  %v9962 = vadd.f32 %v9960, %v9961
  %v9963 = vsel %vm252, %v8823, 0.0
  %v9964 = vadd.f32 %v9962, %v9963
  %v9965 = vsel %vm252, %v8824, 0.0
  %v9966 = vadd.f32 %v9964, %v9965
  %v9967 = vsel %vm252, %v8825, 0.0
  %v9968 = vadd.f32 %v9966, %v9967
  %v9969 = vrot.slane %v9968, 4
  %v9970 = vadd.f32 %v9968, %v9969
  %v9971 = vrot.slane %v9970, 2
  %v9972 = vadd.f32 %v9970, %v9971
  %v9973 = vrot.slane %v9972, 1
  %v9974 = vadd.f32 %v9972, %v9973
  %v9975 = vsel %vm252, %v8826, 0.0
  %v9976 = vsel %vm252, %v8827, 0.0
  %v9977 = vadd.f32 %v9975, %v9976
  %v9978 = vsel %vm252, %v8828, 0.0
  %v9979 = vadd.f32 %v9977, %v9978
  %v9980 = vsel %vm252, %v8829, 0.0
  %v9981 = vadd.f32 %v9979, %v9980
  %v9982 = vsel %vm252, %v8830, 0.0
  %v9983 = vadd.f32 %v9981, %v9982
  %v9984 = vsel %vm252, %v8831, 0.0
  %v9985 = vadd.f32 %v9983, %v9984
  %v9986 = vsel %vm252, %v8832, 0.0
  %v9987 = vadd.f32 %v9985, %v9986
  %v9988 = vsel %vm252, %v8833, 0.0
  %v9989 = vadd.f32 %v9987, %v9988
  %v9990 = vrot.slane %v9989, 4
  %v9991 = vadd.f32 %v9989, %v9990
  %v9992 = vrot.slane %v9991, 2
  %v9993 = vadd.f32 %v9991, %v9992
  %v9994 = vrot.slane %v9993, 1
  %v9995 = vadd.f32 %v9993, %v9994
  %v9996 = vsel %vm252, %v8834, 0.0
  %v9997 = vsel %vm252, %v8835, 0.0
  %v9998 = vadd.f32 %v9996, %v9997
  %v9999 = vsel %vm252, %v8836, 0.0
  %v10000 = vadd.f32 %v9998, %v9999
  %v10001 = vsel %vm252, %v8837, 0.0
  %v10002 = vadd.f32 %v10000, %v10001
  %v10003 = vsel %vm252, %v8838, 0.0
  %v10004 = vadd.f32 %v10002, %v10003
  %v10005 = vsel %vm252, %v8839, 0.0
  %v10006 = vadd.f32 %v10004, %v10005
  %v10007 = vsel %vm252, %v8840, 0.0
  %v10008 = vadd.f32 %v10006, %v10007
  %v10009 = vsel %vm252, %v8841, 0.0
  %v10010 = vadd.f32 %v10008, %v10009
  %v10011 = vrot.slane %v10010, 4
  %v10012 = vadd.f32 %v10010, %v10011
  %v10013 = vrot.slane %v10012, 2
  %v10014 = vadd.f32 %v10012, %v10013
  %v10015 = vrot.slane %v10014, 1
  %v10016 = vadd.f32 %v10014, %v10015
  %v10017 = vsel %vm252, %v8842, 0.0
  %v10018 = vsel %vm252, %v8843, 0.0
  %v10019 = vadd.f32 %v10017, %v10018
  %v10020 = vsel %vm252, %v8844, 0.0
  %v10021 = vadd.f32 %v10019, %v10020
  %v10022 = vsel %vm252, %v8845, 0.0
  %v10023 = vadd.f32 %v10021, %v10022
  %v10024 = vsel %vm252, %v8846, 0.0
  %v10025 = vadd.f32 %v10023, %v10024
  %v10026 = vsel %vm252, %v8847, 0.0
  %v10027 = vadd.f32 %v10025, %v10026
  %v10028 = vsel %vm252, %v8848, 0.0
  %v10029 = vadd.f32 %v10027, %v10028
  %v10030 = vsel %vm252, %v8849, 0.0
  %v10031 = vadd.f32 %v10029, %v10030
  %v10032 = vrot.slane %v10031, 4
  %v10033 = vadd.f32 %v10031, %v10032
  %v10034 = vrot.slane %v10033, 2
  %v10035 = vadd.f32 %v10033, %v10034
  %v10036 = vrot.slane %v10035, 1
  %v10037 = vadd.f32 %v10035, %v10036
  %v10038 = vsel %vm252, %v8850, 0.0
  %v10039 = vsel %vm252, %v8851, 0.0
  %v10040 = vadd.f32 %v10038, %v10039
  %v10041 = vsel %vm252, %v8852, 0.0
  %v10042 = vadd.f32 %v10040, %v10041
  %v10043 = vsel %vm252, %v8853, 0.0
  %v10044 = vadd.f32 %v10042, %v10043
  %v10045 = vsel %vm252, %v8854, 0.0
  %v10046 = vadd.f32 %v10044, %v10045
  %v10047 = vsel %vm252, %v8855, 0.0
  %v10048 = vadd.f32 %v10046, %v10047
  %v10049 = vsel %vm252, %v8856, 0.0
  %v10050 = vadd.f32 %v10048, %v10049
  %v10051 = vsel %vm252, %v8857, 0.0
  %v10052 = vadd.f32 %v10050, %v10051
  %v10053 = vrot.slane %v10052, 4
  %v10054 = vadd.f32 %v10052, %v10053
  %v10055 = vrot.slane %v10054, 2
  %v10056 = vadd.f32 %v10054, %v10055
  %v10057 = vrot.slane %v10056, 1
  %v10058 = vadd.f32 %v10056, %v10057
  %v10059 = vsel %vm252, %v8858, 0.0
  %v10060 = vsel %vm252, %v8859, 0.0
  %v10061 = vadd.f32 %v10059, %v10060
  %v10062 = vsel %vm252, %v8860, 0.0
  %v10063 = vadd.f32 %v10061, %v10062
  %v10064 = vsel %vm252, %v8861, 0.0
  %v10065 = vadd.f32 %v10063, %v10064
  %v10066 = vsel %vm252, %v8862, 0.0
  %v10067 = vadd.f32 %v10065, %v10066
  %v10068 = vsel %vm252, %v8863, 0.0
  %v10069 = vadd.f32 %v10067, %v10068
  %v10070 = vsel %vm252, %v8864, 0.0
  %v10071 = vadd.f32 %v10069, %v10070
  %v10072 = vsel %vm252, %v8865, 0.0
  %v10073 = vadd.f32 %v10071, %v10072
  %v10074 = vrot.slane %v10073, 4
  %v10075 = vadd.f32 %v10073, %v10074
  %v10076 = vrot.slane %v10075, 2
  %v10077 = vadd.f32 %v10075, %v10076
  %v10078 = vrot.slane %v10077, 1
  %v10079 = vadd.f32 %v10077, %v10078
  %v10080 = vsel %vm252, %v8866, 0.0
  %v10081 = vsel %vm252, %v8867, 0.0
  %v10082 = vadd.f32 %v10080, %v10081
  %v10083 = vsel %vm252, %v8868, 0.0
  %v10084 = vadd.f32 %v10082, %v10083
  %v10085 = vsel %vm252, %v8869, 0.0
  %v10086 = vadd.f32 %v10084, %v10085
  %v10087 = vsel %vm252, %v8870, 0.0
  %v10088 = vadd.f32 %v10086, %v10087
  %v10089 = vsel %vm252, %v8871, 0.0
  %v10090 = vadd.f32 %v10088, %v10089
  %v10091 = vsel %vm252, %v8872, 0.0
  %v10092 = vadd.f32 %v10090, %v10091
  %v10093 = vsel %vm252, %v8873, 0.0
  %v10094 = vadd.f32 %v10092, %v10093
  %v10095 = vrot.slane %v10094, 4
  %v10096 = vadd.f32 %v10094, %v10095
  %v10097 = vrot.slane %v10096, 2
  %v10098 = vadd.f32 %v10096, %v10097
  %v10099 = vrot.slane %v10098, 1
  %v10100 = vadd.f32 %v10098, %v10099
  %v10101 = vsel %vm252, %v8874, 0.0
  %v10102 = vsel %vm252, %v8875, 0.0
  %v10103 = vadd.f32 %v10101, %v10102
  %v10104 = vsel %vm252, %v8876, 0.0
  %v10105 = vadd.f32 %v10103, %v10104
  %v10106 = vsel %vm252, %v8877, 0.0
  %v10107 = vadd.f32 %v10105, %v10106
  %v10108 = vsel %vm252, %v8878, 0.0
  %v10109 = vadd.f32 %v10107, %v10108
  %v10110 = vsel %vm252, %v8879, 0.0
  %v10111 = vadd.f32 %v10109, %v10110
  %v10112 = vsel %vm252, %v8880, 0.0
  %v10113 = vadd.f32 %v10111, %v10112
  %v10114 = vsel %vm252, %v8881, 0.0
  %v10115 = vadd.f32 %v10113, %v10114
  %v10116 = vrot.slane %v10115, 4
  %v10117 = vadd.f32 %v10115, %v10116
  %v10118 = vrot.slane %v10117, 2
  %v10119 = vadd.f32 %v10117, %v10118
  %v10120 = vrot.slane %v10119, 1
  %v10121 = vadd.f32 %v10119, %v10120
  %v10122 = vsel %vm252, %v8882, 0.0
  %v10123 = vsel %vm252, %v8883, 0.0
  %v10124 = vadd.f32 %v10122, %v10123
  %v10125 = vsel %vm252, %v8884, 0.0
  %v10126 = vadd.f32 %v10124, %v10125
  %v10127 = vsel %vm252, %v8885, 0.0
  %v10128 = vadd.f32 %v10126, %v10127
  %v10129 = vsel %vm252, %v8886, 0.0
  %v10130 = vadd.f32 %v10128, %v10129
  %v10131 = vsel %vm252, %v8887, 0.0
  %v10132 = vadd.f32 %v10130, %v10131
  %v10133 = vsel %vm252, %v8888, 0.0
  %v10134 = vadd.f32 %v10132, %v10133
  %v10135 = vsel %vm252, %v8889, 0.0
  %v10136 = vadd.f32 %v10134, %v10135
  %v10137 = vrot.slane %v10136, 4
  %v10138 = vadd.f32 %v10136, %v10137
  %v10139 = vrot.slane %v10138, 2
  %v10140 = vadd.f32 %v10138, %v10139
  %v10141 = vrot.slane %v10140, 1
  %v10142 = vadd.f32 %v10140, %v10141
  %v10143 = vsel %vm252, %v8890, 0.0
  %v10144 = vsel %vm252, %v8891, 0.0
  %v10145 = vadd.f32 %v10143, %v10144
  %v10146 = vsel %vm252, %v8892, 0.0
  %v10147 = vadd.f32 %v10145, %v10146
  %v10148 = vsel %vm252, %v8893, 0.0
  %v10149 = vadd.f32 %v10147, %v10148
  %v10150 = vsel %vm252, %v8894, 0.0
  %v10151 = vadd.f32 %v10149, %v10150
  %v10152 = vsel %vm252, %v8895, 0.0
  %v10153 = vadd.f32 %v10151, %v10152
  %v10154 = vsel %vm252, %v8896, 0.0
  %v10155 = vadd.f32 %v10153, %v10154
  %v10156 = vsel %vm252, %v8897, 0.0
  %v10157 = vadd.f32 %v10155, %v10156
  %v10158 = vrot.slane %v10157, 4
  %v10159 = vadd.f32 %v10157, %v10158
  %v10160 = vrot.slane %v10159, 2
  %v10161 = vadd.f32 %v10159, %v10160
  %v10162 = vrot.slane %v10161, 1
  %v10163 = vadd.f32 %v10161, %v10162
  %v10164 = vsel %vm252, %v8898, 0.0
  %v10165 = vsel %vm252, %v8899, 0.0
  %v10166 = vadd.f32 %v10164, %v10165
  %v10167 = vsel %vm252, %v8900, 0.0
  %v10168 = vadd.f32 %v10166, %v10167
  %v10169 = vsel %vm252, %v8901, 0.0
  %v10170 = vadd.f32 %v10168, %v10169
  %v10171 = vsel %vm252, %v8902, 0.0
  %v10172 = vadd.f32 %v10170, %v10171
  %v10173 = vsel %vm252, %v8903, 0.0
  %v10174 = vadd.f32 %v10172, %v10173
  %v10175 = vsel %vm252, %v8904, 0.0
  %v10176 = vadd.f32 %v10174, %v10175
  %v10177 = vsel %vm252, %v8905, 0.0
  %v10178 = vadd.f32 %v10176, %v10177
  %v10179 = vrot.slane %v10178, 4
  %v10180 = vadd.f32 %v10178, %v10179
  %v10181 = vrot.slane %v10180, 2
  %v10182 = vadd.f32 %v10180, %v10181
  %v10183 = vrot.slane %v10182, 1
  %v10184 = vadd.f32 %v10182, %v10183
  %v10185 = vsel %vm252, %v8906, 0.0
  %v10186 = vsel %vm252, %v8907, 0.0
  %v10187 = vadd.f32 %v10185, %v10186
  %v10188 = vsel %vm252, %v8908, 0.0
  %v10189 = vadd.f32 %v10187, %v10188
  %v10190 = vsel %vm252, %v8909, 0.0
  %v10191 = vadd.f32 %v10189, %v10190
  %v10192 = vsel %vm252, %v8910, 0.0
  %v10193 = vadd.f32 %v10191, %v10192
  %v10194 = vsel %vm252, %v8911, 0.0
  %v10195 = vadd.f32 %v10193, %v10194
  %v10196 = vsel %vm252, %v8912, 0.0
  %v10197 = vadd.f32 %v10195, %v10196
  %v10198 = vsel %vm252, %v8913, 0.0
  %v10199 = vadd.f32 %v10197, %v10198
  %v10200 = vrot.slane %v10199, 4
  %v10201 = vadd.f32 %v10199, %v10200
  %v10202 = vrot.slane %v10201, 2
  %v10203 = vadd.f32 %v10201, %v10202
  %v10204 = vrot.slane %v10203, 1
  %v10205 = vadd.f32 %v10203, %v10204
  %v10206 = vsel %vm252, %v8914, 0.0
  %v10207 = vsel %vm252, %v8915, 0.0
  %v10208 = vadd.f32 %v10206, %v10207
  %v10209 = vsel %vm252, %v8916, 0.0
  %v10210 = vadd.f32 %v10208, %v10209
  %v10211 = vsel %vm252, %v8917, 0.0
  %v10212 = vadd.f32 %v10210, %v10211
  %v10213 = vsel %vm252, %v8918, 0.0
  %v10214 = vadd.f32 %v10212, %v10213
  %v10215 = vsel %vm252, %v8919, 0.0
  %v10216 = vadd.f32 %v10214, %v10215
  %v10217 = vsel %vm252, %v8920, 0.0
  %v10218 = vadd.f32 %v10216, %v10217
  %v10219 = vsel %vm252, %v8921, 0.0
  %v10220 = vadd.f32 %v10218, %v10219
  %v10221 = vrot.slane %v10220, 4
  %v10222 = vadd.f32 %v10220, %v10221
  %v10223 = vrot.slane %v10222, 2
  %v10224 = vadd.f32 %v10222, %v10223
  %v10225 = vrot.slane %v10224, 1
  %v10226 = vadd.f32 %v10224, %v10225
  %v10227 = vsel %vm252, %v8922, 0.0
  %v10228 = vsel %vm252, %v8923, 0.0
  %v10229 = vadd.f32 %v10227, %v10228
  %v10230 = vsel %vm252, %v8924, 0.0
  %v10231 = vadd.f32 %v10229, %v10230
  %v10232 = vsel %vm252, %v8925, 0.0
  %v10233 = vadd.f32 %v10231, %v10232
  %v10234 = vsel %vm252, %v8926, 0.0
  %v10235 = vadd.f32 %v10233, %v10234
  %v10236 = vsel %vm252, %v8927, 0.0
  %v10237 = vadd.f32 %v10235, %v10236
  %v10238 = vsel %vm252, %v8928, 0.0
  %v10239 = vadd.f32 %v10237, %v10238
  %v10240 = vsel %vm252, %v8929, 0.0
  %v10241 = vadd.f32 %v10239, %v10240
  %v10242 = vrot.slane %v10241, 4
  %v10243 = vadd.f32 %v10241, %v10242
  %v10244 = vrot.slane %v10243, 2
  %v10245 = vadd.f32 %v10243, %v10244
  %v10246 = vrot.slane %v10245, 1
  %v10247 = vadd.f32 %v10245, %v10246
  %v10248 = vsel %vm252, %v8930, 0.0
  %v10249 = vsel %vm252, %v8931, 0.0
  %v10250 = vadd.f32 %v10248, %v10249
  %v10251 = vsel %vm252, %v8932, 0.0
  %v10252 = vadd.f32 %v10250, %v10251
  %v10253 = vsel %vm252, %v8933, 0.0
  %v10254 = vadd.f32 %v10252, %v10253
  %v10255 = vsel %vm252, %v8934, 0.0
  %v10256 = vadd.f32 %v10254, %v10255
  %v10257 = vsel %vm252, %v8935, 0.0
  %v10258 = vadd.f32 %v10256, %v10257
  %v10259 = vsel %vm252, %v8936, 0.0
  %v10260 = vadd.f32 %v10258, %v10259
  %v10261 = vsel %vm252, %v8937, 0.0
  %v10262 = vadd.f32 %v10260, %v10261
  %v10263 = vrot.slane %v10262, 4
  %v10264 = vadd.f32 %v10262, %v10263
  %v10265 = vrot.slane %v10264, 2
  %v10266 = vadd.f32 %v10264, %v10265
  %v10267 = vrot.slane %v10266, 1
  %v10268 = vadd.f32 %v10266, %v10267
  %v10269 = vsel %vm252, %v8938, 0.0
  %v10270 = vsel %vm252, %v8939, 0.0
  %v10271 = vadd.f32 %v10269, %v10270
  %v10272 = vsel %vm252, %v8940, 0.0
  %v10273 = vadd.f32 %v10271, %v10272
  %v10274 = vsel %vm252, %v8941, 0.0
  %v10275 = vadd.f32 %v10273, %v10274
  %v10276 = vsel %vm252, %v8942, 0.0
  %v10277 = vadd.f32 %v10275, %v10276
  %v10278 = vsel %vm252, %v8943, 0.0
  %v10279 = vadd.f32 %v10277, %v10278
  %v10280 = vsel %vm252, %v8944, 0.0
  %v10281 = vadd.f32 %v10279, %v10280
  %v10282 = vsel %vm252, %v8945, 0.0
  %v10283 = vadd.f32 %v10281, %v10282
  %v10284 = vrot.slane %v10283, 4
  %v10285 = vadd.f32 %v10283, %v10284
  %v10286 = vrot.slane %v10285, 2
  %v10287 = vadd.f32 %v10285, %v10286
  %v10288 = vrot.slane %v10287, 1
  %v10289 = vadd.f32 %v10287, %v10288
  %v10290 = vmul.f32 %v8966, %v283
  %v10291 = vmul.f32 %v8987, %v283
  %v10292 = vmul.f32 %v9008, %v283
  %v10293 = vmul.f32 %v9029, %v283
  %v10294 = vmul.f32 %v9050, %v283
  %v10295 = vmul.f32 %v9071, %v283
  %v10296 = vmul.f32 %v9092, %v283
  %v10297 = vmul.f32 %v9113, %v283
  %v10298 = vmul.f32 %v9134, %v283
  %v10299 = vmul.f32 %v9155, %v283
  %v10300 = vmul.f32 %v9176, %v283
  %v10301 = vmul.f32 %v9197, %v283
  %v10302 = vmul.f32 %v9218, %v283
  %v10303 = vmul.f32 %v9239, %v283
  %v10304 = vmul.f32 %v9260, %v283
  %v10305 = vmul.f32 %v9281, %v283
  %v10306 = vmul.f32 %v9302, %v283
  %v10307 = vmul.f32 %v9323, %v283
  %v10308 = vmul.f32 %v9344, %v283
  %v10309 = vmul.f32 %v9365, %v283
  %v10310 = vmul.f32 %v9386, %v283
  %v10311 = vmul.f32 %v9407, %v283
  %v10312 = vmul.f32 %v9428, %v283
  %v10313 = vmul.f32 %v9449, %v283
  %v10314 = vmul.f32 %v9470, %v283
  %v10315 = vmul.f32 %v9491, %v283
  %v10316 = vmul.f32 %v9512, %v283
  %v10317 = vmul.f32 %v9533, %v283
  %v10318 = vmul.f32 %v9554, %v283
  %v10319 = vmul.f32 %v9575, %v283
  %v10320 = vmul.f32 %v9596, %v283
  %v10321 = vmul.f32 %v9617, %v283
  %v10322 = vmul.f32 %v9638, %v283
  %v10323 = vmul.f32 %v9659, %v283
  %v10324 = vmul.f32 %v9680, %v283
  %v10325 = vmul.f32 %v9701, %v283
  %v10326 = vmul.f32 %v9722, %v283
  %v10327 = vmul.f32 %v9743, %v283
  %v10328 = vmul.f32 %v9764, %v283
  %v10329 = vmul.f32 %v9785, %v283
  %v10330 = vmul.f32 %v9806, %v283
  %v10331 = vmul.f32 %v9827, %v283
  %v10332 = vmul.f32 %v9848, %v283
  %v10333 = vmul.f32 %v9869, %v283
  %v10334 = vmul.f32 %v9890, %v283
  %v10335 = vmul.f32 %v9911, %v283
  %v10336 = vmul.f32 %v9932, %v283
  %v10337 = vmul.f32 %v9953, %v283
  %v10338 = vmul.f32 %v9974, %v283
  %v10339 = vmul.f32 %v9995, %v283
  %v10340 = vmul.f32 %v10016, %v283
  %v10341 = vmul.f32 %v10037, %v283
  %v10342 = vmul.f32 %v10058, %v283
  %v10343 = vmul.f32 %v10079, %v283
  %v10344 = vmul.f32 %v10100, %v283
  %v10345 = vmul.f32 %v10121, %v283
  %v10346 = vmul.f32 %v10142, %v283
  %v10347 = vmul.f32 %v10163, %v283
  %v10348 = vmul.f32 %v10184, %v283
  %v10349 = vmul.f32 %v10205, %v283
  %v10350 = vmul.f32 %v10226, %v283
  %v10351 = vmul.f32 %v10247, %v283
  %v10352 = vmul.f32 %v10268, %v283
  %v10353 = vmul.f32 %v10289, %v283
  %v10354 = vpack.c.bf16 %v10290, %v10290
  %v10355 = vpack.c.bf16 %v10291, %v10291
  %v10356 = vpack.c.bf16 %v10292, %v10292
  %v10357 = vpack.c.bf16 %v10293, %v10293
  %v10358 = vpack.c.bf16 %v10294, %v10294
  %v10359 = vpack.c.bf16 %v10295, %v10295
  %v10360 = vpack.c.bf16 %v10296, %v10296
  %v10361 = vpack.c.bf16 %v10297, %v10297
  %v10362 = vpack.c.bf16 %v10298, %v10298
  %v10363 = vpack.c.bf16 %v10299, %v10299
  %v10364 = vpack.c.bf16 %v10300, %v10300
  %v10365 = vpack.c.bf16 %v10301, %v10301
  %v10366 = vpack.c.bf16 %v10302, %v10302
  %v10367 = vpack.c.bf16 %v10303, %v10303
  %v10368 = vpack.c.bf16 %v10304, %v10304
  %v10369 = vpack.c.bf16 %v10305, %v10305
  %v10370 = vpack.c.bf16 %v10306, %v10306
  %v10371 = vpack.c.bf16 %v10307, %v10307
  %v10372 = vpack.c.bf16 %v10308, %v10308
  %v10373 = vpack.c.bf16 %v10309, %v10309
  %v10374 = vpack.c.bf16 %v10310, %v10310
  %v10375 = vpack.c.bf16 %v10311, %v10311
  %v10376 = vpack.c.bf16 %v10312, %v10312
  %v10377 = vpack.c.bf16 %v10313, %v10313
  %v10378 = vpack.c.bf16 %v10314, %v10314
  %v10379 = vpack.c.bf16 %v10315, %v10315
  %v10380 = vpack.c.bf16 %v10316, %v10316
  %v10381 = vpack.c.bf16 %v10317, %v10317
  %v10382 = vpack.c.bf16 %v10318, %v10318
  %v10383 = vpack.c.bf16 %v10319, %v10319
  %v10384 = vpack.c.bf16 %v10320, %v10320
  %v10385 = vpack.c.bf16 %v10321, %v10321
  %v10386 = vpack.c.bf16 %v10322, %v10322
  %v10387 = vpack.c.bf16 %v10323, %v10323
  %v10388 = vpack.c.bf16 %v10324, %v10324
  %v10389 = vpack.c.bf16 %v10325, %v10325
  %v10390 = vpack.c.bf16 %v10326, %v10326
  %v10391 = vpack.c.bf16 %v10327, %v10327
  %v10392 = vpack.c.bf16 %v10328, %v10328
  %v10393 = vpack.c.bf16 %v10329, %v10329
  %v10394 = vpack.c.bf16 %v10330, %v10330
  %v10395 = vpack.c.bf16 %v10331, %v10331
  %v10396 = vpack.c.bf16 %v10332, %v10332
  %v10397 = vpack.c.bf16 %v10333, %v10333
  %v10398 = vpack.c.bf16 %v10334, %v10334
  %v10399 = vpack.c.bf16 %v10335, %v10335
  %v10400 = vpack.c.bf16 %v10336, %v10336
  %v10401 = vpack.c.bf16 %v10337, %v10337
  %v10402 = vpack.c.bf16 %v10338, %v10338
  %v10403 = vpack.c.bf16 %v10339, %v10339
  %v10404 = vpack.c.bf16 %v10340, %v10340
  %v10405 = vpack.c.bf16 %v10341, %v10341
  %v10406 = vpack.c.bf16 %v10342, %v10342
  %v10407 = vpack.c.bf16 %v10343, %v10343
  %v10408 = vpack.c.bf16 %v10344, %v10344
  %v10409 = vpack.c.bf16 %v10345, %v10345
  %v10410 = vpack.c.bf16 %v10346, %v10346
  %v10411 = vpack.c.bf16 %v10347, %v10347
  %v10412 = vpack.c.bf16 %v10348, %v10348
  %v10413 = vpack.c.bf16 %v10349, %v10349
  %v10414 = vpack.c.bf16 %v10350, %v10350
  %v10415 = vpack.c.bf16 %v10351, %v10351
  %v10416 = vpack.c.bf16 %v10352, %v10352
  %v10417 = vpack.c.bf16 %v10353, %v10353
  %v10482 = vunpack.c.l.b16 %v10354
  %v10483 = vunpack.c.l.b16 %v10355
  %v10484 = vunpack.c.l.b16 %v10356
  %v10485 = vunpack.c.l.b16 %v10357
  %v10486 = vunpack.c.l.b16 %v10358
  %v10487 = vunpack.c.l.b16 %v10359
  %v10488 = vunpack.c.l.b16 %v10360
  %v10489 = vunpack.c.l.b16 %v10361
  %v10490 = vunpack.c.l.b16 %v10362
  %v10491 = vunpack.c.l.b16 %v10363
  %v10492 = vunpack.c.l.b16 %v10364
  %v10493 = vunpack.c.l.b16 %v10365
  %v10494 = vunpack.c.l.b16 %v10366
  %v10495 = vunpack.c.l.b16 %v10367
  %v10496 = vunpack.c.l.b16 %v10368
  %v10497 = vunpack.c.l.b16 %v10369
  %v10498 = vunpack.c.l.b16 %v10370
  %v10499 = vunpack.c.l.b16 %v10371
  %v10500 = vunpack.c.l.b16 %v10372
  %v10501 = vunpack.c.l.b16 %v10373
  %v10502 = vunpack.c.l.b16 %v10374
  %v10503 = vunpack.c.l.b16 %v10375
  %v10504 = vunpack.c.l.b16 %v10376
  %v10505 = vunpack.c.l.b16 %v10377
  %v10506 = vunpack.c.l.b16 %v10378
  %v10507 = vunpack.c.l.b16 %v10379
  %v10508 = vunpack.c.l.b16 %v10380
  %v10509 = vunpack.c.l.b16 %v10381
  %v10510 = vunpack.c.l.b16 %v10382
  %v10511 = vunpack.c.l.b16 %v10383
  %v10512 = vunpack.c.l.b16 %v10384
  %v10513 = vunpack.c.l.b16 %v10385
  %v10514 = vunpack.c.l.b16 %v10386
  %v10515 = vunpack.c.l.b16 %v10387
  %v10516 = vunpack.c.l.b16 %v10388
  %v10517 = vunpack.c.l.b16 %v10389
  %v10518 = vunpack.c.l.b16 %v10390
  %v10519 = vunpack.c.l.b16 %v10391
  %v10520 = vunpack.c.l.b16 %v10392
  %v10521 = vunpack.c.l.b16 %v10393
  %v10522 = vunpack.c.l.b16 %v10394
  %v10523 = vunpack.c.l.b16 %v10395
  %v10524 = vunpack.c.l.b16 %v10396
  %v10525 = vunpack.c.l.b16 %v10397
  %v10526 = vunpack.c.l.b16 %v10398
  %v10527 = vunpack.c.l.b16 %v10399
  %v10528 = vunpack.c.l.b16 %v10400
  %v10529 = vunpack.c.l.b16 %v10401
  %v10530 = vunpack.c.l.b16 %v10402
  %v10531 = vunpack.c.l.b16 %v10403
  %v10532 = vunpack.c.l.b16 %v10404
  %v10533 = vunpack.c.l.b16 %v10405
  %v10534 = vunpack.c.l.b16 %v10406
  %v10535 = vunpack.c.l.b16 %v10407
  %v10536 = vunpack.c.l.b16 %v10408
  %v10537 = vunpack.c.l.b16 %v10409
  %v10538 = vunpack.c.l.b16 %v10410
  %v10539 = vunpack.c.l.b16 %v10411
  %v10540 = vunpack.c.l.b16 %v10412
  %v10541 = vunpack.c.l.b16 %v10413
  %v10542 = vunpack.c.l.b16 %v10414
  %v10543 = vunpack.c.l.b16 %v10415
  %v10544 = vunpack.c.l.b16 %v10416
  %v10545 = vunpack.c.l.b16 %v10417
  %v10546 = vsel %vm745, %v10483, %v10482
  %v10547 = vsel %vm749, %v10484, %v10546
  %v10548 = vsel %vm753, %v10485, %v10547
  %vm10549 = vcmask 1044484
  %v10550 = vsel %vm10549, %v10486, %v10548
  %vm10551 = vcmask 1045509
  %v10552 = vsel %vm10551, %v10487, %v10550
  %vm10553 = vcmask 1046534
  %v10554 = vsel %vm10553, %v10488, %v10552
  %vm10555 = vcmask 1047559
  %v10556 = vsel %vm10555, %v10489, %v10554
  %v10557 = vsel %vm745, %v10491, %v10490
  %v10558 = vsel %vm749, %v10492, %v10557
  %v10559 = vsel %vm753, %v10493, %v10558
  %v10560 = vsel %vm10549, %v10494, %v10559
  %v10561 = vsel %vm10551, %v10495, %v10560
  %v10562 = vsel %vm10553, %v10496, %v10561
  %v10563 = vsel %vm10555, %v10497, %v10562
  %v10564 = vsel %vm745, %v10499, %v10498
  %v10565 = vsel %vm749, %v10500, %v10564
  %v10566 = vsel %vm753, %v10501, %v10565
  %v10567 = vsel %vm10549, %v10502, %v10566
  %v10568 = vsel %vm10551, %v10503, %v10567
  %v10569 = vsel %vm10553, %v10504, %v10568
  %v10570 = vsel %vm10555, %v10505, %v10569
  %v10571 = vsel %vm745, %v10507, %v10506
  %v10572 = vsel %vm749, %v10508, %v10571
  %v10573 = vsel %vm753, %v10509, %v10572
  %v10574 = vsel %vm10549, %v10510, %v10573
  %v10575 = vsel %vm10551, %v10511, %v10574
  %v10576 = vsel %vm10553, %v10512, %v10575
  %v10577 = vsel %vm10555, %v10513, %v10576
  %v10578 = vsel %vm745, %v10515, %v10514
  %v10579 = vsel %vm749, %v10516, %v10578
  %v10580 = vsel %vm753, %v10517, %v10579
  %v10581 = vsel %vm10549, %v10518, %v10580
  %v10582 = vsel %vm10551, %v10519, %v10581
  %v10583 = vsel %vm10553, %v10520, %v10582
  %v10584 = vsel %vm10555, %v10521, %v10583
  %v10585 = vsel %vm745, %v10523, %v10522
  %v10586 = vsel %vm749, %v10524, %v10585
  %v10587 = vsel %vm753, %v10525, %v10586
  %v10588 = vsel %vm10549, %v10526, %v10587
  %v10589 = vsel %vm10551, %v10527, %v10588
  %v10590 = vsel %vm10553, %v10528, %v10589
  %v10591 = vsel %vm10555, %v10529, %v10590
  %v10592 = vsel %vm745, %v10531, %v10530
  %v10593 = vsel %vm749, %v10532, %v10592
  %v10594 = vsel %vm753, %v10533, %v10593
  %v10595 = vsel %vm10549, %v10534, %v10594
  %v10596 = vsel %vm10551, %v10535, %v10595
  %v10597 = vsel %vm10553, %v10536, %v10596
  %v10598 = vsel %vm10555, %v10537, %v10597
  %v10599 = vsel %vm745, %v10539, %v10538
  %v10600 = vsel %vm749, %v10540, %v10599
  %v10601 = vsel %vm753, %v10541, %v10600
  %v10602 = vsel %vm10549, %v10542, %v10601
  %v10603 = vsel %vm10551, %v10543, %v10602
  %v10604 = vsel %vm10553, %v10544, %v10603
  %v10605 = vsel %vm10555, %v10545, %v10604
  %v10606 = vpack.c.b16 %v10563, %v10556
  %v10607 = vpack.c.b16 %v10577, %v10570
  %v10608 = vpack.c.b16 %v10591, %v10584
  %v10609 = vpack.c.b16 %v10605, %v10598
  %v10611 = vsel %vm252, %v10606, 0
  %v10614 = vsel %vm252, %v10607, 0
  %v10617 = vsel %vm252, %v10608, 0
  %v10620 = vsel %vm252, %v10609, 0
  %10622 = vmatpush.bf16.xpose.msra.mxu0 0
  %10623 = vmatpush.bf16.xpose.msra.mxu0 0
  %10624 = vmatpush.bf16.xpose.msra.mxu0 0
  %10625 = vmatpush.bf16.xpose.msra.mxu0 0
  %10626 = vmatpush.bf16.xpose.msra.mxu0 0
  %10627 = vmatpush.bf16.xpose.msra.mxu0 0
  %10628 = vmatpush.bf16.xpose.msra.mxu0 %v311
  %10629 = vmatpush.bf16.xpose.msra.mxu0 %v308
  %10630 = vmatmul.bf16.gmra.mxu0 %v10611
  %v10631 = vpop.f32.mrf.mxu0
  %v10632 = vadd.f32 0.0, %v10631
  %v10633 = vpop.f32.mrf.mxu0
  %v10634 = vadd.f32 0.0, %v10633
  %10635 = vmatmul.bf16.gmra.mxu0 %v10614
  %v10636 = vpop.f32.mrf.mxu0
  %v10637 = vadd.f32 0.0, %v10636
  %v10638 = vpop.f32.mrf.mxu0
  %v10639 = vadd.f32 0.0, %v10638
  %10640 = vmatmul.bf16.gmra.mxu0 %v10617
  %v10641 = vpop.f32.mrf.mxu0
  %v10642 = vadd.f32 0.0, %v10641
  %v10643 = vpop.f32.mrf.mxu0
  %v10644 = vadd.f32 0.0, %v10643
  %10645 = vmatmul.bf16.gmra.mxu0 %v10620
  %v10646 = vpop.f32.mrf.mxu0
  %v10647 = vadd.f32 0.0, %v10646
  %v10648 = vpop.f32.mrf.mxu0
  %v10649 = vadd.f32 0.0, %v10648
  %10650 = vdwg.mxu0
  %vm10651 = vcmask 162816
  %v10652 = vsel %vm10651, %v10632, -inf
  %10653 = vmax.xlane.f32.xlu0 %v10652
  %v10654 = vpop.xlane.xlu0 %10653
  %v10655 = vsel %vm10651, %v10634, -inf
  %10656 = vmax.xlane.f32.xlu0 %v10655
  %v10657 = vpop.xlane.xlu0 %10656
  %v10658 = vsel %vm10651, %v10637, -inf
  %10659 = vmax.xlane.f32.xlu0 %v10658
  %v10660 = vpop.xlane.xlu0 %10659
  %v10661 = vsel %vm10651, %v10639, -inf
  %10662 = vmax.xlane.f32.xlu0 %v10661
  %v10663 = vpop.xlane.xlu0 %10662
  %v10664 = vsel %vm10651, %v10642, -inf
  %10665 = vmax.xlane.f32.xlu0 %v10664
  %v10666 = vpop.xlane.xlu0 %10665
  %v10667 = vsel %vm10651, %v10644, -inf
  %10668 = vmax.xlane.f32.xlu0 %v10667
  %v10669 = vpop.xlane.xlu0 %10668
  %v10670 = vsel %vm10651, %v10647, -inf
  %10671 = vmax.xlane.f32.xlu0 %v10670
  %v10672 = vpop.xlane.xlu0 %10671
  %v10673 = vsel %vm10651, %v10649, -inf
  %10674 = vmax.xlane.f32.xlu0 %v10673
  %v10675 = vpop.xlane.xlu0 %10674
  %v10676 = vsub.f32 %v10632, %v10654
  %v10677 = vsub.f32 %v10634, %v10657
  %v10678 = vsub.f32 %v10637, %v10660
  %v10679 = vsub.f32 %v10639, %v10663
  %v10680 = vsub.f32 %v10642, %v10666
  %v10681 = vsub.f32 %v10644, %v10669
  %v10682 = vsub.f32 %v10647, %v10672
  %v10683 = vsub.f32 %v10649, %v10675
  %v10684 = vmul.f32 %v10676, 1.442695
  %v10685 = vpow.pop %v10684
  %v10686 = vmul.f32 %v10677, 1.442695
  %v10687 = vpow.pop %v10686
  %v10688 = vmul.f32 %v10678, 1.442695
  %v10689 = vpow.pop %v10688
  %v10690 = vmul.f32 %v10679, 1.442695
  %v10691 = vpow.pop %v10690
  %v10692 = vmul.f32 %v10680, 1.442695
  %v10693 = vpow.pop %v10692
  %v10694 = vmul.f32 %v10681, 1.442695
  %v10695 = vpow.pop %v10694
  %v10696 = vmul.f32 %v10682, 1.442695
  %v10697 = vpow.pop %v10696
  %v10698 = vmul.f32 %v10683, 1.442695
  %v10699 = vpow.pop %v10698
  %v10700 = vmul.f32 %v10685, %v377
  %v10701 = vmul.f32 %v10687, %v377
  %v10702 = vmul.f32 %v10689, %v377
  %v10703 = vmul.f32 %v10691, %v377
  %v10704 = vmul.f32 %v10693, %v377
  %v10705 = vmul.f32 %v10695, %v377
  %v10706 = vmul.f32 %v10697, %v377
  %v10707 = vmul.f32 %v10699, %v377
  %v10708 = vsel %vm10651, %v10700, 0.0
  %10709 = vadd.xlane.f32.xlu0 %v10708
  %v10710 = vpop.xlane.xlu0 %10709
  %v10711 = vsel %vm10651, %v10701, 0.0
  %10712 = vadd.xlane.f32.xlu0 %v10711
  %v10713 = vpop.xlane.xlu0 %10712
  %v10714 = vsel %vm10651, %v10702, 0.0
  %10715 = vadd.xlane.f32.xlu0 %v10714
  %v10716 = vpop.xlane.xlu0 %10715
  %v10717 = vsel %vm10651, %v10703, 0.0
  %10718 = vadd.xlane.f32.xlu0 %v10717
  %v10719 = vpop.xlane.xlu0 %10718
  %v10720 = vsel %vm10651, %v10704, 0.0
  %10721 = vadd.xlane.f32.xlu0 %v10720
  %v10722 = vpop.xlane.xlu0 %10721
  %v10723 = vsel %vm10651, %v10705, 0.0
  %10724 = vadd.xlane.f32.xlu0 %v10723
  %v10725 = vpop.xlane.xlu0 %10724
  %v10726 = vsel %vm10651, %v10706, 0.0
  %10727 = vadd.xlane.f32.xlu0 %v10726
  %v10728 = vpop.xlane.xlu0 %10727
  %v10729 = vsel %vm10651, %v10707, 0.0
  %10730 = vadd.xlane.f32.xlu0 %v10729
  %v10731 = vpop.xlane.xlu0 %10730
  %v10732 = vsel %vm10651, %v10685, 0.0
  %10733 = vadd.xlane.f32.xlu0 %v10732
  %v10734 = vpop.xlane.xlu0 %10733
  %v10735 = vsel %vm10651, %v10687, 0.0
  %10736 = vadd.xlane.f32.xlu0 %v10735
  %v10737 = vpop.xlane.xlu0 %10736
  %v10738 = vsel %vm10651, %v10689, 0.0
  %10739 = vadd.xlane.f32.xlu0 %v10738
  %v10740 = vpop.xlane.xlu0 %10739
  %v10741 = vsel %vm10651, %v10691, 0.0
  %10742 = vadd.xlane.f32.xlu0 %v10741
  %v10743 = vpop.xlane.xlu0 %10742
  %v10744 = vsel %vm10651, %v10693, 0.0
  %10745 = vadd.xlane.f32.xlu0 %v10744
  %v10746 = vpop.xlane.xlu0 %10745
  %v10747 = vsel %vm10651, %v10695, 0.0
  %10748 = vadd.xlane.f32.xlu0 %v10747
  %v10749 = vpop.xlane.xlu0 %10748
  %v10750 = vsel %vm10651, %v10697, 0.0
  %10751 = vadd.xlane.f32.xlu0 %v10750
  %v10752 = vpop.xlane.xlu0 %10751
  %v10753 = vsel %vm10651, %v10699, 0.0
  %10754 = vadd.xlane.f32.xlu0 %v10753
  %v10755 = vpop.xlane.xlu0 %10754
  %v10756 = vrcp.pop %v10734
  %v10757 = vmul.f32 %v10734, %v10756
  %v10758 = vsub.f32 1.0, %v10757
  %v10759 = vmul.f32 %v10756, %v10758
  %v10760 = vadd.f32 %v10756, %v10759
  %vm10761 = vweird.f32 %v10734
  %vm10762 = vweird.f32 %v10756
  %vm10763 = vmor %vm10761, %vm10762
  %v10764 = vsel %vm10763, %v10756, %v10760
  %v10765 = vand.u32 2147483647, %v10734
  %vm10766 = vcmp.eq.f32.partialorder %v10765, 8.507059e+37
  %v10767 = vand.u32 %v10734, 2147483648
  %v10768 = vor.u32 1.1754944e-38, %v10767
  %v10769 = vsel %vm10766, %v10768, %v10764
  %v10770 = vrcp.pop %v10737
  %v10771 = vmul.f32 %v10737, %v10770
  %v10772 = vsub.f32 1.0, %v10771
  %v10773 = vmul.f32 %v10770, %v10772
  %v10774 = vadd.f32 %v10770, %v10773
  %vm10775 = vweird.f32 %v10737
  %vm10776 = vweird.f32 %v10770
  %vm10777 = vmor %vm10775, %vm10776
  %v10778 = vsel %vm10777, %v10770, %v10774
  %v10779 = vand.u32 2147483647, %v10737
  %vm10780 = vcmp.eq.f32.partialorder %v10779, 8.507059e+37
  %v10781 = vand.u32 %v10737, 2147483648
  %v10782 = vor.u32 1.1754944e-38, %v10781
  %v10783 = vsel %vm10780, %v10782, %v10778
  %v10784 = vrcp.pop %v10740
  %v10785 = vmul.f32 %v10740, %v10784
  %v10786 = vsub.f32 1.0, %v10785
  %v10787 = vmul.f32 %v10784, %v10786
  %v10788 = vadd.f32 %v10784, %v10787
  %vm10789 = vweird.f32 %v10740
  %vm10790 = vweird.f32 %v10784
  %vm10791 = vmor %vm10789, %vm10790
  %v10792 = vsel %vm10791, %v10784, %v10788
  %v10793 = vand.u32 2147483647, %v10740
  %vm10794 = vcmp.eq.f32.partialorder %v10793, 8.507059e+37
  %v10795 = vand.u32 %v10740, 2147483648
  %v10796 = vor.u32 1.1754944e-38, %v10795
  %v10797 = vsel %vm10794, %v10796, %v10792
  %v10798 = vrcp.pop %v10743
  %v10799 = vmul.f32 %v10743, %v10798
  %v10800 = vsub.f32 1.0, %v10799
  %v10801 = vmul.f32 %v10798, %v10800
  %v10802 = vadd.f32 %v10798, %v10801
  %vm10803 = vweird.f32 %v10743
  %vm10804 = vweird.f32 %v10798
  %vm10805 = vmor %vm10803, %vm10804
  %v10806 = vsel %vm10805, %v10798, %v10802
  %v10807 = vand.u32 2147483647, %v10743
  %vm10808 = vcmp.eq.f32.partialorder %v10807, 8.507059e+37
  %v10809 = vand.u32 %v10743, 2147483648
  %v10810 = vor.u32 1.1754944e-38, %v10809
  %v10811 = vsel %vm10808, %v10810, %v10806
  %v10812 = vrcp.pop %v10746
  %v10813 = vmul.f32 %v10746, %v10812
  %v10814 = vsub.f32 1.0, %v10813
  %v10815 = vmul.f32 %v10812, %v10814
  %v10816 = vadd.f32 %v10812, %v10815
  %vm10817 = vweird.f32 %v10746
  %vm10818 = vweird.f32 %v10812
  %vm10819 = vmor %vm10817, %vm10818
  %v10820 = vsel %vm10819, %v10812, %v10816
  %v10821 = vand.u32 2147483647, %v10746
  %vm10822 = vcmp.eq.f32.partialorder %v10821, 8.507059e+37
  %v10823 = vand.u32 %v10746, 2147483648
  %v10824 = vor.u32 1.1754944e-38, %v10823
  %v10825 = vsel %vm10822, %v10824, %v10820
  %v10826 = vrcp.pop %v10749
  %v10827 = vmul.f32 %v10749, %v10826
  %v10828 = vsub.f32 1.0, %v10827
  %v10829 = vmul.f32 %v10826, %v10828
  %v10830 = vadd.f32 %v10826, %v10829
  %vm10831 = vweird.f32 %v10749
  %vm10832 = vweird.f32 %v10826
  %vm10833 = vmor %vm10831, %vm10832
  %v10834 = vsel %vm10833, %v10826, %v10830
  %v10835 = vand.u32 2147483647, %v10749
  %vm10836 = vcmp.eq.f32.partialorder %v10835, 8.507059e+37
  %v10837 = vand.u32 %v10749, 2147483648
  %v10838 = vor.u32 1.1754944e-38, %v10837
  %v10839 = vsel %vm10836, %v10838, %v10834
  %v10840 = vrcp.pop %v10752
  %v10841 = vmul.f32 %v10752, %v10840
  %v10842 = vsub.f32 1.0, %v10841
  %v10843 = vmul.f32 %v10840, %v10842
  %v10844 = vadd.f32 %v10840, %v10843
  %vm10845 = vweird.f32 %v10752
  %vm10846 = vweird.f32 %v10840
  %vm10847 = vmor %vm10845, %vm10846
  %v10848 = vsel %vm10847, %v10840, %v10844
  %v10849 = vand.u32 2147483647, %v10752
  %vm10850 = vcmp.eq.f32.partialorder %v10849, 8.507059e+37
  %v10851 = vand.u32 %v10752, 2147483648
  %v10852 = vor.u32 1.1754944e-38, %v10851
  %v10853 = vsel %vm10850, %v10852, %v10848
  %v10854 = vrcp.pop %v10755
  %v10855 = vmul.f32 %v10755, %v10854
  %v10856 = vsub.f32 1.0, %v10855
  %v10857 = vmul.f32 %v10854, %v10856
  %v10858 = vadd.f32 %v10854, %v10857
  %vm10859 = vweird.f32 %v10755
  %vm10860 = vweird.f32 %v10854
  %vm10861 = vmor %vm10859, %vm10860
  %v10862 = vsel %vm10861, %v10854, %v10858
  %v10863 = vand.u32 2147483647, %v10755
  %vm10864 = vcmp.eq.f32.partialorder %v10863, 8.507059e+37
  %v10865 = vand.u32 %v10755, 2147483648
  %v10866 = vor.u32 1.1754944e-38, %v10865
  %v10867 = vsel %vm10864, %v10866, %v10862
  %v10868 = vmul.f32 %v10710, %v10769
  %v10869 = vmul.f32 %v10713, %v10783
  %v10870 = vmul.f32 %v10716, %v10797
  %v10871 = vmul.f32 %v10719, %v10811
  %v10872 = vmul.f32 %v10722, %v10825
  %v10873 = vmul.f32 %v10725, %v10839
  %v10874 = vmul.f32 %v10728, %v10853
  %v10875 = vmul.f32 %v10731, %v10867
  %v10876 = vsel %vm556, %v10868, 0.0
  %v10877 = vsel %vm557, %v10869, 0.0
  %v10878 = vsel %vm558, %v10870, 0.0
  %v10879 = vsel %vm559, %v10871, 0.0
  %v10880 = vsel %vm560, %v10872, 0.0
  %v10881 = vsel %vm561, %v10873, 0.0
  %v10882 = vsel %vm562, %v10874, 0.0
  %v10883 = vsel %vm563, %v10875, 0.0
  %v10884 = vmul.f32 %v10876, %v452
  %v10885 = vmul.f32 %v10876, %v481
  %v10886 = vmul.f32 %v10877, %v454
  %v10887 = vmul.f32 %v10877, %v483
  %v10888 = vmul.f32 %v10878, %v457
  %v10889 = vmul.f32 %v10878, %v486
  %v10890 = vmul.f32 %v10879, %v459
  %v10891 = vmul.f32 %v10879, %v488
  %v10892 = vmul.f32 %v10880, %v462
  %v10893 = vmul.f32 %v10880, %v491
  %v10894 = vmul.f32 %v10881, %v464
  %v10895 = vmul.f32 %v10881, %v493
  %v10896 = vmul.f32 %v10882, %v467
  %v10897 = vmul.f32 %v10882, %v496
  %v10898 = vmul.f32 %v10883, %v469
  %v10899 = vmul.f32 %v10883, %v498
  %10900 = vst [vmem:[%s5] sm:$0xff] %v10884
  %10901 = vst [vmem:[%s5 + $0x8] sm:$0xff] %v10885
  %10902 = vst [vmem:[%s5 + $0x10] sm:$0xff] %v10886
  %10903 = vst [vmem:[%s5 + $0x18] sm:$0xff] %v10887
  %10904 = vst [vmem:[%s5 + $0x20] sm:$0xff] %v10888
  %10905 = vst [vmem:[%s5 + $0x28] sm:$0xff] %v10889
  %10906 = vst [vmem:[%s5 + $0x30] sm:$0xff] %v10890
  %10907 = vst [vmem:[%s5 + $0x38] sm:$0xff] %v10891
  %10908 = vst [vmem:[%s5 + $0x40] sm:$0xff] %v10892
  %10909 = vst [vmem:[%s5 + $0x48] sm:$0xff] %v10893
  %10910 = vst [vmem:[%s5 + $0x50] sm:$0xff] %v10894
  %10911 = vst [vmem:[%s5 + $0x58] sm:$0xff] %v10895
  %10912 = vst [vmem:[%s5 + $0x60] sm:$0xff] %v10896
  %10913 = vst [vmem:[%s5 + $0x68] sm:$0xff] %v10897
  %10914 = vst [vmem:[%s5 + $0x70] sm:$0xff] %v10898
  %10915 = vst [vmem:[%s5 + $0x78] sm:$0xff] %v10899
  // Predicated region
  $region22: #{run.1} parent=0 // pred_check
    _
  $region23: #{run.1} parent=0 // pred_check_branch
    %10917 = sbr.rel (0) target = $region25
  $region24: #{run.1} parent=0 // pred_region
    _
  $region25: #{run.1} parent=0 // pred_fallthru
    _
  // Predicated region
  $region26: #{run.1} parent=0 // pred_check
    _
  $region27: #{run.1} parent=0 // pred_check_branch
    %10919 = sbr.rel (0) target = $region29
  $region28: #{run.1} parent=0 // pred_region
    _
  $region29: #{run.1} parent=0 // pred_fallthru
    _

</llo_original>
